<compile_context>
chip_gen: v6e
topology: v6e:2x2x1
jax: 0.10.0
libtpu: 0.0.40
codegen_flags: <defaults>
</compile_context>

<pallas_src>
import functools
import math

import jax
import jax.numpy as jnp
from jax.experimental import pallas as pl
from jax.experimental.pallas import tpu as pltpu


# --------------------------------- kernel --------------------------------------------------
def gated_mha_kernel(num_heads,
                     qin_ref, kin_ref,
                     wqg_ref, bqg_ref,     # fused fc_q + gate Linear        [dQ, 2E], [1, 2E]
                     wqi_ref, bqi_ref,     # MHA q in-projection             [E, E],   [1, E]
                     wkv_ref, bkv_ref,     # folded fc_k/fc_v ∘ k/v in-proj  [dK, 2E], [1, 2E]
                     wo_ref, bo_ref,       # MHA out-projection              [E, E],   [1, E]
                     wfo_ref, bfo_ref,     # fc_o                            [E, E],   [1, E]
                     out_ref):
    e = wqi_ref.shape[0]
    h = num_heads
    hd = e // h
    scale = 1.0 / math.sqrt(hd)            # trace-time constant
    cdt = wqg_ref.dtype                    # MXU operand dtype (bf16); accumulate in f32

    qin = qin_ref[...].astype(cdt)         # [Tq, dQ]
    kin = kin_ref[...].astype(cdt)         # [Lk, dK]
    tq, lk = qin.shape[0], kin.shape[0]

    # ---- fc_q and gate Linear fused (both consume Q_in): one [dQ, 2E] matmul --------------
    qg = jnp.dot(qin, wqg_ref[...], preferred_element_type=jnp.float32) + bqg_ref[...]
    qp = qg[:, :e]                         # fc_q(Q_in)             [Tq, E] f32
    g = qg[:, e:]                          # gate pre-activation
    gate = g * jax.nn.sigmoid(g)           # SiLU

    # ---- MHA in-projections (fc_k / fc_v folded into k/v in-proj: one [dK, 2E] matmul) ----
    q = jnp.dot(qp.astype(cdt), wqi_ref[...], preferred_element_type=jnp.float32) + bqi_ref[...]
    kv = jnp.dot(kin, wkv_ref[...], preferred_element_type=jnp.float32) + bkv_ref[...]
    k, v = kv[:, :e], kv[:, e:]

    # ---- batched per-head scaled dot-product attention (no per-head slicing loop) ---------
    qh = (q * scale).reshape(tq, h, hd).astype(cdt)
    kh = k.reshape(lk, h, hd).astype(cdt)
    vh = v.reshape(lk, h, hd).astype(cdt)
    s = jnp.einsum('qhd,khd->hqk', qh, kh, preferred_element_type=jnp.float32)   # [h,Tq,Lk]
    m = jnp.max(s, axis=-1, keepdims=True)
    p = jnp.exp(s - m)
    l = jnp.sum(p, axis=-1, keepdims=True)                                       # [h,Tq,1]
    ctx = jnp.einsum('hqk,khd->hqd', p.astype(cdt), vh,
                     preferred_element_type=jnp.float32)                         # [h,Tq,hd]
    ctx = ctx * pl.reciprocal(l, approx=True)       # normalize AFTER PV (saves [Tq,Lk] muls)
    ctx = jnp.swapaxes(ctx, 0, 1).reshape(tq, e)                                 # [Tq, E]

    # ---- single K=E out-projection (full MXU depth) ----------------------------------------
    a = jnp.dot(ctx.astype(cdt), wo_ref[...], preferred_element_type=jnp.float32) + bo_ref[...]

    # ---- residual, fc_o relu residual, gate -------------------------------------------------
    o = qp + a                                                                   # (Q + A)
    o = o + jnp.maximum(
        jnp.dot(o.astype(cdt), wfo_ref[...], preferred_element_type=jnp.float32) + bfo_ref[...],
        0.0)
    out_ref[...] = (o * gate).astype(out_ref.dtype)


# --------------------------------- wrapper --------------------------------------------------
def _vmem_limit_bytes():
    # Raise the scoped-VMEM budget on 128-MiB parts (v5e/v6e); keep the default on 64-MiB
    # parts (v7x), where tiling + single-buffered weights do the bounding instead.
    try:
        cap = pltpu.get_tpu_info().vmem_capacity_bytes
        if cap >= 128 * 1024 * 1024:
            return 64 * 1024 * 1024
    except Exception:
        pass
    return None


def gated_mha(q_in, k_in, folded, *, num_heads, tile_q=128, out_dtype=jnp.float32):
    """One gated MultiHeadAttention block. q_in: [1 or B, Lq, dQ], k_in: [B, Lk, dK]."""
    B, Lk, dK = k_in.shape
    Bq, Lq, dQ = q_in.shape
    E = folded[2].shape[0]                 # wqi is [E, E]
    tq = min(tile_q, Lq)
    nq = pl.cdiv(Lq, tq)

    # latent [1, M, E] broadcast over batch through the index_map (no .repeat()).
    q_map = (lambda b, q: (0, q, 0)) if Bq == 1 else (lambda b, q: (b, q, 0))

    def wspec(w, mode):
        shp = w.shape
        idx = lambda b, q: (0,) * len(shp)
        if mode is None:
            return pl.BlockSpec(shp, idx)
        return pl.BlockSpec(shp, idx, pipeline_mode=mode)

    def build(weight_mode):
        in_specs = [pl.BlockSpec((None, tq, dQ), q_map),
                    pl.BlockSpec((None, Lk, dK), lambda b, q: (b, 0, 0))]
        in_specs += [wspec(w, weight_mode) for w in folded]
        return pl.pallas_call(
            functools.partial(gated_mha_kernel, num_heads),
            out_shape=jax.ShapeDtypeStruct((B, Lq, E), out_dtype),
            grid=(B, nq),
            in_specs=in_specs,
            out_specs=pl.BlockSpec((None, tq, E), lambda b, q: (b, q, 0)),
            compiler_params=pltpu.CompilerParams(
                dimension_semantics=("parallel", "parallel"),
                vmem_limit_bytes=_vmem_limit_bytes()),
        )

    # Weight block indices never change -> single-buffer them; fall back if unsupported.
    try:
        if hasattr(pl, "Buffered"):
            return build(pl.Buffered(1))(q_in, k_in, *folded)
    except Exception:
        pass
    return build(None)(q_in, k_in, *folded)


# ---------------------- one-time parameter folding (hoisted out of forward) -----------------
def fold_mha_params(p, *, compute_dtype=jnp.bfloat16):
    """Fold torch-layout gated-MHA params into the fused / pre-transposed kernel layout."""
    wq_in, wk_in, wv_in = jnp.split(p["in_proj_w"], 3, axis=0)      # each [E, E]
    bq_in, bk_in, bv_in = jnp.split(p["in_proj_b"], 3, axis=0)      # each [E]
    # fc_q + gate fused (both consume Q_in).
    wqg = jnp.concatenate([p["fc_q_w"].T, p["gate_w"].T], axis=1)   # [dQ, 2E]
    bqg = jnp.concatenate([p["fc_q_b"], p["gate_b"]])[None, :]      # [1, 2E]
    # MHA q in-proj kept separate (fc_q output also feeds the residual).
    wqi, bqi = wq_in.T, bq_in[None, :]
    # fc_k∘(k in-proj) and fc_v∘(v in-proj): exact composition of Linears.
    wk_eff = p["fc_k_w"].T @ wk_in.T                                # [dK, E]
    bk_eff = p["fc_k_b"] @ wk_in.T + bk_in
    wv_eff = p["fc_v_w"].T @ wv_in.T
    bv_eff = p["fc_v_b"] @ wv_in.T + bv_in
    wkv = jnp.concatenate([wk_eff, wv_eff], axis=1)                 # [dK, 2E]
    bkv = jnp.concatenate([bk_eff, bv_eff])[None, :]
    wo, bo = p["out_proj_w"].T, p["out_proj_b"][None, :]
    wfo, bfo = p["fc_o_w"].T, p["fc_o_b"][None, :]
    c = lambda w: w.astype(compute_dtype)                           # weights bf16, biases f32
    return (c(wqg), bqg, c(wqi), bqi, c(wkv), bkv, c(wo), bo, c(wfo), bfo)


def fold_gab_params(params, *, compute_dtype=jnp.bfloat16):
    return dict(
        latent=params["latent"].astype(compute_dtype),
        project_forward=fold_mha_params(params["project_forward"], compute_dtype=compute_dtype),
        project_backward=fold_mha_params(params["project_backward"], compute_dtype=compute_dtype),
    )


def gab_forward(X, folded, *, num_heads, tile_q=128):
    cdt = folded["latent"].dtype
    Xc = X.astype(cdt)
    # H kept in the compute dtype (bf16): halves the HBM round trip between the two calls.
    H = gated_mha(folded["latent"], Xc, folded["project_forward"],
                  num_heads=num_heads, tile_q=tile_q, out_dtype=cdt)        # [B, M, dim_out]
    X_hat = gated_mha(Xc, H, folded["project_backward"],
                      num_heads=num_heads, tile_q=tile_q, out_dtype=jnp.float32)  # [B, N, dim_out]
    return X_hat


# ----------------------------- parameter init (torch-like) ----------------------------------
def _linear_init(key, out_f, in_f):
    k1, k2 = jax.random.split(key)
    s = 1.0 / math.sqrt(in_f)
    return (jax.random.uniform(k1, (out_f, in_f), jnp.float32, -s, s),
            jax.random.uniform(k2, (out_f,), jnp.float32, -s, s))


def init_mha_params(key, dim_Q, dim_K, dim_V):
    ks = jax.random.split(key, 7)
    fc_q_w, fc_q_b = _linear_init(ks[0], dim_V, dim_Q)
    fc_k_w, fc_k_b = _linear_init(ks[1], dim_V, dim_K)
    fc_v_w, fc_v_b = _linear_init(ks[2], dim_V, dim_K)
    fc_o_w, fc_o_b = _linear_init(ks[3], dim_V, dim_V)
    gate_w, gate_b = _linear_init(ks[4], dim_V, dim_Q)
    xb = math.sqrt(6.0 / (4 * dim_V))      # xavier_uniform_ for in_proj_weight [3E, E]
    in_proj_w = jax.random.uniform(ks[5], (3 * dim_V, dim_V), jnp.float32, -xb, xb)
    in_proj_b = jnp.zeros((3 * dim_V,), jnp.float32)
    out_proj_w, out_proj_b = _linear_init(ks[6], dim_V, dim_V)
    return dict(fc_q_w=fc_q_w, fc_q_b=fc_q_b, fc_k_w=fc_k_w, fc_k_b=fc_k_b,
                fc_v_w=fc_v_w, fc_v_b=fc_v_b, fc_o_w=fc_o_w, fc_o_b=fc_o_b,
                gate_w=gate_w, gate_b=gate_b,
                in_proj_w=in_proj_w, in_proj_b=in_proj_b,
                out_proj_w=out_proj_w, out_proj_b=out_proj_b)


def init_gab_params(key, dim_in, dim_out, num_heads, num_inds):
    k_lat, k_fwd, k_bwd = jax.random.split(key, 3)
    bound = math.sqrt(6.0 / (num_inds + dim_out))   # xavier_uniform_ on [1, M, dim_out]
    latent = jax.random.uniform(k_lat, (1, num_inds, dim_out), jnp.float32, -bound, bound)
    return dict(latent=latent,
                project_forward=init_mha_params(k_fwd, dim_out, dim_in, dim_out),
                project_backward=init_mha_params(k_bwd, dim_in, dim_out, dim_out))


if __name__ == "__main__":
    # Small demo shapes; dim_out = 128 keeps the kernel output lane-dense (unmasked stores).
    B, N = 2, 16
    dim_in, dim_out, num_heads, num_inds = 64, 128, 4, 16

    key = jax.random.PRNGKey(0)
    kx, kp = jax.random.split(key)
    X = jax.random.normal(kx, (B, N, dim_in), jnp.float32)
    params = init_gab_params(kp, dim_in, dim_out, num_heads, num_inds)
    folded = fold_gab_params(params)        # weight folding done ONCE, outside the forward path

    X_hat = gab_forward(X, folded, num_heads=num_heads)
    jax.block_until_ready(X_hat)

    assert X_hat.shape == (B, N, dim_out)
    assert bool(jnp.all(jnp.isfinite(X_hat)))
    print("KERNEL_OK")
</pallas_src>

<mosaic_0001>
module attributes {stable_mosaic.version = 11 : i64} {
  func.func @gated_mha_kernel(%arg0: i32, %arg1: i32, %arg2: memref<1x16x128xbf16, #tpu.memory_space<vmem>>, %arg3: memref<1x16x64xbf16, #tpu.memory_space<vmem>>, %arg4: memref<128x256xbf16, #tpu.memory_space<vmem>>, %arg5: memref<1x256xf32, #tpu.memory_space<vmem>>, %arg6: memref<128x128xbf16, #tpu.memory_space<vmem>>, %arg7: memref<1x128xf32, #tpu.memory_space<vmem>>, %arg8: memref<64x256xbf16, #tpu.memory_space<vmem>>, %arg9: memref<1x256xf32, #tpu.memory_space<vmem>>, %arg10: memref<128x128xbf16, #tpu.memory_space<vmem>>, %arg11: memref<1x128xf32, #tpu.memory_space<vmem>>, %arg12: memref<128x128xbf16, #tpu.memory_space<vmem>>, %arg13: memref<1x128xf32, #tpu.memory_space<vmem>>, %arg14: memref<1x16x128xbf16, #tpu.memory_space<vmem>>) attributes {dimension_semantics = [#tpu.dimension_semantics<parallel>, #tpu.dimension_semantics<parallel>], iteration_bounds = array<i64: 2, 1>, scalar_prefetch = 0 : i64, scratch_operands = 0 : i64, tpu.core_type = #tpu.core_type<tc>, window_params = [{transform_indices = @transform_0, window_bounds = array<i64: 1, 16, 128>}, {transform_indices = @transform_1, window_bounds = array<i64: 1, 16, 64>}, {pipeline_mode = #tpu.pipeline_mode<synchronous>, transform_indices = @transform_2, window_bounds = array<i64: 128, 256>}, {pipeline_mode = #tpu.pipeline_mode<synchronous>, transform_indices = @transform_3, window_bounds = array<i64: 1, 256>}, {pipeline_mode = #tpu.pipeline_mode<synchronous>, transform_indices = @transform_4, window_bounds = array<i64: 128, 128>}, {pipeline_mode = #tpu.pipeline_mode<synchronous>, transform_indices = @transform_5, window_bounds = array<i64: 1, 128>}, {pipeline_mode = #tpu.pipeline_mode<synchronous>, transform_indices = @transform_6, window_bounds = array<i64: 64, 256>}, {pipeline_mode = #tpu.pipeline_mode<synchronous>, transform_indices = @transform_7, window_bounds = array<i64: 1, 256>}, {pipeline_mode = #tpu.pipeline_mode<synchronous>, transform_indices = @transform_8, window_bounds = array<i64: 128, 128>}, {pipeline_mode = #tpu.pipeline_mode<synchronous>, transform_indices = @transform_9, window_bounds = array<i64: 1, 128>}, {pipeline_mode = #tpu.pipeline_mode<synchronous>, transform_indices = @transform_10, window_bounds = array<i64: 128, 128>}, {pipeline_mode = #tpu.pipeline_mode<synchronous>, transform_indices = @transform_11, window_bounds = array<i64: 1, 128>}, {transform_indices = @transform_12, window_bounds = array<i64: 1, 16, 128>}]} {
    %c0 = arith.constant 0 : index
    %c0_0 = arith.constant 0 : index
    %c0_1 = arith.constant 0 : index
    %0 = vector.load %arg2[%c0, %c0_0, %c0_1] : memref<1x16x128xbf16, #tpu.memory_space<vmem>>, vector<1x16x128xbf16>
    %1 = vector.shape_cast %0 : vector<1x16x128xbf16> to vector<16x128xbf16>
    %c0_2 = arith.constant 0 : index
    %c0_3 = arith.constant 0 : index
    %c0_4 = arith.constant 0 : index
    %2 = vector.load %arg3[%c0_2, %c0_3, %c0_4] : memref<1x16x64xbf16, #tpu.memory_space<vmem>>, vector<1x16x64xbf16>
    %3 = vector.shape_cast %2 : vector<1x16x64xbf16> to vector<16x64xbf16>
    %c0_5 = arith.constant 0 : index
    %c0_6 = arith.constant 0 : index
    %4 = vector.load %arg4[%c0_5, %c0_6] : memref<128x256xbf16, #tpu.memory_space<vmem>>, vector<128x256xbf16>
    %cst = arith.constant dense<0.000000e+00> : vector<16x256xf32>
    %5 = tpu.matmul %1, %4, %cst {dimension_numbers = #tpu.dot_dimension_numbers<[1], [0], [0], [1], [0, 0, 1, 1], [], []>} : vector<16x128xbf16>, vector<128x256xbf16>, vector<16x256xf32> -> vector<16x256xf32>
    %c0_7 = arith.constant 0 : index
    %c0_8 = arith.constant 0 : index
    %6 = vector.load %arg5[%c0_7, %c0_8] : memref<1x256xf32, #tpu.memory_space<vmem>>, vector<1x256xf32>
    %7 = vector.broadcast %6 : vector<1x256xf32> to vector<16x256xf32>
    %8 = arith.addf %5, %7 : vector<16x256xf32>
    %9 = vector.extract_strided_slice %8 {offsets = [0, 0], sizes = [16, 128], strides = [1, 1]} : vector<16x256xf32> to vector<16x128xf32>
    %10 = vector.extract_strided_slice %8 {offsets = [0, 128], sizes = [16, 128], strides = [1, 1]} : vector<16x256xf32> to vector<16x128xf32>
    %11 = arith.negf %10 : vector<16x128xf32>
    %12 = math.exp %11 : vector<16x128xf32>
    %cst_9 = arith.constant 1.000000e+00 : f32
    %13 = vector.broadcast %cst_9 : f32 to vector<16x128xf32>
    %14 = arith.addf %13, %12 : vector<16x128xf32>
    %15 = arith.divf %13, %14 : vector<16x128xf32>
    %16 = arith.mulf %10, %15 : vector<16x128xf32>
    %17 = arith.truncf %9 : vector<16x128xf32> to vector<16x128xbf16>
    %c0_10 = arith.constant 0 : index
    %c0_11 = arith.constant 0 : index
    %18 = vector.load %arg6[%c0_10, %c0_11] : memref<128x128xbf16, #tpu.memory_space<vmem>>, vector<128x128xbf16>
    %cst_12 = arith.constant dense<0.000000e+00> : vector<16x128xf32>
    %19 = tpu.matmul %17, %18, %cst_12 {dimension_numbers = #tpu.dot_dimension_numbers<[1], [0], [0], [1], [0, 0, 1, 1], [], []>} : vector<16x128xbf16>, vector<128x128xbf16>, vector<16x128xf32> -> vector<16x128xf32>
    %c0_13 = arith.constant 0 : index
    %c0_14 = arith.constant 0 : index
    %20 = vector.load %arg7[%c0_13, %c0_14] : memref<1x128xf32, #tpu.memory_space<vmem>>, vector<1x128xf32>
    %21 = vector.broadcast %20 : vector<1x128xf32> to vector<16x128xf32>
    %22 = arith.addf %19, %21 : vector<16x128xf32>
    %c0_15 = arith.constant 0 : index
    %c0_16 = arith.constant 0 : index
    %23 = vector.load %arg8[%c0_15, %c0_16] : memref<64x256xbf16, #tpu.memory_space<vmem>>, vector<64x256xbf16>
    %cst_17 = arith.constant dense<0.000000e+00> : vector<16x256xf32>
    %24 = tpu.matmul %3, %23, %cst_17 {dimension_numbers = #tpu.dot_dimension_numbers<[1], [0], [0], [1], [0, 0, 1, 1], [], []>} : vector<16x64xbf16>, vector<64x256xbf16>, vector<16x256xf32> -> vector<16x256xf32>
    %c0_18 = arith.constant 0 : index
    %c0_19 = arith.constant 0 : index
    %25 = vector.load %arg9[%c0_18, %c0_19] : memref<1x256xf32, #tpu.memory_space<vmem>>, vector<1x256xf32>
    %26 = vector.broadcast %25 : vector<1x256xf32> to vector<16x256xf32>
    %27 = arith.addf %24, %26 : vector<16x256xf32>
    %28 = vector.extract_strided_slice %27 {offsets = [0, 0], sizes = [16, 128], strides = [1, 1]} : vector<16x256xf32> to vector<16x128xf32>
    %29 = vector.extract_strided_slice %27 {offsets = [0, 128], sizes = [16, 128], strides = [1, 1]} : vector<16x256xf32> to vector<16x128xf32>
    %cst_20 = arith.constant 0.176776692 : f32
    %30 = vector.broadcast %cst_20 : f32 to vector<16x128xf32>
    %31 = arith.mulf %22, %30 : vector<16x128xf32>
    %32 = vector.shape_cast %31 : vector<16x128xf32> to vector<16x4x32xf32>
    %33 = arith.truncf %32 : vector<16x4x32xf32> to vector<16x4x32xbf16>
    %34 = vector.shape_cast %28 : vector<16x128xf32> to vector<16x4x32xf32>
    %35 = arith.truncf %34 : vector<16x4x32xf32> to vector<16x4x32xbf16>
    %36 = vector.shape_cast %29 : vector<16x128xf32> to vector<16x4x32xf32>
    %37 = arith.truncf %36 : vector<16x4x32xf32> to vector<16x4x32xbf16>
    "tpu.trace_start"() <{level = 10 : i32, message = "qhd,khd->hqk"}> : () -> ()
    %cst_21 = arith.constant dense<0.000000e+00> : vector<4x16x16xf32>
    %38 = tpu.matmul %33, %35, %cst_21 {dimension_numbers = #tpu.dot_dimension_numbers<[2], [2], [0], [0], [0, 1, 0, 0, 1, 0], [1], [1]>} : vector<16x4x32xbf16>, vector<16x4x32xbf16>, vector<4x16x16xf32> -> vector<4x16x16xf32>
    "tpu.trace_stop"() : () -> ()
    %cst_22 = arith.constant dense<0xFF800000> : vector<4x16xf32>
    %39 = vector.multi_reduction <maximumf>, %38, %cst_22 [2] : vector<4x16x16xf32> to vector<4x16xf32>
    %40 = vector.shape_cast %39 : vector<4x16xf32> to vector<4x16x1xf32>
    %41 = vector.broadcast %40 : vector<4x16x1xf32> to vector<4x16x16xf32>
    %42 = arith.subf %38, %41 : vector<4x16x16xf32>
    %43 = math.exp %42 : vector<4x16x16xf32>
    %cst_23 = arith.constant dense<0.000000e+00> : vector<4x16xf32>
    %44 = vector.multi_reduction <add>, %43, %cst_23 [2] : vector<4x16x16xf32> to vector<4x16xf32>
    %45 = vector.shape_cast %44 : vector<4x16xf32> to vector<4x16x1xf32>
    %46 = arith.truncf %43 : vector<4x16x16xf32> to vector<4x16x16xbf16>
    "tpu.trace_start"() <{level = 10 : i32, message = "hqk,khd->hqd"}> : () -> ()
    %cst_24 = arith.constant dense<0.000000e+00> : vector<4x16x32xf32>
    %47 = tpu.matmul %46, %37, %cst_24 {dimension_numbers = #tpu.dot_dimension_numbers<[2], [0], [1], [2], [0, 0, 0, 1, 1, 2], [0], [1]>} : vector<4x16x16xbf16>, vector<16x4x32xbf16>, vector<4x16x32xf32> -> vector<4x16x32xf32>
    "tpu.trace_stop"() : () -> ()
    %48 = tpu.reciprocal %45 {approx = true} : vector<4x16x1xf32> -> vector<4x16x1xf32>
    %49 = vector.broadcast %48 : vector<4x16x1xf32> to vector<4x16x32xf32>
    %50 = arith.mulf %47, %49 : vector<4x16x32xf32>
    %51 = tpu.transpose %50, [1, 0, 2] : vector<4x16x32xf32> -> vector<16x4x32xf32>
    %52 = vector.shape_cast %51 : vector<16x4x32xf32> to vector<16x128xf32>
    %53 = arith.truncf %52 : vector<16x128xf32> to vector<16x128xbf16>
    %c0_25 = arith.constant 0 : index
    %c0_26 = arith.constant 0 : index
    %54 = vector.load %arg10[%c0_25, %c0_26] : memref<128x128xbf16, #tpu.memory_space<vmem>>, vector<128x128xbf16>
    %cst_27 = arith.constant dense<0.000000e+00> : vector<16x128xf32>
    %55 = tpu.matmul %53, %54, %cst_27 {dimension_numbers = #tpu.dot_dimension_numbers<[1], [0], [0], [1], [0, 0, 1, 1], [], []>} : vector<16x128xbf16>, vector<128x128xbf16>, vector<16x128xf32> -> vector<16x128xf32>
    %c0_28 = arith.constant 0 : index
    %c0_29 = arith.constant 0 : index
    %56 = vector.load %arg11[%c0_28, %c0_29] : memref<1x128xf32, #tpu.memory_space<vmem>>, vector<1x128xf32>
    %57 = vector.broadcast %56 : vector<1x128xf32> to vector<16x128xf32>
    %58 = arith.addf %55, %57 : vector<16x128xf32>
    %59 = arith.addf %9, %58 : vector<16x128xf32>
    %60 = arith.truncf %59 : vector<16x128xf32> to vector<16x128xbf16>
    %c0_30 = arith.constant 0 : index
    %c0_31 = arith.constant 0 : index
    %61 = vector.load %arg12[%c0_30, %c0_31] : memref<128x128xbf16, #tpu.memory_space<vmem>>, vector<128x128xbf16>
    %cst_32 = arith.constant dense<0.000000e+00> : vector<16x128xf32>
    %62 = tpu.matmul %60, %61, %cst_32 {dimension_numbers = #tpu.dot_dimension_numbers<[1], [0], [0], [1], [0, 0, 1, 1], [], []>} : vector<16x128xbf16>, vector<128x128xbf16>, vector<16x128xf32> -> vector<16x128xf32>
    %c0_33 = arith.constant 0 : index
    %c0_34 = arith.constant 0 : index
    %63 = vector.load %arg13[%c0_33, %c0_34] : memref<1x128xf32, #tpu.memory_space<vmem>>, vector<1x128xf32>
    %64 = vector.broadcast %63 : vector<1x128xf32> to vector<16x128xf32>
    %65 = arith.addf %62, %64 : vector<16x128xf32>
    %cst_35 = arith.constant 0.000000e+00 : f32
    %66 = vector.broadcast %cst_35 : f32 to vector<16x128xf32>
    %67 = arith.maximumf %65, %66 : vector<16x128xf32>
    %68 = arith.addf %59, %67 : vector<16x128xf32>
    %69 = arith.mulf %68, %16 : vector<16x128xf32>
    %70 = arith.truncf %69 : vector<16x128xf32> to vector<16x128xbf16>
    %c0_36 = arith.constant 0 : index
    %c0_37 = arith.constant 0 : index
    %c0_38 = arith.constant 0 : index
    %71 = vector.load %arg14[%c0_36, %c0_37, %c0_38] : memref<1x16x128xbf16, #tpu.memory_space<vmem>>, vector<1x16x128xbf16>
    %72 = vector.shape_cast %71 : vector<1x16x128xbf16> to vector<16x128xbf16>
    %73 = vector.shape_cast %70 : vector<16x128xbf16> to vector<1x16x128xbf16>
    tpu.vector_store %arg14[%c0_36, %c0_37, %c0_38], %73 {strides = array<i32>} : memref<1x16x128xbf16, #tpu.memory_space<vmem>>, vector<1x16x128xbf16>,
    return
  }
  func.func @transform_0(%arg0: i32, %arg1: i32) -> (i32, i32, i32) {
    %c0_i32 = arith.constant 0 : i32
    %c0_i32_0 = arith.constant 0 : i32
    %c0_i32_1 = arith.constant 0 : i32
    return %c0_i32, %arg1, %c0_i32_0 : i32, i32, i32
  }
  func.func @transform_1(%arg0: i32, %arg1: i32) -> (i32, i32, i32) {
    %c0_i32 = arith.constant 0 : i32
    %c0_i32_0 = arith.constant 0 : i32
    %c0_i32_1 = arith.constant 0 : i32
    return %arg0, %c0_i32, %c0_i32_0 : i32, i32, i32
  }
  func.func @transform_2(%arg0: i32, %arg1: i32) -> (i32, i32) {
    %c0_i32 = arith.constant 0 : i32
    %c0_i32_0 = arith.constant 0 : i32
    %c0_i32_1 = arith.constant 0 : i32
    return %c0_i32, %c0_i32_0 : i32, i32
  }
  func.func @transform_3(%arg0: i32, %arg1: i32) -> (i32, i32) {
    %c0_i32 = arith.constant 0 : i32
    %c0_i32_0 = arith.constant 0 : i32
    %c0_i32_1 = arith.constant 0 : i32
    return %c0_i32, %c0_i32_0 : i32, i32
  }
  func.func @transform_4(%arg0: i32, %arg1: i32) -> (i32, i32) {
    %c0_i32 = arith.constant 0 : i32
    %c0_i32_0 = arith.constant 0 : i32
    %c0_i32_1 = arith.constant 0 : i32
    return %c0_i32, %c0_i32_0 : i32, i32
  }
  func.func @transform_5(%arg0: i32, %arg1: i32) -> (i32, i32) {
    %c0_i32 = arith.constant 0 : i32
    %c0_i32_0 = arith.constant 0 : i32
    %c0_i32_1 = arith.constant 0 : i32
    return %c0_i32, %c0_i32_0 : i32, i32
  }
  func.func @transform_6(%arg0: i32, %arg1: i32) -> (i32, i32) {
    %c0_i32 = arith.constant 0 : i32
    %c0_i32_0 = arith.constant 0 : i32
    %c0_i32_1 = arith.constant 0 : i32
    return %c0_i32, %c0_i32_0 : i32, i32
  }
  func.func @transform_7(%arg0: i32, %arg1: i32) -> (i32, i32) {
    %c0_i32 = arith.constant 0 : i32
    %c0_i32_0 = arith.constant 0 : i32
    %c0_i32_1 = arith.constant 0 : i32
    return %c0_i32, %c0_i32_0 : i32, i32
  }
  func.func @transform_8(%arg0: i32, %arg1: i32) -> (i32, i32) {
    %c0_i32 = arith.constant 0 : i32
    %c0_i32_0 = arith.constant 0 : i32
    %c0_i32_1 = arith.constant 0 : i32
    return %c0_i32, %c0_i32_0 : i32, i32
  }
  func.func @transform_9(%arg0: i32, %arg1: i32) -> (i32, i32) {
    %c0_i32 = arith.constant 0 : i32
    %c0_i32_0 = arith.constant 0 : i32
    %c0_i32_1 = arith.constant 0 : i32
    return %c0_i32, %c0_i32_0 : i32, i32
  }
  func.func @transform_10(%arg0: i32, %arg1: i32) -> (i32, i32) {
    %c0_i32 = arith.constant 0 : i32
    %c0_i32_0 = arith.constant 0 : i32
    %c0_i32_1 = arith.constant 0 : i32
    return %c0_i32, %c0_i32_0 : i32, i32
  }
  func.func @transform_11(%arg0: i32, %arg1: i32) -> (i32, i32) {
    %c0_i32 = arith.constant 0 : i32
    %c0_i32_0 = arith.constant 0 : i32
    %c0_i32_1 = arith.constant 0 : i32
    return %c0_i32, %c0_i32_0 : i32, i32
  }
  func.func @transform_12(%arg0: i32, %arg1: i32) -> (i32, i32, i32) {
    %c0_i32 = arith.constant 0 : i32
    %c0_i32_0 = arith.constant 0 : i32
    return %arg0, %arg1, %c0_i32 : i32, i32, i32
  }
}

module attributes {stable_mosaic.version = 11 : i64} {
  func.func @gated_mha_kernel(%arg0: i32, %arg1: i32, %arg2: memref<1x16x128xbf16, #tpu.memory_space<vmem>>, %arg3: memref<1x16x64xbf16, #tpu.memory_space<vmem>>, %arg4: memref<128x256xbf16, #tpu.memory_space<vmem>>, %arg5: memref<1x256xf32, #tpu.memory_space<vmem>>, %arg6: memref<128x128xbf16, #tpu.memory_space<vmem>>, %arg7: memref<1x128xf32, #tpu.memory_space<vmem>>, %arg8: memref<64x256xbf16, #tpu.memory_space<vmem>>, %arg9: memref<1x256xf32, #tpu.memory_space<vmem>>, %arg10: memref<128x128xbf16, #tpu.memory_space<vmem>>, %arg11: memref<1x128xf32, #tpu.memory_space<vmem>>, %arg12: memref<128x128xbf16, #tpu.memory_space<vmem>>, %arg13: memref<1x128xf32, #tpu.memory_space<vmem>>, %arg14: memref<1x16x128xbf16, #tpu.memory_space<vmem>>) attributes {dimension_semantics = [#tpu.dimension_semantics<parallel>, #tpu.dimension_semantics<parallel>], iteration_bounds = array<i64: 2, 1>, scalar_prefetch = 0 : i64, scratch_operands = 0 : i64, tpu.core_type = #tpu.core_type<tc>, window_params = [{transform_indices = @transform_0, window_bounds = array<i64: 1, 16, 128>}, {transform_indices = @transform_1, window_bounds = array<i64: 1, 16, 64>}, {pipeline_mode = #tpu.pipeline_mode<synchronous>, transform_indices = @transform_2, window_bounds = array<i64: 128, 256>}, {pipeline_mode = #tpu.pipeline_mode<synchronous>, transform_indices = @transform_3, window_bounds = array<i64: 1, 256>}, {pipeline_mode = #tpu.pipeline_mode<synchronous>, transform_indices = @transform_4, window_bounds = array<i64: 128, 128>}, {pipeline_mode = #tpu.pipeline_mode<synchronous>, transform_indices = @transform_5, window_bounds = array<i64: 1, 128>}, {pipeline_mode = #tpu.pipeline_mode<synchronous>, transform_indices = @transform_6, window_bounds = array<i64: 64, 256>}, {pipeline_mode = #tpu.pipeline_mode<synchronous>, transform_indices = @transform_7, window_bounds = array<i64: 1, 256>}, {pipeline_mode = #tpu.pipeline_mode<synchronous>, transform_indices = @transform_8, window_bounds = array<i64: 128, 128>}, {pipeline_mode = #tpu.pipeline_mode<synchronous>, transform_indices = @transform_9, window_bounds = array<i64: 1, 128>}, {pipeline_mode = #tpu.pipeline_mode<synchronous>, transform_indices = @transform_10, window_bounds = array<i64: 128, 128>}, {pipeline_mode = #tpu.pipeline_mode<synchronous>, transform_indices = @transform_11, window_bounds = array<i64: 1, 128>}, {transform_indices = @transform_12, window_bounds = array<i64: 1, 16, 128>}]} {
    %c0 = arith.constant 0 : index
    %c0_0 = arith.constant 0 : index
    %c0_1 = arith.constant 0 : index
    %0 = vector.load %arg2[%c0, %c0_0, %c0_1] : memref<1x16x128xbf16, #tpu.memory_space<vmem>>, vector<1x16x128xbf16>
    %1 = vector.shape_cast %0 : vector<1x16x128xbf16> to vector<16x128xbf16>
    %c0_2 = arith.constant 0 : index
    %c0_3 = arith.constant 0 : index
    %c0_4 = arith.constant 0 : index
    %2 = vector.load %arg3[%c0_2, %c0_3, %c0_4] : memref<1x16x64xbf16, #tpu.memory_space<vmem>>, vector<1x16x64xbf16>
    %3 = vector.shape_cast %2 : vector<1x16x64xbf16> to vector<16x64xbf16>
    %c0_5 = arith.constant 0 : index
    %c0_6 = arith.constant 0 : index
    %4 = vector.load %arg4[%c0_5, %c0_6] : memref<128x256xbf16, #tpu.memory_space<vmem>>, vector<128x256xbf16>
    %cst = arith.constant dense<0.000000e+00> : vector<16x256xf32>
    %5 = tpu.matmul %1, %4, %cst {dimension_numbers = #tpu.dot_dimension_numbers<[1], [0], [0], [1], [0, 0, 1, 1], [], []>} : vector<16x128xbf16>, vector<128x256xbf16>, vector<16x256xf32> -> vector<16x256xf32>
    %c0_7 = arith.constant 0 : index
    %c0_8 = arith.constant 0 : index
    %6 = vector.load %arg5[%c0_7, %c0_8] : memref<1x256xf32, #tpu.memory_space<vmem>>, vector<1x256xf32>
    %7 = vector.broadcast %6 : vector<1x256xf32> to vector<16x256xf32>
    %8 = arith.addf %5, %7 : vector<16x256xf32>
    %9 = vector.extract_strided_slice %8 {offsets = [0, 0], sizes = [16, 128], strides = [1, 1]} : vector<16x256xf32> to vector<16x128xf32>
    %10 = vector.extract_strided_slice %8 {offsets = [0, 128], sizes = [16, 128], strides = [1, 1]} : vector<16x256xf32> to vector<16x128xf32>
    %11 = arith.negf %10 : vector<16x128xf32>
    %12 = math.exp %11 : vector<16x128xf32>
    %cst_9 = arith.constant 1.000000e+00 : f32
    %13 = vector.broadcast %cst_9 : f32 to vector<16x128xf32>
    %14 = arith.addf %13, %12 : vector<16x128xf32>
    %15 = arith.divf %13, %14 : vector<16x128xf32>
    %16 = arith.mulf %10, %15 : vector<16x128xf32>
    %17 = arith.truncf %9 : vector<16x128xf32> to vector<16x128xbf16>
    %c0_10 = arith.constant 0 : index
    %c0_11 = arith.constant 0 : index
    %18 = vector.load %arg6[%c0_10, %c0_11] : memref<128x128xbf16, #tpu.memory_space<vmem>>, vector<128x128xbf16>
    %cst_12 = arith.constant dense<0.000000e+00> : vector<16x128xf32>
    %19 = tpu.matmul %17, %18, %cst_12 {dimension_numbers = #tpu.dot_dimension_numbers<[1], [0], [0], [1], [0, 0, 1, 1], [], []>} : vector<16x128xbf16>, vector<128x128xbf16>, vector<16x128xf32> -> vector<16x128xf32>
    %c0_13 = arith.constant 0 : index
    %c0_14 = arith.constant 0 : index
    %20 = vector.load %arg7[%c0_13, %c0_14] : memref<1x128xf32, #tpu.memory_space<vmem>>, vector<1x128xf32>
    %21 = vector.broadcast %20 : vector<1x128xf32> to vector<16x128xf32>
    %22 = arith.addf %19, %21 : vector<16x128xf32>
    %c0_15 = arith.constant 0 : index
    %c0_16 = arith.constant 0 : index
    %23 = vector.load %arg8[%c0_15, %c0_16] : memref<64x256xbf16, #tpu.memory_space<vmem>>, vector<64x256xbf16>
    %cst_17 = arith.constant dense<0.000000e+00> : vector<16x256xf32>
    %24 = tpu.matmul %3, %23, %cst_17 {dimension_numbers = #tpu.dot_dimension_numbers<[1], [0], [0], [1], [0, 0, 1, 1], [], []>} : vector<16x64xbf16>, vector<64x256xbf16>, vector<16x256xf32> -> vector<16x256xf32>
    %c0_18 = arith.constant 0 : index
    %c0_19 = arith.constant 0 : index
    %25 = vector.load %arg9[%c0_18, %c0_19] : memref<1x256xf32, #tpu.memory_space<vmem>>, vector<1x256xf32>
    %26 = vector.broadcast %25 : vector<1x256xf32> to vector<16x256xf32>
    %27 = arith.addf %24, %26 : vector<16x256xf32>
    %28 = vector.extract_strided_slice %27 {offsets = [0, 0], sizes = [16, 128], strides = [1, 1]} : vector<16x256xf32> to vector<16x128xf32>
    %29 = vector.extract_strided_slice %27 {offsets = [0, 128], sizes = [16, 128], strides = [1, 1]} : vector<16x256xf32> to vector<16x128xf32>
    %cst_20 = arith.constant 0.176776692 : f32
    %30 = vector.broadcast %cst_20 : f32 to vector<16x128xf32>
    %31 = arith.mulf %22, %30 : vector<16x128xf32>
    %32 = vector.shape_cast %31 : vector<16x128xf32> to vector<16x4x32xf32>
    %33 = arith.truncf %32 : vector<16x4x32xf32> to vector<16x4x32xbf16>
    %34 = vector.shape_cast %28 : vector<16x128xf32> to vector<16x4x32xf32>
    %35 = arith.truncf %34 : vector<16x4x32xf32> to vector<16x4x32xbf16>
    %36 = vector.shape_cast %29 : vector<16x128xf32> to vector<16x4x32xf32>
    %37 = arith.truncf %36 : vector<16x4x32xf32> to vector<16x4x32xbf16>
    "tpu.trace_start"() <{level = 10 : i32, message = "qhd,khd->hqk"}> : () -> ()
    %cst_21 = arith.constant dense<0.000000e+00> : vector<4x16x16xf32>
    %38 = tpu.matmul %33, %35, %cst_21 {dimension_numbers = #tpu.dot_dimension_numbers<[2], [2], [0], [0], [0, 1, 0, 0, 1, 0], [1], [1]>} : vector<16x4x32xbf16>, vector<16x4x32xbf16>, vector<4x16x16xf32> -> vector<4x16x16xf32>
    "tpu.trace_stop"() : () -> ()
    %cst_22 = arith.constant dense<0xFF800000> : vector<4x16xf32>
    %39 = vector.multi_reduction <maximumf>, %38, %cst_22 [2] : vector<4x16x16xf32> to vector<4x16xf32>
    %40 = vector.shape_cast %39 : vector<4x16xf32> to vector<4x16x1xf32>
    %41 = vector.broadcast %40 : vector<4x16x1xf32> to vector<4x16x16xf32>
    %42 = arith.subf %38, %41 : vector<4x16x16xf32>
    %43 = math.exp %42 : vector<4x16x16xf32>
    %cst_23 = arith.constant dense<0.000000e+00> : vector<4x16xf32>
    %44 = vector.multi_reduction <add>, %43, %cst_23 [2] : vector<4x16x16xf32> to vector<4x16xf32>
    %45 = vector.shape_cast %44 : vector<4x16xf32> to vector<4x16x1xf32>
    %46 = arith.truncf %43 : vector<4x16x16xf32> to vector<4x16x16xbf16>
    "tpu.trace_start"() <{level = 10 : i32, message = "hqk,khd->hqd"}> : () -> ()
    %cst_24 = arith.constant dense<0.000000e+00> : vector<4x16x32xf32>
    %47 = tpu.matmul %46, %37, %cst_24 {dimension_numbers = #tpu.dot_dimension_numbers<[2], [0], [1], [2], [0, 0, 0, 1, 1, 2], [0], [1]>} : vector<4x16x16xbf16>, vector<16x4x32xbf16>, vector<4x16x32xf32> -> vector<4x16x32xf32>
    "tpu.trace_stop"() : () -> ()
    %48 = tpu.reciprocal %45 {approx = true} : vector<4x16x1xf32> -> vector<4x16x1xf32>
    %49 = vector.broadcast %48 : vector<4x16x1xf32> to vector<4x16x32xf32>
    %50 = arith.mulf %47, %49 : vector<4x16x32xf32>
    %51 = tpu.transpose %50, [1, 0, 2] : vector<4x16x32xf32> -> vector<16x4x32xf32>
    %52 = vector.shape_cast %51 : vector<16x4x32xf32> to vector<16x128xf32>
    %53 = arith.truncf %52 : vector<16x128xf32> to vector<16x128xbf16>
    %c0_25 = arith.constant 0 : index
    %c0_26 = arith.constant 0 : index
    %54 = vector.load %arg10[%c0_25, %c0_26] : memref<128x128xbf16, #tpu.memory_space<vmem>>, vector<128x128xbf16>
    %cst_27 = arith.constant dense<0.000000e+00> : vector<16x128xf32>
    %55 = tpu.matmul %53, %54, %cst_27 {dimension_numbers = #tpu.dot_dimension_numbers<[1], [0], [0], [1], [0, 0, 1, 1], [], []>} : vector<16x128xbf16>, vector<128x128xbf16>, vector<16x128xf32> -> vector<16x128xf32>
    %c0_28 = arith.constant 0 : index
    %c0_29 = arith.constant 0 : index
    %56 = vector.load %arg11[%c0_28, %c0_29] : memref<1x128xf32, #tpu.memory_space<vmem>>, vector<1x128xf32>
    %57 = vector.broadcast %56 : vector<1x128xf32> to vector<16x128xf32>
    %58 = arith.addf %55, %57 : vector<16x128xf32>
    %59 = arith.addf %9, %58 : vector<16x128xf32>
    %60 = arith.truncf %59 : vector<16x128xf32> to vector<16x128xbf16>
    %c0_30 = arith.constant 0 : index
    %c0_31 = arith.constant 0 : index
    %61 = vector.load %arg12[%c0_30, %c0_31] : memref<128x128xbf16, #tpu.memory_space<vmem>>, vector<128x128xbf16>
    %cst_32 = arith.constant dense<0.000000e+00> : vector<16x128xf32>
    %62 = tpu.matmul %60, %61, %cst_32 {dimension_numbers = #tpu.dot_dimension_numbers<[1], [0], [0], [1], [0, 0, 1, 1], [], []>} : vector<16x128xbf16>, vector<128x128xbf16>, vector<16x128xf32> -> vector<16x128xf32>
    %c0_33 = arith.constant 0 : index
    %c0_34 = arith.constant 0 : index
    %63 = vector.load %arg13[%c0_33, %c0_34] : memref<1x128xf32, #tpu.memory_space<vmem>>, vector<1x128xf32>
    %64 = vector.broadcast %63 : vector<1x128xf32> to vector<16x128xf32>
    %65 = arith.addf %62, %64 : vector<16x128xf32>
    %cst_35 = arith.constant 0.000000e+00 : f32
    %66 = vector.broadcast %cst_35 : f32 to vector<16x128xf32>
    %67 = arith.maximumf %65, %66 : vector<16x128xf32>
    %68 = arith.addf %59, %67 : vector<16x128xf32>
    %69 = arith.mulf %68, %16 : vector<16x128xf32>
    %70 = arith.truncf %69 : vector<16x128xf32> to vector<16x128xbf16>
    %c0_36 = arith.constant 0 : index
    %c0_37 = arith.constant 0 : index
    %c0_38 = arith.constant 0 : index
    %71 = vector.load %arg14[%c0_36, %c0_37, %c0_38] : memref<1x16x128xbf16, #tpu.memory_space<vmem>>, vector<1x16x128xbf16>
    %72 = vector.shape_cast %71 : vector<1x16x128xbf16> to vector<16x128xbf16>
    %73 = vector.shape_cast %70 : vector<16x128xbf16> to vector<1x16x128xbf16>
    tpu.vector_store %arg14[%c0_36, %c0_37, %c0_38], %73 {strides = array<i32>} : memref<1x16x128xbf16, #tpu.memory_space<vmem>>, vector<1x16x128xbf16>,
    return
  }
  func.func @transform_0(%arg0: i32, %arg1: i32) -> (i32, i32, i32) {
    %c0_i32 = arith.constant 0 : i32
    %c0_i32_0 = arith.constant 0 : i32
    %c0_i32_1 = arith.constant 0 : i32
    return %c0_i32, %arg1, %c0_i32_0 : i32, i32, i32
  }
  func.func @transform_1(%arg0: i32, %arg1: i32) -> (i32, i32, i32) {
    %c0_i32 = arith.constant 0 : i32
    %c0_i32_0 = arith.constant 0 : i32
    %c0_i32_1 = arith.constant 0 : i32
    return %arg0, %c0_i32, %c0_i32_0 : i32, i32, i32
  }
  func.func @transform_2(%arg0: i32, %arg1: i32) -> (i32, i32) {
    %c0_i32 = arith.constant 0 : i32
    %c0_i32_0 = arith.constant 0 : i32
    %c0_i32_1 = arith.constant 0 : i32
    return %c0_i32, %c0_i32_0 : i32, i32
  }
  func.func @transform_3(%arg0: i32, %arg1: i32) -> (i32, i32) {
    %c0_i32 = arith.constant 0 : i32
    %c0_i32_0 = arith.constant 0 : i32
    %c0_i32_1 = arith.constant 0 : i32
    return %c0_i32, %c0_i32_0 : i32, i32
  }
  func.func @transform_4(%arg0: i32, %arg1: i32) -> (i32, i32) {
    %c0_i32 = arith.constant 0 : i32
    %c0_i32_0 = arith.constant 0 : i32
    %c0_i32_1 = arith.constant 0 : i32
    return %c0_i32, %c0_i32_0 : i32, i32
  }
  func.func @transform_5(%arg0: i32, %arg1: i32) -> (i32, i32) {
    %c0_i32 = arith.constant 0 : i32
    %c0_i32_0 = arith.constant 0 : i32
    %c0_i32_1 = arith.constant 0 : i32
    return %c0_i32, %c0_i32_0 : i32, i32
  }
  func.func @transform_6(%arg0: i32, %arg1: i32) -> (i32, i32) {
    %c0_i32 = arith.constant 0 : i32
    %c0_i32_0 = arith.constant 0 : i32
    %c0_i32_1 = arith.constant 0 : i32
    return %c0_i32, %c0_i32_0 : i32, i32
  }
  func.func @transform_7(%arg0: i32, %arg1: i32) -> (i32, i32) {
    %c0_i32 = arith.constant 0 : i32
    %c0_i32_0 = arith.constant 0 : i32
    %c0_i32_1 = arith.constant 0 : i32
    return %c0_i32, %c0_i32_0 : i32, i32
  }
  func.func @transform_8(%arg0: i32, %arg1: i32) -> (i32, i32) {
    %c0_i32 = arith.constant 0 : i32
    %c0_i32_0 = arith.constant 0 : i32
    %c0_i32_1 = arith.constant 0 : i32
    return %c0_i32, %c0_i32_0 : i32, i32
  }
  func.func @transform_9(%arg0: i32, %arg1: i32) -> (i32, i32) {
    %c0_i32 = arith.constant 0 : i32
    %c0_i32_0 = arith.constant 0 : i32
    %c0_i32_1 = arith.constant 0 : i32
    return %c0_i32, %c0_i32_0 : i32, i32
  }
  func.func @transform_10(%arg0: i32, %arg1: i32) -> (i32, i32) {
    %c0_i32 = arith.constant 0 : i32
    %c0_i32_0 = arith.constant 0 : i32
    %c0_i32_1 = arith.constant 0 : i32
    return %c0_i32, %c0_i32_0 : i32, i32
  }
  func.func @transform_11(%arg0: i32, %arg1: i32) -> (i32, i32) {
    %c0_i32 = arith.constant 0 : i32
    %c0_i32_0 = arith.constant 0 : i32
    %c0_i32_1 = arith.constant 0 : i32
    return %c0_i32, %c0_i32_0 : i32, i32
  }
  func.func @transform_12(%arg0: i32, %arg1: i32) -> (i32, i32, i32) {
    %c0_i32 = arith.constant 0 : i32
    %c0_i32_0 = arith.constant 0 : i32
    return %arg0, %arg1, %c0_i32 : i32, i32, i32
  }
}

</mosaic_0001>

<llo_original>
// kernel: tpu_custom_call.1
$region0: #{tpu_custom_call.1}
  #allocation0 [shape = 'u32[]', space=smem, size = 0x4, offset = 0x4, fixed_abs, tag = 'smem constant byte address 0x4 - core index']
  #allocation1 [shape = 'u32[144,128]{1,0:T(1,128)}', space=vmem, size = 0x12000, scoped, tag = 'internal scratch']
  %s0 = inlined_call_operand.hbm [shape: bf16[1,16,128], index: 0, kind: input, shape index: {}]
  %s1 = inlined_call_operand.hbm [shape: bf16[2,16,64], index: 1, kind: input, shape index: {}]
  %s2 = inlined_call_operand.hbm [shape: bf16[128,256], index: 2, kind: input, shape index: {}]
  %s3 = inlined_call_operand.vmem [shape: f32[1,256], index: 3, kind: input, shape index: {}]
  %s4 = inlined_call_operand.hbm [shape: bf16[128,128], index: 4, kind: input, shape index: {}]
  %s5 = inlined_call_operand.vmem [shape: f32[1,128], index: 5, kind: input, shape index: {}]
  %s6 = inlined_call_operand.hbm [shape: bf16[64,256], index: 6, kind: input, shape index: {}]
  %s7 = inlined_call_operand.vmem [shape: f32[1,256], index: 7, kind: input, shape index: {}]
  %s8 = inlined_call_operand.hbm [shape: bf16[128,128], index: 8, kind: input, shape index: {}]
  %s9 = inlined_call_operand.vmem [shape: f32[1,128], index: 9, kind: input, shape index: {}]
  %s10 = inlined_call_operand.hbm [shape: bf16[128,128], index: 10, kind: input, shape index: {}]
  %s11 = inlined_call_operand.vmem [shape: f32[1,128], index: 11, kind: input, shape index: {}]
  %s12 = inlined_call_operand.hbm [shape: bf16[2,16,128], index: 12, kind: output, shape index: {}]
  %s13 = sld [smem:[#allocation0]]
  $region109: #{tpu_custom_call.1} parent=0
    _
  %s15 = ssub.s32 1, %s13
  %s16 = scalar_select 0, %s15, %s13
  $region1: #{tpu_custom_call.1} parent=0
    #allocation2 [shape = 'u8[4096]{0}', space=vmem, size = 0x1000, scoped, tag = 'input window, operand 0, single buffered']
    #allocation3 [shape = 's32[2]{0}', space=sflag, size = 0x8, scoped, tag = 'scoped memory for tpu_custom_call.1']
    #allocation4 [shape = 's32[2]{0}', space=sflag, size = 0x8, scoped, tag = 'scoped memory for tpu_custom_call.1']
    #allocation5 [shape = 'u8[8192]{0}', space=vmem, size = 0x2000, scoped, tag = 'input window, operand 1']
    #allocation6 [shape = 's32[2]{0}', space=sflag, size = 0x8, scoped, tag = 'scoped memory for tpu_custom_call.1']
    #allocation7 [shape = 'u8[65536]{0}', space=vmem, size = 0x10000, scoped, tag = 'input window, operand 2, single buffered']
    #allocation8 [shape = 'u8[32768]{0}', space=vmem, size = 0x8000, scoped, tag = 'input window, operand 4, single buffered']
    #allocation9 [shape = 's32[1]{0}', space=sflag, size = 0x4, scoped, tag = 'scoped memory for tpu_custom_call.1']
    #allocation10 [shape = 'u8[32768]{0}', space=vmem, size = 0x8000, scoped, tag = 'input window, operand 6, single buffered']
    #allocation11 [shape = 'u8[32768]{0}', space=vmem, size = 0x8000, scoped, tag = 'input window, operand 8, single buffered']
    #allocation12 [shape = 's32[1]{0}', space=sflag, size = 0x4, scoped, tag = 'scoped memory for tpu_custom_call.1']
    #allocation13 [shape = 'u8[32768]{0}', space=vmem, size = 0x8000, scoped, tag = 'input window, operand 10, single buffered']
    #allocation14 [shape = 'u8[8192]{0}', space=vmem, size = 0x2000, scoped, tag = 'output window, operand 0']
    %17 = vsyncpa [#allocation3], 0
    %18 = vsyncpa [#allocation6], 0
    %s19 = scalar_lea.sflag [#allocation6], 1
    %20 = vsyncpa %s19, 0
    %21 = vsyncpa [#allocation9], 0
    %22 = vsyncpa [#allocation12], 0
    %23 = vsyncpa [#allocation4], 0
    %s24 = scalar_lea.sflag [#allocation4], 1
    %25 = vsyncpa %s24, 0
    loop: start=0, step=1, limit=4
    $region2: #{tpu_custom_call.1} parent=1 // loop_pre_header
      _
    $region3: #{tpu_custom_call.1} parent=1 // loop_header
      %s27 = sphi 0, %s31
      %p28 = scmp.ge.s32.totalorder %s27, 4
      %s34 = sphi 0, %s46
      %s35 = sphi 0, %s42
      %s36 = sphi 0, %s34
      %s37 = sphi 0, %s35
      %s38 = sphi 0, %s36
      %s39 = sphi 0, %s37
      %s49 = sphi 0, %s51
      %s52 = sphi 0, %s49
      %s53 = sphi 0, %s52
      %s69 = sphi 0, %s53
      %s75 = sphi 0, %s77
      %s78 = sphi 0, %s75
      %s79 = sphi 0, %s78
      %s95 = sphi 0, %s79
      %s99 = sphi 0, %s99
      %s101 = sphi 0, %s99
      %s102 = sphi 0, %s101
      %s116 = sphi 0, %s102
      %s120 = sphi 0, %s120
      %s122 = sphi 0, %s120
      %s123 = sphi 0, %s122
      %s137 = sphi 0, %s123
      %s141 = sphi 0, %s141
      %s143 = sphi 0, %s141
      %s144 = sphi 0, %s143
      %s158 = sphi 0, %s144
      %s162 = sphi 0, %s162
      %s164 = sphi 0, %s162
      %s165 = sphi 0, %s164
      %s179 = sphi 0, %s165
      %s183 = sphi 0, %s183
      %s185 = sphi 0, %s183
      %s186 = sphi 0, %s185
      %s200 = sphi 0, %s186
      %s204 = sphi 0, %s204
      %s206 = sphi 0, %s204
      %s207 = sphi 0, %s206
      %s221 = sphi 0, %s207
      %s225 = sphi 0, %s225
      %s227 = sphi 0, %s225
      %s228 = sphi 0, %s227
      %s242 = sphi 0, %s228
      %s246 = sphi 0, %s246
      %s248 = sphi 0, %s246
      %s249 = sphi 0, %s248
      %s263 = sphi 0, %s249
      %s267 = sphi 0, %s267
      %s269 = sphi 0, %s267
      %s270 = sphi 0, %s269
      %s284 = sphi 0, %s270
      %s288 = sphi 0, %s288
      %s290 = sphi 0, %s288
      %s291 = sphi 0, %s290
      %s305 = sphi 0, %s291
      %s313 = sphi 0, %s315
      %s316 = sphi 0, %s313
      %s317 = sphi 0, %s316
      %s333 = sphi 0, %s317
    $region4: #{tpu_custom_call.1} parent=1 // loop_header_branch
      %30 = sbr.rel (%p28) target = $region8
    $region5: #{tpu_custom_call.1} parent=1 // loop_body
      %s32 = ssub.s32 %s27, 1
      %s33 = ssub.s32 %s27, 2
      %s40 = sadd.s32 1, %s35
      %p41 = scmp.ge.s32.totalorder %s40, 1
      %s42 = scalar_select %p41, 0, %s40
      %s43 = sadd.s32 1, %s34
      %s44 = scalar_select %p41, %s43, %s34
      %p45 = scmp.ge.s32.totalorder %s44, 2
      %s46 = scalar_select %p45, 0, %s44
      %s47 = ssub.s32 %s35, %s42
      %p48 = scmp.eq.s32.totalorder %s47, 0
      %s50 = sadd.s32 %s49, 1
      %s51 = scalar_select %p48, %s49, %s50
      %p54 = pneg %p48
      %p55 = scmp.eq.s32.totalorder %s27, 1
      %p56 = por %p54, %p55
      %p57 = scmp.ne.s32.totalorder %s49, %s52
      %p58 = scmp.eq.s32.totalorder %s27, 0
      %p59 = por %p57, %p58
      %p60 = scmp.ne.s32.totalorder %s49, %s52
      %p61 = scmp.eq.s32.totalorder %s32, 1
      %p62 = por %p60, %p61
      %p63 = scmp.ne.s32.totalorder %s52, %s53
      %p64 = scmp.eq.s32.totalorder %s32, 0
      %p65 = por %p63, %p64
      %p66 = scmp.ne.s32.totalorder %s52, %s53
      %p67 = scmp.eq.s32.totalorder %s33, 1
      %p68 = por %p66, %p67
      %p70 = scmp.ne.s32.totalorder %s53, %s69
      %p71 = scmp.eq.s32.totalorder %s33, 0
      %p72 = por %p70, %p71
      %s73 = ssub.s32 %s34, %s46
      %p74 = scmp.eq.s32.totalorder %s73, 0
      %s76 = sadd.s32 %s75, 1
      %s77 = scalar_select %p74, %s75, %s76
      %p80 = pneg %p74
      %p81 = scmp.eq.s32.totalorder %s27, 1
      %p82 = por %p80, %p81
      %p83 = scmp.ne.s32.totalorder %s75, %s78
      %p84 = scmp.eq.s32.totalorder %s27, 0
      %p85 = por %p83, %p84
      %p86 = scmp.ne.s32.totalorder %s75, %s78
      %p87 = scmp.eq.s32.totalorder %s32, 1
      %p88 = por %p86, %p87
      %p89 = scmp.ne.s32.totalorder %s78, %s79
      %p90 = scmp.eq.s32.totalorder %s32, 0
      %p91 = por %p89, %p90
      %p92 = scmp.ne.s32.totalorder %s78, %s79
      %p93 = scmp.eq.s32.totalorder %s33, 1
      %p94 = por %p92, %p93
      %p96 = scmp.ne.s32.totalorder %s79, %s95
      %p97 = scmp.eq.s32.totalorder %s33, 0
      %p98 = por %p96, %p97
      %s100 = sadd.s32 %s99, 1
      %p103 = scmp.eq.s32.totalorder %s27, 1
      %p104 = scmp.ne.s32.totalorder %s99, %s101
      %p105 = scmp.eq.s32.totalorder %s27, 0
      %p106 = por %p104, %p105
      %p107 = scmp.ne.s32.totalorder %s99, %s101
      %p108 = scmp.eq.s32.totalorder %s32, 1
      %p109 = por %p107, %p108
      %p110 = scmp.ne.s32.totalorder %s101, %s102
      %p111 = scmp.eq.s32.totalorder %s32, 0
      %p112 = por %p110, %p111
      %p113 = scmp.ne.s32.totalorder %s101, %s102
      %p114 = scmp.eq.s32.totalorder %s33, 1
      %p115 = por %p113, %p114
      %p117 = scmp.ne.s32.totalorder %s102, %s116
      %p118 = scmp.eq.s32.totalorder %s33, 0
      %p119 = por %p117, %p118
      %s121 = sadd.s32 %s120, 1
      %p124 = scmp.eq.s32.totalorder %s27, 1
      %p125 = scmp.ne.s32.totalorder %s120, %s122
      %p126 = scmp.eq.s32.totalorder %s27, 0
      %p127 = por %p125, %p126
      %p128 = scmp.ne.s32.totalorder %s120, %s122
      %p129 = scmp.eq.s32.totalorder %s32, 1
      %p130 = por %p128, %p129
      %p131 = scmp.ne.s32.totalorder %s122, %s123
      %p132 = scmp.eq.s32.totalorder %s32, 0
      %p133 = por %p131, %p132
      %p134 = scmp.ne.s32.totalorder %s122, %s123
      %p135 = scmp.eq.s32.totalorder %s33, 1
      %p136 = por %p134, %p135
      %p138 = scmp.ne.s32.totalorder %s123, %s137
      %p139 = scmp.eq.s32.totalorder %s33, 0
      %p140 = por %p138, %p139
      %s142 = sadd.s32 %s141, 1
      %p145 = scmp.eq.s32.totalorder %s27, 1
      %p146 = scmp.ne.s32.totalorder %s141, %s143
      %p147 = scmp.eq.s32.totalorder %s27, 0
      %p148 = por %p146, %p147
      %p149 = scmp.ne.s32.totalorder %s141, %s143
      %p150 = scmp.eq.s32.totalorder %s32, 1
      %p151 = por %p149, %p150
      %p152 = scmp.ne.s32.totalorder %s143, %s144
      %p153 = scmp.eq.s32.totalorder %s32, 0
      %p154 = por %p152, %p153
      %p155 = scmp.ne.s32.totalorder %s143, %s144
      %p156 = scmp.eq.s32.totalorder %s33, 1
      %p157 = por %p155, %p156
      %p159 = scmp.ne.s32.totalorder %s144, %s158
      %p160 = scmp.eq.s32.totalorder %s33, 0
      %p161 = por %p159, %p160
      %s163 = sadd.s32 %s162, 1
      %p166 = scmp.eq.s32.totalorder %s27, 1
      %p167 = scmp.ne.s32.totalorder %s162, %s164
      %p168 = scmp.eq.s32.totalorder %s27, 0
      %p169 = por %p167, %p168
      %p170 = scmp.ne.s32.totalorder %s162, %s164
      %p171 = scmp.eq.s32.totalorder %s32, 1
      %p172 = por %p170, %p171
      %p173 = scmp.ne.s32.totalorder %s164, %s165
      %p174 = scmp.eq.s32.totalorder %s32, 0
      %p175 = por %p173, %p174
      %p176 = scmp.ne.s32.totalorder %s164, %s165
      %p177 = scmp.eq.s32.totalorder %s33, 1
      %p178 = por %p176, %p177
      %p180 = scmp.ne.s32.totalorder %s165, %s179
      %p181 = scmp.eq.s32.totalorder %s33, 0
      %p182 = por %p180, %p181
      %s184 = sadd.s32 %s183, 1
      %p187 = scmp.eq.s32.totalorder %s27, 1
      %p188 = scmp.ne.s32.totalorder %s183, %s185
      %p189 = scmp.eq.s32.totalorder %s27, 0
      %p190 = por %p188, %p189
      %p191 = scmp.ne.s32.totalorder %s183, %s185
      %p192 = scmp.eq.s32.totalorder %s32, 1
      %p193 = por %p191, %p192
      %p194 = scmp.ne.s32.totalorder %s185, %s186
      %p195 = scmp.eq.s32.totalorder %s32, 0
      %p196 = por %p194, %p195
      %p197 = scmp.ne.s32.totalorder %s185, %s186
      %p198 = scmp.eq.s32.totalorder %s33, 1
      %p199 = por %p197, %p198
      %p201 = scmp.ne.s32.totalorder %s186, %s200
      %p202 = scmp.eq.s32.totalorder %s33, 0
      %p203 = por %p201, %p202
      %s205 = sadd.s32 %s204, 1
      %p208 = scmp.eq.s32.totalorder %s27, 1
      %p209 = scmp.ne.s32.totalorder %s204, %s206
      %p210 = scmp.eq.s32.totalorder %s27, 0
      %p211 = por %p209, %p210
      %p212 = scmp.ne.s32.totalorder %s204, %s206
      %p213 = scmp.eq.s32.totalorder %s32, 1
      %p214 = por %p212, %p213
      %p215 = scmp.ne.s32.totalorder %s206, %s207
      %p216 = scmp.eq.s32.totalorder %s32, 0
      %p217 = por %p215, %p216
      %p218 = scmp.ne.s32.totalorder %s206, %s207
      %p219 = scmp.eq.s32.totalorder %s33, 1
      %p220 = por %p218, %p219
      %p222 = scmp.ne.s32.totalorder %s207, %s221
      %p223 = scmp.eq.s32.totalorder %s33, 0
      %p224 = por %p222, %p223
      %s226 = sadd.s32 %s225, 1
      %p229 = scmp.eq.s32.totalorder %s27, 1
      %p230 = scmp.ne.s32.totalorder %s225, %s227
      %p231 = scmp.eq.s32.totalorder %s27, 0
      %p232 = por %p230, %p231
      %p233 = scmp.ne.s32.totalorder %s225, %s227
      %p234 = scmp.eq.s32.totalorder %s32, 1
      %p235 = por %p233, %p234
      %p236 = scmp.ne.s32.totalorder %s227, %s228
      %p237 = scmp.eq.s32.totalorder %s32, 0
      %p238 = por %p236, %p237
      %p239 = scmp.ne.s32.totalorder %s227, %s228
      %p240 = scmp.eq.s32.totalorder %s33, 1
      %p241 = por %p239, %p240
      %p243 = scmp.ne.s32.totalorder %s228, %s242
      %p244 = scmp.eq.s32.totalorder %s33, 0
      %p245 = por %p243, %p244
      %s247 = sadd.s32 %s246, 1
      %p250 = scmp.eq.s32.totalorder %s27, 1
      %p251 = scmp.ne.s32.totalorder %s246, %s248
      %p252 = scmp.eq.s32.totalorder %s27, 0
      %p253 = por %p251, %p252
      %p254 = scmp.ne.s32.totalorder %s246, %s248
      %p255 = scmp.eq.s32.totalorder %s32, 1
      %p256 = por %p254, %p255
      %p257 = scmp.ne.s32.totalorder %s248, %s249
      %p258 = scmp.eq.s32.totalorder %s32, 0
      %p259 = por %p257, %p258
      %p260 = scmp.ne.s32.totalorder %s248, %s249
      %p261 = scmp.eq.s32.totalorder %s33, 1
      %p262 = por %p260, %p261
      %p264 = scmp.ne.s32.totalorder %s249, %s263
      %p265 = scmp.eq.s32.totalorder %s33, 0
      %p266 = por %p264, %p265
      %s268 = sadd.s32 %s267, 1
      %p271 = scmp.eq.s32.totalorder %s27, 1
      %p272 = scmp.ne.s32.totalorder %s267, %s269
      %p273 = scmp.eq.s32.totalorder %s27, 0
      %p274 = por %p272, %p273
      %p275 = scmp.ne.s32.totalorder %s267, %s269
      %p276 = scmp.eq.s32.totalorder %s32, 1
      %p277 = por %p275, %p276
      %p278 = scmp.ne.s32.totalorder %s269, %s270
      %p279 = scmp.eq.s32.totalorder %s32, 0
      %p280 = por %p278, %p279
      %p281 = scmp.ne.s32.totalorder %s269, %s270
      %p282 = scmp.eq.s32.totalorder %s33, 1
      %p283 = por %p281, %p282
      %p285 = scmp.ne.s32.totalorder %s270, %s284
      %p286 = scmp.eq.s32.totalorder %s33, 0
      %p287 = por %p285, %p286
      %s289 = sadd.s32 %s288, 1
      %p292 = scmp.eq.s32.totalorder %s27, 1
      %p293 = scmp.ne.s32.totalorder %s288, %s290
      %p294 = scmp.eq.s32.totalorder %s27, 0
      %p295 = por %p293, %p294
      %p296 = scmp.ne.s32.totalorder %s288, %s290
      %p297 = scmp.eq.s32.totalorder %s32, 1
      %p298 = por %p296, %p297
      %p299 = scmp.ne.s32.totalorder %s290, %s291
      %p300 = scmp.eq.s32.totalorder %s32, 0
      %p301 = por %p299, %p300
      %p302 = scmp.ne.s32.totalorder %s290, %s291
      %p303 = scmp.eq.s32.totalorder %s33, 1
      %p304 = por %p302, %p303
      %p306 = scmp.ne.s32.totalorder %s291, %s305
      %p307 = scmp.eq.s32.totalorder %s33, 0
      %p308 = por %p306, %p307
      %s309 = ssub.s32 %s34, %s46
      %s310 = ssub.s32 %s35, %s42
      %s311 = sor.u32 %s309, %s310
      %p312 = scmp.eq.s32.totalorder %s311, 0
      %s314 = sadd.s32 %s313, 1
      %s315 = scalar_select %p312, %s313, %s314
      %p318 = pneg %p312
      %p319 = scmp.eq.s32.totalorder %s27, 1
      %p320 = por %p318, %p319
      %p321 = scmp.ne.s32.totalorder %s313, %s316
      %p322 = scmp.eq.s32.totalorder %s27, 0
      %p323 = por %p321, %p322
      %p324 = scmp.ne.s32.totalorder %s313, %s316
      %p325 = scmp.eq.s32.totalorder %s32, 1
      %p326 = por %p324, %p325
      %p327 = scmp.ne.s32.totalorder %s316, %s317
      %p328 = scmp.eq.s32.totalorder %s32, 0
      %p329 = por %p327, %p328
      %p330 = scmp.ne.s32.totalorder %s316, %s317
      %p331 = scmp.eq.s32.totalorder %s33, 1
      %p332 = por %p330, %p331
      %p334 = scmp.ne.s32.totalorder %s317, %s333
      %p335 = scmp.eq.s32.totalorder %s33, 0
      %p336 = por %p334, %p335
      %p337 = scmp.le.s32.totalorder 1, %s27
      %p338 = scmp.lt.s32.totalorder %s27, 3
      %p339 = pnand %p337, %p338
      %p340 = pneg %p339
      // Predicated region
      $region9: #{tpu_custom_call.1} parent=5 // pred_check
        _
      $region10: #{tpu_custom_call.1} parent=5 // pred_check_branch
        %342 = sbr.rel (%p339) target = $region12
      $region11: #{tpu_custom_call.1} parent=5 // pred_region
        %s343 = ssub.s32 %s27, 1
        // Predicated region
        $region13: #{tpu_custom_call.1} parent=11 // pred_check
          %p344 = pneg %p65
        $region14: #{tpu_custom_call.1} parent=11 // pred_check_branch
          %346 = sbr.rel (%p344) target = $region16
        $region15: #{tpu_custom_call.1} parent=11 // pred_region
          %s347 = smul.u32 2, %s37
          %s349 = ssub.s32 128, 128
          %350 = vsyncadd [#allocation3], %s349
          %s351 = smul.addr %s347, 64
          %s352 = scalar_lea.hbm %s0, %s351
          %s353 = sshll.u32 [#allocation2], 4
          %s354 = int_to_ptr.vmem [resolvable:$true] %s353
          %359 = dma.hbm_to_vmem [thread:$0]  %s352, 128, %s354, [#allocation3], 64, 64, 4
        $region16: #{tpu_custom_call.1} parent=11 // pred_fallthru
          _
        // Predicated region
        $region17: #{tpu_custom_call.1} parent=11 // pred_check
          %p360 = pneg %p112
        $region18: #{tpu_custom_call.1} parent=11 // pred_check_branch
          %362 = sbr.rel (%p360) target = $region20
        $region19: #{tpu_custom_call.1} parent=11 // pred_region
          %s364 = ssub.s32 2048, 2048
          %365 = vsyncadd [#allocation6], %s364
          %s366 = sshll.u32 [#allocation7], 4
          %s367 = int_to_ptr.vmem [resolvable:$true] %s366
          %372 = dma.hbm_to_vmem [thread:$0]  %s2, 2048, %s367, [#allocation6], 128, 128, 8
        $region20: #{tpu_custom_call.1} parent=11 // pred_fallthru
          _
        // Predicated region
        $region21: #{tpu_custom_call.1} parent=11 // pred_check
          %p373 = pneg %p133
        $region22: #{tpu_custom_call.1} parent=11 // pred_check_branch
          %375 = sbr.rel (%p373) target = $region24
        $region23: #{tpu_custom_call.1} parent=11 // pred_region
          _
        $region24: #{tpu_custom_call.1} parent=11 // pred_fallthru
          _
        // Predicated region
        $region25: #{tpu_custom_call.1} parent=11 // pred_check
          %p376 = pneg %p154
        $region26: #{tpu_custom_call.1} parent=11 // pred_check_branch
          %378 = sbr.rel (%p376) target = $region28
        $region27: #{tpu_custom_call.1} parent=11 // pred_region
          %s380 = ssub.s32 1024, 1024
          %381 = vsyncadd [#allocation9], %s380
          %s382 = sshll.u32 [#allocation8], 4
          %s383 = int_to_ptr.vmem [resolvable:$true] %s382
          %388 = dma.hbm_to_vmem [thread:$0]  %s4, 1024, %s383, [#allocation9], 64, 64, 4
        $region28: #{tpu_custom_call.1} parent=11 // pred_fallthru
          _
        // Predicated region
        $region29: #{tpu_custom_call.1} parent=11 // pred_check
          %p389 = pneg %p175
        $region30: #{tpu_custom_call.1} parent=11 // pred_check_branch
          %391 = sbr.rel (%p389) target = $region32
        $region31: #{tpu_custom_call.1} parent=11 // pred_region
          _
        $region32: #{tpu_custom_call.1} parent=11 // pred_fallthru
          _
        // Predicated region
        $region33: #{tpu_custom_call.1} parent=11 // pred_check
          %p392 = pneg %p196
        $region34: #{tpu_custom_call.1} parent=11 // pred_check_branch
          %394 = sbr.rel (%p392) target = $region36
        $region35: #{tpu_custom_call.1} parent=11 // pred_region
          %s396 = ssub.s32 1024, 1024
          %397 = vsyncadd [#allocation9], %s396
          %s398 = sshll.u32 [#allocation10], 4
          %s399 = int_to_ptr.vmem [resolvable:$true] %s398
          %404 = dma.hbm_to_vmem [thread:$0]  %s6, 1024, %s399, [#allocation9], 128, 128, 8
        $region36: #{tpu_custom_call.1} parent=11 // pred_fallthru
          _
        // Predicated region
        $region37: #{tpu_custom_call.1} parent=11 // pred_check
          %p405 = pneg %p217
        $region38: #{tpu_custom_call.1} parent=11 // pred_check_branch
          %407 = sbr.rel (%p405) target = $region40
        $region39: #{tpu_custom_call.1} parent=11 // pred_region
          _
        $region40: #{tpu_custom_call.1} parent=11 // pred_fallthru
          _
        // Predicated region
        $region41: #{tpu_custom_call.1} parent=11 // pred_check
          %p408 = pneg %p238
        $region42: #{tpu_custom_call.1} parent=11 // pred_check_branch
          %410 = sbr.rel (%p408) target = $region44
        $region43: #{tpu_custom_call.1} parent=11 // pred_region
          %s412 = ssub.s32 1024, 1024
          %413 = vsyncadd [#allocation12], %s412
          %s414 = sshll.u32 [#allocation11], 4
          %s415 = int_to_ptr.vmem [resolvable:$true] %s414
          %420 = dma.hbm_to_vmem [thread:$0]  %s8, 1024, %s415, [#allocation12], 64, 64, 4
        $region44: #{tpu_custom_call.1} parent=11 // pred_fallthru
          _
        // Predicated region
        $region45: #{tpu_custom_call.1} parent=11 // pred_check
          %p421 = pneg %p259
        $region46: #{tpu_custom_call.1} parent=11 // pred_check_branch
          %423 = sbr.rel (%p421) target = $region48
        $region47: #{tpu_custom_call.1} parent=11 // pred_region
          _
        $region48: #{tpu_custom_call.1} parent=11 // pred_fallthru
          _
        // Predicated region
        $region49: #{tpu_custom_call.1} parent=11 // pred_check
          %p424 = pneg %p280
        $region50: #{tpu_custom_call.1} parent=11 // pred_check_branch
          %426 = sbr.rel (%p424) target = $region52
        $region51: #{tpu_custom_call.1} parent=11 // pred_region
          %s428 = ssub.s32 1024, 1024
          %429 = vsyncadd [#allocation12], %s428
          %s430 = sshll.u32 [#allocation13], 4
          %s431 = int_to_ptr.vmem [resolvable:$true] %s430
          %436 = dma.hbm_to_vmem [thread:$0]  %s10, 1024, %s431, [#allocation12], 64, 64, 4
        $region52: #{tpu_custom_call.1} parent=11 // pred_fallthru
          _
        // Predicated region
        $region53: #{tpu_custom_call.1} parent=11 // pred_check
          %p437 = pneg %p301
        $region54: #{tpu_custom_call.1} parent=11 // pred_check_branch
          %439 = sbr.rel (%p437) target = $region56
        $region55: #{tpu_custom_call.1} parent=11 // pred_region
          _
        $region56: #{tpu_custom_call.1} parent=11 // pred_fallthru
          _
      $region12: #{tpu_custom_call.1} parent=5 // pred_fallthru
        _
      %p440 = scmp.lt.s32.totalorder %s27, 2
      // Predicated region
      $region57: #{tpu_custom_call.1} parent=5 // pred_check
        %p441 = pneg %p440
      $region58: #{tpu_custom_call.1} parent=5 // pred_check_branch
        %443 = sbr.rel (%p441) target = $region60
      $region59: #{tpu_custom_call.1} parent=5 // pred_region
        // Predicated region
        $region61: #{tpu_custom_call.1} parent=59 // pred_check
          %p444 = pneg %p85
        $region62: #{tpu_custom_call.1} parent=59 // pred_check_branch
          %446 = sbr.rel (%p444) target = $region64
        $region63: #{tpu_custom_call.1} parent=59 // pred_region
          %s447 = sand.u32 %s27, 1
          %s448 = scalar_lea.sflag [#allocation6], %s447
          %s449 = sand.u32 %s75, 1
          %s450 = smul.addr %s449, 8
          %s451 = scalar_lea.vmem [#allocation5], %s450
          %s453 = ssub.s32 128, 128
          %454 = vsyncadd %s448, %s453
          %s455 = smul.addr %s34, 2
          %s456 = smul.addr %s455, 64
          %s457 = scalar_lea.hbm %s1, %s456
          %s458 = sshll.u32 %s451, 4
          %s459 = int_to_ptr.vmem [resolvable:$true] %s458
          %464 = dma.hbm_to_vmem [thread:$0]  %s457, 128, %s459, %s448, 64, 64, 4
        $region64: #{tpu_custom_call.1} parent=59 // pred_fallthru
          _
      $region60: #{tpu_custom_call.1} parent=5 // pred_fallthru
        _
      %p465 = scmp.le.s32.totalorder 1, %s27
      %p466 = scmp.lt.s32.totalorder %s27, 3
      %p467 = pnand %p465, %p466
      %p468 = pneg %p467
      // Predicated region
      $region65: #{tpu_custom_call.1} parent=5 // pred_check
        _
      $region66: #{tpu_custom_call.1} parent=5 // pred_check_branch
        %470 = sbr.rel (%p467) target = $region68
      $region67: #{tpu_custom_call.1} parent=5 // pred_region
        %s471 = ssub.s32 %s27, 1
        // Predicated region
        $region69: #{tpu_custom_call.1} parent=67 // pred_check
          %p472 = pneg %p65
        $region70: #{tpu_custom_call.1} parent=67 // pred_check_branch
          %474 = sbr.rel (%p472) target = $region72
        $region71: #{tpu_custom_call.1} parent=67 // pred_region
          %475 = dma.done [#allocation3], 128
        $region72: #{tpu_custom_call.1} parent=67 // pred_fallthru
          _
        %s476 = sand.u32 %s32, 1
        %s477 = scalar_lea.sflag [#allocation6], %s476
        %s478 = sand.u32 %s78, 1
        %s479 = smul.addr %s478, 8
        %s480 = scalar_lea.vmem [#allocation5], %s479
        // Predicated region
        $region73: #{tpu_custom_call.1} parent=67 // pred_check
          %p481 = pneg %p91
        $region74: #{tpu_custom_call.1} parent=67 // pred_check_branch
          %483 = sbr.rel (%p481) target = $region76
        $region75: #{tpu_custom_call.1} parent=67 // pred_region
          %484 = dma.done %s477, 128
        $region76: #{tpu_custom_call.1} parent=67 // pred_fallthru
          _
        // Predicated region
        $region77: #{tpu_custom_call.1} parent=67 // pred_check
          %p485 = pneg %p112
        $region78: #{tpu_custom_call.1} parent=67 // pred_check_branch
          %487 = sbr.rel (%p485) target = $region80
        $region79: #{tpu_custom_call.1} parent=67 // pred_region
          %488 = dma.done [#allocation6], 2048
        $region80: #{tpu_custom_call.1} parent=67 // pred_fallthru
          _
        // Predicated region
        $region81: #{tpu_custom_call.1} parent=67 // pred_check
          %p489 = pneg %p154
        $region82: #{tpu_custom_call.1} parent=67 // pred_check_branch
          %491 = sbr.rel (%p489) target = $region84
        $region83: #{tpu_custom_call.1} parent=67 // pred_region
          %492 = dma.done [#allocation9], 1024
        $region84: #{tpu_custom_call.1} parent=67 // pred_fallthru
          _
        // Predicated region
        $region85: #{tpu_custom_call.1} parent=67 // pred_check
          %p493 = pneg %p196
        $region86: #{tpu_custom_call.1} parent=67 // pred_check_branch
          %495 = sbr.rel (%p493) target = $region88
        $region87: #{tpu_custom_call.1} parent=67 // pred_region
          %496 = dma.done [#allocation9], 1024
        $region88: #{tpu_custom_call.1} parent=67 // pred_fallthru
          _
        // Predicated region
        $region89: #{tpu_custom_call.1} parent=67 // pred_check
          %p497 = pneg %p238
        $region90: #{tpu_custom_call.1} parent=67 // pred_check_branch
          %499 = sbr.rel (%p497) target = $region92
        $region91: #{tpu_custom_call.1} parent=67 // pred_region
          %500 = dma.done [#allocation12], 1024
        $region92: #{tpu_custom_call.1} parent=67 // pred_fallthru
          _
        // Predicated region
        $region93: #{tpu_custom_call.1} parent=67 // pred_check
          %p501 = pneg %p280
        $region94: #{tpu_custom_call.1} parent=67 // pred_check_branch
          %503 = sbr.rel (%p501) target = $region96
        $region95: #{tpu_custom_call.1} parent=67 // pred_region
          %504 = dma.done [#allocation12], 1024
        $region96: #{tpu_custom_call.1} parent=67 // pred_fallthru
          _
        %p505 = pneg %p65
        %p506 = pneg %p62
        %s507 = sand.u32 %s32, 1
        %s508 = scalar_lea.sflag [#allocation6], %s507
        %s509 = sand.u32 %s78, 1
        %s510 = smul.addr %s509, 8
        %s511 = scalar_lea.vmem [#allocation5], %s510
        %p512 = pneg %p91
        %p513 = pneg %p88
        %p514 = pneg %p112
        %p515 = pneg %p109
        %p516 = pneg %p133
        %p517 = pneg %p130
        %p518 = pneg %p154
        %p519 = pneg %p151
        %p520 = pneg %p175
        %p521 = pneg %p172
        %p522 = pneg %p196
        %p523 = pneg %p193
        %p524 = pneg %p217
        %p525 = pneg %p214
        %p526 = pneg %p238
        %p527 = pneg %p235
        %p528 = pneg %p259
        %p529 = pneg %p256
        %p530 = pneg %p280
        %p531 = pneg %p277
        %p532 = pneg %p301
        %p533 = pneg %p298
        %p534 = pneg %p329
        %p535 = pneg %p326
        %s536 = sand.u32 %s316, 1
        %s537 = scalar_lea.sflag [#allocation4], %s536
        %s538 = sand.u32 %s316, 1
        %s539 = smul.addr %s538, 8
        %s540 = scalar_lea.vmem [#allocation14], %s539
        %s541 = smul.u32 2, %s37
        %s542 = smul.u32 2, %s37
        %v544 = vld [vmem:[#allocation2] sm:$0xf]
        %v545 = vld [vmem:[#allocation2 + $0x4] sm:$0xf]
        %v546 = vld [vmem:[%s480] sm:$0xf]
        %v547 = vld [vmem:[%s480 + $0x4] sm:$0xf]
        %v548 = vld [vmem:[#allocation7] sm:$0xff]
        %v549 = vld [vmem:[#allocation7 + $0x8] sm:$0xff]
        %v550 = vld [vmem:[#allocation7 + $0x10] sm:$0xff]
        %v551 = vld [vmem:[#allocation7 + $0x18] sm:$0xff]
        %v552 = vld [vmem:[#allocation7 + $0x20] sm:$0xff]
        %v553 = vld [vmem:[#allocation7 + $0x28] sm:$0xff]
        %v554 = vld [vmem:[#allocation7 + $0x30] sm:$0xff]
        %v555 = vld [vmem:[#allocation7 + $0x38] sm:$0xff]
        %v556 = vld [vmem:[#allocation7 + $0x40] sm:$0xff]
        %v557 = vld [vmem:[#allocation7 + $0x48] sm:$0xff]
        %v558 = vld [vmem:[#allocation7 + $0x50] sm:$0xff]
        %v559 = vld [vmem:[#allocation7 + $0x58] sm:$0xff]
        %v560 = vld [vmem:[#allocation7 + $0x60] sm:$0xff]
        %v561 = vld [vmem:[#allocation7 + $0x68] sm:$0xff]
        %v562 = vld [vmem:[#allocation7 + $0x70] sm:$0xff]
        %v563 = vld [vmem:[#allocation7 + $0x78] sm:$0xff]
        %v564 = vld [vmem:[%s3] sm:$0x3]
        %v566 = vlaneseq
        %v567 = vshrl.u32 %v566, 7
        %v568 = vsub.s32 0, %v567
        %v569 = vrot.slane %v564, %v568
        %v570 = vlaneseq
        %v571 = vshrl.u32 %v570, 7
        %v572 = vsub.s32 1, %v571
        %v573 = vrot.slane %v564, %v572
        %v578 = vunpack.c.l.b16 %v544
        %v579 = vunpack.c.l.b16 %v545
        %v580 = vpack.c.b16 %v579, %v578
        %v598 = vunpack.c.l.b16 %v548
        %v599 = vunpack.c.h.b16 %v548
        %v600 = vunpack.c.l.b16 %v549
        %v601 = vunpack.c.h.b16 %v549
        %v602 = vunpack.c.l.b16 %v550
        %v603 = vunpack.c.h.b16 %v550
        %v604 = vunpack.c.l.b16 %v551
        %v605 = vunpack.c.h.b16 %v551
        %v606 = vunpack.c.l.b16 %v552
        %v607 = vunpack.c.h.b16 %v552
        %v608 = vunpack.c.l.b16 %v553
        %v609 = vunpack.c.h.b16 %v553
        %v610 = vunpack.c.l.b16 %v554
        %v611 = vunpack.c.h.b16 %v554
        %v612 = vunpack.c.l.b16 %v555
        %v613 = vunpack.c.h.b16 %v555
        %v614 = vunpack.c.l.b16 %v556
        %v615 = vunpack.c.h.b16 %v556
        %v616 = vunpack.c.l.b16 %v557
        %v617 = vunpack.c.h.b16 %v557
        %v618 = vunpack.c.l.b16 %v558
        %v619 = vunpack.c.h.b16 %v558
        %v620 = vunpack.c.l.b16 %v559
        %v621 = vunpack.c.h.b16 %v559
        %v622 = vunpack.c.l.b16 %v560
        %v623 = vunpack.c.h.b16 %v560
        %v624 = vunpack.c.l.b16 %v561
        %v625 = vunpack.c.h.b16 %v561
        %v626 = vunpack.c.l.b16 %v562
        %v627 = vunpack.c.h.b16 %v562
        %v628 = vunpack.c.l.b16 %v563
        %v629 = vunpack.c.h.b16 %v563
        %v630 = vpack.c.b16 %v600, %v598
        %v631 = vpack.c.b16 %v601, %v599
        %v632 = vpack.c.b16 %v604, %v602
        %v633 = vpack.c.b16 %v605, %v603
        %v634 = vpack.c.b16 %v608, %v606
        %v635 = vpack.c.b16 %v609, %v607
        %v636 = vpack.c.b16 %v612, %v610
        %v637 = vpack.c.b16 %v613, %v611
        %v638 = vpack.c.b16 %v616, %v614
        %v639 = vpack.c.b16 %v617, %v615
        %v640 = vpack.c.b16 %v620, %v618
        %v641 = vpack.c.b16 %v621, %v619
        %v642 = vpack.c.b16 %v624, %v622
        %v643 = vpack.c.b16 %v625, %v623
        %v644 = vpack.c.b16 %v628, %v626
        %v645 = vpack.c.b16 %v629, %v627
        %662 = vmatprep.subr.bf16.mxu0 %v645
        %663 = vmatpush1.bf16.msra.mxu0 %v644
        %664 = vmatprep.subr.bf16.mxu0 %v643
        %665 = vmatpush1.bf16.msra.mxu0 %v642
        %666 = vmatprep.subr.bf16.mxu0 %v641
        %667 = vmatpush1.bf16.msra.mxu0 %v640
        %668 = vmatprep.subr.bf16.mxu0 %v639
        %669 = vmatpush1.bf16.msra.mxu0 %v638
        %670 = vmatprep.subr.bf16.mxu0 %v637
        %671 = vmatpush1.bf16.msra.mxu0 %v636
        %672 = vmatprep.subr.bf16.mxu0 %v635
        %673 = vmatpush1.bf16.msra.mxu0 %v634
        %674 = vmatprep.subr.bf16.mxu0 %v633
        %675 = vmatpush1.bf16.msra.mxu0 %v632
        %676 = vmatprep.subr.bf16.mxu0 %v631
        %677 = vmatpush1.bf16.msra.mxu0 %v630
        %678 = vmatprep.subr.bf16.mxu0 0
        %679 = vmatpush2.bf16.msra.mxu0 0
        %680 = vmatprep.subr.bf16.mxu0 0
        %681 = vmatpush2.bf16.msra.mxu0 0
        %682 = vmatprep.subr.bf16.mxu0 0
        %683 = vmatpush2.bf16.msra.mxu0 0
        %684 = vmatprep.subr.bf16.mxu0 0
        %685 = vmatpush2.bf16.msra.mxu0 0
        %686 = vmatprep.subr.bf16.mxu0 0
        %687 = vmatpush2.bf16.msra.mxu0 0
        %688 = vmatprep.subr.bf16.mxu0 0
        %689 = vmatpush2.bf16.msra.mxu0 0
        %690 = vmatprep.subr.bf16.mxu0 0
        %691 = vmatpush2.bf16.msra.mxu0 0
        %692 = vmatprep.subr.bf16.mxu0 0
        %693 = vmatpush2.bf16.msra.mxu0 0
        %694 = vmatprep.mubr.bf16.mxu0 0
        %695 = vmatmul.mubr.bf16.gmra.mxu0 %v580
        %v696 = vpop.f32.mrf.mxu0
        %v697 = vadd.f32 %v569, %v696
        %v698 = vpop.f32.mrf.mxu0
        %v699 = vadd.f32 %v573, %v698
        %v700 = vpop.f32.mrf.mxu0
        %v701 = vadd.f32 %v569, %v700
        %v702 = vpop.f32.mrf.mxu0
        %v703 = vadd.f32 %v573, %v702
        %704 = vdwg.mxu0
        %v705 = vxor.u32 %v699, 2147483648
        %v706 = vxor.u32 %v703, 2147483648
        %v707 = vmul.f32 %v705, 1.442695
        %v708 = vpow.pop %v707
        %v709 = vmul.f32 %v706, 1.442695
        %v710 = vpow.pop %v709
        %v711 = vadd.f32 %v708, 1.0
        %v712 = vadd.f32 %v710, 1.0
        %v713 = vrcp.pop %v711
        %v714 = vmul.f32 1.0, %v713
        %v715 = vrcp.pop %v712
        %v716 = vmul.f32 1.0, %v715
        %v717 = vmul.f32 %v699, %v714
        %v718 = vmul.f32 %v703, %v716
        %v719 = vpack.c.bf16 %v701, %v697
        %v720 = vld [vmem:[#allocation8] sm:$0xf]
        %v721 = vld [vmem:[#allocation8 + $0x4] sm:$0xf]
        %v722 = vld [vmem:[#allocation8 + $0x8] sm:$0xf]
        %v723 = vld [vmem:[#allocation8 + $0xc] sm:$0xf]
        %v724 = vld [vmem:[#allocation8 + $0x10] sm:$0xf]
        %v725 = vld [vmem:[#allocation8 + $0x14] sm:$0xf]
        %v726 = vld [vmem:[#allocation8 + $0x18] sm:$0xf]
        %v727 = vld [vmem:[#allocation8 + $0x1c] sm:$0xf]
        %v728 = vld [vmem:[#allocation8 + $0x20] sm:$0xf]
        %v729 = vld [vmem:[#allocation8 + $0x24] sm:$0xf]
        %v730 = vld [vmem:[#allocation8 + $0x28] sm:$0xf]
        %v731 = vld [vmem:[#allocation8 + $0x2c] sm:$0xf]
        %v732 = vld [vmem:[#allocation8 + $0x30] sm:$0xf]
        %v733 = vld [vmem:[#allocation8 + $0x34] sm:$0xf]
        %v734 = vld [vmem:[#allocation8 + $0x38] sm:$0xf]
        %v735 = vld [vmem:[#allocation8 + $0x3c] sm:$0xf]
        %v736 = vld [vmem:[%s5] sm:$0x1]
        %v738 = vlaneseq
        %v739 = vshrl.u32 %v738, 7
        %v740 = vsub.s32 0, %v739
        %v741 = vrot.slane %v736, %v740
        %v759 = vunpack.c.l.b16 %v720
        %v760 = vunpack.c.l.b16 %v721
        %v761 = vunpack.c.l.b16 %v722
        %v762 = vunpack.c.l.b16 %v723
        %v763 = vunpack.c.l.b16 %v724
        %v764 = vunpack.c.l.b16 %v725
        %v765 = vunpack.c.l.b16 %v726
        %v766 = vunpack.c.l.b16 %v727
        %v767 = vunpack.c.l.b16 %v728
        %v768 = vunpack.c.l.b16 %v729
        %v769 = vunpack.c.l.b16 %v730
        %v770 = vunpack.c.l.b16 %v731
        %v771 = vunpack.c.l.b16 %v732
        %v772 = vunpack.c.l.b16 %v733
        %v773 = vunpack.c.l.b16 %v734
        %v774 = vunpack.c.l.b16 %v735
        %v775 = vpack.c.b16 %v760, %v759
        %v776 = vpack.c.b16 %v762, %v761
        %v777 = vpack.c.b16 %v764, %v763
        %v778 = vpack.c.b16 %v766, %v765
        %v779 = vpack.c.b16 %v768, %v767
        %v780 = vpack.c.b16 %v770, %v769
        %v781 = vpack.c.b16 %v772, %v771
        %v782 = vpack.c.b16 %v774, %v773
        %791 = vmatprep.subr.bf16.mxu0 0
        %792 = vmatpush1.bf16.msra.mxu0 %v782
        %793 = vmatprep.subr.bf16.mxu0 0
        %794 = vmatpush1.bf16.msra.mxu0 %v781
        %795 = vmatprep.subr.bf16.mxu0 0
        %796 = vmatpush1.bf16.msra.mxu0 %v780
        %797 = vmatprep.subr.bf16.mxu0 0
        %798 = vmatpush1.bf16.msra.mxu0 %v779
        %799 = vmatprep.subr.bf16.mxu0 0
        %800 = vmatpush1.bf16.msra.mxu0 %v778
        %801 = vmatprep.subr.bf16.mxu0 0
        %802 = vmatpush1.bf16.msra.mxu0 %v777
        %803 = vmatprep.subr.bf16.mxu0 0
        %804 = vmatpush1.bf16.msra.mxu0 %v776
        %805 = vmatprep.subr.bf16.mxu0 0
        %806 = vmatpush1.bf16.msra.mxu0 %v775
        %807 = vmatprep.subr.bf16.mxu0 0
        %808 = vmatpush2.bf16.msra.mxu0 0
        %809 = vmatprep.subr.bf16.mxu0 0
        %810 = vmatpush2.bf16.msra.mxu0 0
        %811 = vmatprep.subr.bf16.mxu0 0
        %812 = vmatpush2.bf16.msra.mxu0 0
        %813 = vmatprep.subr.bf16.mxu0 0
        %814 = vmatpush2.bf16.msra.mxu0 0
        %815 = vmatprep.subr.bf16.mxu0 0
        %816 = vmatpush2.bf16.msra.mxu0 0
        %817 = vmatprep.subr.bf16.mxu0 0
        %818 = vmatpush2.bf16.msra.mxu0 0
        %819 = vmatprep.subr.bf16.mxu0 0
        %820 = vmatpush2.bf16.msra.mxu0 0
        %821 = vmatprep.subr.bf16.mxu0 0
        %822 = vmatpush2.bf16.msra.mxu0 0
        %823 = vmatprep.mubr.bf16.mxu0 0
        %824 = vmatmul.mubr.bf16.gmra.mxu0 %v719
        %v825 = vpop.f32.mrf.mxu0
        %v826 = vadd.f32 %v741, %v825
        %v827 = vpop.f32.mrf.mxu0
        %v828 = vpop.f32.mrf.mxu0
        %v829 = vadd.f32 %v741, %v828
        %v830 = vpop.f32.mrf.mxu0
        %831 = vdwg.mxu0
        %v832 = vld [vmem:[#allocation10] sm:$0xff]
        %v833 = vld [vmem:[#allocation10 + $0x8] sm:$0xff]
        %v834 = vld [vmem:[#allocation10 + $0x10] sm:$0xff]
        %v835 = vld [vmem:[#allocation10 + $0x18] sm:$0xff]
        %v836 = vld [vmem:[#allocation10 + $0x20] sm:$0xff]
        %v837 = vld [vmem:[#allocation10 + $0x28] sm:$0xff]
        %v838 = vld [vmem:[#allocation10 + $0x30] sm:$0xff]
        %v839 = vld [vmem:[#allocation10 + $0x38] sm:$0xff]
        %v840 = vld [vmem:[%s7] sm:$0x3]
        %v842 = vlaneseq
        %v843 = vshrl.u32 %v842, 7
        %v844 = vsub.s32 0, %v843
        %v845 = vrot.slane %v840, %v844
        %v846 = vlaneseq
        %v847 = vshrl.u32 %v846, 7
        %v848 = vsub.s32 1, %v847
        %v849 = vrot.slane %v840, %v848
        %v854 = vunpack.c.l.b16 %v546
        %v855 = vunpack.c.l.b16 %v547
        %v856 = vpack.c.b16 %v855, %v854
        %v865 = vunpack.c.l.b16 %v832
        %v866 = vunpack.c.h.b16 %v832
        %v867 = vunpack.c.l.b16 %v833
        %v868 = vunpack.c.h.b16 %v833
        %v869 = vunpack.c.l.b16 %v834
        %v870 = vunpack.c.h.b16 %v834
        %v871 = vunpack.c.l.b16 %v835
        %v872 = vunpack.c.h.b16 %v835
        %v873 = vunpack.c.l.b16 %v836
        %v874 = vunpack.c.h.b16 %v836
        %v875 = vunpack.c.l.b16 %v837
        %v876 = vunpack.c.h.b16 %v837
        %v877 = vunpack.c.l.b16 %v838
        %v878 = vunpack.c.h.b16 %v838
        %v879 = vunpack.c.l.b16 %v839
        %v880 = vunpack.c.h.b16 %v839
        %v881 = vpack.c.b16 %v867, %v865
        %v882 = vpack.c.b16 %v868, %v866
        %v883 = vpack.c.b16 %v871, %v869
        %v884 = vpack.c.b16 %v872, %v870
        %v885 = vpack.c.b16 %v875, %v873
        %v886 = vpack.c.b16 %v876, %v874
        %v887 = vpack.c.b16 %v879, %v877
        %v888 = vpack.c.b16 %v880, %v878
        %vm897 = vcmask 523264
        %v899 = vsel %vm897, %v856, 0
        %901 = vmatprep.subr.bf16.mxu0 0
        %902 = vmatpush1.bf16.msra.mxu0 0
        %903 = vmatprep.subr.bf16.mxu0 0
        %904 = vmatpush1.bf16.msra.mxu0 0
        %905 = vmatprep.subr.bf16.mxu0 0
        %906 = vmatpush1.bf16.msra.mxu0 0
        %907 = vmatprep.subr.bf16.mxu0 0
        %908 = vmatpush1.bf16.msra.mxu0 0
        %909 = vmatprep.subr.bf16.mxu0 %v888
        %910 = vmatpush1.bf16.msra.mxu0 %v887
        %911 = vmatprep.subr.bf16.mxu0 %v886
        %912 = vmatpush1.bf16.msra.mxu0 %v885
        %913 = vmatprep.subr.bf16.mxu0 %v884
        %914 = vmatpush1.bf16.msra.mxu0 %v883
        %915 = vmatprep.subr.bf16.mxu0 %v882
        %916 = vmatpush1.bf16.msra.mxu0 %v881
        %917 = vmatprep.subr.bf16.mxu0 0
        %918 = vmatpush2.bf16.msra.mxu0 0
        %919 = vmatprep.subr.bf16.mxu0 0
        %920 = vmatpush2.bf16.msra.mxu0 0
        %921 = vmatprep.subr.bf16.mxu0 0
        %922 = vmatpush2.bf16.msra.mxu0 0
        %923 = vmatprep.subr.bf16.mxu0 0
        %924 = vmatpush2.bf16.msra.mxu0 0
        %925 = vmatprep.subr.bf16.mxu0 0
        %926 = vmatpush2.bf16.msra.mxu0 0
        %927 = vmatprep.subr.bf16.mxu0 0
        %928 = vmatpush2.bf16.msra.mxu0 0
        %929 = vmatprep.subr.bf16.mxu0 0
        %930 = vmatpush2.bf16.msra.mxu0 0
        %931 = vmatprep.subr.bf16.mxu0 0
        %932 = vmatpush2.bf16.msra.mxu0 0
        %933 = vmatprep.mubr.bf16.mxu0 0
        %934 = vmatmul.mubr.bf16.gmra.mxu0 %v899
        %v935 = vpop.f32.mrf.mxu0
        %v936 = vadd.f32 %v845, %v935
        %v937 = vpop.f32.mrf.mxu0
        %v938 = vadd.f32 %v849, %v937
        %v939 = vpop.f32.mrf.mxu0
        %v940 = vadd.f32 %v845, %v939
        %v941 = vpop.f32.mrf.mxu0
        %v942 = vadd.f32 %v849, %v941
        %943 = vdwg.mxu0
        %v944 = vmul.f32 %v826, 0.17677669
        %v945 = vmul.f32 %v829, 0.17677669
        %948 = vrot.lane.b32.xlu0 %v944, 96
        %v949 = vpop.permute.xlu0 %948
        %950 = vrot.lane.b32.xlu0 %v945, 96
        %v951 = vpop.permute.xlu0 %950
        %954 = vrot.lane.b32.xlu0 %v944, 64
        %v955 = vpop.permute.xlu0 %954
        %956 = vrot.lane.b32.xlu0 %v945, 64
        %v957 = vpop.permute.xlu0 %956
        %960 = vrot.lane.b32.xlu0 %v944, 32
        %v961 = vpop.permute.xlu0 %960
        %962 = vrot.lane.b32.xlu0 %v945, 32
        %v963 = vpop.permute.xlu0 %962
        %v966 = vcombine.low %v944, %v955
        %v967 = vcombine.high %v944, %v955
        %v969 = vunpack.c.l.s4 1983009808
        %v970 = vunpack.c.0.s8 %v969
        %v971 = vlaneseq
        %v972 = vshrl.u32 %v971, 7
        %v973 = vsub.s32 %v970, %v972
        %v974 = vrot.slane %v966, %v973
        %v976 = vunpack.c.l.s4 1983009808
        %v977 = vunpack.c.0.s8 %v976
        %v978 = vlaneseq
        %v979 = vshrl.u32 %v978, 7
        %v980 = vsub.s32 %v977, %v979
        %v981 = vrot.slane %v967, %v980
        %v982 = vcombine.low %v949, %v961
        %v983 = vcombine.high %v949, %v961
        %v985 = vunpack.c.l.s4 1983009808
        %v986 = vunpack.c.0.s8 %v985
        %v987 = vlaneseq
        %v988 = vshrl.u32 %v987, 7
        %v989 = vsub.s32 %v986, %v988
        %v990 = vrot.slane %v982, %v989
        %v992 = vunpack.c.l.s4 1983009808
        %v993 = vunpack.c.0.s8 %v992
        %v994 = vlaneseq
        %v995 = vshrl.u32 %v994, 7
        %v996 = vsub.s32 %v993, %v995
        %v997 = vrot.slane %v983, %v996
        %v998 = vcombine.low %v974, %v990
        %v999 = vcombine.high %v974, %v990
        %v1001 = vunpack.c.l.s4 1934713408
        %v1002 = vunpack.c.0.s8 %v1001
        %v1003 = vlaneseq
        %v1004 = vshrl.u32 %v1003, 7
        %v1005 = vsub.s32 %v1002, %v1004
        %v1006 = vrot.slane %v998, %v1005
        %v1008 = vunpack.c.l.s4 1934713408
        %v1009 = vunpack.c.0.s8 %v1008
        %v1010 = vlaneseq
        %v1011 = vshrl.u32 %v1010, 7
        %v1012 = vsub.s32 %v1009, %v1011
        %v1013 = vrot.slane %v999, %v1012
        %v1014 = vcombine.low %v981, %v997
        %v1015 = vcombine.high %v981, %v997
        %v1017 = vunpack.c.l.s4 1934713408
        %v1018 = vunpack.c.0.s8 %v1017
        %v1019 = vlaneseq
        %v1020 = vshrl.u32 %v1019, 7
        %v1021 = vsub.s32 %v1018, %v1020
        %v1022 = vrot.slane %v1014, %v1021
        %v1024 = vunpack.c.l.s4 1934713408
        %v1025 = vunpack.c.0.s8 %v1024
        %v1026 = vlaneseq
        %v1027 = vshrl.u32 %v1026, 7
        %v1028 = vsub.s32 %v1025, %v1027
        %v1029 = vrot.slane %v1015, %v1028
        %v1030 = vcombine.high %v1006, 0.0
        %v1031 = vcombine.high %v1013, 0.0
        %v1032 = vcombine.high %v1022, 0.0
        %v1033 = vcombine.high %v1029, 0.0
        %v1034 = vcombine.low %v945, %v957
        %v1035 = vcombine.high %v945, %v957
        %v1037 = vunpack.c.l.s4 1983009808
        %v1038 = vunpack.c.0.s8 %v1037
        %v1039 = vlaneseq
        %v1040 = vshrl.u32 %v1039, 7
        %v1041 = vsub.s32 %v1038, %v1040
        %v1042 = vrot.slane %v1034, %v1041
        %v1044 = vunpack.c.l.s4 1983009808
        %v1045 = vunpack.c.0.s8 %v1044
        %v1046 = vlaneseq
        %v1047 = vshrl.u32 %v1046, 7
        %v1048 = vsub.s32 %v1045, %v1047
        %v1049 = vrot.slane %v1035, %v1048
        %v1050 = vcombine.low %v951, %v963
        %v1051 = vcombine.high %v951, %v963
        %v1053 = vunpack.c.l.s4 1983009808
        %v1054 = vunpack.c.0.s8 %v1053
        %v1055 = vlaneseq
        %v1056 = vshrl.u32 %v1055, 7
        %v1057 = vsub.s32 %v1054, %v1056
        %v1058 = vrot.slane %v1050, %v1057
        %v1060 = vunpack.c.l.s4 1983009808
        %v1061 = vunpack.c.0.s8 %v1060
        %v1062 = vlaneseq
        %v1063 = vshrl.u32 %v1062, 7
        %v1064 = vsub.s32 %v1061, %v1063
        %v1065 = vrot.slane %v1051, %v1064
        %v1066 = vcombine.low %v1042, %v1058
        %v1067 = vcombine.high %v1042, %v1058
        %v1069 = vunpack.c.l.s4 1934713408
        %v1070 = vunpack.c.0.s8 %v1069
        %v1071 = vlaneseq
        %v1072 = vshrl.u32 %v1071, 7
        %v1073 = vsub.s32 %v1070, %v1072
        %v1074 = vrot.slane %v1066, %v1073
        %v1076 = vunpack.c.l.s4 1934713408
        %v1077 = vunpack.c.0.s8 %v1076
        %v1078 = vlaneseq
        %v1079 = vshrl.u32 %v1078, 7
        %v1080 = vsub.s32 %v1077, %v1079
        %v1081 = vrot.slane %v1067, %v1080
        %v1082 = vcombine.low %v1049, %v1065
        %v1083 = vcombine.high %v1049, %v1065
        %v1085 = vunpack.c.l.s4 1934713408
        %v1086 = vunpack.c.0.s8 %v1085
        %v1087 = vlaneseq
        %v1088 = vshrl.u32 %v1087, 7
        %v1089 = vsub.s32 %v1086, %v1088
        %v1090 = vrot.slane %v1082, %v1089
        %v1092 = vunpack.c.l.s4 1934713408
        %v1093 = vunpack.c.0.s8 %v1092
        %v1094 = vlaneseq
        %v1095 = vshrl.u32 %v1094, 7
        %v1096 = vsub.s32 %v1093, %v1095
        %v1097 = vrot.slane %v1083, %v1096
        %v1098 = vcombine.high %v1074, 0.0
        %v1099 = vcombine.high %v1081, 0.0
        %v1100 = vcombine.high %v1090, 0.0
        %v1101 = vcombine.high %v1097, 0.0
        %v1102 = vpack.c.bf16 %v1006, %v1006
        %v1103 = vpack.c.bf16 %v1030, %v1030
        %v1104 = vpack.c.bf16 %v1013, %v1013
        %v1105 = vpack.c.bf16 %v1031, %v1031
        %v1106 = vpack.c.bf16 %v1022, %v1022
        %v1107 = vpack.c.bf16 %v1032, %v1032
        %v1108 = vpack.c.bf16 %v1029, %v1029
        %v1109 = vpack.c.bf16 %v1033, %v1033
        %v1110 = vpack.c.bf16 %v1074, %v1074
        %v1111 = vpack.c.bf16 %v1098, %v1098
        %v1112 = vpack.c.bf16 %v1081, %v1081
        %v1113 = vpack.c.bf16 %v1099, %v1099
        %v1114 = vpack.c.bf16 %v1090, %v1090
        %v1115 = vpack.c.bf16 %v1100, %v1100
        %v1116 = vpack.c.bf16 %v1097, %v1097
        %v1117 = vpack.c.bf16 %v1101, %v1101
        %1120 = vrot.lane.b32.xlu0 %v936, 96
        %v1121 = vpop.permute.xlu0 %1120
        %1122 = vrot.lane.b32.xlu0 %v940, 96
        %v1123 = vpop.permute.xlu0 %1122
        %1126 = vrot.lane.b32.xlu0 %v936, 64
        %v1127 = vpop.permute.xlu0 %1126
        %1128 = vrot.lane.b32.xlu0 %v940, 64
        %v1129 = vpop.permute.xlu0 %1128
        %1132 = vrot.lane.b32.xlu0 %v936, 32
        %v1133 = vpop.permute.xlu0 %1132
        %1134 = vrot.lane.b32.xlu0 %v940, 32
        %v1135 = vpop.permute.xlu0 %1134
        %v1138 = vcombine.low %v936, %v1127
        %v1139 = vcombine.high %v936, %v1127
        %v1141 = vunpack.c.l.s4 1983009808
        %v1142 = vunpack.c.0.s8 %v1141
        %v1143 = vlaneseq
        %v1144 = vshrl.u32 %v1143, 7
        %v1145 = vsub.s32 %v1142, %v1144
        %v1146 = vrot.slane %v1138, %v1145
        %v1148 = vunpack.c.l.s4 1983009808
        %v1149 = vunpack.c.0.s8 %v1148
        %v1150 = vlaneseq
        %v1151 = vshrl.u32 %v1150, 7
        %v1152 = vsub.s32 %v1149, %v1151
        %v1153 = vrot.slane %v1139, %v1152
        %v1154 = vcombine.low %v1121, %v1133
        %v1155 = vcombine.high %v1121, %v1133
        %v1157 = vunpack.c.l.s4 1983009808
        %v1158 = vunpack.c.0.s8 %v1157
        %v1159 = vlaneseq
        %v1160 = vshrl.u32 %v1159, 7
        %v1161 = vsub.s32 %v1158, %v1160
        %v1162 = vrot.slane %v1154, %v1161
        %v1164 = vunpack.c.l.s4 1983009808
        %v1165 = vunpack.c.0.s8 %v1164
        %v1166 = vlaneseq
        %v1167 = vshrl.u32 %v1166, 7
        %v1168 = vsub.s32 %v1165, %v1167
        %v1169 = vrot.slane %v1155, %v1168
        %v1170 = vcombine.low %v1146, %v1162
        %v1171 = vcombine.high %v1146, %v1162
        %v1173 = vunpack.c.l.s4 1934713408
        %v1174 = vunpack.c.0.s8 %v1173
        %v1175 = vlaneseq
        %v1176 = vshrl.u32 %v1175, 7
        %v1177 = vsub.s32 %v1174, %v1176
        %v1178 = vrot.slane %v1170, %v1177
        %v1180 = vunpack.c.l.s4 1934713408
        %v1181 = vunpack.c.0.s8 %v1180
        %v1182 = vlaneseq
        %v1183 = vshrl.u32 %v1182, 7
        %v1184 = vsub.s32 %v1181, %v1183
        %v1185 = vrot.slane %v1171, %v1184
        %v1186 = vcombine.low %v1153, %v1169
        %v1187 = vcombine.high %v1153, %v1169
        %v1189 = vunpack.c.l.s4 1934713408
        %v1190 = vunpack.c.0.s8 %v1189
        %v1191 = vlaneseq
        %v1192 = vshrl.u32 %v1191, 7
        %v1193 = vsub.s32 %v1190, %v1192
        %v1194 = vrot.slane %v1186, %v1193
        %v1196 = vunpack.c.l.s4 1934713408
        %v1197 = vunpack.c.0.s8 %v1196
        %v1198 = vlaneseq
        %v1199 = vshrl.u32 %v1198, 7
        %v1200 = vsub.s32 %v1197, %v1199
        %v1201 = vrot.slane %v1187, %v1200
        %v1202 = vcombine.high %v1178, 0.0
        %v1203 = vcombine.high %v1185, 0.0
        %v1204 = vcombine.high %v1194, 0.0
        %v1205 = vcombine.high %v1201, 0.0
        %v1206 = vcombine.low %v940, %v1129
        %v1207 = vcombine.high %v940, %v1129
        %v1209 = vunpack.c.l.s4 1983009808
        %v1210 = vunpack.c.0.s8 %v1209
        %v1211 = vlaneseq
        %v1212 = vshrl.u32 %v1211, 7
        %v1213 = vsub.s32 %v1210, %v1212
        %v1214 = vrot.slane %v1206, %v1213
        %v1216 = vunpack.c.l.s4 1983009808
        %v1217 = vunpack.c.0.s8 %v1216
        %v1218 = vlaneseq
        %v1219 = vshrl.u32 %v1218, 7
        %v1220 = vsub.s32 %v1217, %v1219
        %v1221 = vrot.slane %v1207, %v1220
        %v1222 = vcombine.low %v1123, %v1135
        %v1223 = vcombine.high %v1123, %v1135
        %v1225 = vunpack.c.l.s4 1983009808
        %v1226 = vunpack.c.0.s8 %v1225
        %v1227 = vlaneseq
        %v1228 = vshrl.u32 %v1227, 7
        %v1229 = vsub.s32 %v1226, %v1228
        %v1230 = vrot.slane %v1222, %v1229
        %v1232 = vunpack.c.l.s4 1983009808
        %v1233 = vunpack.c.0.s8 %v1232
        %v1234 = vlaneseq
        %v1235 = vshrl.u32 %v1234, 7
        %v1236 = vsub.s32 %v1233, %v1235
        %v1237 = vrot.slane %v1223, %v1236
        %v1238 = vcombine.low %v1214, %v1230
        %v1239 = vcombine.high %v1214, %v1230
        %v1241 = vunpack.c.l.s4 1934713408
        %v1242 = vunpack.c.0.s8 %v1241
        %v1243 = vlaneseq
        %v1244 = vshrl.u32 %v1243, 7
        %v1245 = vsub.s32 %v1242, %v1244
        %v1246 = vrot.slane %v1238, %v1245
        %v1248 = vunpack.c.l.s4 1934713408
        %v1249 = vunpack.c.0.s8 %v1248
        %v1250 = vlaneseq
        %v1251 = vshrl.u32 %v1250, 7
        %v1252 = vsub.s32 %v1249, %v1251
        %v1253 = vrot.slane %v1239, %v1252
        %v1254 = vcombine.low %v1221, %v1237
        %v1255 = vcombine.high %v1221, %v1237
        %v1257 = vunpack.c.l.s4 1934713408
        %v1258 = vunpack.c.0.s8 %v1257
        %v1259 = vlaneseq
        %v1260 = vshrl.u32 %v1259, 7
        %v1261 = vsub.s32 %v1258, %v1260
        %v1262 = vrot.slane %v1254, %v1261
        %v1264 = vunpack.c.l.s4 1934713408
        %v1265 = vunpack.c.0.s8 %v1264
        %v1266 = vlaneseq
        %v1267 = vshrl.u32 %v1266, 7
        %v1268 = vsub.s32 %v1265, %v1267
        %v1269 = vrot.slane %v1255, %v1268
        %v1270 = vcombine.high %v1246, 0.0
        %v1271 = vcombine.high %v1253, 0.0
        %v1272 = vcombine.high %v1262, 0.0
        %v1273 = vcombine.high %v1269, 0.0
        %v1274 = vpack.c.bf16 %v1178, %v1178
        %v1275 = vpack.c.bf16 %v1202, %v1202
        %v1276 = vpack.c.bf16 %v1185, %v1185
        %v1277 = vpack.c.bf16 %v1203, %v1203
        %v1278 = vpack.c.bf16 %v1194, %v1194
        %v1279 = vpack.c.bf16 %v1204, %v1204
        %v1280 = vpack.c.bf16 %v1201, %v1201
        %v1281 = vpack.c.bf16 %v1205, %v1205
        %v1282 = vpack.c.bf16 %v1246, %v1246
        %v1283 = vpack.c.bf16 %v1270, %v1270
        %v1284 = vpack.c.bf16 %v1253, %v1253
        %v1285 = vpack.c.bf16 %v1271, %v1271
        %v1286 = vpack.c.bf16 %v1262, %v1262
        %v1287 = vpack.c.bf16 %v1272, %v1272
        %v1288 = vpack.c.bf16 %v1269, %v1269
        %v1289 = vpack.c.bf16 %v1273, %v1273
        %1292 = vrot.lane.b32.xlu0 %v938, 96
        %v1293 = vpop.permute.xlu0 %1292
        %1294 = vrot.lane.b32.xlu0 %v942, 96
        %v1295 = vpop.permute.xlu0 %1294
        %1298 = vrot.lane.b32.xlu0 %v938, 64
        %v1299 = vpop.permute.xlu0 %1298
        %1300 = vrot.lane.b32.xlu0 %v942, 64
        %v1301 = vpop.permute.xlu0 %1300
        %1304 = vrot.lane.b32.xlu0 %v938, 32
        %v1305 = vpop.permute.xlu0 %1304
        %1306 = vrot.lane.b32.xlu0 %v942, 32
        %v1307 = vpop.permute.xlu0 %1306
        %v1310 = vcombine.low %v938, %v1299
        %v1311 = vcombine.high %v938, %v1299
        %v1313 = vunpack.c.l.s4 1983009808
        %v1314 = vunpack.c.0.s8 %v1313
        %v1315 = vlaneseq
        %v1316 = vshrl.u32 %v1315, 7
        %v1317 = vsub.s32 %v1314, %v1316
        %v1318 = vrot.slane %v1310, %v1317
        %v1320 = vunpack.c.l.s4 1983009808
        %v1321 = vunpack.c.0.s8 %v1320
        %v1322 = vlaneseq
        %v1323 = vshrl.u32 %v1322, 7
        %v1324 = vsub.s32 %v1321, %v1323
        %v1325 = vrot.slane %v1311, %v1324
        %v1326 = vcombine.low %v1293, %v1305
        %v1327 = vcombine.high %v1293, %v1305
        %v1329 = vunpack.c.l.s4 1983009808
        %v1330 = vunpack.c.0.s8 %v1329
        %v1331 = vlaneseq
        %v1332 = vshrl.u32 %v1331, 7
        %v1333 = vsub.s32 %v1330, %v1332
        %v1334 = vrot.slane %v1326, %v1333
        %v1336 = vunpack.c.l.s4 1983009808
        %v1337 = vunpack.c.0.s8 %v1336
        %v1338 = vlaneseq
        %v1339 = vshrl.u32 %v1338, 7
        %v1340 = vsub.s32 %v1337, %v1339
        %v1341 = vrot.slane %v1327, %v1340
        %v1342 = vcombine.low %v1318, %v1334
        %v1343 = vcombine.high %v1318, %v1334
        %v1345 = vunpack.c.l.s4 1934713408
        %v1346 = vunpack.c.0.s8 %v1345
        %v1347 = vlaneseq
        %v1348 = vshrl.u32 %v1347, 7
        %v1349 = vsub.s32 %v1346, %v1348
        %v1350 = vrot.slane %v1342, %v1349
        %v1352 = vunpack.c.l.s4 1934713408
        %v1353 = vunpack.c.0.s8 %v1352
        %v1354 = vlaneseq
        %v1355 = vshrl.u32 %v1354, 7
        %v1356 = vsub.s32 %v1353, %v1355
        %v1357 = vrot.slane %v1343, %v1356
        %v1358 = vcombine.low %v1325, %v1341
        %v1359 = vcombine.high %v1325, %v1341
        %v1361 = vunpack.c.l.s4 1934713408
        %v1362 = vunpack.c.0.s8 %v1361
        %v1363 = vlaneseq
        %v1364 = vshrl.u32 %v1363, 7
        %v1365 = vsub.s32 %v1362, %v1364
        %v1366 = vrot.slane %v1358, %v1365
        %v1368 = vunpack.c.l.s4 1934713408
        %v1369 = vunpack.c.0.s8 %v1368
        %v1370 = vlaneseq
        %v1371 = vshrl.u32 %v1370, 7
        %v1372 = vsub.s32 %v1369, %v1371
        %v1373 = vrot.slane %v1359, %v1372
        %v1374 = vcombine.high %v1350, 0.0
        %v1375 = vcombine.high %v1357, 0.0
        %v1376 = vcombine.high %v1366, 0.0
        %v1377 = vcombine.high %v1373, 0.0
        %v1378 = vcombine.low %v942, %v1301
        %v1379 = vcombine.high %v942, %v1301
        %v1381 = vunpack.c.l.s4 1983009808
        %v1382 = vunpack.c.0.s8 %v1381
        %v1383 = vlaneseq
        %v1384 = vshrl.u32 %v1383, 7
        %v1385 = vsub.s32 %v1382, %v1384
        %v1386 = vrot.slane %v1378, %v1385
        %v1388 = vunpack.c.l.s4 1983009808
        %v1389 = vunpack.c.0.s8 %v1388
        %v1390 = vlaneseq
        %v1391 = vshrl.u32 %v1390, 7
        %v1392 = vsub.s32 %v1389, %v1391
        %v1393 = vrot.slane %v1379, %v1392
        %v1394 = vcombine.low %v1295, %v1307
        %v1395 = vcombine.high %v1295, %v1307
        %v1397 = vunpack.c.l.s4 1983009808
        %v1398 = vunpack.c.0.s8 %v1397
        %v1399 = vlaneseq
        %v1400 = vshrl.u32 %v1399, 7
        %v1401 = vsub.s32 %v1398, %v1400
        %v1402 = vrot.slane %v1394, %v1401
        %v1404 = vunpack.c.l.s4 1983009808
        %v1405 = vunpack.c.0.s8 %v1404
        %v1406 = vlaneseq
        %v1407 = vshrl.u32 %v1406, 7
        %v1408 = vsub.s32 %v1405, %v1407
        %v1409 = vrot.slane %v1395, %v1408
        %v1410 = vcombine.low %v1386, %v1402
        %v1411 = vcombine.high %v1386, %v1402
        %v1413 = vunpack.c.l.s4 1934713408
        %v1414 = vunpack.c.0.s8 %v1413
        %v1415 = vlaneseq
        %v1416 = vshrl.u32 %v1415, 7
        %v1417 = vsub.s32 %v1414, %v1416
        %v1418 = vrot.slane %v1410, %v1417
        %v1420 = vunpack.c.l.s4 1934713408
        %v1421 = vunpack.c.0.s8 %v1420
        %v1422 = vlaneseq
        %v1423 = vshrl.u32 %v1422, 7
        %v1424 = vsub.s32 %v1421, %v1423
        %v1425 = vrot.slane %v1411, %v1424
        %v1426 = vcombine.low %v1393, %v1409
        %v1427 = vcombine.high %v1393, %v1409
        %v1429 = vunpack.c.l.s4 1934713408
        %v1430 = vunpack.c.0.s8 %v1429
        %v1431 = vlaneseq
        %v1432 = vshrl.u32 %v1431, 7
        %v1433 = vsub.s32 %v1430, %v1432
        %v1434 = vrot.slane %v1426, %v1433
        %v1436 = vunpack.c.l.s4 1934713408
        %v1437 = vunpack.c.0.s8 %v1436
        %v1438 = vlaneseq
        %v1439 = vshrl.u32 %v1438, 7
        %v1440 = vsub.s32 %v1437, %v1439
        %v1441 = vrot.slane %v1427, %v1440
        %v1442 = vcombine.high %v1418, 0.0
        %v1443 = vcombine.high %v1425, 0.0
        %v1444 = vcombine.high %v1434, 0.0
        %v1445 = vcombine.high %v1441, 0.0
        %v1446 = vpack.c.bf16 %v1350, %v1350
        %v1447 = vpack.c.bf16 %v1374, %v1374
        %v1448 = vpack.c.bf16 %v1357, %v1357
        %v1449 = vpack.c.bf16 %v1375, %v1375
        %v1450 = vpack.c.bf16 %v1366, %v1366
        %v1451 = vpack.c.bf16 %v1376, %v1376
        %v1452 = vpack.c.bf16 %v1373, %v1373
        %v1453 = vpack.c.bf16 %v1377, %v1377
        %v1454 = vpack.c.bf16 %v1418, %v1418
        %v1455 = vpack.c.bf16 %v1442, %v1442
        %v1456 = vpack.c.bf16 %v1425, %v1425
        %v1457 = vpack.c.bf16 %v1443, %v1443
        %v1458 = vpack.c.bf16 %v1434, %v1434
        %v1459 = vpack.c.bf16 %v1444, %v1444
        %v1460 = vpack.c.bf16 %v1441, %v1441
        %v1461 = vpack.c.bf16 %v1445, %v1445
        %v1462 = vcombine.low %v1102, %v1106
        %v1464 = vunpack.c.l.s4 1983009808
        %v1465 = vunpack.c.0.s8 %v1464
        %v1466 = vlaneseq
        %v1467 = vshrl.u32 %v1466, 7
        %v1468 = vsub.s32 %v1465, %v1467
        %v1469 = vrot.slane %v1462, %v1468
        %v1470 = vcombine.low %v1104, %v1108
        %v1472 = vunpack.c.l.s4 1983009808
        %v1473 = vunpack.c.0.s8 %v1472
        %v1474 = vlaneseq
        %v1475 = vshrl.u32 %v1474, 7
        %v1476 = vsub.s32 %v1473, %v1475
        %v1477 = vrot.slane %v1470, %v1476
        %v1478 = vcombine.low %v1110, %v1114
        %v1480 = vunpack.c.l.s4 1983009808
        %v1481 = vunpack.c.0.s8 %v1480
        %v1482 = vlaneseq
        %v1483 = vshrl.u32 %v1482, 7
        %v1484 = vsub.s32 %v1481, %v1483
        %v1485 = vrot.slane %v1478, %v1484
        %v1486 = vcombine.low %v1112, %v1116
        %v1488 = vunpack.c.l.s4 1983009808
        %v1489 = vunpack.c.0.s8 %v1488
        %v1490 = vlaneseq
        %v1491 = vshrl.u32 %v1490, 7
        %v1492 = vsub.s32 %v1489, %v1491
        %v1493 = vrot.slane %v1486, %v1492
        %v1494 = vcombine.low %v1469, %v1477
        %v1496 = vunpack.c.l.s4 1934713408
        %v1497 = vunpack.c.0.s8 %v1496
        %v1498 = vlaneseq
        %v1499 = vshrl.u32 %v1498, 7
        %v1500 = vsub.s32 %v1497, %v1499
        %v1501 = vrot.slane %v1494, %v1500
        %v1502 = vcombine.low %v1485, %v1493
        %v1504 = vunpack.c.l.s4 1934713408
        %v1505 = vunpack.c.0.s8 %v1504
        %v1506 = vlaneseq
        %v1507 = vshrl.u32 %v1506, 7
        %v1508 = vsub.s32 %v1505, %v1507
        %v1509 = vrot.slane %v1502, %v1508
        %v1510 = vcombine.low %v1501, %v1509
        %v1511 = vcombine.high %v1501, %v1509
        %v1512 = vcombine.low %v1103, %v1107
        %v1514 = vunpack.c.l.s4 1983009808
        %v1515 = vunpack.c.0.s8 %v1514
        %v1516 = vlaneseq
        %v1517 = vshrl.u32 %v1516, 7
        %v1518 = vsub.s32 %v1515, %v1517
        %v1519 = vrot.slane %v1512, %v1518
        %v1520 = vcombine.low %v1105, %v1109
        %v1522 = vunpack.c.l.s4 1983009808
        %v1523 = vunpack.c.0.s8 %v1522
        %v1524 = vlaneseq
        %v1525 = vshrl.u32 %v1524, 7
        %v1526 = vsub.s32 %v1523, %v1525
        %v1527 = vrot.slane %v1520, %v1526
        %v1528 = vcombine.low %v1111, %v1115
        %v1530 = vunpack.c.l.s4 1983009808
        %v1531 = vunpack.c.0.s8 %v1530
        %v1532 = vlaneseq
        %v1533 = vshrl.u32 %v1532, 7
        %v1534 = vsub.s32 %v1531, %v1533
        %v1535 = vrot.slane %v1528, %v1534
        %v1536 = vcombine.low %v1113, %v1117
        %v1538 = vunpack.c.l.s4 1983009808
        %v1539 = vunpack.c.0.s8 %v1538
        %v1540 = vlaneseq
        %v1541 = vshrl.u32 %v1540, 7
        %v1542 = vsub.s32 %v1539, %v1541
        %v1543 = vrot.slane %v1536, %v1542
        %v1544 = vcombine.low %v1519, %v1527
        %v1546 = vunpack.c.l.s4 1934713408
        %v1547 = vunpack.c.0.s8 %v1546
        %v1548 = vlaneseq
        %v1549 = vshrl.u32 %v1548, 7
        %v1550 = vsub.s32 %v1547, %v1549
        %v1551 = vrot.slane %v1544, %v1550
        %v1552 = vcombine.low %v1535, %v1543
        %v1554 = vunpack.c.l.s4 1934713408
        %v1555 = vunpack.c.0.s8 %v1554
        %v1556 = vlaneseq
        %v1557 = vshrl.u32 %v1556, 7
        %v1558 = vsub.s32 %v1555, %v1557
        %v1559 = vrot.slane %v1552, %v1558
        %v1560 = vcombine.low %v1551, %v1559
        %v1561 = vcombine.high %v1551, %v1559
        %v1564 = vpack.i.b16 %v1560, %v1510
        %v1565 = vshrl.u32 %v1510, 16
        %v1566 = vshrl.u32 %v1560, 16
        %v1567 = vpack.i.b16 %v1566, %v1565
        %v1570 = vpack.i.b16 %v1561, %v1511
        %v1571 = vshrl.u32 %v1511, 16
        %v1572 = vshrl.u32 %v1561, 16
        %v1573 = vpack.i.b16 %v1572, %v1571
        %1574 = vxpose.xlu0.c.b16.start [1/8] %v1274, 128
        %1575 = vxpose.xlu0.c.b16.cont [2/8] 0, 128
        %1576 = vxpose.xlu0.c.b16.cont [3/8] 0, 128
        %1577 = vxpose.xlu0.c.b16.cont [4/8] 0, 128
        %1578 = vxpose.xlu0.c.b16.cont [5/8] 0, 128
        %1579 = vxpose.xlu0.c.b16.cont [6/8] 0, 128
        %1580 = vxpose.xlu0.c.b16.cont [7/8] 0, 128
        %1581 = vxpose.xlu0.c.b16.end [8/8] 0, 128
        %v1582 = vpop.trf.xlu0
        %v1583 = vpop.trf.xlu0
        %v1584 = vpop.trf.xlu0
        %v1585 = vpop.trf.xlu0
        %v1586 = vpop.trf.xlu0
        %v1587 = vpop.trf.xlu0
        %v1588 = vpop.trf.xlu0
        %v1589 = vpop.trf.xlu0
        %1590 = vxpose.xlu0.c.b16.start [1/8] %v1275, 128
        %1591 = vxpose.xlu0.c.b16.cont [2/8] 0, 128
        %1592 = vxpose.xlu0.c.b16.cont [3/8] 0, 128
        %1593 = vxpose.xlu0.c.b16.cont [4/8] 0, 128
        %1594 = vxpose.xlu0.c.b16.cont [5/8] 0, 128
        %1595 = vxpose.xlu0.c.b16.cont [6/8] 0, 128
        %1596 = vxpose.xlu0.c.b16.cont [7/8] 0, 128
        %1597 = vxpose.xlu0.c.b16.end [8/8] 0, 128
        %v1598 = vpop.trf.xlu0
        %v1599 = vpop.trf.xlu0
        %v1600 = vpop.trf.xlu0
        %v1601 = vpop.trf.xlu0
        %v1602 = vpop.trf.xlu0
        %v1603 = vpop.trf.xlu0
        %v1604 = vpop.trf.xlu0
        %v1605 = vpop.trf.xlu0
        %1606 = vxpose.xlu0.c.b16.start [1/8] %v1276, 128
        %1607 = vxpose.xlu0.c.b16.cont [2/8] 0, 128
        %1608 = vxpose.xlu0.c.b16.cont [3/8] 0, 128
        %1609 = vxpose.xlu0.c.b16.cont [4/8] 0, 128
        %1610 = vxpose.xlu0.c.b16.cont [5/8] 0, 128
        %1611 = vxpose.xlu0.c.b16.cont [6/8] 0, 128
        %1612 = vxpose.xlu0.c.b16.cont [7/8] 0, 128
        %1613 = vxpose.xlu0.c.b16.end [8/8] 0, 128
        %v1614 = vpop.trf.xlu0
        %v1615 = vpop.trf.xlu0
        %v1616 = vpop.trf.xlu0
        %v1617 = vpop.trf.xlu0
        %v1618 = vpop.trf.xlu0
        %v1619 = vpop.trf.xlu0
        %v1620 = vpop.trf.xlu0
        %v1621 = vpop.trf.xlu0
        %1622 = vxpose.xlu0.c.b16.start [1/8] %v1277, 128
        %1623 = vxpose.xlu0.c.b16.cont [2/8] 0, 128
        %1624 = vxpose.xlu0.c.b16.cont [3/8] 0, 128
        %1625 = vxpose.xlu0.c.b16.cont [4/8] 0, 128
        %1626 = vxpose.xlu0.c.b16.cont [5/8] 0, 128
        %1627 = vxpose.xlu0.c.b16.cont [6/8] 0, 128
        %1628 = vxpose.xlu0.c.b16.cont [7/8] 0, 128
        %1629 = vxpose.xlu0.c.b16.end [8/8] 0, 128
        %v1630 = vpop.trf.xlu0
        %v1631 = vpop.trf.xlu0
        %v1632 = vpop.trf.xlu0
        %v1633 = vpop.trf.xlu0
        %v1634 = vpop.trf.xlu0
        %v1635 = vpop.trf.xlu0
        %v1636 = vpop.trf.xlu0
        %v1637 = vpop.trf.xlu0
        %1638 = vxpose.xlu0.c.b16.start [1/8] %v1278, 128
        %1639 = vxpose.xlu0.c.b16.cont [2/8] 0, 128
        %1640 = vxpose.xlu0.c.b16.cont [3/8] 0, 128
        %1641 = vxpose.xlu0.c.b16.cont [4/8] 0, 128
        %1642 = vxpose.xlu0.c.b16.cont [5/8] 0, 128
        %1643 = vxpose.xlu0.c.b16.cont [6/8] 0, 128
        %1644 = vxpose.xlu0.c.b16.cont [7/8] 0, 128
        %1645 = vxpose.xlu0.c.b16.end [8/8] 0, 128
        %v1646 = vpop.trf.xlu0
        %v1647 = vpop.trf.xlu0
        %v1648 = vpop.trf.xlu0
        %v1649 = vpop.trf.xlu0
        %v1650 = vpop.trf.xlu0
        %v1651 = vpop.trf.xlu0
        %v1652 = vpop.trf.xlu0
        %v1653 = vpop.trf.xlu0
        %1654 = vxpose.xlu0.c.b16.start [1/8] %v1279, 128
        %1655 = vxpose.xlu0.c.b16.cont [2/8] 0, 128
        %1656 = vxpose.xlu0.c.b16.cont [3/8] 0, 128
        %1657 = vxpose.xlu0.c.b16.cont [4/8] 0, 128
        %1658 = vxpose.xlu0.c.b16.cont [5/8] 0, 128
        %1659 = vxpose.xlu0.c.b16.cont [6/8] 0, 128
        %1660 = vxpose.xlu0.c.b16.cont [7/8] 0, 128
        %1661 = vxpose.xlu0.c.b16.end [8/8] 0, 128
        %v1662 = vpop.trf.xlu0
        %v1663 = vpop.trf.xlu0
        %v1664 = vpop.trf.xlu0
        %v1665 = vpop.trf.xlu0
        %v1666 = vpop.trf.xlu0
        %v1667 = vpop.trf.xlu0
        %v1668 = vpop.trf.xlu0
        %v1669 = vpop.trf.xlu0
        %1670 = vxpose.xlu0.c.b16.start [1/8] %v1280, 128
        %1671 = vxpose.xlu0.c.b16.cont [2/8] 0, 128
        %1672 = vxpose.xlu0.c.b16.cont [3/8] 0, 128
        %1673 = vxpose.xlu0.c.b16.cont [4/8] 0, 128
        %1674 = vxpose.xlu0.c.b16.cont [5/8] 0, 128
        %1675 = vxpose.xlu0.c.b16.cont [6/8] 0, 128
        %1676 = vxpose.xlu0.c.b16.cont [7/8] 0, 128
        %1677 = vxpose.xlu0.c.b16.end [8/8] 0, 128
        %v1678 = vpop.trf.xlu0
        %v1679 = vpop.trf.xlu0
        %v1680 = vpop.trf.xlu0
        %v1681 = vpop.trf.xlu0
        %v1682 = vpop.trf.xlu0
        %v1683 = vpop.trf.xlu0
        %v1684 = vpop.trf.xlu0
        %v1685 = vpop.trf.xlu0
        %1686 = vxpose.xlu0.c.b16.start [1/8] %v1281, 128
        %1687 = vxpose.xlu0.c.b16.cont [2/8] 0, 128
        %1688 = vxpose.xlu0.c.b16.cont [3/8] 0, 128
        %1689 = vxpose.xlu0.c.b16.cont [4/8] 0, 128
        %1690 = vxpose.xlu0.c.b16.cont [5/8] 0, 128
        %1691 = vxpose.xlu0.c.b16.cont [6/8] 0, 128
        %1692 = vxpose.xlu0.c.b16.cont [7/8] 0, 128
        %1693 = vxpose.xlu0.c.b16.end [8/8] 0, 128
        %v1694 = vpop.trf.xlu0
        %v1695 = vpop.trf.xlu0
        %v1696 = vpop.trf.xlu0
        %v1697 = vpop.trf.xlu0
        %v1698 = vpop.trf.xlu0
        %v1699 = vpop.trf.xlu0
        %v1700 = vpop.trf.xlu0
        %v1701 = vpop.trf.xlu0
        %1702 = vxpose.xlu0.c.b16.start [1/8] %v1282, 128
        %1703 = vxpose.xlu0.c.b16.cont [2/8] 0, 128
        %1704 = vxpose.xlu0.c.b16.cont [3/8] 0, 128
        %1705 = vxpose.xlu0.c.b16.cont [4/8] 0, 128
        %1706 = vxpose.xlu0.c.b16.cont [5/8] 0, 128
        %1707 = vxpose.xlu0.c.b16.cont [6/8] 0, 128
        %1708 = vxpose.xlu0.c.b16.cont [7/8] 0, 128
        %1709 = vxpose.xlu0.c.b16.end [8/8] 0, 128
        %v1710 = vpop.trf.xlu0
        %v1711 = vpop.trf.xlu0
        %v1712 = vpop.trf.xlu0
        %v1713 = vpop.trf.xlu0
        %v1714 = vpop.trf.xlu0
        %v1715 = vpop.trf.xlu0
        %v1716 = vpop.trf.xlu0
        %v1717 = vpop.trf.xlu0
        %1718 = vxpose.xlu0.c.b16.start [1/8] %v1283, 128
        %1719 = vxpose.xlu0.c.b16.cont [2/8] 0, 128
        %1720 = vxpose.xlu0.c.b16.cont [3/8] 0, 128
        %1721 = vxpose.xlu0.c.b16.cont [4/8] 0, 128
        %1722 = vxpose.xlu0.c.b16.cont [5/8] 0, 128
        %1723 = vxpose.xlu0.c.b16.cont [6/8] 0, 128
        %1724 = vxpose.xlu0.c.b16.cont [7/8] 0, 128
        %1725 = vxpose.xlu0.c.b16.end [8/8] 0, 128
        %v1726 = vpop.trf.xlu0
        %v1727 = vpop.trf.xlu0
        %v1728 = vpop.trf.xlu0
        %v1729 = vpop.trf.xlu0
        %v1730 = vpop.trf.xlu0
        %v1731 = vpop.trf.xlu0
        %v1732 = vpop.trf.xlu0
        %v1733 = vpop.trf.xlu0
        %1734 = vxpose.xlu0.c.b16.start [1/8] %v1284, 128
        %1735 = vxpose.xlu0.c.b16.cont [2/8] 0, 128
        %1736 = vxpose.xlu0.c.b16.cont [3/8] 0, 128
        %1737 = vxpose.xlu0.c.b16.cont [4/8] 0, 128
        %1738 = vxpose.xlu0.c.b16.cont [5/8] 0, 128
        %1739 = vxpose.xlu0.c.b16.cont [6/8] 0, 128
        %1740 = vxpose.xlu0.c.b16.cont [7/8] 0, 128
        %1741 = vxpose.xlu0.c.b16.end [8/8] 0, 128
        %v1742 = vpop.trf.xlu0
        %v1743 = vpop.trf.xlu0
        %v1744 = vpop.trf.xlu0
        %v1745 = vpop.trf.xlu0
        %v1746 = vpop.trf.xlu0
        %v1747 = vpop.trf.xlu0
        %v1748 = vpop.trf.xlu0
        %v1749 = vpop.trf.xlu0
        %1750 = vxpose.xlu0.c.b16.start [1/8] %v1285, 128
        %1751 = vxpose.xlu0.c.b16.cont [2/8] 0, 128
        %1752 = vxpose.xlu0.c.b16.cont [3/8] 0, 128
        %1753 = vxpose.xlu0.c.b16.cont [4/8] 0, 128
        %1754 = vxpose.xlu0.c.b16.cont [5/8] 0, 128
        %1755 = vxpose.xlu0.c.b16.cont [6/8] 0, 128
        %1756 = vxpose.xlu0.c.b16.cont [7/8] 0, 128
        %1757 = vxpose.xlu0.c.b16.end [8/8] 0, 128
        %v1758 = vpop.trf.xlu0
        %v1759 = vpop.trf.xlu0
        %v1760 = vpop.trf.xlu0
        %v1761 = vpop.trf.xlu0
        %v1762 = vpop.trf.xlu0
        %v1763 = vpop.trf.xlu0
        %v1764 = vpop.trf.xlu0
        %v1765 = vpop.trf.xlu0
        %1766 = vxpose.xlu0.c.b16.start [1/8] %v1286, 128
        %1767 = vxpose.xlu0.c.b16.cont [2/8] 0, 128
        %1768 = vxpose.xlu0.c.b16.cont [3/8] 0, 128
        %1769 = vxpose.xlu0.c.b16.cont [4/8] 0, 128
        %1770 = vxpose.xlu0.c.b16.cont [5/8] 0, 128
        %1771 = vxpose.xlu0.c.b16.cont [6/8] 0, 128
        %1772 = vxpose.xlu0.c.b16.cont [7/8] 0, 128
        %1773 = vxpose.xlu0.c.b16.end [8/8] 0, 128
        %v1774 = vpop.trf.xlu0
        %v1775 = vpop.trf.xlu0
        %v1776 = vpop.trf.xlu0
        %v1777 = vpop.trf.xlu0
        %v1778 = vpop.trf.xlu0
        %v1779 = vpop.trf.xlu0
        %v1780 = vpop.trf.xlu0
        %v1781 = vpop.trf.xlu0
        %1782 = vxpose.xlu0.c.b16.start [1/8] %v1287, 128
        %1783 = vxpose.xlu0.c.b16.cont [2/8] 0, 128
        %1784 = vxpose.xlu0.c.b16.cont [3/8] 0, 128
        %1785 = vxpose.xlu0.c.b16.cont [4/8] 0, 128
        %1786 = vxpose.xlu0.c.b16.cont [5/8] 0, 128
        %1787 = vxpose.xlu0.c.b16.cont [6/8] 0, 128
        %1788 = vxpose.xlu0.c.b16.cont [7/8] 0, 128
        %1789 = vxpose.xlu0.c.b16.end [8/8] 0, 128
        %v1790 = vpop.trf.xlu0
        %v1791 = vpop.trf.xlu0
        %v1792 = vpop.trf.xlu0
        %v1793 = vpop.trf.xlu0
        %v1794 = vpop.trf.xlu0
        %v1795 = vpop.trf.xlu0
        %v1796 = vpop.trf.xlu0
        %v1797 = vpop.trf.xlu0
        %1798 = vxpose.xlu0.c.b16.start [1/8] %v1288, 128
        %1799 = vxpose.xlu0.c.b16.cont [2/8] 0, 128
        %1800 = vxpose.xlu0.c.b16.cont [3/8] 0, 128
        %1801 = vxpose.xlu0.c.b16.cont [4/8] 0, 128
        %1802 = vxpose.xlu0.c.b16.cont [5/8] 0, 128
        %1803 = vxpose.xlu0.c.b16.cont [6/8] 0, 128
        %1804 = vxpose.xlu0.c.b16.cont [7/8] 0, 128
        %1805 = vxpose.xlu0.c.b16.end [8/8] 0, 128
        %v1806 = vpop.trf.xlu0
        %v1807 = vpop.trf.xlu0
        %v1808 = vpop.trf.xlu0
        %v1809 = vpop.trf.xlu0
        %v1810 = vpop.trf.xlu0
        %v1811 = vpop.trf.xlu0
        %v1812 = vpop.trf.xlu0
        %v1813 = vpop.trf.xlu0
        %1814 = vxpose.xlu0.c.b16.start [1/8] %v1289, 128
        %1815 = vxpose.xlu0.c.b16.cont [2/8] 0, 128
        %1816 = vxpose.xlu0.c.b16.cont [3/8] 0, 128
        %1817 = vxpose.xlu0.c.b16.cont [4/8] 0, 128
        %1818 = vxpose.xlu0.c.b16.cont [5/8] 0, 128
        %1819 = vxpose.xlu0.c.b16.cont [6/8] 0, 128
        %1820 = vxpose.xlu0.c.b16.cont [7/8] 0, 128
        %1821 = vxpose.xlu0.c.b16.end [8/8] 0, 128
        %v1822 = vpop.trf.xlu0
        %v1823 = vpop.trf.xlu0
        %v1824 = vpop.trf.xlu0
        %v1825 = vpop.trf.xlu0
        %v1826 = vpop.trf.xlu0
        %v1827 = vpop.trf.xlu0
        %v1828 = vpop.trf.xlu0
        %v1829 = vpop.trf.xlu0
        %v1830 = vcombine.low %v1582, %v1646
        %v1831 = vcombine.high %v1582, %v1646
        %v1833 = vunpack.c.l.s4 1983009808
        %v1834 = vunpack.c.0.s8 %v1833
        %v1835 = vlaneseq
        %v1836 = vshrl.u32 %v1835, 7
        %v1837 = vsub.s32 %v1834, %v1836
        %v1838 = vrot.slane %v1830, %v1837
        %v1840 = vunpack.c.l.s4 1983009808
        %v1841 = vunpack.c.0.s8 %v1840
        %v1842 = vlaneseq
        %v1843 = vshrl.u32 %v1842, 7
        %v1844 = vsub.s32 %v1841, %v1843
        %v1845 = vrot.slane %v1831, %v1844
        %v1846 = vcombine.low %v1614, %v1678
        %v1847 = vcombine.high %v1614, %v1678
        %v1849 = vunpack.c.l.s4 1983009808
        %v1850 = vunpack.c.0.s8 %v1849
        %v1851 = vlaneseq
        %v1852 = vshrl.u32 %v1851, 7
        %v1853 = vsub.s32 %v1850, %v1852
        %v1854 = vrot.slane %v1846, %v1853
        %v1856 = vunpack.c.l.s4 1983009808
        %v1857 = vunpack.c.0.s8 %v1856
        %v1858 = vlaneseq
        %v1859 = vshrl.u32 %v1858, 7
        %v1860 = vsub.s32 %v1857, %v1859
        %v1861 = vrot.slane %v1847, %v1860
        %v1862 = vcombine.low %v1710, %v1774
        %v1863 = vcombine.high %v1710, %v1774
        %v1865 = vunpack.c.l.s4 1983009808
        %v1866 = vunpack.c.0.s8 %v1865
        %v1867 = vlaneseq
        %v1868 = vshrl.u32 %v1867, 7
        %v1869 = vsub.s32 %v1866, %v1868
        %v1870 = vrot.slane %v1862, %v1869
        %v1872 = vunpack.c.l.s4 1983009808
        %v1873 = vunpack.c.0.s8 %v1872
        %v1874 = vlaneseq
        %v1875 = vshrl.u32 %v1874, 7
        %v1876 = vsub.s32 %v1873, %v1875
        %v1877 = vrot.slane %v1863, %v1876
        %v1878 = vcombine.low %v1742, %v1806
        %v1879 = vcombine.high %v1742, %v1806
        %v1881 = vunpack.c.l.s4 1983009808
        %v1882 = vunpack.c.0.s8 %v1881
        %v1883 = vlaneseq
        %v1884 = vshrl.u32 %v1883, 7
        %v1885 = vsub.s32 %v1882, %v1884
        %v1886 = vrot.slane %v1878, %v1885
        %v1888 = vunpack.c.l.s4 1983009808
        %v1889 = vunpack.c.0.s8 %v1888
        %v1890 = vlaneseq
        %v1891 = vshrl.u32 %v1890, 7
        %v1892 = vsub.s32 %v1889, %v1891
        %v1893 = vrot.slane %v1879, %v1892
        %v1894 = vcombine.low %v1838, %v1854
        %v1895 = vcombine.high %v1838, %v1854
        %v1897 = vunpack.c.l.s4 1934713408
        %v1898 = vunpack.c.0.s8 %v1897
        %v1899 = vlaneseq
        %v1900 = vshrl.u32 %v1899, 7
        %v1901 = vsub.s32 %v1898, %v1900
        %v1902 = vrot.slane %v1894, %v1901
        %v1904 = vunpack.c.l.s4 1934713408
        %v1905 = vunpack.c.0.s8 %v1904
        %v1906 = vlaneseq
        %v1907 = vshrl.u32 %v1906, 7
        %v1908 = vsub.s32 %v1905, %v1907
        %v1909 = vrot.slane %v1895, %v1908
        %v1910 = vcombine.low %v1845, %v1861
        %v1911 = vcombine.high %v1845, %v1861
        %v1913 = vunpack.c.l.s4 1934713408
        %v1914 = vunpack.c.0.s8 %v1913
        %v1915 = vlaneseq
        %v1916 = vshrl.u32 %v1915, 7
        %v1917 = vsub.s32 %v1914, %v1916
        %v1918 = vrot.slane %v1910, %v1917
        %v1920 = vunpack.c.l.s4 1934713408
        %v1921 = vunpack.c.0.s8 %v1920
        %v1922 = vlaneseq
        %v1923 = vshrl.u32 %v1922, 7
        %v1924 = vsub.s32 %v1921, %v1923
        %v1925 = vrot.slane %v1911, %v1924
        %v1926 = vcombine.low %v1870, %v1886
        %v1927 = vcombine.high %v1870, %v1886
        %v1929 = vunpack.c.l.s4 1934713408
        %v1930 = vunpack.c.0.s8 %v1929
        %v1931 = vlaneseq
        %v1932 = vshrl.u32 %v1931, 7
        %v1933 = vsub.s32 %v1930, %v1932
        %v1934 = vrot.slane %v1926, %v1933
        %v1936 = vunpack.c.l.s4 1934713408
        %v1937 = vunpack.c.0.s8 %v1936
        %v1938 = vlaneseq
        %v1939 = vshrl.u32 %v1938, 7
        %v1940 = vsub.s32 %v1937, %v1939
        %v1941 = vrot.slane %v1927, %v1940
        %v1942 = vcombine.low %v1877, %v1893
        %v1943 = vcombine.high %v1877, %v1893
        %v1945 = vunpack.c.l.s4 1934713408
        %v1946 = vunpack.c.0.s8 %v1945
        %v1947 = vlaneseq
        %v1948 = vshrl.u32 %v1947, 7
        %v1949 = vsub.s32 %v1946, %v1948
        %v1950 = vrot.slane %v1942, %v1949
        %v1952 = vunpack.c.l.s4 1934713408
        %v1953 = vunpack.c.0.s8 %v1952
        %v1954 = vlaneseq
        %v1955 = vshrl.u32 %v1954, 7
        %v1956 = vsub.s32 %v1953, %v1955
        %v1957 = vrot.slane %v1943, %v1956
        %v1958 = vcombine.low %v1902, %v1934
        %v1959 = vcombine.high %v1902, %v1934
        %v1960 = vcombine.low %v1909, %v1941
        %v1961 = vcombine.high %v1909, %v1941
        %v1962 = vcombine.low %v1918, %v1950
        %v1963 = vcombine.high %v1918, %v1950
        %v1964 = vcombine.low %v1925, %v1957
        %v1965 = vcombine.high %v1925, %v1957
        %v1966 = vcombine.low %v1598, %v1662
        %v1967 = vcombine.high %v1598, %v1662
        %v1969 = vunpack.c.l.s4 1983009808
        %v1970 = vunpack.c.0.s8 %v1969
        %v1971 = vlaneseq
        %v1972 = vshrl.u32 %v1971, 7
        %v1973 = vsub.s32 %v1970, %v1972
        %v1974 = vrot.slane %v1966, %v1973
        %v1976 = vunpack.c.l.s4 1983009808
        %v1977 = vunpack.c.0.s8 %v1976
        %v1978 = vlaneseq
        %v1979 = vshrl.u32 %v1978, 7
        %v1980 = vsub.s32 %v1977, %v1979
        %v1981 = vrot.slane %v1967, %v1980
        %v1982 = vcombine.low %v1630, %v1694
        %v1983 = vcombine.high %v1630, %v1694
        %v1985 = vunpack.c.l.s4 1983009808
        %v1986 = vunpack.c.0.s8 %v1985
        %v1987 = vlaneseq
        %v1988 = vshrl.u32 %v1987, 7
        %v1989 = vsub.s32 %v1986, %v1988
        %v1990 = vrot.slane %v1982, %v1989
        %v1992 = vunpack.c.l.s4 1983009808
        %v1993 = vunpack.c.0.s8 %v1992
        %v1994 = vlaneseq
        %v1995 = vshrl.u32 %v1994, 7
        %v1996 = vsub.s32 %v1993, %v1995
        %v1997 = vrot.slane %v1983, %v1996
        %v1998 = vcombine.low %v1726, %v1790
        %v1999 = vcombine.high %v1726, %v1790
        %v2001 = vunpack.c.l.s4 1983009808
        %v2002 = vunpack.c.0.s8 %v2001
        %v2003 = vlaneseq
        %v2004 = vshrl.u32 %v2003, 7
        %v2005 = vsub.s32 %v2002, %v2004
        %v2006 = vrot.slane %v1998, %v2005
        %v2008 = vunpack.c.l.s4 1983009808
        %v2009 = vunpack.c.0.s8 %v2008
        %v2010 = vlaneseq
        %v2011 = vshrl.u32 %v2010, 7
        %v2012 = vsub.s32 %v2009, %v2011
        %v2013 = vrot.slane %v1999, %v2012
        %v2014 = vcombine.low %v1758, %v1822
        %v2015 = vcombine.high %v1758, %v1822
        %v2017 = vunpack.c.l.s4 1983009808
        %v2018 = vunpack.c.0.s8 %v2017
        %v2019 = vlaneseq
        %v2020 = vshrl.u32 %v2019, 7
        %v2021 = vsub.s32 %v2018, %v2020
        %v2022 = vrot.slane %v2014, %v2021
        %v2024 = vunpack.c.l.s4 1983009808
        %v2025 = vunpack.c.0.s8 %v2024
        %v2026 = vlaneseq
        %v2027 = vshrl.u32 %v2026, 7
        %v2028 = vsub.s32 %v2025, %v2027
        %v2029 = vrot.slane %v2015, %v2028
        %v2030 = vcombine.low %v1974, %v1990
        %v2031 = vcombine.high %v1974, %v1990
        %v2033 = vunpack.c.l.s4 1934713408
        %v2034 = vunpack.c.0.s8 %v2033
        %v2035 = vlaneseq
        %v2036 = vshrl.u32 %v2035, 7
        %v2037 = vsub.s32 %v2034, %v2036
        %v2038 = vrot.slane %v2030, %v2037
        %v2040 = vunpack.c.l.s4 1934713408
        %v2041 = vunpack.c.0.s8 %v2040
        %v2042 = vlaneseq
        %v2043 = vshrl.u32 %v2042, 7
        %v2044 = vsub.s32 %v2041, %v2043
        %v2045 = vrot.slane %v2031, %v2044
        %v2046 = vcombine.low %v1981, %v1997
        %v2047 = vcombine.high %v1981, %v1997
        %v2049 = vunpack.c.l.s4 1934713408
        %v2050 = vunpack.c.0.s8 %v2049
        %v2051 = vlaneseq
        %v2052 = vshrl.u32 %v2051, 7
        %v2053 = vsub.s32 %v2050, %v2052
        %v2054 = vrot.slane %v2046, %v2053
        %v2056 = vunpack.c.l.s4 1934713408
        %v2057 = vunpack.c.0.s8 %v2056
        %v2058 = vlaneseq
        %v2059 = vshrl.u32 %v2058, 7
        %v2060 = vsub.s32 %v2057, %v2059
        %v2061 = vrot.slane %v2047, %v2060
        %v2062 = vcombine.low %v2006, %v2022
        %v2063 = vcombine.high %v2006, %v2022
        %v2065 = vunpack.c.l.s4 1934713408
        %v2066 = vunpack.c.0.s8 %v2065
        %v2067 = vlaneseq
        %v2068 = vshrl.u32 %v2067, 7
        %v2069 = vsub.s32 %v2066, %v2068
        %v2070 = vrot.slane %v2062, %v2069
        %v2072 = vunpack.c.l.s4 1934713408
        %v2073 = vunpack.c.0.s8 %v2072
        %v2074 = vlaneseq
        %v2075 = vshrl.u32 %v2074, 7
        %v2076 = vsub.s32 %v2073, %v2075
        %v2077 = vrot.slane %v2063, %v2076
        %v2078 = vcombine.low %v2013, %v2029
        %v2079 = vcombine.high %v2013, %v2029
        %v2081 = vunpack.c.l.s4 1934713408
        %v2082 = vunpack.c.0.s8 %v2081
        %v2083 = vlaneseq
        %v2084 = vshrl.u32 %v2083, 7
        %v2085 = vsub.s32 %v2082, %v2084
        %v2086 = vrot.slane %v2078, %v2085
        %v2088 = vunpack.c.l.s4 1934713408
        %v2089 = vunpack.c.0.s8 %v2088
        %v2090 = vlaneseq
        %v2091 = vshrl.u32 %v2090, 7
        %v2092 = vsub.s32 %v2089, %v2091
        %v2093 = vrot.slane %v2079, %v2092
        %v2094 = vcombine.low %v2038, %v2070
        %v2095 = vcombine.high %v2038, %v2070
        %v2096 = vcombine.low %v2045, %v2077
        %v2097 = vcombine.high %v2045, %v2077
        %v2098 = vcombine.low %v2054, %v2086
        %v2099 = vcombine.high %v2054, %v2086
        %v2100 = vcombine.low %v2061, %v2093
        %v2101 = vcombine.high %v2061, %v2093
        %v2102 = vcombine.low %v1583, %v1647
        %v2103 = vcombine.high %v1583, %v1647
        %v2105 = vunpack.c.l.s4 1983009808
        %v2106 = vunpack.c.0.s8 %v2105
        %v2107 = vlaneseq
        %v2108 = vshrl.u32 %v2107, 7
        %v2109 = vsub.s32 %v2106, %v2108
        %v2110 = vrot.slane %v2102, %v2109
        %v2112 = vunpack.c.l.s4 1983009808
        %v2113 = vunpack.c.0.s8 %v2112
        %v2114 = vlaneseq
        %v2115 = vshrl.u32 %v2114, 7
        %v2116 = vsub.s32 %v2113, %v2115
        %v2117 = vrot.slane %v2103, %v2116
        %v2118 = vcombine.low %v1615, %v1679
        %v2119 = vcombine.high %v1615, %v1679
        %v2121 = vunpack.c.l.s4 1983009808
        %v2122 = vunpack.c.0.s8 %v2121
        %v2123 = vlaneseq
        %v2124 = vshrl.u32 %v2123, 7
        %v2125 = vsub.s32 %v2122, %v2124
        %v2126 = vrot.slane %v2118, %v2125
        %v2128 = vunpack.c.l.s4 1983009808
        %v2129 = vunpack.c.0.s8 %v2128
        %v2130 = vlaneseq
        %v2131 = vshrl.u32 %v2130, 7
        %v2132 = vsub.s32 %v2129, %v2131
        %v2133 = vrot.slane %v2119, %v2132
        %v2134 = vcombine.low %v1711, %v1775
        %v2135 = vcombine.high %v1711, %v1775
        %v2137 = vunpack.c.l.s4 1983009808
        %v2138 = vunpack.c.0.s8 %v2137
        %v2139 = vlaneseq
        %v2140 = vshrl.u32 %v2139, 7
        %v2141 = vsub.s32 %v2138, %v2140
        %v2142 = vrot.slane %v2134, %v2141
        %v2144 = vunpack.c.l.s4 1983009808
        %v2145 = vunpack.c.0.s8 %v2144
        %v2146 = vlaneseq
        %v2147 = vshrl.u32 %v2146, 7
        %v2148 = vsub.s32 %v2145, %v2147
        %v2149 = vrot.slane %v2135, %v2148
        %v2150 = vcombine.low %v1743, %v1807
        %v2151 = vcombine.high %v1743, %v1807
        %v2153 = vunpack.c.l.s4 1983009808
        %v2154 = vunpack.c.0.s8 %v2153
        %v2155 = vlaneseq
        %v2156 = vshrl.u32 %v2155, 7
        %v2157 = vsub.s32 %v2154, %v2156
        %v2158 = vrot.slane %v2150, %v2157
        %v2160 = vunpack.c.l.s4 1983009808
        %v2161 = vunpack.c.0.s8 %v2160
        %v2162 = vlaneseq
        %v2163 = vshrl.u32 %v2162, 7
        %v2164 = vsub.s32 %v2161, %v2163
        %v2165 = vrot.slane %v2151, %v2164
        %v2166 = vcombine.low %v2110, %v2126
        %v2167 = vcombine.high %v2110, %v2126
        %v2169 = vunpack.c.l.s4 1934713408
        %v2170 = vunpack.c.0.s8 %v2169
        %v2171 = vlaneseq
        %v2172 = vshrl.u32 %v2171, 7
        %v2173 = vsub.s32 %v2170, %v2172
        %v2174 = vrot.slane %v2166, %v2173
        %v2176 = vunpack.c.l.s4 1934713408
        %v2177 = vunpack.c.0.s8 %v2176
        %v2178 = vlaneseq
        %v2179 = vshrl.u32 %v2178, 7
        %v2180 = vsub.s32 %v2177, %v2179
        %v2181 = vrot.slane %v2167, %v2180
        %v2182 = vcombine.low %v2117, %v2133
        %v2183 = vcombine.high %v2117, %v2133
        %v2185 = vunpack.c.l.s4 1934713408
        %v2186 = vunpack.c.0.s8 %v2185
        %v2187 = vlaneseq
        %v2188 = vshrl.u32 %v2187, 7
        %v2189 = vsub.s32 %v2186, %v2188
        %v2190 = vrot.slane %v2182, %v2189
        %v2192 = vunpack.c.l.s4 1934713408
        %v2193 = vunpack.c.0.s8 %v2192
        %v2194 = vlaneseq
        %v2195 = vshrl.u32 %v2194, 7
        %v2196 = vsub.s32 %v2193, %v2195
        %v2197 = vrot.slane %v2183, %v2196
        %v2198 = vcombine.low %v2142, %v2158
        %v2199 = vcombine.high %v2142, %v2158
        %v2201 = vunpack.c.l.s4 1934713408
        %v2202 = vunpack.c.0.s8 %v2201
        %v2203 = vlaneseq
        %v2204 = vshrl.u32 %v2203, 7
        %v2205 = vsub.s32 %v2202, %v2204
        %v2206 = vrot.slane %v2198, %v2205
        %v2208 = vunpack.c.l.s4 1934713408
        %v2209 = vunpack.c.0.s8 %v2208
        %v2210 = vlaneseq
        %v2211 = vshrl.u32 %v2210, 7
        %v2212 = vsub.s32 %v2209, %v2211
        %v2213 = vrot.slane %v2199, %v2212
        %v2214 = vcombine.low %v2149, %v2165
        %v2215 = vcombine.high %v2149, %v2165
        %v2217 = vunpack.c.l.s4 1934713408
        %v2218 = vunpack.c.0.s8 %v2217
        %v2219 = vlaneseq
        %v2220 = vshrl.u32 %v2219, 7
        %v2221 = vsub.s32 %v2218, %v2220
        %v2222 = vrot.slane %v2214, %v2221
        %v2224 = vunpack.c.l.s4 1934713408
        %v2225 = vunpack.c.0.s8 %v2224
        %v2226 = vlaneseq
        %v2227 = vshrl.u32 %v2226, 7
        %v2228 = vsub.s32 %v2225, %v2227
        %v2229 = vrot.slane %v2215, %v2228
        %v2230 = vcombine.low %v2174, %v2206
        %v2231 = vcombine.high %v2174, %v2206
        %v2232 = vcombine.low %v2181, %v2213
        %v2233 = vcombine.high %v2181, %v2213
        %v2234 = vcombine.low %v2190, %v2222
        %v2235 = vcombine.high %v2190, %v2222
        %v2236 = vcombine.low %v2197, %v2229
        %v2237 = vcombine.high %v2197, %v2229
        %v2238 = vcombine.low %v1599, %v1663
        %v2239 = vcombine.high %v1599, %v1663
        %v2241 = vunpack.c.l.s4 1983009808
        %v2242 = vunpack.c.0.s8 %v2241
        %v2243 = vlaneseq
        %v2244 = vshrl.u32 %v2243, 7
        %v2245 = vsub.s32 %v2242, %v2244
        %v2246 = vrot.slane %v2238, %v2245
        %v2248 = vunpack.c.l.s4 1983009808
        %v2249 = vunpack.c.0.s8 %v2248
        %v2250 = vlaneseq
        %v2251 = vshrl.u32 %v2250, 7
        %v2252 = vsub.s32 %v2249, %v2251
        %v2253 = vrot.slane %v2239, %v2252
        %v2254 = vcombine.low %v1631, %v1695
        %v2255 = vcombine.high %v1631, %v1695
        %v2257 = vunpack.c.l.s4 1983009808
        %v2258 = vunpack.c.0.s8 %v2257
        %v2259 = vlaneseq
        %v2260 = vshrl.u32 %v2259, 7
        %v2261 = vsub.s32 %v2258, %v2260
        %v2262 = vrot.slane %v2254, %v2261
        %v2264 = vunpack.c.l.s4 1983009808
        %v2265 = vunpack.c.0.s8 %v2264
        %v2266 = vlaneseq
        %v2267 = vshrl.u32 %v2266, 7
        %v2268 = vsub.s32 %v2265, %v2267
        %v2269 = vrot.slane %v2255, %v2268
        %v2270 = vcombine.low %v1727, %v1791
        %v2271 = vcombine.high %v1727, %v1791
        %v2273 = vunpack.c.l.s4 1983009808
        %v2274 = vunpack.c.0.s8 %v2273
        %v2275 = vlaneseq
        %v2276 = vshrl.u32 %v2275, 7
        %v2277 = vsub.s32 %v2274, %v2276
        %v2278 = vrot.slane %v2270, %v2277
        %v2280 = vunpack.c.l.s4 1983009808
        %v2281 = vunpack.c.0.s8 %v2280
        %v2282 = vlaneseq
        %v2283 = vshrl.u32 %v2282, 7
        %v2284 = vsub.s32 %v2281, %v2283
        %v2285 = vrot.slane %v2271, %v2284
        %v2286 = vcombine.low %v1759, %v1823
        %v2287 = vcombine.high %v1759, %v1823
        %v2289 = vunpack.c.l.s4 1983009808
        %v2290 = vunpack.c.0.s8 %v2289
        %v2291 = vlaneseq
        %v2292 = vshrl.u32 %v2291, 7
        %v2293 = vsub.s32 %v2290, %v2292
        %v2294 = vrot.slane %v2286, %v2293
        %v2296 = vunpack.c.l.s4 1983009808
        %v2297 = vunpack.c.0.s8 %v2296
        %v2298 = vlaneseq
        %v2299 = vshrl.u32 %v2298, 7
        %v2300 = vsub.s32 %v2297, %v2299
        %v2301 = vrot.slane %v2287, %v2300
        %v2302 = vcombine.low %v2246, %v2262
        %v2303 = vcombine.high %v2246, %v2262
        %v2305 = vunpack.c.l.s4 1934713408
        %v2306 = vunpack.c.0.s8 %v2305
        %v2307 = vlaneseq
        %v2308 = vshrl.u32 %v2307, 7
        %v2309 = vsub.s32 %v2306, %v2308
        %v2310 = vrot.slane %v2302, %v2309
        %v2312 = vunpack.c.l.s4 1934713408
        %v2313 = vunpack.c.0.s8 %v2312
        %v2314 = vlaneseq
        %v2315 = vshrl.u32 %v2314, 7
        %v2316 = vsub.s32 %v2313, %v2315
        %v2317 = vrot.slane %v2303, %v2316
        %v2318 = vcombine.low %v2253, %v2269
        %v2319 = vcombine.high %v2253, %v2269
        %v2321 = vunpack.c.l.s4 1934713408
        %v2322 = vunpack.c.0.s8 %v2321
        %v2323 = vlaneseq
        %v2324 = vshrl.u32 %v2323, 7
        %v2325 = vsub.s32 %v2322, %v2324
        %v2326 = vrot.slane %v2318, %v2325
        %v2328 = vunpack.c.l.s4 1934713408
        %v2329 = vunpack.c.0.s8 %v2328
        %v2330 = vlaneseq
        %v2331 = vshrl.u32 %v2330, 7
        %v2332 = vsub.s32 %v2329, %v2331
        %v2333 = vrot.slane %v2319, %v2332
        %v2334 = vcombine.low %v2278, %v2294
        %v2335 = vcombine.high %v2278, %v2294
        %v2337 = vunpack.c.l.s4 1934713408
        %v2338 = vunpack.c.0.s8 %v2337
        %v2339 = vlaneseq
        %v2340 = vshrl.u32 %v2339, 7
        %v2341 = vsub.s32 %v2338, %v2340
        %v2342 = vrot.slane %v2334, %v2341
        %v2344 = vunpack.c.l.s4 1934713408
        %v2345 = vunpack.c.0.s8 %v2344
        %v2346 = vlaneseq
        %v2347 = vshrl.u32 %v2346, 7
        %v2348 = vsub.s32 %v2345, %v2347
        %v2349 = vrot.slane %v2335, %v2348
        %v2350 = vcombine.low %v2285, %v2301
        %v2351 = vcombine.high %v2285, %v2301
        %v2353 = vunpack.c.l.s4 1934713408
        %v2354 = vunpack.c.0.s8 %v2353
        %v2355 = vlaneseq
        %v2356 = vshrl.u32 %v2355, 7
        %v2357 = vsub.s32 %v2354, %v2356
        %v2358 = vrot.slane %v2350, %v2357
        %v2360 = vunpack.c.l.s4 1934713408
        %v2361 = vunpack.c.0.s8 %v2360
        %v2362 = vlaneseq
        %v2363 = vshrl.u32 %v2362, 7
        %v2364 = vsub.s32 %v2361, %v2363
        %v2365 = vrot.slane %v2351, %v2364
        %v2366 = vcombine.low %v2310, %v2342
        %v2367 = vcombine.high %v2310, %v2342
        %v2368 = vcombine.low %v2317, %v2349
        %v2369 = vcombine.high %v2317, %v2349
        %v2370 = vcombine.low %v2326, %v2358
        %v2371 = vcombine.high %v2326, %v2358
        %v2372 = vcombine.low %v2333, %v2365
        %v2373 = vcombine.high %v2333, %v2365
        %v2376 = vpack.i.b16 %v2094, %v1958
        %v2378 = vshrl.u32 %v1958, 16
        %v2379 = vshrl.u32 %v2094, 16
        %v2380 = vpack.i.b16 %v2379, %v2378
        %v2384 = vpack.i.b16 %v2095, %v1959
        %v2386 = vshrl.u32 %v1959, 16
        %v2387 = vshrl.u32 %v2095, 16
        %v2388 = vpack.i.b16 %v2387, %v2386
        %v2392 = vpack.i.b16 %v2096, %v1960
        %v2394 = vshrl.u32 %v1960, 16
        %v2395 = vshrl.u32 %v2096, 16
        %v2396 = vpack.i.b16 %v2395, %v2394
        %v2400 = vpack.i.b16 %v2097, %v1961
        %v2402 = vshrl.u32 %v1961, 16
        %v2403 = vshrl.u32 %v2097, 16
        %v2404 = vpack.i.b16 %v2403, %v2402
        %v2408 = vpack.i.b16 %v2098, %v1962
        %v2410 = vshrl.u32 %v1962, 16
        %v2411 = vshrl.u32 %v2098, 16
        %v2412 = vpack.i.b16 %v2411, %v2410
        %v2416 = vpack.i.b16 %v2099, %v1963
        %v2418 = vshrl.u32 %v1963, 16
        %v2419 = vshrl.u32 %v2099, 16
        %v2420 = vpack.i.b16 %v2419, %v2418
        %v2424 = vpack.i.b16 %v2100, %v1964
        %v2426 = vshrl.u32 %v1964, 16
        %v2427 = vshrl.u32 %v2100, 16
        %v2428 = vpack.i.b16 %v2427, %v2426
        %v2432 = vpack.i.b16 %v2101, %v1965
        %v2434 = vshrl.u32 %v1965, 16
        %v2435 = vshrl.u32 %v2101, 16
        %v2436 = vpack.i.b16 %v2435, %v2434
        %v2440 = vpack.i.b16 %v2366, %v2230
        %v2442 = vshrl.u32 %v2230, 16
        %v2443 = vshrl.u32 %v2366, 16
        %v2444 = vpack.i.b16 %v2443, %v2442
        %v2448 = vpack.i.b16 %v2367, %v2231
        %v2450 = vshrl.u32 %v2231, 16
        %v2451 = vshrl.u32 %v2367, 16
        %v2452 = vpack.i.b16 %v2451, %v2450
        %v2456 = vpack.i.b16 %v2368, %v2232
        %v2458 = vshrl.u32 %v2232, 16
        %v2459 = vshrl.u32 %v2368, 16
        %v2460 = vpack.i.b16 %v2459, %v2458
        %v2464 = vpack.i.b16 %v2369, %v2233
        %v2466 = vshrl.u32 %v2233, 16
        %v2467 = vshrl.u32 %v2369, 16
        %v2468 = vpack.i.b16 %v2467, %v2466
        %v2472 = vpack.i.b16 %v2370, %v2234
        %v2474 = vshrl.u32 %v2234, 16
        %v2475 = vshrl.u32 %v2370, 16
        %v2476 = vpack.i.b16 %v2475, %v2474
        %v2480 = vpack.i.b16 %v2371, %v2235
        %v2482 = vshrl.u32 %v2235, 16
        %v2483 = vshrl.u32 %v2371, 16
        %v2484 = vpack.i.b16 %v2483, %v2482
        %v2488 = vpack.i.b16 %v2372, %v2236
        %v2490 = vshrl.u32 %v2236, 16
        %v2491 = vshrl.u32 %v2372, 16
        %v2492 = vpack.i.b16 %v2491, %v2490
        %v2496 = vpack.i.b16 %v2373, %v2237
        %v2498 = vshrl.u32 %v2237, 16
        %v2499 = vshrl.u32 %v2373, 16
        %v2500 = vpack.i.b16 %v2499, %v2498
        %2502 = vxpose.xlu0.c.b16.start [1/8] %v2376, 128
        %2503 = vxpose.xlu0.c.b16.cont [2/8] 0, 128
        %2504 = vxpose.xlu0.c.b16.cont [3/8] 0, 128
        %2505 = vxpose.xlu0.c.b16.cont [4/8] 0, 128
        %2506 = vxpose.xlu0.c.b16.cont [5/8] 0, 128
        %2507 = vxpose.xlu0.c.b16.cont [6/8] 0, 128
        %2508 = vxpose.xlu0.c.b16.cont [7/8] 0, 128
        %2509 = vxpose.xlu0.c.b16.end [8/8] 0, 128
        %v2510 = vpop.trf.xlu0
        %v2511 = vpop.trf.xlu0
        %v2512 = vpop.trf.xlu0
        %v2513 = vpop.trf.xlu0
        %v2514 = vpop.trf.xlu0
        %v2515 = vpop.trf.xlu0
        %v2516 = vpop.trf.xlu0
        %v2517 = vpop.trf.xlu0
        %2518 = vxpose.xlu0.c.b16.start [1/8] %v2380, 128
        %2519 = vxpose.xlu0.c.b16.cont [2/8] 0, 128
        %2520 = vxpose.xlu0.c.b16.cont [3/8] 0, 128
        %2521 = vxpose.xlu0.c.b16.cont [4/8] 0, 128
        %2522 = vxpose.xlu0.c.b16.cont [5/8] 0, 128
        %2523 = vxpose.xlu0.c.b16.cont [6/8] 0, 128
        %2524 = vxpose.xlu0.c.b16.cont [7/8] 0, 128
        %2525 = vxpose.xlu0.c.b16.end [8/8] 0, 128
        %v2526 = vpop.trf.xlu0
        %v2527 = vpop.trf.xlu0
        %v2528 = vpop.trf.xlu0
        %v2529 = vpop.trf.xlu0
        %v2530 = vpop.trf.xlu0
        %v2531 = vpop.trf.xlu0
        %v2532 = vpop.trf.xlu0
        %v2533 = vpop.trf.xlu0
        %2534 = vxpose.xlu0.c.b16.start [1/8] %v2384, 128
        %2535 = vxpose.xlu0.c.b16.cont [2/8] 0, 128
        %2536 = vxpose.xlu0.c.b16.cont [3/8] 0, 128
        %2537 = vxpose.xlu0.c.b16.cont [4/8] 0, 128
        %2538 = vxpose.xlu0.c.b16.cont [5/8] 0, 128
        %2539 = vxpose.xlu0.c.b16.cont [6/8] 0, 128
        %2540 = vxpose.xlu0.c.b16.cont [7/8] 0, 128
        %2541 = vxpose.xlu0.c.b16.end [8/8] 0, 128
        %v2542 = vpop.trf.xlu0
        %v2543 = vpop.trf.xlu0
        %v2544 = vpop.trf.xlu0
        %v2545 = vpop.trf.xlu0
        %v2546 = vpop.trf.xlu0
        %v2547 = vpop.trf.xlu0
        %v2548 = vpop.trf.xlu0
        %v2549 = vpop.trf.xlu0
        %2550 = vxpose.xlu0.c.b16.start [1/8] %v2388, 128
        %2551 = vxpose.xlu0.c.b16.cont [2/8] 0, 128
        %2552 = vxpose.xlu0.c.b16.cont [3/8] 0, 128
        %2553 = vxpose.xlu0.c.b16.cont [4/8] 0, 128
        %2554 = vxpose.xlu0.c.b16.cont [5/8] 0, 128
        %2555 = vxpose.xlu0.c.b16.cont [6/8] 0, 128
        %2556 = vxpose.xlu0.c.b16.cont [7/8] 0, 128
        %2557 = vxpose.xlu0.c.b16.end [8/8] 0, 128
        %v2558 = vpop.trf.xlu0
        %v2559 = vpop.trf.xlu0
        %v2560 = vpop.trf.xlu0
        %v2561 = vpop.trf.xlu0
        %v2562 = vpop.trf.xlu0
        %v2563 = vpop.trf.xlu0
        %v2564 = vpop.trf.xlu0
        %v2565 = vpop.trf.xlu0
        %2566 = vxpose.xlu0.c.b16.start [1/8] %v2392, 128
        %2567 = vxpose.xlu0.c.b16.cont [2/8] 0, 128
        %2568 = vxpose.xlu0.c.b16.cont [3/8] 0, 128
        %2569 = vxpose.xlu0.c.b16.cont [4/8] 0, 128
        %2570 = vxpose.xlu0.c.b16.cont [5/8] 0, 128
        %2571 = vxpose.xlu0.c.b16.cont [6/8] 0, 128
        %2572 = vxpose.xlu0.c.b16.cont [7/8] 0, 128
        %2573 = vxpose.xlu0.c.b16.end [8/8] 0, 128
        %v2574 = vpop.trf.xlu0
        %v2575 = vpop.trf.xlu0
        %v2576 = vpop.trf.xlu0
        %v2577 = vpop.trf.xlu0
        %v2578 = vpop.trf.xlu0
        %v2579 = vpop.trf.xlu0
        %v2580 = vpop.trf.xlu0
        %v2581 = vpop.trf.xlu0
        %2582 = vxpose.xlu0.c.b16.start [1/8] %v2396, 128
        %2583 = vxpose.xlu0.c.b16.cont [2/8] 0, 128
        %2584 = vxpose.xlu0.c.b16.cont [3/8] 0, 128
        %2585 = vxpose.xlu0.c.b16.cont [4/8] 0, 128
        %2586 = vxpose.xlu0.c.b16.cont [5/8] 0, 128
        %2587 = vxpose.xlu0.c.b16.cont [6/8] 0, 128
        %2588 = vxpose.xlu0.c.b16.cont [7/8] 0, 128
        %2589 = vxpose.xlu0.c.b16.end [8/8] 0, 128
        %v2590 = vpop.trf.xlu0
        %v2591 = vpop.trf.xlu0
        %v2592 = vpop.trf.xlu0
        %v2593 = vpop.trf.xlu0
        %v2594 = vpop.trf.xlu0
        %v2595 = vpop.trf.xlu0
        %v2596 = vpop.trf.xlu0
        %v2597 = vpop.trf.xlu0
        %2598 = vxpose.xlu0.c.b16.start [1/8] %v2400, 128
        %2599 = vxpose.xlu0.c.b16.cont [2/8] 0, 128
        %2600 = vxpose.xlu0.c.b16.cont [3/8] 0, 128
        %2601 = vxpose.xlu0.c.b16.cont [4/8] 0, 128
        %2602 = vxpose.xlu0.c.b16.cont [5/8] 0, 128
        %2603 = vxpose.xlu0.c.b16.cont [6/8] 0, 128
        %2604 = vxpose.xlu0.c.b16.cont [7/8] 0, 128
        %2605 = vxpose.xlu0.c.b16.end [8/8] 0, 128
        %v2606 = vpop.trf.xlu0
        %v2607 = vpop.trf.xlu0
        %v2608 = vpop.trf.xlu0
        %v2609 = vpop.trf.xlu0
        %v2610 = vpop.trf.xlu0
        %v2611 = vpop.trf.xlu0
        %v2612 = vpop.trf.xlu0
        %v2613 = vpop.trf.xlu0
        %2614 = vxpose.xlu0.c.b16.start [1/8] %v2404, 128
        %2615 = vxpose.xlu0.c.b16.cont [2/8] 0, 128
        %2616 = vxpose.xlu0.c.b16.cont [3/8] 0, 128
        %2617 = vxpose.xlu0.c.b16.cont [4/8] 0, 128
        %2618 = vxpose.xlu0.c.b16.cont [5/8] 0, 128
        %2619 = vxpose.xlu0.c.b16.cont [6/8] 0, 128
        %2620 = vxpose.xlu0.c.b16.cont [7/8] 0, 128
        %2621 = vxpose.xlu0.c.b16.end [8/8] 0, 128
        %v2622 = vpop.trf.xlu0
        %v2623 = vpop.trf.xlu0
        %v2624 = vpop.trf.xlu0
        %v2625 = vpop.trf.xlu0
        %v2626 = vpop.trf.xlu0
        %v2627 = vpop.trf.xlu0
        %v2628 = vpop.trf.xlu0
        %v2629 = vpop.trf.xlu0
        %2630 = vxpose.xlu0.c.b16.start [1/8] %v2408, 128
        %2631 = vxpose.xlu0.c.b16.cont [2/8] 0, 128
        %2632 = vxpose.xlu0.c.b16.cont [3/8] 0, 128
        %2633 = vxpose.xlu0.c.b16.cont [4/8] 0, 128
        %2634 = vxpose.xlu0.c.b16.cont [5/8] 0, 128
        %2635 = vxpose.xlu0.c.b16.cont [6/8] 0, 128
        %2636 = vxpose.xlu0.c.b16.cont [7/8] 0, 128
        %2637 = vxpose.xlu0.c.b16.end [8/8] 0, 128
        %v2638 = vpop.trf.xlu0
        %v2639 = vpop.trf.xlu0
        %v2640 = vpop.trf.xlu0
        %v2641 = vpop.trf.xlu0
        %v2642 = vpop.trf.xlu0
        %v2643 = vpop.trf.xlu0
        %v2644 = vpop.trf.xlu0
        %v2645 = vpop.trf.xlu0
        %2646 = vxpose.xlu0.c.b16.start [1/8] %v2412, 128
        %2647 = vxpose.xlu0.c.b16.cont [2/8] 0, 128
        %2648 = vxpose.xlu0.c.b16.cont [3/8] 0, 128
        %2649 = vxpose.xlu0.c.b16.cont [4/8] 0, 128
        %2650 = vxpose.xlu0.c.b16.cont [5/8] 0, 128
        %2651 = vxpose.xlu0.c.b16.cont [6/8] 0, 128
        %2652 = vxpose.xlu0.c.b16.cont [7/8] 0, 128
        %2653 = vxpose.xlu0.c.b16.end [8/8] 0, 128
        %v2654 = vpop.trf.xlu0
        %v2655 = vpop.trf.xlu0
        %v2656 = vpop.trf.xlu0
        %v2657 = vpop.trf.xlu0
        %v2658 = vpop.trf.xlu0
        %v2659 = vpop.trf.xlu0
        %v2660 = vpop.trf.xlu0
        %v2661 = vpop.trf.xlu0
        %2662 = vxpose.xlu0.c.b16.start [1/8] %v2416, 128
        %2663 = vxpose.xlu0.c.b16.cont [2/8] 0, 128
        %2664 = vxpose.xlu0.c.b16.cont [3/8] 0, 128
        %2665 = vxpose.xlu0.c.b16.cont [4/8] 0, 128
        %2666 = vxpose.xlu0.c.b16.cont [5/8] 0, 128
        %2667 = vxpose.xlu0.c.b16.cont [6/8] 0, 128
        %2668 = vxpose.xlu0.c.b16.cont [7/8] 0, 128
        %2669 = vxpose.xlu0.c.b16.end [8/8] 0, 128
        %v2670 = vpop.trf.xlu0
        %v2671 = vpop.trf.xlu0
        %v2672 = vpop.trf.xlu0
        %v2673 = vpop.trf.xlu0
        %v2674 = vpop.trf.xlu0
        %v2675 = vpop.trf.xlu0
        %v2676 = vpop.trf.xlu0
        %v2677 = vpop.trf.xlu0
        %2678 = vxpose.xlu0.c.b16.start [1/8] %v2420, 128
        %2679 = vxpose.xlu0.c.b16.cont [2/8] 0, 128
        %2680 = vxpose.xlu0.c.b16.cont [3/8] 0, 128
        %2681 = vxpose.xlu0.c.b16.cont [4/8] 0, 128
        %2682 = vxpose.xlu0.c.b16.cont [5/8] 0, 128
        %2683 = vxpose.xlu0.c.b16.cont [6/8] 0, 128
        %2684 = vxpose.xlu0.c.b16.cont [7/8] 0, 128
        %2685 = vxpose.xlu0.c.b16.end [8/8] 0, 128
        %v2686 = vpop.trf.xlu0
        %v2687 = vpop.trf.xlu0
        %v2688 = vpop.trf.xlu0
        %v2689 = vpop.trf.xlu0
        %v2690 = vpop.trf.xlu0
        %v2691 = vpop.trf.xlu0
        %v2692 = vpop.trf.xlu0
        %v2693 = vpop.trf.xlu0
        %2694 = vxpose.xlu0.c.b16.start [1/8] %v2424, 128
        %2695 = vxpose.xlu0.c.b16.cont [2/8] 0, 128
        %2696 = vxpose.xlu0.c.b16.cont [3/8] 0, 128
        %2697 = vxpose.xlu0.c.b16.cont [4/8] 0, 128
        %2698 = vxpose.xlu0.c.b16.cont [5/8] 0, 128
        %2699 = vxpose.xlu0.c.b16.cont [6/8] 0, 128
        %2700 = vxpose.xlu0.c.b16.cont [7/8] 0, 128
        %2701 = vxpose.xlu0.c.b16.end [8/8] 0, 128
        %v2702 = vpop.trf.xlu0
        %v2703 = vpop.trf.xlu0
        %v2704 = vpop.trf.xlu0
        %v2705 = vpop.trf.xlu0
        %v2706 = vpop.trf.xlu0
        %v2707 = vpop.trf.xlu0
        %v2708 = vpop.trf.xlu0
        %v2709 = vpop.trf.xlu0
        %2710 = vxpose.xlu0.c.b16.start [1/8] %v2428, 128
        %2711 = vxpose.xlu0.c.b16.cont [2/8] 0, 128
        %2712 = vxpose.xlu0.c.b16.cont [3/8] 0, 128
        %2713 = vxpose.xlu0.c.b16.cont [4/8] 0, 128
        %2714 = vxpose.xlu0.c.b16.cont [5/8] 0, 128
        %2715 = vxpose.xlu0.c.b16.cont [6/8] 0, 128
        %2716 = vxpose.xlu0.c.b16.cont [7/8] 0, 128
        %2717 = vxpose.xlu0.c.b16.end [8/8] 0, 128
        %v2718 = vpop.trf.xlu0
        %v2719 = vpop.trf.xlu0
        %v2720 = vpop.trf.xlu0
        %v2721 = vpop.trf.xlu0
        %v2722 = vpop.trf.xlu0
        %v2723 = vpop.trf.xlu0
        %v2724 = vpop.trf.xlu0
        %v2725 = vpop.trf.xlu0
        %2726 = vxpose.xlu0.c.b16.start [1/8] %v2432, 128
        %2727 = vxpose.xlu0.c.b16.cont [2/8] 0, 128
        %2728 = vxpose.xlu0.c.b16.cont [3/8] 0, 128
        %2729 = vxpose.xlu0.c.b16.cont [4/8] 0, 128
        %2730 = vxpose.xlu0.c.b16.cont [5/8] 0, 128
        %2731 = vxpose.xlu0.c.b16.cont [6/8] 0, 128
        %2732 = vxpose.xlu0.c.b16.cont [7/8] 0, 128
        %2733 = vxpose.xlu0.c.b16.end [8/8] 0, 128
        %v2734 = vpop.trf.xlu0
        %v2735 = vpop.trf.xlu0
        %v2736 = vpop.trf.xlu0
        %v2737 = vpop.trf.xlu0
        %v2738 = vpop.trf.xlu0
        %v2739 = vpop.trf.xlu0
        %v2740 = vpop.trf.xlu0
        %v2741 = vpop.trf.xlu0
        %2742 = vxpose.xlu0.c.b16.start [1/8] %v2436, 128
        %2743 = vxpose.xlu0.c.b16.cont [2/8] 0, 128
        %2744 = vxpose.xlu0.c.b16.cont [3/8] 0, 128
        %2745 = vxpose.xlu0.c.b16.cont [4/8] 0, 128
        %2746 = vxpose.xlu0.c.b16.cont [5/8] 0, 128
        %2747 = vxpose.xlu0.c.b16.cont [6/8] 0, 128
        %2748 = vxpose.xlu0.c.b16.cont [7/8] 0, 128
        %2749 = vxpose.xlu0.c.b16.end [8/8] 0, 128
        %v2750 = vpop.trf.xlu0
        %v2751 = vpop.trf.xlu0
        %v2752 = vpop.trf.xlu0
        %v2753 = vpop.trf.xlu0
        %v2754 = vpop.trf.xlu0
        %v2755 = vpop.trf.xlu0
        %v2756 = vpop.trf.xlu0
        %v2757 = vpop.trf.xlu0
        %2758 = vxpose.xlu0.c.b16.start [1/8] %v2440, 128
        %2759 = vxpose.xlu0.c.b16.cont [2/8] 0, 128
        %2760 = vxpose.xlu0.c.b16.cont [3/8] 0, 128
        %2761 = vxpose.xlu0.c.b16.cont [4/8] 0, 128
        %2762 = vxpose.xlu0.c.b16.cont [5/8] 0, 128
        %2763 = vxpose.xlu0.c.b16.cont [6/8] 0, 128
        %2764 = vxpose.xlu0.c.b16.cont [7/8] 0, 128
        %2765 = vxpose.xlu0.c.b16.end [8/8] 0, 128
        %v2766 = vpop.trf.xlu0
        %v2767 = vpop.trf.xlu0
        %v2768 = vpop.trf.xlu0
        %v2769 = vpop.trf.xlu0
        %v2770 = vpop.trf.xlu0
        %v2771 = vpop.trf.xlu0
        %v2772 = vpop.trf.xlu0
        %v2773 = vpop.trf.xlu0
        %2774 = vxpose.xlu0.c.b16.start [1/8] %v2444, 128
        %2775 = vxpose.xlu0.c.b16.cont [2/8] 0, 128
        %2776 = vxpose.xlu0.c.b16.cont [3/8] 0, 128
        %2777 = vxpose.xlu0.c.b16.cont [4/8] 0, 128
        %2778 = vxpose.xlu0.c.b16.cont [5/8] 0, 128
        %2779 = vxpose.xlu0.c.b16.cont [6/8] 0, 128
        %2780 = vxpose.xlu0.c.b16.cont [7/8] 0, 128
        %2781 = vxpose.xlu0.c.b16.end [8/8] 0, 128
        %v2782 = vpop.trf.xlu0
        %v2783 = vpop.trf.xlu0
        %v2784 = vpop.trf.xlu0
        %v2785 = vpop.trf.xlu0
        %v2786 = vpop.trf.xlu0
        %v2787 = vpop.trf.xlu0
        %v2788 = vpop.trf.xlu0
        %v2789 = vpop.trf.xlu0
        %2790 = vxpose.xlu0.c.b16.start [1/8] %v2448, 128
        %2791 = vxpose.xlu0.c.b16.cont [2/8] 0, 128
        %2792 = vxpose.xlu0.c.b16.cont [3/8] 0, 128
        %2793 = vxpose.xlu0.c.b16.cont [4/8] 0, 128
        %2794 = vxpose.xlu0.c.b16.cont [5/8] 0, 128
        %2795 = vxpose.xlu0.c.b16.cont [6/8] 0, 128
        %2796 = vxpose.xlu0.c.b16.cont [7/8] 0, 128
        %2797 = vxpose.xlu0.c.b16.end [8/8] 0, 128
        %v2798 = vpop.trf.xlu0
        %v2799 = vpop.trf.xlu0
        %v2800 = vpop.trf.xlu0
        %v2801 = vpop.trf.xlu0
        %v2802 = vpop.trf.xlu0
        %v2803 = vpop.trf.xlu0
        %v2804 = vpop.trf.xlu0
        %v2805 = vpop.trf.xlu0
        %2806 = vxpose.xlu0.c.b16.start [1/8] %v2452, 128
        %2807 = vxpose.xlu0.c.b16.cont [2/8] 0, 128
        %2808 = vxpose.xlu0.c.b16.cont [3/8] 0, 128
        %2809 = vxpose.xlu0.c.b16.cont [4/8] 0, 128
        %2810 = vxpose.xlu0.c.b16.cont [5/8] 0, 128
        %2811 = vxpose.xlu0.c.b16.cont [6/8] 0, 128
        %2812 = vxpose.xlu0.c.b16.cont [7/8] 0, 128
        %2813 = vxpose.xlu0.c.b16.end [8/8] 0, 128
        %v2814 = vpop.trf.xlu0
        %v2815 = vpop.trf.xlu0
        %v2816 = vpop.trf.xlu0
        %v2817 = vpop.trf.xlu0
        %v2818 = vpop.trf.xlu0
        %v2819 = vpop.trf.xlu0
        %v2820 = vpop.trf.xlu0
        %v2821 = vpop.trf.xlu0
        %2822 = vxpose.xlu0.c.b16.start [1/8] %v2456, 128
        %2823 = vxpose.xlu0.c.b16.cont [2/8] 0, 128
        %2824 = vxpose.xlu0.c.b16.cont [3/8] 0, 128
        %2825 = vxpose.xlu0.c.b16.cont [4/8] 0, 128
        %2826 = vxpose.xlu0.c.b16.cont [5/8] 0, 128
        %2827 = vxpose.xlu0.c.b16.cont [6/8] 0, 128
        %2828 = vxpose.xlu0.c.b16.cont [7/8] 0, 128
        %2829 = vxpose.xlu0.c.b16.end [8/8] 0, 128
        %v2830 = vpop.trf.xlu0
        %v2831 = vpop.trf.xlu0
        %v2832 = vpop.trf.xlu0
        %v2833 = vpop.trf.xlu0
        %v2834 = vpop.trf.xlu0
        %v2835 = vpop.trf.xlu0
        %v2836 = vpop.trf.xlu0
        %v2837 = vpop.trf.xlu0
        %2838 = vxpose.xlu0.c.b16.start [1/8] %v2460, 128
        %2839 = vxpose.xlu0.c.b16.cont [2/8] 0, 128
        %2840 = vxpose.xlu0.c.b16.cont [3/8] 0, 128
        %2841 = vxpose.xlu0.c.b16.cont [4/8] 0, 128
        %2842 = vxpose.xlu0.c.b16.cont [5/8] 0, 128
        %2843 = vxpose.xlu0.c.b16.cont [6/8] 0, 128
        %2844 = vxpose.xlu0.c.b16.cont [7/8] 0, 128
        %2845 = vxpose.xlu0.c.b16.end [8/8] 0, 128
        %v2846 = vpop.trf.xlu0
        %v2847 = vpop.trf.xlu0
        %v2848 = vpop.trf.xlu0
        %v2849 = vpop.trf.xlu0
        %v2850 = vpop.trf.xlu0
        %v2851 = vpop.trf.xlu0
        %v2852 = vpop.trf.xlu0
        %v2853 = vpop.trf.xlu0
        %2854 = vxpose.xlu0.c.b16.start [1/8] %v2464, 128
        %2855 = vxpose.xlu0.c.b16.cont [2/8] 0, 128
        %2856 = vxpose.xlu0.c.b16.cont [3/8] 0, 128
        %2857 = vxpose.xlu0.c.b16.cont [4/8] 0, 128
        %2858 = vxpose.xlu0.c.b16.cont [5/8] 0, 128
        %2859 = vxpose.xlu0.c.b16.cont [6/8] 0, 128
        %2860 = vxpose.xlu0.c.b16.cont [7/8] 0, 128
        %2861 = vxpose.xlu0.c.b16.end [8/8] 0, 128
        %v2862 = vpop.trf.xlu0
        %v2863 = vpop.trf.xlu0
        %v2864 = vpop.trf.xlu0
        %v2865 = vpop.trf.xlu0
        %v2866 = vpop.trf.xlu0
        %v2867 = vpop.trf.xlu0
        %v2868 = vpop.trf.xlu0
        %v2869 = vpop.trf.xlu0
        %2870 = vxpose.xlu0.c.b16.start [1/8] %v2468, 128
        %2871 = vxpose.xlu0.c.b16.cont [2/8] 0, 128
        %2872 = vxpose.xlu0.c.b16.cont [3/8] 0, 128
        %2873 = vxpose.xlu0.c.b16.cont [4/8] 0, 128
        %2874 = vxpose.xlu0.c.b16.cont [5/8] 0, 128
        %2875 = vxpose.xlu0.c.b16.cont [6/8] 0, 128
        %2876 = vxpose.xlu0.c.b16.cont [7/8] 0, 128
        %2877 = vxpose.xlu0.c.b16.end [8/8] 0, 128
        %v2878 = vpop.trf.xlu0
        %v2879 = vpop.trf.xlu0
        %v2880 = vpop.trf.xlu0
        %v2881 = vpop.trf.xlu0
        %v2882 = vpop.trf.xlu0
        %v2883 = vpop.trf.xlu0
        %v2884 = vpop.trf.xlu0
        %v2885 = vpop.trf.xlu0
        %2886 = vxpose.xlu0.c.b16.start [1/8] %v2472, 128
        %2887 = vxpose.xlu0.c.b16.cont [2/8] 0, 128
        %2888 = vxpose.xlu0.c.b16.cont [3/8] 0, 128
        %2889 = vxpose.xlu0.c.b16.cont [4/8] 0, 128
        %2890 = vxpose.xlu0.c.b16.cont [5/8] 0, 128
        %2891 = vxpose.xlu0.c.b16.cont [6/8] 0, 128
        %2892 = vxpose.xlu0.c.b16.cont [7/8] 0, 128
        %2893 = vxpose.xlu0.c.b16.end [8/8] 0, 128
        %v2894 = vpop.trf.xlu0
        %v2895 = vpop.trf.xlu0
        %v2896 = vpop.trf.xlu0
        %v2897 = vpop.trf.xlu0
        %v2898 = vpop.trf.xlu0
        %v2899 = vpop.trf.xlu0
        %v2900 = vpop.trf.xlu0
        %v2901 = vpop.trf.xlu0
        %2902 = vxpose.xlu0.c.b16.start [1/8] %v2476, 128
        %2903 = vxpose.xlu0.c.b16.cont [2/8] 0, 128
        %2904 = vxpose.xlu0.c.b16.cont [3/8] 0, 128
        %2905 = vxpose.xlu0.c.b16.cont [4/8] 0, 128
        %2906 = vxpose.xlu0.c.b16.cont [5/8] 0, 128
        %2907 = vxpose.xlu0.c.b16.cont [6/8] 0, 128
        %2908 = vxpose.xlu0.c.b16.cont [7/8] 0, 128
        %2909 = vxpose.xlu0.c.b16.end [8/8] 0, 128
        %v2910 = vpop.trf.xlu0
        %v2911 = vpop.trf.xlu0
        %v2912 = vpop.trf.xlu0
        %v2913 = vpop.trf.xlu0
        %v2914 = vpop.trf.xlu0
        %v2915 = vpop.trf.xlu0
        %v2916 = vpop.trf.xlu0
        %v2917 = vpop.trf.xlu0
        %2918 = vxpose.xlu0.c.b16.start [1/8] %v2480, 128
        %2919 = vxpose.xlu0.c.b16.cont [2/8] 0, 128
        %2920 = vxpose.xlu0.c.b16.cont [3/8] 0, 128
        %2921 = vxpose.xlu0.c.b16.cont [4/8] 0, 128
        %2922 = vxpose.xlu0.c.b16.cont [5/8] 0, 128
        %2923 = vxpose.xlu0.c.b16.cont [6/8] 0, 128
        %2924 = vxpose.xlu0.c.b16.cont [7/8] 0, 128
        %2925 = vxpose.xlu0.c.b16.end [8/8] 0, 128
        %v2926 = vpop.trf.xlu0
        %v2927 = vpop.trf.xlu0
        %v2928 = vpop.trf.xlu0
        %v2929 = vpop.trf.xlu0
        %v2930 = vpop.trf.xlu0
        %v2931 = vpop.trf.xlu0
        %v2932 = vpop.trf.xlu0
        %v2933 = vpop.trf.xlu0
        %2934 = vxpose.xlu0.c.b16.start [1/8] %v2484, 128
        %2935 = vxpose.xlu0.c.b16.cont [2/8] 0, 128
        %2936 = vxpose.xlu0.c.b16.cont [3/8] 0, 128
        %2937 = vxpose.xlu0.c.b16.cont [4/8] 0, 128
        %2938 = vxpose.xlu0.c.b16.cont [5/8] 0, 128
        %2939 = vxpose.xlu0.c.b16.cont [6/8] 0, 128
        %2940 = vxpose.xlu0.c.b16.cont [7/8] 0, 128
        %2941 = vxpose.xlu0.c.b16.end [8/8] 0, 128
        %v2942 = vpop.trf.xlu0
        %v2943 = vpop.trf.xlu0
        %v2944 = vpop.trf.xlu0
        %v2945 = vpop.trf.xlu0
        %v2946 = vpop.trf.xlu0
        %v2947 = vpop.trf.xlu0
        %v2948 = vpop.trf.xlu0
        %v2949 = vpop.trf.xlu0
        %2950 = vxpose.xlu0.c.b16.start [1/8] %v2488, 128
        %2951 = vxpose.xlu0.c.b16.cont [2/8] 0, 128
        %2952 = vxpose.xlu0.c.b16.cont [3/8] 0, 128
        %2953 = vxpose.xlu0.c.b16.cont [4/8] 0, 128
        %2954 = vxpose.xlu0.c.b16.cont [5/8] 0, 128
        %2955 = vxpose.xlu0.c.b16.cont [6/8] 0, 128
        %2956 = vxpose.xlu0.c.b16.cont [7/8] 0, 128
        %2957 = vxpose.xlu0.c.b16.end [8/8] 0, 128
        %v2958 = vpop.trf.xlu0
        %v2959 = vpop.trf.xlu0
        %v2960 = vpop.trf.xlu0
        %v2961 = vpop.trf.xlu0
        %v2962 = vpop.trf.xlu0
        %v2963 = vpop.trf.xlu0
        %v2964 = vpop.trf.xlu0
        %v2965 = vpop.trf.xlu0
        %2966 = vxpose.xlu0.c.b16.start [1/8] %v2492, 128
        %2967 = vxpose.xlu0.c.b16.cont [2/8] 0, 128
        %2968 = vxpose.xlu0.c.b16.cont [3/8] 0, 128
        %2969 = vxpose.xlu0.c.b16.cont [4/8] 0, 128
        %2970 = vxpose.xlu0.c.b16.cont [5/8] 0, 128
        %2971 = vxpose.xlu0.c.b16.cont [6/8] 0, 128
        %2972 = vxpose.xlu0.c.b16.cont [7/8] 0, 128
        %2973 = vxpose.xlu0.c.b16.end [8/8] 0, 128
        %v2974 = vpop.trf.xlu0
        %v2975 = vpop.trf.xlu0
        %v2976 = vpop.trf.xlu0
        %v2977 = vpop.trf.xlu0
        %v2978 = vpop.trf.xlu0
        %v2979 = vpop.trf.xlu0
        %v2980 = vpop.trf.xlu0
        %v2981 = vpop.trf.xlu0
        %2982 = vxpose.xlu0.c.b16.start [1/8] %v2496, 128
        %2983 = vxpose.xlu0.c.b16.cont [2/8] 0, 128
        %2984 = vxpose.xlu0.c.b16.cont [3/8] 0, 128
        %2985 = vxpose.xlu0.c.b16.cont [4/8] 0, 128
        %2986 = vxpose.xlu0.c.b16.cont [5/8] 0, 128
        %2987 = vxpose.xlu0.c.b16.cont [6/8] 0, 128
        %2988 = vxpose.xlu0.c.b16.cont [7/8] 0, 128
        %2989 = vxpose.xlu0.c.b16.end [8/8] 0, 128
        %v2990 = vpop.trf.xlu0
        %v2991 = vpop.trf.xlu0
        %v2992 = vpop.trf.xlu0
        %v2993 = vpop.trf.xlu0
        %v2994 = vpop.trf.xlu0
        %v2995 = vpop.trf.xlu0
        %v2996 = vpop.trf.xlu0
        %v2997 = vpop.trf.xlu0
        %2998 = vxpose.xlu0.c.b16.start [1/8] %v2500, 128
        %2999 = vxpose.xlu0.c.b16.cont [2/8] 0, 128
        %3000 = vxpose.xlu0.c.b16.cont [3/8] 0, 128
        %3001 = vxpose.xlu0.c.b16.cont [4/8] 0, 128
        %3002 = vxpose.xlu0.c.b16.cont [5/8] 0, 128
        %3003 = vxpose.xlu0.c.b16.cont [6/8] 0, 128
        %3004 = vxpose.xlu0.c.b16.cont [7/8] 0, 128
        %3005 = vxpose.xlu0.c.b16.end [8/8] 0, 128
        %v3006 = vpop.trf.xlu0
        %v3007 = vpop.trf.xlu0
        %v3008 = vpop.trf.xlu0
        %v3009 = vpop.trf.xlu0
        %v3010 = vpop.trf.xlu0
        %v3011 = vpop.trf.xlu0
        %v3012 = vpop.trf.xlu0
        %v3013 = vpop.trf.xlu0
        %v3014 = vcombine.low %v2510, %v2574
        %v3016 = vunpack.c.l.s4 1983009808
        %v3017 = vunpack.c.0.s8 %v3016
        %v3018 = vlaneseq
        %v3019 = vshrl.u32 %v3018, 7
        %v3020 = vsub.s32 %v3017, %v3019
        %v3021 = vrot.slane %v3014, %v3020
        %v3022 = vcombine.low %v2542, %v2606
        %v3024 = vunpack.c.l.s4 1983009808
        %v3025 = vunpack.c.0.s8 %v3024
        %v3026 = vlaneseq
        %v3027 = vshrl.u32 %v3026, 7
        %v3028 = vsub.s32 %v3025, %v3027
        %v3029 = vrot.slane %v3022, %v3028
        %v3030 = vcombine.low %v2638, %v2702
        %v3032 = vunpack.c.l.s4 1983009808
        %v3033 = vunpack.c.0.s8 %v3032
        %v3034 = vlaneseq
        %v3035 = vshrl.u32 %v3034, 7
        %v3036 = vsub.s32 %v3033, %v3035
        %v3037 = vrot.slane %v3030, %v3036
        %v3038 = vcombine.low %v2670, %v2734
        %v3040 = vunpack.c.l.s4 1983009808
        %v3041 = vunpack.c.0.s8 %v3040
        %v3042 = vlaneseq
        %v3043 = vshrl.u32 %v3042, 7
        %v3044 = vsub.s32 %v3041, %v3043
        %v3045 = vrot.slane %v3038, %v3044
        %v3046 = vcombine.low %v3021, %v3029
        %v3048 = vunpack.c.l.s4 1934713408
        %v3049 = vunpack.c.0.s8 %v3048
        %v3050 = vlaneseq
        %v3051 = vshrl.u32 %v3050, 7
        %v3052 = vsub.s32 %v3049, %v3051
        %v3053 = vrot.slane %v3046, %v3052
        %v3054 = vcombine.low %v3037, %v3045
        %v3056 = vunpack.c.l.s4 1934713408
        %v3057 = vunpack.c.0.s8 %v3056
        %v3058 = vlaneseq
        %v3059 = vshrl.u32 %v3058, 7
        %v3060 = vsub.s32 %v3057, %v3059
        %v3061 = vrot.slane %v3054, %v3060
        %v3062 = vcombine.low %v3053, %v3061
        %v3063 = vcombine.high %v3053, %v3061
        %v3064 = vcombine.low %v2526, %v2590
        %v3066 = vunpack.c.l.s4 1983009808
        %v3067 = vunpack.c.0.s8 %v3066
        %v3068 = vlaneseq
        %v3069 = vshrl.u32 %v3068, 7
        %v3070 = vsub.s32 %v3067, %v3069
        %v3071 = vrot.slane %v3064, %v3070
        %v3072 = vcombine.low %v2558, %v2622
        %v3074 = vunpack.c.l.s4 1983009808
        %v3075 = vunpack.c.0.s8 %v3074
        %v3076 = vlaneseq
        %v3077 = vshrl.u32 %v3076, 7
        %v3078 = vsub.s32 %v3075, %v3077
        %v3079 = vrot.slane %v3072, %v3078
        %v3080 = vcombine.low %v2654, %v2718
        %v3082 = vunpack.c.l.s4 1983009808
        %v3083 = vunpack.c.0.s8 %v3082
        %v3084 = vlaneseq
        %v3085 = vshrl.u32 %v3084, 7
        %v3086 = vsub.s32 %v3083, %v3085
        %v3087 = vrot.slane %v3080, %v3086
        %v3088 = vcombine.low %v2686, %v2750
        %v3090 = vunpack.c.l.s4 1983009808
        %v3091 = vunpack.c.0.s8 %v3090
        %v3092 = vlaneseq
        %v3093 = vshrl.u32 %v3092, 7
        %v3094 = vsub.s32 %v3091, %v3093
        %v3095 = vrot.slane %v3088, %v3094
        %v3096 = vcombine.low %v3071, %v3079
        %v3098 = vunpack.c.l.s4 1934713408
        %v3099 = vunpack.c.0.s8 %v3098
        %v3100 = vlaneseq
        %v3101 = vshrl.u32 %v3100, 7
        %v3102 = vsub.s32 %v3099, %v3101
        %v3103 = vrot.slane %v3096, %v3102
        %v3104 = vcombine.low %v3087, %v3095
        %v3106 = vunpack.c.l.s4 1934713408
        %v3107 = vunpack.c.0.s8 %v3106
        %v3108 = vlaneseq
        %v3109 = vshrl.u32 %v3108, 7
        %v3110 = vsub.s32 %v3107, %v3109
        %v3111 = vrot.slane %v3104, %v3110
        %v3112 = vcombine.low %v3103, %v3111
        %v3113 = vcombine.high %v3103, %v3111
        %v3114 = vcombine.low %v2766, %v2830
        %v3116 = vunpack.c.l.s4 1983009808
        %v3117 = vunpack.c.0.s8 %v3116
        %v3118 = vlaneseq
        %v3119 = vshrl.u32 %v3118, 7
        %v3120 = vsub.s32 %v3117, %v3119
        %v3121 = vrot.slane %v3114, %v3120
        %v3122 = vcombine.low %v2798, %v2862
        %v3124 = vunpack.c.l.s4 1983009808
        %v3125 = vunpack.c.0.s8 %v3124
        %v3126 = vlaneseq
        %v3127 = vshrl.u32 %v3126, 7
        %v3128 = vsub.s32 %v3125, %v3127
        %v3129 = vrot.slane %v3122, %v3128
        %v3130 = vcombine.low %v2894, %v2958
        %v3132 = vunpack.c.l.s4 1983009808
        %v3133 = vunpack.c.0.s8 %v3132
        %v3134 = vlaneseq
        %v3135 = vshrl.u32 %v3134, 7
        %v3136 = vsub.s32 %v3133, %v3135
        %v3137 = vrot.slane %v3130, %v3136
        %v3138 = vcombine.low %v2926, %v2990
        %v3140 = vunpack.c.l.s4 1983009808
        %v3141 = vunpack.c.0.s8 %v3140
        %v3142 = vlaneseq
        %v3143 = vshrl.u32 %v3142, 7
        %v3144 = vsub.s32 %v3141, %v3143
        %v3145 = vrot.slane %v3138, %v3144
        %v3146 = vcombine.low %v3121, %v3129
        %v3148 = vunpack.c.l.s4 1934713408
        %v3149 = vunpack.c.0.s8 %v3148
        %v3150 = vlaneseq
        %v3151 = vshrl.u32 %v3150, 7
        %v3152 = vsub.s32 %v3149, %v3151
        %v3153 = vrot.slane %v3146, %v3152
        %v3154 = vcombine.low %v3137, %v3145
        %v3156 = vunpack.c.l.s4 1934713408
        %v3157 = vunpack.c.0.s8 %v3156
        %v3158 = vlaneseq
        %v3159 = vshrl.u32 %v3158, 7
        %v3160 = vsub.s32 %v3157, %v3159
        %v3161 = vrot.slane %v3154, %v3160
        %v3162 = vcombine.low %v3153, %v3161
        %v3163 = vcombine.high %v3153, %v3161
        %v3164 = vcombine.low %v2782, %v2846
        %v3166 = vunpack.c.l.s4 1983009808
        %v3167 = vunpack.c.0.s8 %v3166
        %v3168 = vlaneseq
        %v3169 = vshrl.u32 %v3168, 7
        %v3170 = vsub.s32 %v3167, %v3169
        %v3171 = vrot.slane %v3164, %v3170
        %v3172 = vcombine.low %v2814, %v2878
        %v3174 = vunpack.c.l.s4 1983009808
        %v3175 = vunpack.c.0.s8 %v3174
        %v3176 = vlaneseq
        %v3177 = vshrl.u32 %v3176, 7
        %v3178 = vsub.s32 %v3175, %v3177
        %v3179 = vrot.slane %v3172, %v3178
        %v3180 = vcombine.low %v2910, %v2974
        %v3182 = vunpack.c.l.s4 1983009808
        %v3183 = vunpack.c.0.s8 %v3182
        %v3184 = vlaneseq
        %v3185 = vshrl.u32 %v3184, 7
        %v3186 = vsub.s32 %v3183, %v3185
        %v3187 = vrot.slane %v3180, %v3186
        %v3188 = vcombine.low %v2942, %v3006
        %v3190 = vunpack.c.l.s4 1983009808
        %v3191 = vunpack.c.0.s8 %v3190
        %v3192 = vlaneseq
        %v3193 = vshrl.u32 %v3192, 7
        %v3194 = vsub.s32 %v3191, %v3193
        %v3195 = vrot.slane %v3188, %v3194
        %v3196 = vcombine.low %v3171, %v3179
        %v3198 = vunpack.c.l.s4 1934713408
        %v3199 = vunpack.c.0.s8 %v3198
        %v3200 = vlaneseq
        %v3201 = vshrl.u32 %v3200, 7
        %v3202 = vsub.s32 %v3199, %v3201
        %v3203 = vrot.slane %v3196, %v3202
        %v3204 = vcombine.low %v3187, %v3195
        %v3206 = vunpack.c.l.s4 1934713408
        %v3207 = vunpack.c.0.s8 %v3206
        %v3208 = vlaneseq
        %v3209 = vshrl.u32 %v3208, 7
        %v3210 = vsub.s32 %v3207, %v3209
        %v3211 = vrot.slane %v3204, %v3210
        %v3212 = vcombine.low %v3203, %v3211
        %v3213 = vcombine.high %v3203, %v3211
        %v3216 = vpack.i.b16 %v3112, %v3062
        %v3218 = vshrl.u32 %v3062, 16
        %v3219 = vshrl.u32 %v3112, 16
        %v3220 = vpack.i.b16 %v3219, %v3218
        %v3224 = vpack.i.b16 %v3113, %v3063
        %v3226 = vshrl.u32 %v3063, 16
        %v3227 = vshrl.u32 %v3113, 16
        %v3228 = vpack.i.b16 %v3227, %v3226
        %v3232 = vpack.i.b16 %v3212, %v3162
        %v3234 = vshrl.u32 %v3162, 16
        %v3235 = vshrl.u32 %v3212, 16
        %v3236 = vpack.i.b16 %v3235, %v3234
        %v3240 = vpack.i.b16 %v3213, %v3163
        %v3242 = vshrl.u32 %v3163, 16
        %v3243 = vshrl.u32 %v3213, 16
        %v3244 = vpack.i.b16 %v3243, %v3242
        %vm3246 = vcmask 261120
        %v3248 = vsel %vm3246, %v1564, 0
        %3250 = vmatprep.subr.bf16.mxu0 0
        %3251 = vmatpush1.bf16.msra.mxu0 0
        %3252 = vmatprep.subr.bf16.mxu0 0
        %3253 = vmatpush1.bf16.msra.mxu0 0
        %3254 = vmatprep.subr.bf16.mxu0 0
        %3255 = vmatpush1.bf16.msra.mxu0 0
        %3256 = vmatprep.subr.bf16.mxu0 0
        %3257 = vmatpush1.bf16.msra.mxu0 0
        %3258 = vmatprep.subr.bf16.mxu0 0
        %3259 = vmatpush1.bf16.msra.mxu0 0
        %3260 = vmatprep.subr.bf16.mxu0 0
        %3261 = vmatpush1.bf16.msra.mxu0 0
        %3262 = vmatprep.subr.bf16.mxu0 0
        %3263 = vmatpush1.bf16.msra.mxu0 %v3232
        %3264 = vmatprep.subr.bf16.mxu0 0
        %3265 = vmatpush1.bf16.msra.mxu0 %v3216
        %3266 = vmatprep.subr.bf16.mxu0 0
        %3267 = vmatpush2.bf16.msra.mxu0 0
        %3268 = vmatprep.subr.bf16.mxu0 0
        %3269 = vmatpush2.bf16.msra.mxu0 0
        %3270 = vmatprep.subr.bf16.mxu0 0
        %3271 = vmatpush2.bf16.msra.mxu0 0
        %3272 = vmatprep.subr.bf16.mxu0 0
        %3273 = vmatpush2.bf16.msra.mxu0 0
        %3274 = vmatprep.subr.bf16.mxu0 0
        %3275 = vmatpush2.bf16.msra.mxu0 0
        %3276 = vmatprep.subr.bf16.mxu0 0
        %3277 = vmatpush2.bf16.msra.mxu0 0
        %3278 = vmatprep.subr.bf16.mxu0 0
        %3279 = vmatpush2.bf16.msra.mxu0 0
        %3280 = vmatprep.subr.bf16.mxu0 0
        %3281 = vmatpush2.bf16.msra.mxu0 0
        %3282 = vmatprep.mubr.bf16.mxu0 0
        %3283 = vmatmul.mubr.bf16.gmra.mxu0 %v3248
        %v3284 = vpop.f32.mrf.mxu0
        %v3285 = vadd.f32 0.0, %v3284
        %v3286 = vpop.f32.mrf.mxu0
        %v3287 = vpop.f32.mrf.mxu0
        %v3288 = vadd.f32 0.0, %v3287
        %v3289 = vpop.f32.mrf.mxu0
        %3290 = vdwg.mxu0
        %v3292 = vsel %vm3246, %v1567, 0
        %3294 = vmatprep.subr.bf16.mxu0 0
        %3295 = vmatpush1.bf16.msra.mxu0 0
        %3296 = vmatprep.subr.bf16.mxu0 0
        %3297 = vmatpush1.bf16.msra.mxu0 0
        %3298 = vmatprep.subr.bf16.mxu0 0
        %3299 = vmatpush1.bf16.msra.mxu0 0
        %3300 = vmatprep.subr.bf16.mxu0 0
        %3301 = vmatpush1.bf16.msra.mxu0 0
        %3302 = vmatprep.subr.bf16.mxu0 0
        %3303 = vmatpush1.bf16.msra.mxu0 0
        %3304 = vmatprep.subr.bf16.mxu0 0
        %3305 = vmatpush1.bf16.msra.mxu0 0
        %3306 = vmatprep.subr.bf16.mxu0 0
        %3307 = vmatpush1.bf16.msra.mxu0 %v3236
        %3308 = vmatprep.subr.bf16.mxu0 0
        %3309 = vmatpush1.bf16.msra.mxu0 %v3220
        %3310 = vmatprep.subr.bf16.mxu0 0
        %3311 = vmatpush2.bf16.msra.mxu0 0
        %3312 = vmatprep.subr.bf16.mxu0 0
        %3313 = vmatpush2.bf16.msra.mxu0 0
        %3314 = vmatprep.subr.bf16.mxu0 0
        %3315 = vmatpush2.bf16.msra.mxu0 0
        %3316 = vmatprep.subr.bf16.mxu0 0
        %3317 = vmatpush2.bf16.msra.mxu0 0
        %3318 = vmatprep.subr.bf16.mxu0 0
        %3319 = vmatpush2.bf16.msra.mxu0 0
        %3320 = vmatprep.subr.bf16.mxu0 0
        %3321 = vmatpush2.bf16.msra.mxu0 0
        %3322 = vmatprep.subr.bf16.mxu0 0
        %3323 = vmatpush2.bf16.msra.mxu0 0
        %3324 = vmatprep.subr.bf16.mxu0 0
        %3325 = vmatpush2.bf16.msra.mxu0 0
        %3326 = vmatprep.mubr.bf16.mxu0 0
        %3327 = vmatmul.mubr.bf16.gmra.mxu0 %v3292
        %v3328 = vpop.f32.mrf.mxu0
        %v3329 = vadd.f32 0.0, %v3328
        %v3330 = vpop.f32.mrf.mxu0
        %v3331 = vpop.f32.mrf.mxu0
        %v3332 = vadd.f32 0.0, %v3331
        %v3333 = vpop.f32.mrf.mxu0
        %3334 = vdwg.mxu0
        %v3336 = vsel %vm3246, %v1570, 0
        %3338 = vmatprep.subr.bf16.mxu0 0
        %3339 = vmatpush1.bf16.msra.mxu0 0
        %3340 = vmatprep.subr.bf16.mxu0 0
        %3341 = vmatpush1.bf16.msra.mxu0 0
        %3342 = vmatprep.subr.bf16.mxu0 0
        %3343 = vmatpush1.bf16.msra.mxu0 0
        %3344 = vmatprep.subr.bf16.mxu0 0
        %3345 = vmatpush1.bf16.msra.mxu0 0
        %3346 = vmatprep.subr.bf16.mxu0 0
        %3347 = vmatpush1.bf16.msra.mxu0 0
        %3348 = vmatprep.subr.bf16.mxu0 0
        %3349 = vmatpush1.bf16.msra.mxu0 0
        %3350 = vmatprep.subr.bf16.mxu0 0
        %3351 = vmatpush1.bf16.msra.mxu0 %v3240
        %3352 = vmatprep.subr.bf16.mxu0 0
        %3353 = vmatpush1.bf16.msra.mxu0 %v3224
        %3354 = vmatprep.subr.bf16.mxu0 0
        %3355 = vmatpush2.bf16.msra.mxu0 0
        %3356 = vmatprep.subr.bf16.mxu0 0
        %3357 = vmatpush2.bf16.msra.mxu0 0
        %3358 = vmatprep.subr.bf16.mxu0 0
        %3359 = vmatpush2.bf16.msra.mxu0 0
        %3360 = vmatprep.subr.bf16.mxu0 0
        %3361 = vmatpush2.bf16.msra.mxu0 0
        %3362 = vmatprep.subr.bf16.mxu0 0
        %3363 = vmatpush2.bf16.msra.mxu0 0
        %3364 = vmatprep.subr.bf16.mxu0 0
        %3365 = vmatpush2.bf16.msra.mxu0 0
        %3366 = vmatprep.subr.bf16.mxu0 0
        %3367 = vmatpush2.bf16.msra.mxu0 0
        %3368 = vmatprep.subr.bf16.mxu0 0
        %3369 = vmatpush2.bf16.msra.mxu0 0
        %3370 = vmatprep.mubr.bf16.mxu0 0
        %3371 = vmatmul.mubr.bf16.gmra.mxu0 %v3336
        %v3372 = vpop.f32.mrf.mxu0
        %v3373 = vadd.f32 0.0, %v3372
        %v3374 = vpop.f32.mrf.mxu0
        %v3375 = vpop.f32.mrf.mxu0
        %v3376 = vadd.f32 0.0, %v3375
        %v3377 = vpop.f32.mrf.mxu0
        %3378 = vdwg.mxu0
        %v3380 = vsel %vm3246, %v1573, 0
        %3382 = vmatprep.subr.bf16.mxu0 0
        %3383 = vmatpush1.bf16.msra.mxu0 0
        %3384 = vmatprep.subr.bf16.mxu0 0
        %3385 = vmatpush1.bf16.msra.mxu0 0
        %3386 = vmatprep.subr.bf16.mxu0 0
        %3387 = vmatpush1.bf16.msra.mxu0 0
        %3388 = vmatprep.subr.bf16.mxu0 0
        %3389 = vmatpush1.bf16.msra.mxu0 0
        %3390 = vmatprep.subr.bf16.mxu0 0
        %3391 = vmatpush1.bf16.msra.mxu0 0
        %3392 = vmatprep.subr.bf16.mxu0 0
        %3393 = vmatpush1.bf16.msra.mxu0 0
        %3394 = vmatprep.subr.bf16.mxu0 0
        %3395 = vmatpush1.bf16.msra.mxu0 %v3244
        %3396 = vmatprep.subr.bf16.mxu0 0
        %3397 = vmatpush1.bf16.msra.mxu0 %v3228
        %3398 = vmatprep.subr.bf16.mxu0 0
        %3399 = vmatpush2.bf16.msra.mxu0 0
        %3400 = vmatprep.subr.bf16.mxu0 0
        %3401 = vmatpush2.bf16.msra.mxu0 0
        %3402 = vmatprep.subr.bf16.mxu0 0
        %3403 = vmatpush2.bf16.msra.mxu0 0
        %3404 = vmatprep.subr.bf16.mxu0 0
        %3405 = vmatpush2.bf16.msra.mxu0 0
        %3406 = vmatprep.subr.bf16.mxu0 0
        %3407 = vmatpush2.bf16.msra.mxu0 0
        %3408 = vmatprep.subr.bf16.mxu0 0
        %3409 = vmatpush2.bf16.msra.mxu0 0
        %3410 = vmatprep.subr.bf16.mxu0 0
        %3411 = vmatpush2.bf16.msra.mxu0 0
        %3412 = vmatprep.subr.bf16.mxu0 0
        %3413 = vmatpush2.bf16.msra.mxu0 0
        %3414 = vmatprep.mubr.bf16.mxu0 0
        %3415 = vmatmul.mubr.bf16.gmra.mxu0 %v3380
        %v3416 = vpop.f32.mrf.mxu0
        %v3417 = vadd.f32 0.0, %v3416
        %v3418 = vpop.f32.mrf.mxu0
        %v3419 = vpop.f32.mrf.mxu0
        %v3420 = vadd.f32 0.0, %v3419
        %v3421 = vpop.f32.mrf.mxu0
        %3422 = vdwg.mxu0
        %vm3423 = vcmask 130048
        %v3424 = vsel %vm3423, %v3285, -inf
        %3425 = vmax.xlane.f32.xlu0 %v3424
        %v3426 = vpop.xlane.xlu0 %3425
        %v3427 = vsel %vm3423, %v3288, -inf
        %3428 = vmax.xlane.f32.xlu0 %v3427
        %v3429 = vpop.xlane.xlu0 %3428
        %v3430 = vsel %vm3423, %v3329, -inf
        %3431 = vmax.xlane.f32.xlu0 %v3430
        %v3432 = vpop.xlane.xlu0 %3431
        %v3433 = vsel %vm3423, %v3332, -inf
        %3434 = vmax.xlane.f32.xlu0 %v3433
        %v3435 = vpop.xlane.xlu0 %3434
        %v3436 = vsel %vm3423, %v3373, -inf
        %3437 = vmax.xlane.f32.xlu0 %v3436
        %v3438 = vpop.xlane.xlu0 %3437
        %v3439 = vsel %vm3423, %v3376, -inf
        %3440 = vmax.xlane.f32.xlu0 %v3439
        %v3441 = vpop.xlane.xlu0 %3440
        %v3442 = vsel %vm3423, %v3417, -inf
        %3443 = vmax.xlane.f32.xlu0 %v3442
        %v3444 = vpop.xlane.xlu0 %3443
        %v3445 = vsel %vm3423, %v3420, -inf
        %3446 = vmax.xlane.f32.xlu0 %v3445
        %v3447 = vpop.xlane.xlu0 %3446
        %v3448 = vsub.f32 %v3285, %v3426
        %v3449 = vsub.f32 %v3288, %v3429
        %v3450 = vsub.f32 %v3329, %v3432
        %v3451 = vsub.f32 %v3332, %v3435
        %v3452 = vsub.f32 %v3373, %v3438
        %v3453 = vsub.f32 %v3376, %v3441
        %v3454 = vsub.f32 %v3417, %v3444
        %v3455 = vsub.f32 %v3420, %v3447
        %v3456 = vmul.f32 %v3448, 1.442695
        %v3457 = vpow.pop %v3456
        %v3458 = vmul.f32 %v3449, 1.442695
        %v3459 = vpow.pop %v3458
        %v3460 = vmul.f32 %v3450, 1.442695
        %v3461 = vpow.pop %v3460
        %v3462 = vmul.f32 %v3451, 1.442695
        %v3463 = vpow.pop %v3462
        %v3464 = vmul.f32 %v3452, 1.442695
        %v3465 = vpow.pop %v3464
        %v3466 = vmul.f32 %v3453, 1.442695
        %v3467 = vpow.pop %v3466
        %v3468 = vmul.f32 %v3454, 1.442695
        %v3469 = vpow.pop %v3468
        %v3470 = vmul.f32 %v3455, 1.442695
        %v3471 = vpow.pop %v3470
        %v3472 = vsel %vm3423, %v3457, 0.0
        %3473 = vadd.xlane.f32.xlu0 %v3472
        %v3474 = vpop.xlane.xlu0 %3473
        %v3475 = vsel %vm3423, %v3459, 0.0
        %3476 = vadd.xlane.f32.xlu0 %v3475
        %v3477 = vpop.xlane.xlu0 %3476
        %v3478 = vsel %vm3423, %v3461, 0.0
        %3479 = vadd.xlane.f32.xlu0 %v3478
        %v3480 = vpop.xlane.xlu0 %3479
        %v3481 = vsel %vm3423, %v3463, 0.0
        %3482 = vadd.xlane.f32.xlu0 %v3481
        %v3483 = vpop.xlane.xlu0 %3482
        %v3484 = vsel %vm3423, %v3465, 0.0
        %3485 = vadd.xlane.f32.xlu0 %v3484
        %v3486 = vpop.xlane.xlu0 %3485
        %v3487 = vsel %vm3423, %v3467, 0.0
        %3488 = vadd.xlane.f32.xlu0 %v3487
        %v3489 = vpop.xlane.xlu0 %3488
        %v3490 = vsel %vm3423, %v3469, 0.0
        %3491 = vadd.xlane.f32.xlu0 %v3490
        %v3492 = vpop.xlane.xlu0 %3491
        %v3493 = vsel %vm3423, %v3471, 0.0
        %3494 = vadd.xlane.f32.xlu0 %v3493
        %v3495 = vpop.xlane.xlu0 %3494
        %v3496 = vpack.c.bf16 %v3459, %v3457
        %v3497 = vpack.c.bf16 %v3463, %v3461
        %v3498 = vpack.c.bf16 %v3467, %v3465
        %v3499 = vpack.c.bf16 %v3471, %v3469
        %v3500 = vcombine.low %v1446, %v1450
        %v3502 = vunpack.c.l.s4 1983009808
        %v3503 = vunpack.c.0.s8 %v3502
        %v3504 = vlaneseq
        %v3505 = vshrl.u32 %v3504, 7
        %v3506 = vsub.s32 %v3503, %v3505
        %v3507 = vrot.slane %v3500, %v3506
        %v3508 = vcombine.low %v1448, %v1452
        %v3510 = vunpack.c.l.s4 1983009808
        %v3511 = vunpack.c.0.s8 %v3510
        %v3512 = vlaneseq
        %v3513 = vshrl.u32 %v3512, 7
        %v3514 = vsub.s32 %v3511, %v3513
        %v3515 = vrot.slane %v3508, %v3514
        %v3516 = vcombine.low %v1454, %v1458
        %v3518 = vunpack.c.l.s4 1983009808
        %v3519 = vunpack.c.0.s8 %v3518
        %v3520 = vlaneseq
        %v3521 = vshrl.u32 %v3520, 7
        %v3522 = vsub.s32 %v3519, %v3521
        %v3523 = vrot.slane %v3516, %v3522
        %v3524 = vcombine.low %v1456, %v1460
        %v3526 = vunpack.c.l.s4 1983009808
        %v3527 = vunpack.c.0.s8 %v3526
        %v3528 = vlaneseq
        %v3529 = vshrl.u32 %v3528, 7
        %v3530 = vsub.s32 %v3527, %v3529
        %v3531 = vrot.slane %v3524, %v3530
        %v3532 = vcombine.low %v3507, %v3515
        %v3534 = vunpack.c.l.s4 1934713408
        %v3535 = vunpack.c.0.s8 %v3534
        %v3536 = vlaneseq
        %v3537 = vshrl.u32 %v3536, 7
        %v3538 = vsub.s32 %v3535, %v3537
        %v3539 = vrot.slane %v3532, %v3538
        %v3540 = vcombine.low %v3523, %v3531
        %v3542 = vunpack.c.l.s4 1934713408
        %v3543 = vunpack.c.0.s8 %v3542
        %v3544 = vlaneseq
        %v3545 = vshrl.u32 %v3544, 7
        %v3546 = vsub.s32 %v3543, %v3545
        %v3547 = vrot.slane %v3540, %v3546
        %v3548 = vcombine.low %v3539, %v3547
        %v3549 = vcombine.high %v3539, %v3547
        %v3550 = vcombine.low %v1447, %v1451
        %v3552 = vunpack.c.l.s4 1983009808
        %v3553 = vunpack.c.0.s8 %v3552
        %v3554 = vlaneseq
        %v3555 = vshrl.u32 %v3554, 7
        %v3556 = vsub.s32 %v3553, %v3555
        %v3557 = vrot.slane %v3550, %v3556
        %v3558 = vcombine.low %v1449, %v1453
        %v3560 = vunpack.c.l.s4 1983009808
        %v3561 = vunpack.c.0.s8 %v3560
        %v3562 = vlaneseq
        %v3563 = vshrl.u32 %v3562, 7
        %v3564 = vsub.s32 %v3561, %v3563
        %v3565 = vrot.slane %v3558, %v3564
        %v3566 = vcombine.low %v1455, %v1459
        %v3568 = vunpack.c.l.s4 1983009808
        %v3569 = vunpack.c.0.s8 %v3568
        %v3570 = vlaneseq
        %v3571 = vshrl.u32 %v3570, 7
        %v3572 = vsub.s32 %v3569, %v3571
        %v3573 = vrot.slane %v3566, %v3572
        %v3574 = vcombine.low %v1457, %v1461
        %v3576 = vunpack.c.l.s4 1983009808
        %v3577 = vunpack.c.0.s8 %v3576
        %v3578 = vlaneseq
        %v3579 = vshrl.u32 %v3578, 7
        %v3580 = vsub.s32 %v3577, %v3579
        %v3581 = vrot.slane %v3574, %v3580
        %v3582 = vcombine.low %v3557, %v3565
        %v3584 = vunpack.c.l.s4 1934713408
        %v3585 = vunpack.c.0.s8 %v3584
        %v3586 = vlaneseq
        %v3587 = vshrl.u32 %v3586, 7
        %v3588 = vsub.s32 %v3585, %v3587
        %v3589 = vrot.slane %v3582, %v3588
        %v3590 = vcombine.low %v3573, %v3581
        %v3592 = vunpack.c.l.s4 1934713408
        %v3593 = vunpack.c.0.s8 %v3592
        %v3594 = vlaneseq
        %v3595 = vshrl.u32 %v3594, 7
        %v3596 = vsub.s32 %v3593, %v3595
        %v3597 = vrot.slane %v3590, %v3596
        %v3598 = vcombine.low %v3589, %v3597
        %v3599 = vcombine.high %v3589, %v3597
        %v3602 = vpack.i.b16 %v3598, %v3548
        %v3604 = vshrl.u32 %v3548, 16
        %v3605 = vshrl.u32 %v3598, 16
        %v3606 = vpack.i.b16 %v3605, %v3604
        %v3610 = vpack.i.b16 %v3599, %v3549
        %v3612 = vshrl.u32 %v3549, 16
        %v3613 = vshrl.u32 %v3599, 16
        %v3614 = vpack.i.b16 %v3613, %v3612
        %v3617 = vsel %vm3423, %v3496, 0
        %3619 = vmatprep.subr.bf16.mxu0 0
        %3620 = vmatpush1.bf16.msra.mxu0 0
        %3621 = vmatprep.subr.bf16.mxu0 0
        %3622 = vmatpush1.bf16.msra.mxu0 0
        %3623 = vmatprep.subr.bf16.mxu0 0
        %3624 = vmatpush1.bf16.msra.mxu0 0
        %3625 = vmatprep.subr.bf16.mxu0 0
        %3626 = vmatpush1.bf16.msra.mxu0 0
        %3627 = vmatprep.subr.bf16.mxu0 0
        %3628 = vmatpush1.bf16.msra.mxu0 0
        %3629 = vmatprep.subr.bf16.mxu0 0
        %3630 = vmatpush1.bf16.msra.mxu0 0
        %3631 = vmatprep.subr.bf16.mxu0 0
        %3632 = vmatpush1.bf16.msra.mxu0 0
        %3633 = vmatprep.subr.bf16.mxu0 0
        %3634 = vmatpush1.bf16.msra.mxu0 %v3602
        %3635 = vmatprep.subr.bf16.mxu0 0
        %3636 = vmatpush2.bf16.msra.mxu0 0
        %3637 = vmatprep.subr.bf16.mxu0 0
        %3638 = vmatpush2.bf16.msra.mxu0 0
        %3639 = vmatprep.subr.bf16.mxu0 0
        %3640 = vmatpush2.bf16.msra.mxu0 0
        %3641 = vmatprep.subr.bf16.mxu0 0
        %3642 = vmatpush2.bf16.msra.mxu0 0
        %3643 = vmatprep.subr.bf16.mxu0 0
        %3644 = vmatpush2.bf16.msra.mxu0 0
        %3645 = vmatprep.subr.bf16.mxu0 0
        %3646 = vmatpush2.bf16.msra.mxu0 0
        %3647 = vmatprep.subr.bf16.mxu0 0
        %3648 = vmatpush2.bf16.msra.mxu0 0
        %3649 = vmatprep.subr.bf16.mxu0 0
        %3650 = vmatpush2.bf16.msra.mxu0 0
        %3651 = vmatprep.mubr.bf16.mxu0 0
        %3652 = vmatmul.mubr.bf16.gmra.mxu0 %v3617
        %v3653 = vpop.f32.mrf.mxu0
        %v3654 = vadd.f32 0.0, %v3653
        %v3655 = vpop.f32.mrf.mxu0
        %v3656 = vpop.f32.mrf.mxu0
        %v3657 = vadd.f32 0.0, %v3656
        %v3658 = vpop.f32.mrf.mxu0
        %3659 = vdwg.mxu0
        %v3661 = vsel %vm3423, %v3497, 0
        %3663 = vmatprep.subr.bf16.mxu0 0
        %3664 = vmatpush1.bf16.msra.mxu0 0
        %3665 = vmatprep.subr.bf16.mxu0 0
        %3666 = vmatpush1.bf16.msra.mxu0 0
        %3667 = vmatprep.subr.bf16.mxu0 0
        %3668 = vmatpush1.bf16.msra.mxu0 0
        %3669 = vmatprep.subr.bf16.mxu0 0
        %3670 = vmatpush1.bf16.msra.mxu0 0
        %3671 = vmatprep.subr.bf16.mxu0 0
        %3672 = vmatpush1.bf16.msra.mxu0 0
        %3673 = vmatprep.subr.bf16.mxu0 0
        %3674 = vmatpush1.bf16.msra.mxu0 0
        %3675 = vmatprep.subr.bf16.mxu0 0
        %3676 = vmatpush1.bf16.msra.mxu0 0
        %3677 = vmatprep.subr.bf16.mxu0 0
        %3678 = vmatpush1.bf16.msra.mxu0 %v3606
        %3679 = vmatprep.subr.bf16.mxu0 0
        %3680 = vmatpush2.bf16.msra.mxu0 0
        %3681 = vmatprep.subr.bf16.mxu0 0
        %3682 = vmatpush2.bf16.msra.mxu0 0
        %3683 = vmatprep.subr.bf16.mxu0 0
        %3684 = vmatpush2.bf16.msra.mxu0 0
        %3685 = vmatprep.subr.bf16.mxu0 0
        %3686 = vmatpush2.bf16.msra.mxu0 0
        %3687 = vmatprep.subr.bf16.mxu0 0
        %3688 = vmatpush2.bf16.msra.mxu0 0
        %3689 = vmatprep.subr.bf16.mxu0 0
        %3690 = vmatpush2.bf16.msra.mxu0 0
        %3691 = vmatprep.subr.bf16.mxu0 0
        %3692 = vmatpush2.bf16.msra.mxu0 0
        %3693 = vmatprep.subr.bf16.mxu0 0
        %3694 = vmatpush2.bf16.msra.mxu0 0
        %3695 = vmatprep.mubr.bf16.mxu0 0
        %3696 = vmatmul.mubr.bf16.gmra.mxu0 %v3661
        %v3697 = vpop.f32.mrf.mxu0
        %v3698 = vadd.f32 0.0, %v3697
        %v3699 = vpop.f32.mrf.mxu0
        %v3700 = vpop.f32.mrf.mxu0
        %v3701 = vadd.f32 0.0, %v3700
        %v3702 = vpop.f32.mrf.mxu0
        %3703 = vdwg.mxu0
        %v3705 = vsel %vm3423, %v3498, 0
        %3707 = vmatprep.subr.bf16.mxu0 0
        %3708 = vmatpush1.bf16.msra.mxu0 0
        %3709 = vmatprep.subr.bf16.mxu0 0
        %3710 = vmatpush1.bf16.msra.mxu0 0
        %3711 = vmatprep.subr.bf16.mxu0 0
        %3712 = vmatpush1.bf16.msra.mxu0 0
        %3713 = vmatprep.subr.bf16.mxu0 0
        %3714 = vmatpush1.bf16.msra.mxu0 0
        %3715 = vmatprep.subr.bf16.mxu0 0
        %3716 = vmatpush1.bf16.msra.mxu0 0
        %3717 = vmatprep.subr.bf16.mxu0 0
        %3718 = vmatpush1.bf16.msra.mxu0 0
        %3719 = vmatprep.subr.bf16.mxu0 0
        %3720 = vmatpush1.bf16.msra.mxu0 0
        %3721 = vmatprep.subr.bf16.mxu0 0
        %3722 = vmatpush1.bf16.msra.mxu0 %v3610
        %3723 = vmatprep.subr.bf16.mxu0 0
        %3724 = vmatpush2.bf16.msra.mxu0 0
        %3725 = vmatprep.subr.bf16.mxu0 0
        %3726 = vmatpush2.bf16.msra.mxu0 0
        %3727 = vmatprep.subr.bf16.mxu0 0
        %3728 = vmatpush2.bf16.msra.mxu0 0
        %3729 = vmatprep.subr.bf16.mxu0 0
        %3730 = vmatpush2.bf16.msra.mxu0 0
        %3731 = vmatprep.subr.bf16.mxu0 0
        %3732 = vmatpush2.bf16.msra.mxu0 0
        %3733 = vmatprep.subr.bf16.mxu0 0
        %3734 = vmatpush2.bf16.msra.mxu0 0
        %3735 = vmatprep.subr.bf16.mxu0 0
        %3736 = vmatpush2.bf16.msra.mxu0 0
        %3737 = vmatprep.subr.bf16.mxu0 0
        %3738 = vmatpush2.bf16.msra.mxu0 0
        %3739 = vmatprep.mubr.bf16.mxu0 0
        %3740 = vmatmul.mubr.bf16.gmra.mxu0 %v3705
        %v3741 = vpop.f32.mrf.mxu0
        %v3742 = vadd.f32 0.0, %v3741
        %v3743 = vpop.f32.mrf.mxu0
        %v3744 = vpop.f32.mrf.mxu0
        %v3745 = vadd.f32 0.0, %v3744
        %v3746 = vpop.f32.mrf.mxu0
        %3747 = vdwg.mxu0
        %v3749 = vsel %vm3423, %v3499, 0
        %3751 = vmatprep.subr.bf16.mxu0 0
        %3752 = vmatpush1.bf16.msra.mxu0 0
        %3753 = vmatprep.subr.bf16.mxu0 0
        %3754 = vmatpush1.bf16.msra.mxu0 0
        %3755 = vmatprep.subr.bf16.mxu0 0
        %3756 = vmatpush1.bf16.msra.mxu0 0
        %3757 = vmatprep.subr.bf16.mxu0 0
        %3758 = vmatpush1.bf16.msra.mxu0 0
        %3759 = vmatprep.subr.bf16.mxu0 0
        %3760 = vmatpush1.bf16.msra.mxu0 0
        %3761 = vmatprep.subr.bf16.mxu0 0
        %3762 = vmatpush1.bf16.msra.mxu0 0
        %3763 = vmatprep.subr.bf16.mxu0 0
        %3764 = vmatpush1.bf16.msra.mxu0 0
        %3765 = vmatprep.subr.bf16.mxu0 0
        %3766 = vmatpush1.bf16.msra.mxu0 %v3614
        %3767 = vmatprep.subr.bf16.mxu0 0
        %3768 = vmatpush2.bf16.msra.mxu0 0
        %3769 = vmatprep.subr.bf16.mxu0 0
        %3770 = vmatpush2.bf16.msra.mxu0 0
        %3771 = vmatprep.subr.bf16.mxu0 0
        %3772 = vmatpush2.bf16.msra.mxu0 0
        %3773 = vmatprep.subr.bf16.mxu0 0
        %3774 = vmatpush2.bf16.msra.mxu0 0
        %3775 = vmatprep.subr.bf16.mxu0 0
        %3776 = vmatpush2.bf16.msra.mxu0 0
        %3777 = vmatprep.subr.bf16.mxu0 0
        %3778 = vmatpush2.bf16.msra.mxu0 0
        %3779 = vmatprep.subr.bf16.mxu0 0
        %3780 = vmatpush2.bf16.msra.mxu0 0
        %3781 = vmatprep.subr.bf16.mxu0 0
        %3782 = vmatpush2.bf16.msra.mxu0 0
        %3783 = vmatprep.mubr.bf16.mxu0 0
        %3784 = vmatmul.mubr.bf16.gmra.mxu0 %v3749
        %v3785 = vpop.f32.mrf.mxu0
        %v3786 = vadd.f32 0.0, %v3785
        %v3787 = vpop.f32.mrf.mxu0
        %v3788 = vpop.f32.mrf.mxu0
        %v3789 = vadd.f32 0.0, %v3788
        %v3790 = vpop.f32.mrf.mxu0
        %3791 = vdwg.mxu0
        %v3792 = vrcp.pop %v3474
        %v3793 = vrcp.pop %v3477
        %v3794 = vrcp.pop %v3480
        %v3795 = vrcp.pop %v3483
        %v3796 = vrcp.pop %v3486
        %v3797 = vrcp.pop %v3489
        %v3798 = vrcp.pop %v3492
        %v3799 = vrcp.pop %v3495
        %v3800 = vmul.f32 %v3654, %v3792
        %v3801 = vmul.f32 %v3657, %v3793
        %v3802 = vmul.f32 %v3698, %v3794
        %v3803 = vmul.f32 %v3701, %v3795
        %v3804 = vmul.f32 %v3742, %v3796
        %v3805 = vmul.f32 %v3745, %v3797
        %v3806 = vmul.f32 %v3786, %v3798
        %v3807 = vmul.f32 %v3789, %v3799
        %v3808 = vcombine.low %v3800, %v3804
        %v3809 = vcombine.high %v3800, %v3804
        %v3811 = vunpack.c.l.s4 1983009808
        %v3812 = vunpack.c.0.s8 %v3811
        %v3813 = vlaneseq
        %v3814 = vshrl.u32 %v3813, 7
        %v3815 = vsub.s32 %v3812, %v3814
        %v3816 = vrot.slane %v3808, %v3815
        %v3818 = vunpack.c.l.s4 1983009808
        %v3819 = vunpack.c.0.s8 %v3818
        %v3820 = vlaneseq
        %v3821 = vshrl.u32 %v3820, 7
        %v3822 = vsub.s32 %v3819, %v3821
        %v3823 = vrot.slane %v3809, %v3822
        %v3824 = vcombine.low %v3802, %v3806
        %v3825 = vcombine.high %v3802, %v3806
        %v3827 = vunpack.c.l.s4 1983009808
        %v3828 = vunpack.c.0.s8 %v3827
        %v3829 = vlaneseq
        %v3830 = vshrl.u32 %v3829, 7
        %v3831 = vsub.s32 %v3828, %v3830
        %v3832 = vrot.slane %v3824, %v3831
        %v3834 = vunpack.c.l.s4 1983009808
        %v3835 = vunpack.c.0.s8 %v3834
        %v3836 = vlaneseq
        %v3837 = vshrl.u32 %v3836, 7
        %v3838 = vsub.s32 %v3835, %v3837
        %v3839 = vrot.slane %v3825, %v3838
        %v3840 = vcombine.low %v3816, %v3832
        %v3841 = vcombine.high %v3816, %v3832
        %v3843 = vunpack.c.l.s4 1934713408
        %v3844 = vunpack.c.0.s8 %v3843
        %v3845 = vlaneseq
        %v3846 = vshrl.u32 %v3845, 7
        %v3847 = vsub.s32 %v3844, %v3846
        %v3848 = vrot.slane %v3840, %v3847
        %v3850 = vunpack.c.l.s4 1934713408
        %v3851 = vunpack.c.0.s8 %v3850
        %v3852 = vlaneseq
        %v3853 = vshrl.u32 %v3852, 7
        %v3854 = vsub.s32 %v3851, %v3853
        %v3855 = vrot.slane %v3841, %v3854
        %v3856 = vcombine.low %v3823, %v3839
        %v3857 = vcombine.high %v3823, %v3839
        %v3859 = vunpack.c.l.s4 1934713408
        %v3860 = vunpack.c.0.s8 %v3859
        %v3861 = vlaneseq
        %v3862 = vshrl.u32 %v3861, 7
        %v3863 = vsub.s32 %v3860, %v3862
        %v3864 = vrot.slane %v3856, %v3863
        %v3866 = vunpack.c.l.s4 1934713408
        %v3867 = vunpack.c.0.s8 %v3866
        %v3868 = vlaneseq
        %v3869 = vshrl.u32 %v3868, 7
        %v3870 = vsub.s32 %v3867, %v3869
        %v3871 = vrot.slane %v3857, %v3870
        %v3872 = vcombine.high %v3848, 0.0
        %v3873 = vcombine.high %v3855, 0.0
        %v3874 = vcombine.high %v3864, 0.0
        %v3875 = vcombine.high %v3871, 0.0
        %v3876 = vcombine.low %v3801, %v3805
        %v3877 = vcombine.high %v3801, %v3805
        %v3879 = vunpack.c.l.s4 1983009808
        %v3880 = vunpack.c.0.s8 %v3879
        %v3881 = vlaneseq
        %v3882 = vshrl.u32 %v3881, 7
        %v3883 = vsub.s32 %v3880, %v3882
        %v3884 = vrot.slane %v3876, %v3883
        %v3886 = vunpack.c.l.s4 1983009808
        %v3887 = vunpack.c.0.s8 %v3886
        %v3888 = vlaneseq
        %v3889 = vshrl.u32 %v3888, 7
        %v3890 = vsub.s32 %v3887, %v3889
        %v3891 = vrot.slane %v3877, %v3890
        %v3892 = vcombine.low %v3803, %v3807
        %v3893 = vcombine.high %v3803, %v3807
        %v3895 = vunpack.c.l.s4 1983009808
        %v3896 = vunpack.c.0.s8 %v3895
        %v3897 = vlaneseq
        %v3898 = vshrl.u32 %v3897, 7
        %v3899 = vsub.s32 %v3896, %v3898
        %v3900 = vrot.slane %v3892, %v3899
        %v3902 = vunpack.c.l.s4 1983009808
        %v3903 = vunpack.c.0.s8 %v3902
        %v3904 = vlaneseq
        %v3905 = vshrl.u32 %v3904, 7
        %v3906 = vsub.s32 %v3903, %v3905
        %v3907 = vrot.slane %v3893, %v3906
        %v3908 = vcombine.low %v3884, %v3900
        %v3909 = vcombine.high %v3884, %v3900
        %v3911 = vunpack.c.l.s4 1934713408
        %v3912 = vunpack.c.0.s8 %v3911
        %v3913 = vlaneseq
        %v3914 = vshrl.u32 %v3913, 7
        %v3915 = vsub.s32 %v3912, %v3914
        %v3916 = vrot.slane %v3908, %v3915
        %v3918 = vunpack.c.l.s4 1934713408
        %v3919 = vunpack.c.0.s8 %v3918
        %v3920 = vlaneseq
        %v3921 = vshrl.u32 %v3920, 7
        %v3922 = vsub.s32 %v3919, %v3921
        %v3923 = vrot.slane %v3909, %v3922
        %v3924 = vcombine.low %v3891, %v3907
        %v3925 = vcombine.high %v3891, %v3907
        %v3927 = vunpack.c.l.s4 1934713408
        %v3928 = vunpack.c.0.s8 %v3927
        %v3929 = vlaneseq
        %v3930 = vshrl.u32 %v3929, 7
        %v3931 = vsub.s32 %v3928, %v3930
        %v3932 = vrot.slane %v3924, %v3931
        %v3934 = vunpack.c.l.s4 1934713408
        %v3935 = vunpack.c.0.s8 %v3934
        %v3936 = vlaneseq
        %v3937 = vshrl.u32 %v3936, 7
        %v3938 = vsub.s32 %v3935, %v3937
        %v3939 = vrot.slane %v3925, %v3938
        %v3940 = vcombine.high %v3916, 0.0
        %v3941 = vcombine.high %v3923, 0.0
        %v3942 = vcombine.high %v3932, 0.0
        %v3943 = vcombine.high %v3939, 0.0
        %v3944 = vcombine.low %v3848, %v3855
        %v3946 = vunpack.c.l.s4 1983009808
        %v3947 = vunpack.c.0.s8 %v3946
        %v3948 = vlaneseq
        %v3949 = vshrl.u32 %v3948, 7
        %v3950 = vsub.s32 %v3947, %v3949
        %v3951 = vrot.slane %v3944, %v3950
        %v3952 = vcombine.low %v3872, %v3873
        %v3954 = vunpack.c.l.s4 1983009808
        %v3955 = vunpack.c.0.s8 %v3954
        %v3956 = vlaneseq
        %v3957 = vshrl.u32 %v3956, 7
        %v3958 = vsub.s32 %v3955, %v3957
        %v3959 = vrot.slane %v3952, %v3958
        %v3960 = vcombine.low %v3864, %v3871
        %v3962 = vunpack.c.l.s4 1983009808
        %v3963 = vunpack.c.0.s8 %v3962
        %v3964 = vlaneseq
        %v3965 = vshrl.u32 %v3964, 7
        %v3966 = vsub.s32 %v3963, %v3965
        %v3967 = vrot.slane %v3960, %v3966
        %v3968 = vcombine.low %v3874, %v3875
        %v3970 = vunpack.c.l.s4 1983009808
        %v3971 = vunpack.c.0.s8 %v3970
        %v3972 = vlaneseq
        %v3973 = vshrl.u32 %v3972, 7
        %v3974 = vsub.s32 %v3971, %v3973
        %v3975 = vrot.slane %v3968, %v3974
        %v3976 = vcombine.low %v3951, %v3959
        %v3977 = vcombine.high %v3951, %v3959
        %v3979 = vunpack.c.l.s4 1934713408
        %v3980 = vunpack.c.0.s8 %v3979
        %v3981 = vlaneseq
        %v3982 = vshrl.u32 %v3981, 7
        %v3983 = vsub.s32 %v3980, %v3982
        %v3984 = vrot.slane %v3976, %v3983
        %v3986 = vunpack.c.l.s4 1934713408
        %v3987 = vunpack.c.0.s8 %v3986
        %v3988 = vlaneseq
        %v3989 = vshrl.u32 %v3988, 7
        %v3990 = vsub.s32 %v3987, %v3989
        %v3991 = vrot.slane %v3977, %v3990
        %v3992 = vcombine.low %v3967, %v3975
        %v3993 = vcombine.high %v3967, %v3975
        %v3995 = vunpack.c.l.s4 1934713408
        %v3996 = vunpack.c.0.s8 %v3995
        %v3997 = vlaneseq
        %v3998 = vshrl.u32 %v3997, 7
        %v3999 = vsub.s32 %v3996, %v3998
        %v4000 = vrot.slane %v3992, %v3999
        %v4002 = vunpack.c.l.s4 1934713408
        %v4003 = vunpack.c.0.s8 %v4002
        %v4004 = vlaneseq
        %v4005 = vshrl.u32 %v4004, 7
        %v4006 = vsub.s32 %v4003, %v4005
        %v4007 = vrot.slane %v3993, %v4006
        %v4008 = vcombine.low %v3984, %v4000
        %v4009 = vcombine.high %v3984, %v4000
        %v4010 = vcombine.low %v3991, %v4007
        %v4011 = vcombine.high %v3991, %v4007
        %v4012 = vcombine.low %v3916, %v3923
        %v4014 = vunpack.c.l.s4 1983009808
        %v4015 = vunpack.c.0.s8 %v4014
        %v4016 = vlaneseq
        %v4017 = vshrl.u32 %v4016, 7
        %v4018 = vsub.s32 %v4015, %v4017
        %v4019 = vrot.slane %v4012, %v4018
        %v4020 = vcombine.low %v3940, %v3941
        %v4022 = vunpack.c.l.s4 1983009808
        %v4023 = vunpack.c.0.s8 %v4022
        %v4024 = vlaneseq
        %v4025 = vshrl.u32 %v4024, 7
        %v4026 = vsub.s32 %v4023, %v4025
        %v4027 = vrot.slane %v4020, %v4026
        %v4028 = vcombine.low %v3932, %v3939
        %v4030 = vunpack.c.l.s4 1983009808
        %v4031 = vunpack.c.0.s8 %v4030
        %v4032 = vlaneseq
        %v4033 = vshrl.u32 %v4032, 7
        %v4034 = vsub.s32 %v4031, %v4033
        %v4035 = vrot.slane %v4028, %v4034
        %v4036 = vcombine.low %v3942, %v3943
        %v4038 = vunpack.c.l.s4 1983009808
        %v4039 = vunpack.c.0.s8 %v4038
        %v4040 = vlaneseq
        %v4041 = vshrl.u32 %v4040, 7
        %v4042 = vsub.s32 %v4039, %v4041
        %v4043 = vrot.slane %v4036, %v4042
        %v4044 = vcombine.low %v4019, %v4027
        %v4045 = vcombine.high %v4019, %v4027
        %v4047 = vunpack.c.l.s4 1934713408
        %v4048 = vunpack.c.0.s8 %v4047
        %v4049 = vlaneseq
        %v4050 = vshrl.u32 %v4049, 7
        %v4051 = vsub.s32 %v4048, %v4050
        %v4052 = vrot.slane %v4044, %v4051
        %v4054 = vunpack.c.l.s4 1934713408
        %v4055 = vunpack.c.0.s8 %v4054
        %v4056 = vlaneseq
        %v4057 = vshrl.u32 %v4056, 7
        %v4058 = vsub.s32 %v4055, %v4057
        %v4059 = vrot.slane %v4045, %v4058
        %v4060 = vcombine.low %v4035, %v4043
        %v4061 = vcombine.high %v4035, %v4043
        %v4063 = vunpack.c.l.s4 1934713408
        %v4064 = vunpack.c.0.s8 %v4063
        %v4065 = vlaneseq
        %v4066 = vshrl.u32 %v4065, 7
        %v4067 = vsub.s32 %v4064, %v4066
        %v4068 = vrot.slane %v4060, %v4067
        %v4070 = vunpack.c.l.s4 1934713408
        %v4071 = vunpack.c.0.s8 %v4070
        %v4072 = vlaneseq
        %v4073 = vshrl.u32 %v4072, 7
        %v4074 = vsub.s32 %v4071, %v4073
        %v4075 = vrot.slane %v4061, %v4074
        %v4076 = vcombine.low %v4052, %v4068
        %v4077 = vcombine.high %v4052, %v4068
        %v4078 = vcombine.low %v4059, %v4075
        %v4079 = vcombine.high %v4059, %v4075
        %4082 = vrot.lane.b32.xlu0 %v4009, 32
        %v4083 = vpop.permute.xlu0 %4082
        %4084 = vrot.lane.b32.xlu0 %v4077, 32
        %v4085 = vpop.permute.xlu0 %4084
        %4090 = vrot.lane.b32.xlu0 %v4010, 64
        %v4091 = vpop.permute.xlu0 %4090
        %4092 = vrot.lane.b32.xlu0 %v4078, 64
        %v4093 = vpop.permute.xlu0 %4092
        %4098 = vrot.lane.b32.xlu0 %v4011, 96
        %v4099 = vpop.permute.xlu0 %4098
        %4100 = vrot.lane.b32.xlu0 %v4079, 96
        %v4101 = vpop.permute.xlu0 %4100
        %v4104 = vsel %vm3246, %v4008, %v4083
        %v4105 = vsel %vm3246, %v4076, %v4085
        %v4106 = vsel %vm897, %v4104, %v4091
        %v4107 = vsel %vm897, %v4105, %v4093
        %vm4108 = vcmask 785408
        %v4109 = vsel %vm4108, %v4106, %v4099
        %v4110 = vsel %vm4108, %v4107, %v4101
        %v4111 = vpack.c.bf16 %v4110, %v4109
        %v4112 = vld [vmem:[#allocation11] sm:$0xf]
        %v4113 = vld [vmem:[#allocation11 + $0x4] sm:$0xf]
        %v4114 = vld [vmem:[#allocation11 + $0x8] sm:$0xf]
        %v4115 = vld [vmem:[#allocation11 + $0xc] sm:$0xf]
        %v4116 = vld [vmem:[#allocation11 + $0x10] sm:$0xf]
        %v4117 = vld [vmem:[#allocation11 + $0x14] sm:$0xf]
        %v4118 = vld [vmem:[#allocation11 + $0x18] sm:$0xf]
        %v4119 = vld [vmem:[#allocation11 + $0x1c] sm:$0xf]
        %v4120 = vld [vmem:[#allocation11 + $0x20] sm:$0xf]
        %v4121 = vld [vmem:[#allocation11 + $0x24] sm:$0xf]
        %v4122 = vld [vmem:[#allocation11 + $0x28] sm:$0xf]
        %v4123 = vld [vmem:[#allocation11 + $0x2c] sm:$0xf]
        %v4124 = vld [vmem:[#allocation11 + $0x30] sm:$0xf]
        %v4125 = vld [vmem:[#allocation11 + $0x34] sm:$0xf]
        %v4126 = vld [vmem:[#allocation11 + $0x38] sm:$0xf]
        %v4127 = vld [vmem:[#allocation11 + $0x3c] sm:$0xf]
        %v4128 = vld [vmem:[%s9] sm:$0x1]
        %v4130 = vlaneseq
        %v4131 = vshrl.u32 %v4130, 7
        %v4132 = vsub.s32 0, %v4131
        %v4133 = vrot.slane %v4128, %v4132
        %v4151 = vunpack.c.l.b16 %v4112
        %v4152 = vunpack.c.l.b16 %v4113
        %v4153 = vunpack.c.l.b16 %v4114
        %v4154 = vunpack.c.l.b16 %v4115
        %v4155 = vunpack.c.l.b16 %v4116
        %v4156 = vunpack.c.l.b16 %v4117
        %v4157 = vunpack.c.l.b16 %v4118
        %v4158 = vunpack.c.l.b16 %v4119
        %v4159 = vunpack.c.l.b16 %v4120
        %v4160 = vunpack.c.l.b16 %v4121
        %v4161 = vunpack.c.l.b16 %v4122
        %v4162 = vunpack.c.l.b16 %v4123
        %v4163 = vunpack.c.l.b16 %v4124
        %v4164 = vunpack.c.l.b16 %v4125
        %v4165 = vunpack.c.l.b16 %v4126
        %v4166 = vunpack.c.l.b16 %v4127
        %v4167 = vpack.c.b16 %v4152, %v4151
        %v4168 = vpack.c.b16 %v4154, %v4153
        %v4169 = vpack.c.b16 %v4156, %v4155
        %v4170 = vpack.c.b16 %v4158, %v4157
        %v4171 = vpack.c.b16 %v4160, %v4159
        %v4172 = vpack.c.b16 %v4162, %v4161
        %v4173 = vpack.c.b16 %v4164, %v4163
        %v4174 = vpack.c.b16 %v4166, %v4165
        %4183 = vmatprep.subr.bf16.mxu0 0
        %4184 = vmatpush1.bf16.msra.mxu0 %v4174
        %4185 = vmatprep.subr.bf16.mxu0 0
        %4186 = vmatpush1.bf16.msra.mxu0 %v4173
        %4187 = vmatprep.subr.bf16.mxu0 0
        %4188 = vmatpush1.bf16.msra.mxu0 %v4172
        %4189 = vmatprep.subr.bf16.mxu0 0
        %4190 = vmatpush1.bf16.msra.mxu0 %v4171
        %4191 = vmatprep.subr.bf16.mxu0 0
        %4192 = vmatpush1.bf16.msra.mxu0 %v4170
        %4193 = vmatprep.subr.bf16.mxu0 0
        %4194 = vmatpush1.bf16.msra.mxu0 %v4169
        %4195 = vmatprep.subr.bf16.mxu0 0
        %4196 = vmatpush1.bf16.msra.mxu0 %v4168
        %4197 = vmatprep.subr.bf16.mxu0 0
        %4198 = vmatpush1.bf16.msra.mxu0 %v4167
        %4199 = vmatprep.subr.bf16.mxu0 0
        %4200 = vmatpush2.bf16.msra.mxu0 0
        %4201 = vmatprep.subr.bf16.mxu0 0
        %4202 = vmatpush2.bf16.msra.mxu0 0
        %4203 = vmatprep.subr.bf16.mxu0 0
        %4204 = vmatpush2.bf16.msra.mxu0 0
        %4205 = vmatprep.subr.bf16.mxu0 0
        %4206 = vmatpush2.bf16.msra.mxu0 0
        %4207 = vmatprep.subr.bf16.mxu0 0
        %4208 = vmatpush2.bf16.msra.mxu0 0
        %4209 = vmatprep.subr.bf16.mxu0 0
        %4210 = vmatpush2.bf16.msra.mxu0 0
        %4211 = vmatprep.subr.bf16.mxu0 0
        %4212 = vmatpush2.bf16.msra.mxu0 0
        %4213 = vmatprep.subr.bf16.mxu0 0
        %4214 = vmatpush2.bf16.msra.mxu0 0
        %4215 = vmatprep.mubr.bf16.mxu0 0
        %4216 = vmatmul.mubr.bf16.gmra.mxu0 %v4111
        %v4217 = vpop.f32.mrf.mxu0
        %v4218 = vadd.f32 %v4133, %v4217
        %v4219 = vpop.f32.mrf.mxu0
        %v4220 = vpop.f32.mrf.mxu0
        %v4221 = vadd.f32 %v4133, %v4220
        %v4222 = vpop.f32.mrf.mxu0
        %4223 = vdwg.mxu0
        %v4224 = vadd.f32 %v697, %v4218
        %v4225 = vadd.f32 %v701, %v4221
        %v4226 = vpack.c.bf16 %v4225, %v4224
        %v4227 = vld [vmem:[#allocation13] sm:$0xf]
        %v4228 = vld [vmem:[#allocation13 + $0x4] sm:$0xf]
        %v4229 = vld [vmem:[#allocation13 + $0x8] sm:$0xf]
        %v4230 = vld [vmem:[#allocation13 + $0xc] sm:$0xf]
        %v4231 = vld [vmem:[#allocation13 + $0x10] sm:$0xf]
        %v4232 = vld [vmem:[#allocation13 + $0x14] sm:$0xf]
        %v4233 = vld [vmem:[#allocation13 + $0x18] sm:$0xf]
        %v4234 = vld [vmem:[#allocation13 + $0x1c] sm:$0xf]
        %v4235 = vld [vmem:[#allocation13 + $0x20] sm:$0xf]
        %v4236 = vld [vmem:[#allocation13 + $0x24] sm:$0xf]
        %v4237 = vld [vmem:[#allocation13 + $0x28] sm:$0xf]
        %v4238 = vld [vmem:[#allocation13 + $0x2c] sm:$0xf]
        %v4239 = vld [vmem:[#allocation13 + $0x30] sm:$0xf]
        %v4240 = vld [vmem:[#allocation13 + $0x34] sm:$0xf]
        %v4241 = vld [vmem:[#allocation13 + $0x38] sm:$0xf]
        %v4242 = vld [vmem:[#allocation13 + $0x3c] sm:$0xf]
        %v4243 = vld [vmem:[%s11] sm:$0x1]
        %v4245 = vlaneseq
        %v4246 = vshrl.u32 %v4245, 7
        %v4247 = vsub.s32 0, %v4246
        %v4248 = vrot.slane %v4243, %v4247
        %v4266 = vunpack.c.l.b16 %v4227
        %v4267 = vunpack.c.l.b16 %v4228
        %v4268 = vunpack.c.l.b16 %v4229
        %v4269 = vunpack.c.l.b16 %v4230
        %v4270 = vunpack.c.l.b16 %v4231
        %v4271 = vunpack.c.l.b16 %v4232
        %v4272 = vunpack.c.l.b16 %v4233
        %v4273 = vunpack.c.l.b16 %v4234
        %v4274 = vunpack.c.l.b16 %v4235
        %v4275 = vunpack.c.l.b16 %v4236
        %v4276 = vunpack.c.l.b16 %v4237
        %v4277 = vunpack.c.l.b16 %v4238
        %v4278 = vunpack.c.l.b16 %v4239
        %v4279 = vunpack.c.l.b16 %v4240
        %v4280 = vunpack.c.l.b16 %v4241
        %v4281 = vunpack.c.l.b16 %v4242
        %v4282 = vpack.c.b16 %v4267, %v4266
        %v4283 = vpack.c.b16 %v4269, %v4268
        %v4284 = vpack.c.b16 %v4271, %v4270
        %v4285 = vpack.c.b16 %v4273, %v4272
        %v4286 = vpack.c.b16 %v4275, %v4274
        %v4287 = vpack.c.b16 %v4277, %v4276
        %v4288 = vpack.c.b16 %v4279, %v4278
        %v4289 = vpack.c.b16 %v4281, %v4280
        %4298 = vmatprep.subr.bf16.mxu0 0
        %4299 = vmatpush1.bf16.msra.mxu0 %v4289
        %4300 = vmatprep.subr.bf16.mxu0 0
        %4301 = vmatpush1.bf16.msra.mxu0 %v4288
        %4302 = vmatprep.subr.bf16.mxu0 0
        %4303 = vmatpush1.bf16.msra.mxu0 %v4287
        %4304 = vmatprep.subr.bf16.mxu0 0
        %4305 = vmatpush1.bf16.msra.mxu0 %v4286
        %4306 = vmatprep.subr.bf16.mxu0 0
        %4307 = vmatpush1.bf16.msra.mxu0 %v4285
        %4308 = vmatprep.subr.bf16.mxu0 0
        %4309 = vmatpush1.bf16.msra.mxu0 %v4284
        %4310 = vmatprep.subr.bf16.mxu0 0
        %4311 = vmatpush1.bf16.msra.mxu0 %v4283
        %4312 = vmatprep.subr.bf16.mxu0 0
        %4313 = vmatpush1.bf16.msra.mxu0 %v4282
        %4314 = vmatprep.subr.bf16.mxu0 0
        %4315 = vmatpush2.bf16.msra.mxu0 0
        %4316 = vmatprep.subr.bf16.mxu0 0
        %4317 = vmatpush2.bf16.msra.mxu0 0
        %4318 = vmatprep.subr.bf16.mxu0 0
        %4319 = vmatpush2.bf16.msra.mxu0 0
        %4320 = vmatprep.subr.bf16.mxu0 0
        %4321 = vmatpush2.bf16.msra.mxu0 0
        %4322 = vmatprep.subr.bf16.mxu0 0
        %4323 = vmatpush2.bf16.msra.mxu0 0
        %4324 = vmatprep.subr.bf16.mxu0 0
        %4325 = vmatpush2.bf16.msra.mxu0 0
        %4326 = vmatprep.subr.bf16.mxu0 0
        %4327 = vmatpush2.bf16.msra.mxu0 0
        %4328 = vmatprep.subr.bf16.mxu0 0
        %4329 = vmatpush2.bf16.msra.mxu0 0
        %4330 = vmatprep.mubr.bf16.mxu0 0
        %4331 = vmatmul.mubr.bf16.gmra.mxu0 %v4226
        %v4332 = vpop.f32.mrf.mxu0
        %v4333 = vadd.f32 %v4248, %v4332
        %v4334 = vpop.f32.mrf.mxu0
        %v4335 = vpop.f32.mrf.mxu0
        %v4336 = vadd.f32 %v4248, %v4335
        %v4337 = vpop.f32.mrf.mxu0
        %4338 = vdwg.mxu0
        %v4339 = vmax.f32 %v4333, 0.0
        %v4340 = vmax.f32 %v4336, 0.0
        %v4341 = vadd.f32 %v4224, %v4339
        %v4342 = vadd.f32 %v4225, %v4340
        %v4343 = vmul.f32 %v4341, %v717
        %v4344 = vmul.f32 %v4342, %v718
        %v4345 = vpack.c.bf16 %v4344, %v4343
        %v4347 = vunpack.c.l.b16 %v4345
        %v4348 = vunpack.c.h.b16 %v4345
        %v4349 = vpack.c.b16 %v4347, %v4347
        %v4350 = vpack.c.b16 %v4348, %v4348
        %4353 = vst [vmem:[%s540] sm:$0xf] %v4349
        %4354 = vst [vmem:[%s540 + $0x4] sm:$0xf] %v4350
        %s4355 = sand.u32 %s316, 1
        %s4356 = scalar_lea.sflag [#allocation4], %s4355
        %s4357 = sand.u32 %s316, 1
        %s4358 = smul.addr %s4357, 8
        %s4359 = scalar_lea.vmem [#allocation14], %s4358
        // Predicated region
        $region97: #{tpu_custom_call.1} parent=67 // pred_check
          %p4360 = pneg %p326
        $region98: #{tpu_custom_call.1} parent=67 // pred_check_branch
          %4362 = sbr.rel (%p4360) target = $region100
        $region99: #{tpu_custom_call.1} parent=67 // pred_region
          %s4363 = smul.u32 2, %s37
          %s4365 = ssub.s32 128, 128
          %4366 = vsyncadd %s4356, %s4365
          %s4367 = smul.addr %s36, 2
          %s4368 = sadd.s32 %s4363, %s4367
          %s4369 = smul.addr %s4368, 64
          %s4370 = scalar_lea.hbm %s12, %s4369
          %s4371 = sshll.u32 %s4359, 4
          %s4372 = int_to_ptr.vmem [resolvable:$true] %s4371
          %4377 = dma.vmem_to_hbm [thread:$0]  %s4372, 128, %s4370, %s4356, 64, 64, 4
        $region100: #{tpu_custom_call.1} parent=67 // pred_fallthru
          _
      $region68: #{tpu_custom_call.1} parent=5 // pred_fallthru
        _
      %p4378 = scmp.le.s32.totalorder 2, %s27
      // Predicated region
      $region101: #{tpu_custom_call.1} parent=5 // pred_check
        %p4379 = pneg %p4378
      $region102: #{tpu_custom_call.1} parent=5 // pred_check_branch
        %4381 = sbr.rel (%p4379) target = $region104
      $region103: #{tpu_custom_call.1} parent=5 // pred_region
        %s4382 = ssub.s32 %s27, 2
        // Predicated region
        $region105: #{tpu_custom_call.1} parent=103 // pred_check
          %p4383 = pneg %p332
        $region106: #{tpu_custom_call.1} parent=103 // pred_check_branch
          %4385 = sbr.rel (%p4383) target = $region108
        $region107: #{tpu_custom_call.1} parent=103 // pred_region
          %s4386 = sand.u32 %s317, 1
          %s4387 = scalar_lea.sflag [#allocation4], %s4386
          %s4388 = sand.u32 %s317, 1
          %s4389 = smul.addr %s4388, 8
          %s4390 = scalar_lea.vmem [#allocation14], %s4389
          %4391 = dma.done %s4387, 128
        $region108: #{tpu_custom_call.1} parent=103 // pred_fallthru
          _
      $region104: #{tpu_custom_call.1} parent=5 // pred_fallthru
        _
    $region6: #{tpu_custom_call.1} parent=1 // loop_footer
      %s31 = sadd.s32 1, %s27
    $region7: #{tpu_custom_call.1} parent=1 // loop_footer_branch
      %26 = sbr.rel target = $region3
    $region8: #{tpu_custom_call.1} parent=1 // loop_exit
      _
    %4392 = vsyncpa [#allocation3], 1
    %s4393 = scalar_lea.sflag [#allocation3], 1
    %4394 = vsyncpa %s4393, 1
    %4395 = vsyncpa [#allocation6], 1
    %s4396 = scalar_lea.sflag [#allocation6], 1
    %4397 = vsyncpa %s4396, 1
    %4398 = vsyncpa [#allocation9], 1
    %4399 = vsyncpa [#allocation12], 1
    %4400 = vsyncpa [#allocation4], 1
    %s4401 = scalar_lea.sflag [#allocation4], 1
    %4402 = vsyncpa %s4401, 1

// kernel: tpu_custom_call.1
$region0: #{tpu_custom_call.1}
  #allocation0 [shape = 'u32[]', space=smem, size = 0x4, offset = 0x4, fixed_abs, tag = 'smem constant byte address 0x4 - core index']
  #allocation1 [shape = 'u32[144,128]{1,0:T(1,128)}', space=vmem, size = 0x12000, scoped, tag = 'internal scratch']
  %s0 = inlined_call_operand.hbm [shape: bf16[1,16,128], index: 0, kind: input, shape index: {}]
  %s1 = inlined_call_operand.hbm [shape: bf16[2,16,64], index: 1, kind: input, shape index: {}]
  %s2 = inlined_call_operand.hbm [shape: bf16[128,256], index: 2, kind: input, shape index: {}]
  %s3 = inlined_call_operand.vmem [shape: f32[1,256], index: 3, kind: input, shape index: {}]
  %s4 = inlined_call_operand.hbm [shape: bf16[128,128], index: 4, kind: input, shape index: {}]
  %s5 = inlined_call_operand.vmem [shape: f32[1,128], index: 5, kind: input, shape index: {}]
  %s6 = inlined_call_operand.hbm [shape: bf16[64,256], index: 6, kind: input, shape index: {}]
  %s7 = inlined_call_operand.vmem [shape: f32[1,256], index: 7, kind: input, shape index: {}]
  %s8 = inlined_call_operand.hbm [shape: bf16[128,128], index: 8, kind: input, shape index: {}]
  %s9 = inlined_call_operand.vmem [shape: f32[1,128], index: 9, kind: input, shape index: {}]
  %s10 = inlined_call_operand.hbm [shape: bf16[128,128], index: 10, kind: input, shape index: {}]
  %s11 = inlined_call_operand.vmem [shape: f32[1,128], index: 11, kind: input, shape index: {}]
  %s12 = inlined_call_operand.hbm [shape: bf16[2,16,128], index: 12, kind: output, shape index: {}]
  %s13 = sld [smem:[#allocation0]]
  $region109: #{tpu_custom_call.1} parent=0
    _
  %s15 = ssub.s32 1, %s13
  %s16 = scalar_select 0, %s15, %s13
  $region1: #{tpu_custom_call.1} parent=0
    #allocation2 [shape = 'u8[4096]{0}', space=vmem, size = 0x1000, scoped, tag = 'input window, operand 0, single buffered']
    #allocation3 [shape = 's32[2]{0}', space=sflag, size = 0x8, scoped, tag = 'scoped memory for tpu_custom_call.1']
    #allocation4 [shape = 's32[2]{0}', space=sflag, size = 0x8, scoped, tag = 'scoped memory for tpu_custom_call.1']
    #allocation5 [shape = 'u8[8192]{0}', space=vmem, size = 0x2000, scoped, tag = 'input window, operand 1']
    #allocation6 [shape = 's32[2]{0}', space=sflag, size = 0x8, scoped, tag = 'scoped memory for tpu_custom_call.1']
    #allocation7 [shape = 'u8[65536]{0}', space=vmem, size = 0x10000, scoped, tag = 'input window, operand 2, single buffered']
    #allocation8 [shape = 'u8[32768]{0}', space=vmem, size = 0x8000, scoped, tag = 'input window, operand 4, single buffered']
    #allocation9 [shape = 's32[1]{0}', space=sflag, size = 0x4, scoped, tag = 'scoped memory for tpu_custom_call.1']
    #allocation10 [shape = 'u8[32768]{0}', space=vmem, size = 0x8000, scoped, tag = 'input window, operand 6, single buffered']
    #allocation11 [shape = 'u8[32768]{0}', space=vmem, size = 0x8000, scoped, tag = 'input window, operand 8, single buffered']
    #allocation12 [shape = 's32[1]{0}', space=sflag, size = 0x4, scoped, tag = 'scoped memory for tpu_custom_call.1']
    #allocation13 [shape = 'u8[32768]{0}', space=vmem, size = 0x8000, scoped, tag = 'input window, operand 10, single buffered']
    #allocation14 [shape = 'u8[8192]{0}', space=vmem, size = 0x2000, scoped, tag = 'output window, operand 0']
    %17 = vsyncpa [#allocation3], 0
    %18 = vsyncpa [#allocation6], 0
    %s19 = scalar_lea.sflag [#allocation6], 1
    %20 = vsyncpa %s19, 0
    %21 = vsyncpa [#allocation9], 0
    %22 = vsyncpa [#allocation12], 0
    %23 = vsyncpa [#allocation4], 0
    %s24 = scalar_lea.sflag [#allocation4], 1
    %25 = vsyncpa %s24, 0
    loop: start=0, step=1, limit=4
    $region2: #{tpu_custom_call.1} parent=1 // loop_pre_header
      _
    $region3: #{tpu_custom_call.1} parent=1 // loop_header
      %s27 = sphi 0, %s31
      %p28 = scmp.ge.s32.totalorder %s27, 4
      %s34 = sphi 0, %s46
      %s35 = sphi 0, %s42
      %s36 = sphi 0, %s34
      %s37 = sphi 0, %s35
      %s38 = sphi 0, %s36
      %s39 = sphi 0, %s37
      %s49 = sphi 0, %s51
      %s52 = sphi 0, %s49
      %s53 = sphi 0, %s52
      %s69 = sphi 0, %s53
      %s75 = sphi 0, %s77
      %s78 = sphi 0, %s75
      %s79 = sphi 0, %s78
      %s95 = sphi 0, %s79
      %s99 = sphi 0, %s99
      %s101 = sphi 0, %s99
      %s102 = sphi 0, %s101
      %s116 = sphi 0, %s102
      %s120 = sphi 0, %s120
      %s122 = sphi 0, %s120
      %s123 = sphi 0, %s122
      %s137 = sphi 0, %s123
      %s141 = sphi 0, %s141
      %s143 = sphi 0, %s141
      %s144 = sphi 0, %s143
      %s158 = sphi 0, %s144
      %s162 = sphi 0, %s162
      %s164 = sphi 0, %s162
      %s165 = sphi 0, %s164
      %s179 = sphi 0, %s165
      %s183 = sphi 0, %s183
      %s185 = sphi 0, %s183
      %s186 = sphi 0, %s185
      %s200 = sphi 0, %s186
      %s204 = sphi 0, %s204
      %s206 = sphi 0, %s204
      %s207 = sphi 0, %s206
      %s221 = sphi 0, %s207
      %s225 = sphi 0, %s225
      %s227 = sphi 0, %s225
      %s228 = sphi 0, %s227
      %s242 = sphi 0, %s228
      %s246 = sphi 0, %s246
      %s248 = sphi 0, %s246
      %s249 = sphi 0, %s248
      %s263 = sphi 0, %s249
      %s267 = sphi 0, %s267
      %s269 = sphi 0, %s267
      %s270 = sphi 0, %s269
      %s284 = sphi 0, %s270
      %s288 = sphi 0, %s288
      %s290 = sphi 0, %s288
      %s291 = sphi 0, %s290
      %s305 = sphi 0, %s291
      %s313 = sphi 0, %s315
      %s316 = sphi 0, %s313
      %s317 = sphi 0, %s316
      %s333 = sphi 0, %s317
    $region4: #{tpu_custom_call.1} parent=1 // loop_header_branch
      %30 = sbr.rel (%p28) target = $region8
    $region5: #{tpu_custom_call.1} parent=1 // loop_body
      %s32 = ssub.s32 %s27, 1
      %s33 = ssub.s32 %s27, 2
      %s40 = sadd.s32 1, %s35
      %p41 = scmp.ge.s32.totalorder %s40, 1
      %s42 = scalar_select %p41, 0, %s40
      %s43 = sadd.s32 1, %s34
      %s44 = scalar_select %p41, %s43, %s34
      %p45 = scmp.ge.s32.totalorder %s44, 2
      %s46 = scalar_select %p45, 0, %s44
      %s47 = ssub.s32 %s35, %s42
      %p48 = scmp.eq.s32.totalorder %s47, 0
      %s50 = sadd.s32 %s49, 1
      %s51 = scalar_select %p48, %s49, %s50
      %p54 = pneg %p48
      %p55 = scmp.eq.s32.totalorder %s27, 1
      %p56 = por %p54, %p55
      %p57 = scmp.ne.s32.totalorder %s49, %s52
      %p58 = scmp.eq.s32.totalorder %s27, 0
      %p59 = por %p57, %p58
      %p60 = scmp.ne.s32.totalorder %s49, %s52
      %p61 = scmp.eq.s32.totalorder %s32, 1
      %p62 = por %p60, %p61
      %p63 = scmp.ne.s32.totalorder %s52, %s53
      %p64 = scmp.eq.s32.totalorder %s32, 0
      %p65 = por %p63, %p64
      %p66 = scmp.ne.s32.totalorder %s52, %s53
      %p67 = scmp.eq.s32.totalorder %s33, 1
      %p68 = por %p66, %p67
      %p70 = scmp.ne.s32.totalorder %s53, %s69
      %p71 = scmp.eq.s32.totalorder %s33, 0
      %p72 = por %p70, %p71
      %s73 = ssub.s32 %s34, %s46
      %p74 = scmp.eq.s32.totalorder %s73, 0
      %s76 = sadd.s32 %s75, 1
      %s77 = scalar_select %p74, %s75, %s76
      %p80 = pneg %p74
      %p81 = scmp.eq.s32.totalorder %s27, 1
      %p82 = por %p80, %p81
      %p83 = scmp.ne.s32.totalorder %s75, %s78
      %p84 = scmp.eq.s32.totalorder %s27, 0
      %p85 = por %p83, %p84
      %p86 = scmp.ne.s32.totalorder %s75, %s78
      %p87 = scmp.eq.s32.totalorder %s32, 1
      %p88 = por %p86, %p87
      %p89 = scmp.ne.s32.totalorder %s78, %s79
      %p90 = scmp.eq.s32.totalorder %s32, 0
      %p91 = por %p89, %p90
      %p92 = scmp.ne.s32.totalorder %s78, %s79
      %p93 = scmp.eq.s32.totalorder %s33, 1
      %p94 = por %p92, %p93
      %p96 = scmp.ne.s32.totalorder %s79, %s95
      %p97 = scmp.eq.s32.totalorder %s33, 0
      %p98 = por %p96, %p97
      %s100 = sadd.s32 %s99, 1
      %p103 = scmp.eq.s32.totalorder %s27, 1
      %p104 = scmp.ne.s32.totalorder %s99, %s101
      %p105 = scmp.eq.s32.totalorder %s27, 0
      %p106 = por %p104, %p105
      %p107 = scmp.ne.s32.totalorder %s99, %s101
      %p108 = scmp.eq.s32.totalorder %s32, 1
      %p109 = por %p107, %p108
      %p110 = scmp.ne.s32.totalorder %s101, %s102
      %p111 = scmp.eq.s32.totalorder %s32, 0
      %p112 = por %p110, %p111
      %p113 = scmp.ne.s32.totalorder %s101, %s102
      %p114 = scmp.eq.s32.totalorder %s33, 1
      %p115 = por %p113, %p114
      %p117 = scmp.ne.s32.totalorder %s102, %s116
      %p118 = scmp.eq.s32.totalorder %s33, 0
      %p119 = por %p117, %p118
      %s121 = sadd.s32 %s120, 1
      %p124 = scmp.eq.s32.totalorder %s27, 1
      %p125 = scmp.ne.s32.totalorder %s120, %s122
      %p126 = scmp.eq.s32.totalorder %s27, 0
      %p127 = por %p125, %p126
      %p128 = scmp.ne.s32.totalorder %s120, %s122
      %p129 = scmp.eq.s32.totalorder %s32, 1
      %p130 = por %p128, %p129
      %p131 = scmp.ne.s32.totalorder %s122, %s123
      %p132 = scmp.eq.s32.totalorder %s32, 0
      %p133 = por %p131, %p132
      %p134 = scmp.ne.s32.totalorder %s122, %s123
      %p135 = scmp.eq.s32.totalorder %s33, 1
      %p136 = por %p134, %p135
      %p138 = scmp.ne.s32.totalorder %s123, %s137
      %p139 = scmp.eq.s32.totalorder %s33, 0
      %p140 = por %p138, %p139
      %s142 = sadd.s32 %s141, 1
      %p145 = scmp.eq.s32.totalorder %s27, 1
      %p146 = scmp.ne.s32.totalorder %s141, %s143
      %p147 = scmp.eq.s32.totalorder %s27, 0
      %p148 = por %p146, %p147
      %p149 = scmp.ne.s32.totalorder %s141, %s143
      %p150 = scmp.eq.s32.totalorder %s32, 1
      %p151 = por %p149, %p150
      %p152 = scmp.ne.s32.totalorder %s143, %s144
      %p153 = scmp.eq.s32.totalorder %s32, 0
      %p154 = por %p152, %p153
      %p155 = scmp.ne.s32.totalorder %s143, %s144
      %p156 = scmp.eq.s32.totalorder %s33, 1
      %p157 = por %p155, %p156
      %p159 = scmp.ne.s32.totalorder %s144, %s158
      %p160 = scmp.eq.s32.totalorder %s33, 0
      %p161 = por %p159, %p160
      %s163 = sadd.s32 %s162, 1
      %p166 = scmp.eq.s32.totalorder %s27, 1
      %p167 = scmp.ne.s32.totalorder %s162, %s164
      %p168 = scmp.eq.s32.totalorder %s27, 0
      %p169 = por %p167, %p168
      %p170 = scmp.ne.s32.totalorder %s162, %s164
      %p171 = scmp.eq.s32.totalorder %s32, 1
      %p172 = por %p170, %p171
      %p173 = scmp.ne.s32.totalorder %s164, %s165
      %p174 = scmp.eq.s32.totalorder %s32, 0
      %p175 = por %p173, %p174
      %p176 = scmp.ne.s32.totalorder %s164, %s165
      %p177 = scmp.eq.s32.totalorder %s33, 1
      %p178 = por %p176, %p177
      %p180 = scmp.ne.s32.totalorder %s165, %s179
      %p181 = scmp.eq.s32.totalorder %s33, 0
      %p182 = por %p180, %p181
      %s184 = sadd.s32 %s183, 1
      %p187 = scmp.eq.s32.totalorder %s27, 1
      %p188 = scmp.ne.s32.totalorder %s183, %s185
      %p189 = scmp.eq.s32.totalorder %s27, 0
      %p190 = por %p188, %p189
      %p191 = scmp.ne.s32.totalorder %s183, %s185
      %p192 = scmp.eq.s32.totalorder %s32, 1
      %p193 = por %p191, %p192
      %p194 = scmp.ne.s32.totalorder %s185, %s186
      %p195 = scmp.eq.s32.totalorder %s32, 0
      %p196 = por %p194, %p195
      %p197 = scmp.ne.s32.totalorder %s185, %s186
      %p198 = scmp.eq.s32.totalorder %s33, 1
      %p199 = por %p197, %p198
      %p201 = scmp.ne.s32.totalorder %s186, %s200
      %p202 = scmp.eq.s32.totalorder %s33, 0
      %p203 = por %p201, %p202
      %s205 = sadd.s32 %s204, 1
      %p208 = scmp.eq.s32.totalorder %s27, 1
      %p209 = scmp.ne.s32.totalorder %s204, %s206
      %p210 = scmp.eq.s32.totalorder %s27, 0
      %p211 = por %p209, %p210
      %p212 = scmp.ne.s32.totalorder %s204, %s206
      %p213 = scmp.eq.s32.totalorder %s32, 1
      %p214 = por %p212, %p213
      %p215 = scmp.ne.s32.totalorder %s206, %s207
      %p216 = scmp.eq.s32.totalorder %s32, 0
      %p217 = por %p215, %p216
      %p218 = scmp.ne.s32.totalorder %s206, %s207
      %p219 = scmp.eq.s32.totalorder %s33, 1
      %p220 = por %p218, %p219
      %p222 = scmp.ne.s32.totalorder %s207, %s221
      %p223 = scmp.eq.s32.totalorder %s33, 0
      %p224 = por %p222, %p223
      %s226 = sadd.s32 %s225, 1
      %p229 = scmp.eq.s32.totalorder %s27, 1
      %p230 = scmp.ne.s32.totalorder %s225, %s227
      %p231 = scmp.eq.s32.totalorder %s27, 0
      %p232 = por %p230, %p231
      %p233 = scmp.ne.s32.totalorder %s225, %s227
      %p234 = scmp.eq.s32.totalorder %s32, 1
      %p235 = por %p233, %p234
      %p236 = scmp.ne.s32.totalorder %s227, %s228
      %p237 = scmp.eq.s32.totalorder %s32, 0
      %p238 = por %p236, %p237
      %p239 = scmp.ne.s32.totalorder %s227, %s228
      %p240 = scmp.eq.s32.totalorder %s33, 1
      %p241 = por %p239, %p240
      %p243 = scmp.ne.s32.totalorder %s228, %s242
      %p244 = scmp.eq.s32.totalorder %s33, 0
      %p245 = por %p243, %p244
      %s247 = sadd.s32 %s246, 1
      %p250 = scmp.eq.s32.totalorder %s27, 1
      %p251 = scmp.ne.s32.totalorder %s246, %s248
      %p252 = scmp.eq.s32.totalorder %s27, 0
      %p253 = por %p251, %p252
      %p254 = scmp.ne.s32.totalorder %s246, %s248
      %p255 = scmp.eq.s32.totalorder %s32, 1
      %p256 = por %p254, %p255
      %p257 = scmp.ne.s32.totalorder %s248, %s249
      %p258 = scmp.eq.s32.totalorder %s32, 0
      %p259 = por %p257, %p258
      %p260 = scmp.ne.s32.totalorder %s248, %s249
      %p261 = scmp.eq.s32.totalorder %s33, 1
      %p262 = por %p260, %p261
      %p264 = scmp.ne.s32.totalorder %s249, %s263
      %p265 = scmp.eq.s32.totalorder %s33, 0
      %p266 = por %p264, %p265
      %s268 = sadd.s32 %s267, 1
      %p271 = scmp.eq.s32.totalorder %s27, 1
      %p272 = scmp.ne.s32.totalorder %s267, %s269
      %p273 = scmp.eq.s32.totalorder %s27, 0
      %p274 = por %p272, %p273
      %p275 = scmp.ne.s32.totalorder %s267, %s269
      %p276 = scmp.eq.s32.totalorder %s32, 1
      %p277 = por %p275, %p276
      %p278 = scmp.ne.s32.totalorder %s269, %s270
      %p279 = scmp.eq.s32.totalorder %s32, 0
      %p280 = por %p278, %p279
      %p281 = scmp.ne.s32.totalorder %s269, %s270
      %p282 = scmp.eq.s32.totalorder %s33, 1
      %p283 = por %p281, %p282
      %p285 = scmp.ne.s32.totalorder %s270, %s284
      %p286 = scmp.eq.s32.totalorder %s33, 0
      %p287 = por %p285, %p286
      %s289 = sadd.s32 %s288, 1
      %p292 = scmp.eq.s32.totalorder %s27, 1
      %p293 = scmp.ne.s32.totalorder %s288, %s290
      %p294 = scmp.eq.s32.totalorder %s27, 0
      %p295 = por %p293, %p294
      %p296 = scmp.ne.s32.totalorder %s288, %s290
      %p297 = scmp.eq.s32.totalorder %s32, 1
      %p298 = por %p296, %p297
      %p299 = scmp.ne.s32.totalorder %s290, %s291
      %p300 = scmp.eq.s32.totalorder %s32, 0
      %p301 = por %p299, %p300
      %p302 = scmp.ne.s32.totalorder %s290, %s291
      %p303 = scmp.eq.s32.totalorder %s33, 1
      %p304 = por %p302, %p303
      %p306 = scmp.ne.s32.totalorder %s291, %s305
      %p307 = scmp.eq.s32.totalorder %s33, 0
      %p308 = por %p306, %p307
      %s309 = ssub.s32 %s34, %s46
      %s310 = ssub.s32 %s35, %s42
      %s311 = sor.u32 %s309, %s310
      %p312 = scmp.eq.s32.totalorder %s311, 0
      %s314 = sadd.s32 %s313, 1
      %s315 = scalar_select %p312, %s313, %s314
      %p318 = pneg %p312
      %p319 = scmp.eq.s32.totalorder %s27, 1
      %p320 = por %p318, %p319
      %p321 = scmp.ne.s32.totalorder %s313, %s316
      %p322 = scmp.eq.s32.totalorder %s27, 0
      %p323 = por %p321, %p322
      %p324 = scmp.ne.s32.totalorder %s313, %s316
      %p325 = scmp.eq.s32.totalorder %s32, 1
      %p326 = por %p324, %p325
      %p327 = scmp.ne.s32.totalorder %s316, %s317
      %p328 = scmp.eq.s32.totalorder %s32, 0
      %p329 = por %p327, %p328
      %p330 = scmp.ne.s32.totalorder %s316, %s317
      %p331 = scmp.eq.s32.totalorder %s33, 1
      %p332 = por %p330, %p331
      %p334 = scmp.ne.s32.totalorder %s317, %s333
      %p335 = scmp.eq.s32.totalorder %s33, 0
      %p336 = por %p334, %p335
      %p337 = scmp.le.s32.totalorder 1, %s27
      %p338 = scmp.lt.s32.totalorder %s27, 3
      %p339 = pnand %p337, %p338
      %p340 = pneg %p339
      // Predicated region
      $region9: #{tpu_custom_call.1} parent=5 // pred_check
        _
      $region10: #{tpu_custom_call.1} parent=5 // pred_check_branch
        %342 = sbr.rel (%p339) target = $region12
      $region11: #{tpu_custom_call.1} parent=5 // pred_region
        %s343 = ssub.s32 %s27, 1
        // Predicated region
        $region13: #{tpu_custom_call.1} parent=11 // pred_check
          %p344 = pneg %p65
        $region14: #{tpu_custom_call.1} parent=11 // pred_check_branch
          %346 = sbr.rel (%p344) target = $region16
        $region15: #{tpu_custom_call.1} parent=11 // pred_region
          %s347 = smul.u32 2, %s37
          %s349 = ssub.s32 128, 128
          %350 = vsyncadd [#allocation3], %s349
          %s351 = smul.addr %s347, 64
          %s352 = scalar_lea.hbm %s0, %s351
          %s353 = sshll.u32 [#allocation2], 4
          %s354 = int_to_ptr.vmem [resolvable:$true] %s353
          %359 = dma.hbm_to_vmem [thread:$0]  %s352, 128, %s354, [#allocation3], 64, 64, 4
        $region16: #{tpu_custom_call.1} parent=11 // pred_fallthru
          _
        // Predicated region
        $region17: #{tpu_custom_call.1} parent=11 // pred_check
          %p360 = pneg %p112
        $region18: #{tpu_custom_call.1} parent=11 // pred_check_branch
          %362 = sbr.rel (%p360) target = $region20
        $region19: #{tpu_custom_call.1} parent=11 // pred_region
          %s364 = ssub.s32 2048, 2048
          %365 = vsyncadd [#allocation6], %s364
          %s366 = sshll.u32 [#allocation7], 4
          %s367 = int_to_ptr.vmem [resolvable:$true] %s366
          %372 = dma.hbm_to_vmem [thread:$0]  %s2, 2048, %s367, [#allocation6], 128, 128, 8
        $region20: #{tpu_custom_call.1} parent=11 // pred_fallthru
          _
        // Predicated region
        $region21: #{tpu_custom_call.1} parent=11 // pred_check
          %p373 = pneg %p133
        $region22: #{tpu_custom_call.1} parent=11 // pred_check_branch
          %375 = sbr.rel (%p373) target = $region24
        $region23: #{tpu_custom_call.1} parent=11 // pred_region
          _
        $region24: #{tpu_custom_call.1} parent=11 // pred_fallthru
          _
        // Predicated region
        $region25: #{tpu_custom_call.1} parent=11 // pred_check
          %p376 = pneg %p154
        $region26: #{tpu_custom_call.1} parent=11 // pred_check_branch
          %378 = sbr.rel (%p376) target = $region28
        $region27: #{tpu_custom_call.1} parent=11 // pred_region
          %s380 = ssub.s32 1024, 1024
          %381 = vsyncadd [#allocation9], %s380
          %s382 = sshll.u32 [#allocation8], 4
          %s383 = int_to_ptr.vmem [resolvable:$true] %s382
          %388 = dma.hbm_to_vmem [thread:$0]  %s4, 1024, %s383, [#allocation9], 64, 64, 4
        $region28: #{tpu_custom_call.1} parent=11 // pred_fallthru
          _
        // Predicated region
        $region29: #{tpu_custom_call.1} parent=11 // pred_check
          %p389 = pneg %p175
        $region30: #{tpu_custom_call.1} parent=11 // pred_check_branch
          %391 = sbr.rel (%p389) target = $region32
        $region31: #{tpu_custom_call.1} parent=11 // pred_region
          _
        $region32: #{tpu_custom_call.1} parent=11 // pred_fallthru
          _
        // Predicated region
        $region33: #{tpu_custom_call.1} parent=11 // pred_check
          %p392 = pneg %p196
        $region34: #{tpu_custom_call.1} parent=11 // pred_check_branch
          %394 = sbr.rel (%p392) target = $region36
        $region35: #{tpu_custom_call.1} parent=11 // pred_region
          %s396 = ssub.s32 1024, 1024
          %397 = vsyncadd [#allocation9], %s396
          %s398 = sshll.u32 [#allocation10], 4
          %s399 = int_to_ptr.vmem [resolvable:$true] %s398
          %404 = dma.hbm_to_vmem [thread:$0]  %s6, 1024, %s399, [#allocation9], 128, 128, 8
        $region36: #{tpu_custom_call.1} parent=11 // pred_fallthru
          _
        // Predicated region
        $region37: #{tpu_custom_call.1} parent=11 // pred_check
          %p405 = pneg %p217
        $region38: #{tpu_custom_call.1} parent=11 // pred_check_branch
          %407 = sbr.rel (%p405) target = $region40
        $region39: #{tpu_custom_call.1} parent=11 // pred_region
          _
        $region40: #{tpu_custom_call.1} parent=11 // pred_fallthru
          _
        // Predicated region
        $region41: #{tpu_custom_call.1} parent=11 // pred_check
          %p408 = pneg %p238
        $region42: #{tpu_custom_call.1} parent=11 // pred_check_branch
          %410 = sbr.rel (%p408) target = $region44
        $region43: #{tpu_custom_call.1} parent=11 // pred_region
          %s412 = ssub.s32 1024, 1024
          %413 = vsyncadd [#allocation12], %s412
          %s414 = sshll.u32 [#allocation11], 4
          %s415 = int_to_ptr.vmem [resolvable:$true] %s414
          %420 = dma.hbm_to_vmem [thread:$0]  %s8, 1024, %s415, [#allocation12], 64, 64, 4
        $region44: #{tpu_custom_call.1} parent=11 // pred_fallthru
          _
        // Predicated region
        $region45: #{tpu_custom_call.1} parent=11 // pred_check
          %p421 = pneg %p259
        $region46: #{tpu_custom_call.1} parent=11 // pred_check_branch
          %423 = sbr.rel (%p421) target = $region48
        $region47: #{tpu_custom_call.1} parent=11 // pred_region
          _
        $region48: #{tpu_custom_call.1} parent=11 // pred_fallthru
          _
        // Predicated region
        $region49: #{tpu_custom_call.1} parent=11 // pred_check
          %p424 = pneg %p280
        $region50: #{tpu_custom_call.1} parent=11 // pred_check_branch
          %426 = sbr.rel (%p424) target = $region52
        $region51: #{tpu_custom_call.1} parent=11 // pred_region
          %s428 = ssub.s32 1024, 1024
          %429 = vsyncadd [#allocation12], %s428
          %s430 = sshll.u32 [#allocation13], 4
          %s431 = int_to_ptr.vmem [resolvable:$true] %s430
          %436 = dma.hbm_to_vmem [thread:$0]  %s10, 1024, %s431, [#allocation12], 64, 64, 4
        $region52: #{tpu_custom_call.1} parent=11 // pred_fallthru
          _
        // Predicated region
        $region53: #{tpu_custom_call.1} parent=11 // pred_check
          %p437 = pneg %p301
        $region54: #{tpu_custom_call.1} parent=11 // pred_check_branch
          %439 = sbr.rel (%p437) target = $region56
        $region55: #{tpu_custom_call.1} parent=11 // pred_region
          _
        $region56: #{tpu_custom_call.1} parent=11 // pred_fallthru
          _
      $region12: #{tpu_custom_call.1} parent=5 // pred_fallthru
        _
      %p440 = scmp.lt.s32.totalorder %s27, 2
      // Predicated region
      $region57: #{tpu_custom_call.1} parent=5 // pred_check
        %p441 = pneg %p440
      $region58: #{tpu_custom_call.1} parent=5 // pred_check_branch
        %443 = sbr.rel (%p441) target = $region60
      $region59: #{tpu_custom_call.1} parent=5 // pred_region
        // Predicated region
        $region61: #{tpu_custom_call.1} parent=59 // pred_check
          %p444 = pneg %p85
        $region62: #{tpu_custom_call.1} parent=59 // pred_check_branch
          %446 = sbr.rel (%p444) target = $region64
        $region63: #{tpu_custom_call.1} parent=59 // pred_region
          %s447 = sand.u32 %s27, 1
          %s448 = scalar_lea.sflag [#allocation6], %s447
          %s449 = sand.u32 %s75, 1
          %s450 = smul.addr %s449, 8
          %s451 = scalar_lea.vmem [#allocation5], %s450
          %s453 = ssub.s32 128, 128
          %454 = vsyncadd %s448, %s453
          %s455 = smul.addr %s34, 2
          %s456 = smul.addr %s455, 64
          %s457 = scalar_lea.hbm %s1, %s456
          %s458 = sshll.u32 %s451, 4
          %s459 = int_to_ptr.vmem [resolvable:$true] %s458
          %464 = dma.hbm_to_vmem [thread:$0]  %s457, 128, %s459, %s448, 64, 64, 4
        $region64: #{tpu_custom_call.1} parent=59 // pred_fallthru
          _
      $region60: #{tpu_custom_call.1} parent=5 // pred_fallthru
        _
      %p465 = scmp.le.s32.totalorder 1, %s27
      %p466 = scmp.lt.s32.totalorder %s27, 3
      %p467 = pnand %p465, %p466
      %p468 = pneg %p467
      // Predicated region
      $region65: #{tpu_custom_call.1} parent=5 // pred_check
        _
      $region66: #{tpu_custom_call.1} parent=5 // pred_check_branch
        %470 = sbr.rel (%p467) target = $region68
      $region67: #{tpu_custom_call.1} parent=5 // pred_region
        %s471 = ssub.s32 %s27, 1
        // Predicated region
        $region69: #{tpu_custom_call.1} parent=67 // pred_check
          %p472 = pneg %p65
        $region70: #{tpu_custom_call.1} parent=67 // pred_check_branch
          %474 = sbr.rel (%p472) target = $region72
        $region71: #{tpu_custom_call.1} parent=67 // pred_region
          %475 = dma.done [#allocation3], 128
        $region72: #{tpu_custom_call.1} parent=67 // pred_fallthru
          _
        %s476 = sand.u32 %s32, 1
        %s477 = scalar_lea.sflag [#allocation6], %s476
        %s478 = sand.u32 %s78, 1
        %s479 = smul.addr %s478, 8
        %s480 = scalar_lea.vmem [#allocation5], %s479
        // Predicated region
        $region73: #{tpu_custom_call.1} parent=67 // pred_check
          %p481 = pneg %p91
        $region74: #{tpu_custom_call.1} parent=67 // pred_check_branch
          %483 = sbr.rel (%p481) target = $region76
        $region75: #{tpu_custom_call.1} parent=67 // pred_region
          %484 = dma.done %s477, 128
        $region76: #{tpu_custom_call.1} parent=67 // pred_fallthru
          _
        // Predicated region
        $region77: #{tpu_custom_call.1} parent=67 // pred_check
          %p485 = pneg %p112
        $region78: #{tpu_custom_call.1} parent=67 // pred_check_branch
          %487 = sbr.rel (%p485) target = $region80
        $region79: #{tpu_custom_call.1} parent=67 // pred_region
          %488 = dma.done [#allocation6], 2048
        $region80: #{tpu_custom_call.1} parent=67 // pred_fallthru
          _
        // Predicated region
        $region81: #{tpu_custom_call.1} parent=67 // pred_check
          %p489 = pneg %p154
        $region82: #{tpu_custom_call.1} parent=67 // pred_check_branch
          %491 = sbr.rel (%p489) target = $region84
        $region83: #{tpu_custom_call.1} parent=67 // pred_region
          %492 = dma.done [#allocation9], 1024
        $region84: #{tpu_custom_call.1} parent=67 // pred_fallthru
          _
        // Predicated region
        $region85: #{tpu_custom_call.1} parent=67 // pred_check
          %p493 = pneg %p196
        $region86: #{tpu_custom_call.1} parent=67 // pred_check_branch
          %495 = sbr.rel (%p493) target = $region88
        $region87: #{tpu_custom_call.1} parent=67 // pred_region
          %496 = dma.done [#allocation9], 1024
        $region88: #{tpu_custom_call.1} parent=67 // pred_fallthru
          _
        // Predicated region
        $region89: #{tpu_custom_call.1} parent=67 // pred_check
          %p497 = pneg %p238
        $region90: #{tpu_custom_call.1} parent=67 // pred_check_branch
          %499 = sbr.rel (%p497) target = $region92
        $region91: #{tpu_custom_call.1} parent=67 // pred_region
          %500 = dma.done [#allocation12], 1024
        $region92: #{tpu_custom_call.1} parent=67 // pred_fallthru
          _
        // Predicated region
        $region93: #{tpu_custom_call.1} parent=67 // pred_check
          %p501 = pneg %p280
        $region94: #{tpu_custom_call.1} parent=67 // pred_check_branch
          %503 = sbr.rel (%p501) target = $region96
        $region95: #{tpu_custom_call.1} parent=67 // pred_region
          %504 = dma.done [#allocation12], 1024
        $region96: #{tpu_custom_call.1} parent=67 // pred_fallthru
          _
        %p505 = pneg %p65
        %p506 = pneg %p62
        %s507 = sand.u32 %s32, 1
        %s508 = scalar_lea.sflag [#allocation6], %s507
        %s509 = sand.u32 %s78, 1
        %s510 = smul.addr %s509, 8
        %s511 = scalar_lea.vmem [#allocation5], %s510
        %p512 = pneg %p91
        %p513 = pneg %p88
        %p514 = pneg %p112
        %p515 = pneg %p109
        %p516 = pneg %p133
        %p517 = pneg %p130
        %p518 = pneg %p154
        %p519 = pneg %p151
        %p520 = pneg %p175
        %p521 = pneg %p172
        %p522 = pneg %p196
        %p523 = pneg %p193
        %p524 = pneg %p217
        %p525 = pneg %p214
        %p526 = pneg %p238
        %p527 = pneg %p235
        %p528 = pneg %p259
        %p529 = pneg %p256
        %p530 = pneg %p280
        %p531 = pneg %p277
        %p532 = pneg %p301
        %p533 = pneg %p298
        %p534 = pneg %p329
        %p535 = pneg %p326
        %s536 = sand.u32 %s316, 1
        %s537 = scalar_lea.sflag [#allocation4], %s536
        %s538 = sand.u32 %s316, 1
        %s539 = smul.addr %s538, 8
        %s540 = scalar_lea.vmem [#allocation14], %s539
        %s541 = smul.u32 2, %s37
        %s542 = smul.u32 2, %s37
        %v544 = vld [vmem:[#allocation2] sm:$0xf]
        %v545 = vld [vmem:[#allocation2 + $0x4] sm:$0xf]
        %v546 = vld [vmem:[%s480] sm:$0xf]
        %v547 = vld [vmem:[%s480 + $0x4] sm:$0xf]
        %v548 = vld [vmem:[#allocation7] sm:$0xff]
        %v549 = vld [vmem:[#allocation7 + $0x8] sm:$0xff]
        %v550 = vld [vmem:[#allocation7 + $0x10] sm:$0xff]
        %v551 = vld [vmem:[#allocation7 + $0x18] sm:$0xff]
        %v552 = vld [vmem:[#allocation7 + $0x20] sm:$0xff]
        %v553 = vld [vmem:[#allocation7 + $0x28] sm:$0xff]
        %v554 = vld [vmem:[#allocation7 + $0x30] sm:$0xff]
        %v555 = vld [vmem:[#allocation7 + $0x38] sm:$0xff]
        %v556 = vld [vmem:[#allocation7 + $0x40] sm:$0xff]
        %v557 = vld [vmem:[#allocation7 + $0x48] sm:$0xff]
        %v558 = vld [vmem:[#allocation7 + $0x50] sm:$0xff]
        %v559 = vld [vmem:[#allocation7 + $0x58] sm:$0xff]
        %v560 = vld [vmem:[#allocation7 + $0x60] sm:$0xff]
        %v561 = vld [vmem:[#allocation7 + $0x68] sm:$0xff]
        %v562 = vld [vmem:[#allocation7 + $0x70] sm:$0xff]
        %v563 = vld [vmem:[#allocation7 + $0x78] sm:$0xff]
        %v564 = vld [vmem:[%s3] sm:$0x3]
        %v566 = vlaneseq
        %v567 = vshrl.u32 %v566, 7
        %v568 = vsub.s32 0, %v567
        %v569 = vrot.slane %v564, %v568
        %v570 = vlaneseq
        %v571 = vshrl.u32 %v570, 7
        %v572 = vsub.s32 1, %v571
        %v573 = vrot.slane %v564, %v572
        %v578 = vunpack.c.l.b16 %v544
        %v579 = vunpack.c.l.b16 %v545
        %v580 = vpack.c.b16 %v579, %v578
        %v598 = vunpack.c.l.b16 %v548
        %v599 = vunpack.c.h.b16 %v548
        %v600 = vunpack.c.l.b16 %v549
        %v601 = vunpack.c.h.b16 %v549
        %v602 = vunpack.c.l.b16 %v550
        %v603 = vunpack.c.h.b16 %v550
        %v604 = vunpack.c.l.b16 %v551
        %v605 = vunpack.c.h.b16 %v551
        %v606 = vunpack.c.l.b16 %v552
        %v607 = vunpack.c.h.b16 %v552
        %v608 = vunpack.c.l.b16 %v553
        %v609 = vunpack.c.h.b16 %v553
        %v610 = vunpack.c.l.b16 %v554
        %v611 = vunpack.c.h.b16 %v554
        %v612 = vunpack.c.l.b16 %v555
        %v613 = vunpack.c.h.b16 %v555
        %v614 = vunpack.c.l.b16 %v556
        %v615 = vunpack.c.h.b16 %v556
        %v616 = vunpack.c.l.b16 %v557
        %v617 = vunpack.c.h.b16 %v557
        %v618 = vunpack.c.l.b16 %v558
        %v619 = vunpack.c.h.b16 %v558
        %v620 = vunpack.c.l.b16 %v559
        %v621 = vunpack.c.h.b16 %v559
        %v622 = vunpack.c.l.b16 %v560
        %v623 = vunpack.c.h.b16 %v560
        %v624 = vunpack.c.l.b16 %v561
        %v625 = vunpack.c.h.b16 %v561
        %v626 = vunpack.c.l.b16 %v562
        %v627 = vunpack.c.h.b16 %v562
        %v628 = vunpack.c.l.b16 %v563
        %v629 = vunpack.c.h.b16 %v563
        %v630 = vpack.c.b16 %v600, %v598
        %v631 = vpack.c.b16 %v601, %v599
        %v632 = vpack.c.b16 %v604, %v602
        %v633 = vpack.c.b16 %v605, %v603
        %v634 = vpack.c.b16 %v608, %v606
        %v635 = vpack.c.b16 %v609, %v607
        %v636 = vpack.c.b16 %v612, %v610
        %v637 = vpack.c.b16 %v613, %v611
        %v638 = vpack.c.b16 %v616, %v614
        %v639 = vpack.c.b16 %v617, %v615
        %v640 = vpack.c.b16 %v620, %v618
        %v641 = vpack.c.b16 %v621, %v619
        %v642 = vpack.c.b16 %v624, %v622
        %v643 = vpack.c.b16 %v625, %v623
        %v644 = vpack.c.b16 %v628, %v626
        %v645 = vpack.c.b16 %v629, %v627
        %662 = vmatprep.subr.bf16.mxu0 %v645
        %663 = vmatpush1.bf16.msra.mxu0 %v644
        %664 = vmatprep.subr.bf16.mxu0 %v643
        %665 = vmatpush1.bf16.msra.mxu0 %v642
        %666 = vmatprep.subr.bf16.mxu0 %v641
        %667 = vmatpush1.bf16.msra.mxu0 %v640
        %668 = vmatprep.subr.bf16.mxu0 %v639
        %669 = vmatpush1.bf16.msra.mxu0 %v638
        %670 = vmatprep.subr.bf16.mxu0 %v637
        %671 = vmatpush1.bf16.msra.mxu0 %v636
        %672 = vmatprep.subr.bf16.mxu0 %v635
        %673 = vmatpush1.bf16.msra.mxu0 %v634
        %674 = vmatprep.subr.bf16.mxu0 %v633
        %675 = vmatpush1.bf16.msra.mxu0 %v632
        %676 = vmatprep.subr.bf16.mxu0 %v631
        %677 = vmatpush1.bf16.msra.mxu0 %v630
        %678 = vmatprep.subr.bf16.mxu0 0
        %679 = vmatpush2.bf16.msra.mxu0 0
        %680 = vmatprep.subr.bf16.mxu0 0
        %681 = vmatpush2.bf16.msra.mxu0 0
        %682 = vmatprep.subr.bf16.mxu0 0
        %683 = vmatpush2.bf16.msra.mxu0 0
        %684 = vmatprep.subr.bf16.mxu0 0
        %685 = vmatpush2.bf16.msra.mxu0 0
        %686 = vmatprep.subr.bf16.mxu0 0
        %687 = vmatpush2.bf16.msra.mxu0 0
        %688 = vmatprep.subr.bf16.mxu0 0
        %689 = vmatpush2.bf16.msra.mxu0 0
        %690 = vmatprep.subr.bf16.mxu0 0
        %691 = vmatpush2.bf16.msra.mxu0 0
        %692 = vmatprep.subr.bf16.mxu0 0
        %693 = vmatpush2.bf16.msra.mxu0 0
        %694 = vmatprep.mubr.bf16.mxu0 0
        %695 = vmatmul.mubr.bf16.gmra.mxu0 %v580
        %v696 = vpop.f32.mrf.mxu0
        %v697 = vadd.f32 %v569, %v696
        %v698 = vpop.f32.mrf.mxu0
        %v699 = vadd.f32 %v573, %v698
        %v700 = vpop.f32.mrf.mxu0
        %v701 = vadd.f32 %v569, %v700
        %v702 = vpop.f32.mrf.mxu0
        %v703 = vadd.f32 %v573, %v702
        %704 = vdwg.mxu0
        %v705 = vxor.u32 %v699, 2147483648
        %v706 = vxor.u32 %v703, 2147483648
        %v707 = vmul.f32 %v705, 1.442695
        %v708 = vpow.pop %v707
        %v709 = vmul.f32 %v706, 1.442695
        %v710 = vpow.pop %v709
        %v711 = vadd.f32 %v708, 1.0
        %v712 = vadd.f32 %v710, 1.0
        %v713 = vrcp.pop %v711
        %v714 = vmul.f32 1.0, %v713
        %v715 = vrcp.pop %v712
        %v716 = vmul.f32 1.0, %v715
        %v717 = vmul.f32 %v699, %v714
        %v718 = vmul.f32 %v703, %v716
        %v719 = vpack.c.bf16 %v701, %v697
        %v720 = vld [vmem:[#allocation8] sm:$0xf]
        %v721 = vld [vmem:[#allocation8 + $0x4] sm:$0xf]
        %v722 = vld [vmem:[#allocation8 + $0x8] sm:$0xf]
        %v723 = vld [vmem:[#allocation8 + $0xc] sm:$0xf]
        %v724 = vld [vmem:[#allocation8 + $0x10] sm:$0xf]
        %v725 = vld [vmem:[#allocation8 + $0x14] sm:$0xf]
        %v726 = vld [vmem:[#allocation8 + $0x18] sm:$0xf]
        %v727 = vld [vmem:[#allocation8 + $0x1c] sm:$0xf]
        %v728 = vld [vmem:[#allocation8 + $0x20] sm:$0xf]
        %v729 = vld [vmem:[#allocation8 + $0x24] sm:$0xf]
        %v730 = vld [vmem:[#allocation8 + $0x28] sm:$0xf]
        %v731 = vld [vmem:[#allocation8 + $0x2c] sm:$0xf]
        %v732 = vld [vmem:[#allocation8 + $0x30] sm:$0xf]
        %v733 = vld [vmem:[#allocation8 + $0x34] sm:$0xf]
        %v734 = vld [vmem:[#allocation8 + $0x38] sm:$0xf]
        %v735 = vld [vmem:[#allocation8 + $0x3c] sm:$0xf]
        %v736 = vld [vmem:[%s5] sm:$0x1]
        %v738 = vlaneseq
        %v739 = vshrl.u32 %v738, 7
        %v740 = vsub.s32 0, %v739
        %v741 = vrot.slane %v736, %v740
        %v759 = vunpack.c.l.b16 %v720
        %v760 = vunpack.c.l.b16 %v721
        %v761 = vunpack.c.l.b16 %v722
        %v762 = vunpack.c.l.b16 %v723
        %v763 = vunpack.c.l.b16 %v724
        %v764 = vunpack.c.l.b16 %v725
        %v765 = vunpack.c.l.b16 %v726
        %v766 = vunpack.c.l.b16 %v727
        %v767 = vunpack.c.l.b16 %v728
        %v768 = vunpack.c.l.b16 %v729
        %v769 = vunpack.c.l.b16 %v730
        %v770 = vunpack.c.l.b16 %v731
        %v771 = vunpack.c.l.b16 %v732
        %v772 = vunpack.c.l.b16 %v733
        %v773 = vunpack.c.l.b16 %v734
        %v774 = vunpack.c.l.b16 %v735
        %v775 = vpack.c.b16 %v760, %v759
        %v776 = vpack.c.b16 %v762, %v761
        %v777 = vpack.c.b16 %v764, %v763
        %v778 = vpack.c.b16 %v766, %v765
        %v779 = vpack.c.b16 %v768, %v767
        %v780 = vpack.c.b16 %v770, %v769
        %v781 = vpack.c.b16 %v772, %v771
        %v782 = vpack.c.b16 %v774, %v773
        %791 = vmatprep.subr.bf16.mxu0 0
        %792 = vmatpush1.bf16.msra.mxu0 %v782
        %793 = vmatprep.subr.bf16.mxu0 0
        %794 = vmatpush1.bf16.msra.mxu0 %v781
        %795 = vmatprep.subr.bf16.mxu0 0
        %796 = vmatpush1.bf16.msra.mxu0 %v780
        %797 = vmatprep.subr.bf16.mxu0 0
        %798 = vmatpush1.bf16.msra.mxu0 %v779
        %799 = vmatprep.subr.bf16.mxu0 0
        %800 = vmatpush1.bf16.msra.mxu0 %v778
        %801 = vmatprep.subr.bf16.mxu0 0
        %802 = vmatpush1.bf16.msra.mxu0 %v777
        %803 = vmatprep.subr.bf16.mxu0 0
        %804 = vmatpush1.bf16.msra.mxu0 %v776
        %805 = vmatprep.subr.bf16.mxu0 0
        %806 = vmatpush1.bf16.msra.mxu0 %v775
        %807 = vmatprep.subr.bf16.mxu0 0
        %808 = vmatpush2.bf16.msra.mxu0 0
        %809 = vmatprep.subr.bf16.mxu0 0
        %810 = vmatpush2.bf16.msra.mxu0 0
        %811 = vmatprep.subr.bf16.mxu0 0
        %812 = vmatpush2.bf16.msra.mxu0 0
        %813 = vmatprep.subr.bf16.mxu0 0
        %814 = vmatpush2.bf16.msra.mxu0 0
        %815 = vmatprep.subr.bf16.mxu0 0
        %816 = vmatpush2.bf16.msra.mxu0 0
        %817 = vmatprep.subr.bf16.mxu0 0
        %818 = vmatpush2.bf16.msra.mxu0 0
        %819 = vmatprep.subr.bf16.mxu0 0
        %820 = vmatpush2.bf16.msra.mxu0 0
        %821 = vmatprep.subr.bf16.mxu0 0
        %822 = vmatpush2.bf16.msra.mxu0 0
        %823 = vmatprep.mubr.bf16.mxu0 0
        %824 = vmatmul.mubr.bf16.gmra.mxu0 %v719
        %v825 = vpop.f32.mrf.mxu0
        %v826 = vadd.f32 %v741, %v825
        %v827 = vpop.f32.mrf.mxu0
        %v828 = vpop.f32.mrf.mxu0
        %v829 = vadd.f32 %v741, %v828
        %v830 = vpop.f32.mrf.mxu0
        %831 = vdwg.mxu0
        %v832 = vld [vmem:[#allocation10] sm:$0xff]
        %v833 = vld [vmem:[#allocation10 + $0x8] sm:$0xff]
        %v834 = vld [vmem:[#allocation10 + $0x10] sm:$0xff]
        %v835 = vld [vmem:[#allocation10 + $0x18] sm:$0xff]
        %v836 = vld [vmem:[#allocation10 + $0x20] sm:$0xff]
        %v837 = vld [vmem:[#allocation10 + $0x28] sm:$0xff]
        %v838 = vld [vmem:[#allocation10 + $0x30] sm:$0xff]
        %v839 = vld [vmem:[#allocation10 + $0x38] sm:$0xff]
        %v840 = vld [vmem:[%s7] sm:$0x3]
        %v842 = vlaneseq
        %v843 = vshrl.u32 %v842, 7
        %v844 = vsub.s32 0, %v843
        %v845 = vrot.slane %v840, %v844
        %v846 = vlaneseq
        %v847 = vshrl.u32 %v846, 7
        %v848 = vsub.s32 1, %v847
        %v849 = vrot.slane %v840, %v848
        %v854 = vunpack.c.l.b16 %v546
        %v855 = vunpack.c.l.b16 %v547
        %v856 = vpack.c.b16 %v855, %v854
        %v865 = vunpack.c.l.b16 %v832
        %v866 = vunpack.c.h.b16 %v832
        %v867 = vunpack.c.l.b16 %v833
        %v868 = vunpack.c.h.b16 %v833
        %v869 = vunpack.c.l.b16 %v834
        %v870 = vunpack.c.h.b16 %v834
        %v871 = vunpack.c.l.b16 %v835
        %v872 = vunpack.c.h.b16 %v835
        %v873 = vunpack.c.l.b16 %v836
        %v874 = vunpack.c.h.b16 %v836
        %v875 = vunpack.c.l.b16 %v837
        %v876 = vunpack.c.h.b16 %v837
        %v877 = vunpack.c.l.b16 %v838
        %v878 = vunpack.c.h.b16 %v838
        %v879 = vunpack.c.l.b16 %v839
        %v880 = vunpack.c.h.b16 %v839
        %v881 = vpack.c.b16 %v867, %v865
        %v882 = vpack.c.b16 %v868, %v866
        %v883 = vpack.c.b16 %v871, %v869
        %v884 = vpack.c.b16 %v872, %v870
        %v885 = vpack.c.b16 %v875, %v873
        %v886 = vpack.c.b16 %v876, %v874
        %v887 = vpack.c.b16 %v879, %v877
        %v888 = vpack.c.b16 %v880, %v878
        %vm897 = vcmask 523264
        %v899 = vsel %vm897, %v856, 0
        %901 = vmatprep.subr.bf16.mxu0 0
        %902 = vmatpush1.bf16.msra.mxu0 0
        %903 = vmatprep.subr.bf16.mxu0 0
        %904 = vmatpush1.bf16.msra.mxu0 0
        %905 = vmatprep.subr.bf16.mxu0 0
        %906 = vmatpush1.bf16.msra.mxu0 0
        %907 = vmatprep.subr.bf16.mxu0 0
        %908 = vmatpush1.bf16.msra.mxu0 0
        %909 = vmatprep.subr.bf16.mxu0 %v888
        %910 = vmatpush1.bf16.msra.mxu0 %v887
        %911 = vmatprep.subr.bf16.mxu0 %v886
        %912 = vmatpush1.bf16.msra.mxu0 %v885
        %913 = vmatprep.subr.bf16.mxu0 %v884
        %914 = vmatpush1.bf16.msra.mxu0 %v883
        %915 = vmatprep.subr.bf16.mxu0 %v882
        %916 = vmatpush1.bf16.msra.mxu0 %v881
        %917 = vmatprep.subr.bf16.mxu0 0
        %918 = vmatpush2.bf16.msra.mxu0 0
        %919 = vmatprep.subr.bf16.mxu0 0
        %920 = vmatpush2.bf16.msra.mxu0 0
        %921 = vmatprep.subr.bf16.mxu0 0
        %922 = vmatpush2.bf16.msra.mxu0 0
        %923 = vmatprep.subr.bf16.mxu0 0
        %924 = vmatpush2.bf16.msra.mxu0 0
        %925 = vmatprep.subr.bf16.mxu0 0
        %926 = vmatpush2.bf16.msra.mxu0 0
        %927 = vmatprep.subr.bf16.mxu0 0
        %928 = vmatpush2.bf16.msra.mxu0 0
        %929 = vmatprep.subr.bf16.mxu0 0
        %930 = vmatpush2.bf16.msra.mxu0 0
        %931 = vmatprep.subr.bf16.mxu0 0
        %932 = vmatpush2.bf16.msra.mxu0 0
        %933 = vmatprep.mubr.bf16.mxu0 0
        %934 = vmatmul.mubr.bf16.gmra.mxu0 %v899
        %v935 = vpop.f32.mrf.mxu0
        %v936 = vadd.f32 %v845, %v935
        %v937 = vpop.f32.mrf.mxu0
        %v938 = vadd.f32 %v849, %v937
        %v939 = vpop.f32.mrf.mxu0
        %v940 = vadd.f32 %v845, %v939
        %v941 = vpop.f32.mrf.mxu0
        %v942 = vadd.f32 %v849, %v941
        %943 = vdwg.mxu0
        %v944 = vmul.f32 %v826, 0.17677669
        %v945 = vmul.f32 %v829, 0.17677669
        %948 = vrot.lane.b32.xlu0 %v944, 96
        %v949 = vpop.permute.xlu0 %948
        %950 = vrot.lane.b32.xlu0 %v945, 96
        %v951 = vpop.permute.xlu0 %950
        %954 = vrot.lane.b32.xlu0 %v944, 64
        %v955 = vpop.permute.xlu0 %954
        %956 = vrot.lane.b32.xlu0 %v945, 64
        %v957 = vpop.permute.xlu0 %956
        %960 = vrot.lane.b32.xlu0 %v944, 32
        %v961 = vpop.permute.xlu0 %960
        %962 = vrot.lane.b32.xlu0 %v945, 32
        %v963 = vpop.permute.xlu0 %962
        %v966 = vcombine.low %v944, %v955
        %v967 = vcombine.high %v944, %v955
        %v969 = vunpack.c.l.s4 1983009808
        %v970 = vunpack.c.0.s8 %v969
        %v971 = vlaneseq
        %v972 = vshrl.u32 %v971, 7
        %v973 = vsub.s32 %v970, %v972
        %v974 = vrot.slane %v966, %v973
        %v976 = vunpack.c.l.s4 1983009808
        %v977 = vunpack.c.0.s8 %v976
        %v978 = vlaneseq
        %v979 = vshrl.u32 %v978, 7
        %v980 = vsub.s32 %v977, %v979
        %v981 = vrot.slane %v967, %v980
        %v982 = vcombine.low %v949, %v961
        %v983 = vcombine.high %v949, %v961
        %v985 = vunpack.c.l.s4 1983009808
        %v986 = vunpack.c.0.s8 %v985
        %v987 = vlaneseq
        %v988 = vshrl.u32 %v987, 7
        %v989 = vsub.s32 %v986, %v988
        %v990 = vrot.slane %v982, %v989
        %v992 = vunpack.c.l.s4 1983009808
        %v993 = vunpack.c.0.s8 %v992
        %v994 = vlaneseq
        %v995 = vshrl.u32 %v994, 7
        %v996 = vsub.s32 %v993, %v995
        %v997 = vrot.slane %v983, %v996
        %v998 = vcombine.low %v974, %v990
        %v999 = vcombine.high %v974, %v990
        %v1001 = vunpack.c.l.s4 1934713408
        %v1002 = vunpack.c.0.s8 %v1001
        %v1003 = vlaneseq
        %v1004 = vshrl.u32 %v1003, 7
        %v1005 = vsub.s32 %v1002, %v1004
        %v1006 = vrot.slane %v998, %v1005
        %v1008 = vunpack.c.l.s4 1934713408
        %v1009 = vunpack.c.0.s8 %v1008
        %v1010 = vlaneseq
        %v1011 = vshrl.u32 %v1010, 7
        %v1012 = vsub.s32 %v1009, %v1011
        %v1013 = vrot.slane %v999, %v1012
        %v1014 = vcombine.low %v981, %v997
        %v1015 = vcombine.high %v981, %v997
        %v1017 = vunpack.c.l.s4 1934713408
        %v1018 = vunpack.c.0.s8 %v1017
        %v1019 = vlaneseq
        %v1020 = vshrl.u32 %v1019, 7
        %v1021 = vsub.s32 %v1018, %v1020
        %v1022 = vrot.slane %v1014, %v1021
        %v1024 = vunpack.c.l.s4 1934713408
        %v1025 = vunpack.c.0.s8 %v1024
        %v1026 = vlaneseq
        %v1027 = vshrl.u32 %v1026, 7
        %v1028 = vsub.s32 %v1025, %v1027
        %v1029 = vrot.slane %v1015, %v1028
        %v1030 = vcombine.high %v1006, 0.0
        %v1031 = vcombine.high %v1013, 0.0
        %v1032 = vcombine.high %v1022, 0.0
        %v1033 = vcombine.high %v1029, 0.0
        %v1034 = vcombine.low %v945, %v957
        %v1035 = vcombine.high %v945, %v957
        %v1037 = vunpack.c.l.s4 1983009808
        %v1038 = vunpack.c.0.s8 %v1037
        %v1039 = vlaneseq
        %v1040 = vshrl.u32 %v1039, 7
        %v1041 = vsub.s32 %v1038, %v1040
        %v1042 = vrot.slane %v1034, %v1041
        %v1044 = vunpack.c.l.s4 1983009808
        %v1045 = vunpack.c.0.s8 %v1044
        %v1046 = vlaneseq
        %v1047 = vshrl.u32 %v1046, 7
        %v1048 = vsub.s32 %v1045, %v1047
        %v1049 = vrot.slane %v1035, %v1048
        %v1050 = vcombine.low %v951, %v963
        %v1051 = vcombine.high %v951, %v963
        %v1053 = vunpack.c.l.s4 1983009808
        %v1054 = vunpack.c.0.s8 %v1053
        %v1055 = vlaneseq
        %v1056 = vshrl.u32 %v1055, 7
        %v1057 = vsub.s32 %v1054, %v1056
        %v1058 = vrot.slane %v1050, %v1057
        %v1060 = vunpack.c.l.s4 1983009808
        %v1061 = vunpack.c.0.s8 %v1060
        %v1062 = vlaneseq
        %v1063 = vshrl.u32 %v1062, 7
        %v1064 = vsub.s32 %v1061, %v1063
        %v1065 = vrot.slane %v1051, %v1064
        %v1066 = vcombine.low %v1042, %v1058
        %v1067 = vcombine.high %v1042, %v1058
        %v1069 = vunpack.c.l.s4 1934713408
        %v1070 = vunpack.c.0.s8 %v1069
        %v1071 = vlaneseq
        %v1072 = vshrl.u32 %v1071, 7
        %v1073 = vsub.s32 %v1070, %v1072
        %v1074 = vrot.slane %v1066, %v1073
        %v1076 = vunpack.c.l.s4 1934713408
        %v1077 = vunpack.c.0.s8 %v1076
        %v1078 = vlaneseq
        %v1079 = vshrl.u32 %v1078, 7
        %v1080 = vsub.s32 %v1077, %v1079
        %v1081 = vrot.slane %v1067, %v1080
        %v1082 = vcombine.low %v1049, %v1065
        %v1083 = vcombine.high %v1049, %v1065
        %v1085 = vunpack.c.l.s4 1934713408
        %v1086 = vunpack.c.0.s8 %v1085
        %v1087 = vlaneseq
        %v1088 = vshrl.u32 %v1087, 7
        %v1089 = vsub.s32 %v1086, %v1088
        %v1090 = vrot.slane %v1082, %v1089
        %v1092 = vunpack.c.l.s4 1934713408
        %v1093 = vunpack.c.0.s8 %v1092
        %v1094 = vlaneseq
        %v1095 = vshrl.u32 %v1094, 7
        %v1096 = vsub.s32 %v1093, %v1095
        %v1097 = vrot.slane %v1083, %v1096
        %v1098 = vcombine.high %v1074, 0.0
        %v1099 = vcombine.high %v1081, 0.0
        %v1100 = vcombine.high %v1090, 0.0
        %v1101 = vcombine.high %v1097, 0.0
        %v1102 = vpack.c.bf16 %v1006, %v1006
        %v1103 = vpack.c.bf16 %v1030, %v1030
        %v1104 = vpack.c.bf16 %v1013, %v1013
        %v1105 = vpack.c.bf16 %v1031, %v1031
        %v1106 = vpack.c.bf16 %v1022, %v1022
        %v1107 = vpack.c.bf16 %v1032, %v1032
        %v1108 = vpack.c.bf16 %v1029, %v1029
        %v1109 = vpack.c.bf16 %v1033, %v1033
        %v1110 = vpack.c.bf16 %v1074, %v1074
        %v1111 = vpack.c.bf16 %v1098, %v1098
        %v1112 = vpack.c.bf16 %v1081, %v1081
        %v1113 = vpack.c.bf16 %v1099, %v1099
        %v1114 = vpack.c.bf16 %v1090, %v1090
        %v1115 = vpack.c.bf16 %v1100, %v1100
        %v1116 = vpack.c.bf16 %v1097, %v1097
        %v1117 = vpack.c.bf16 %v1101, %v1101
        %1120 = vrot.lane.b32.xlu0 %v936, 96
        %v1121 = vpop.permute.xlu0 %1120
        %1122 = vrot.lane.b32.xlu0 %v940, 96
        %v1123 = vpop.permute.xlu0 %1122
        %1126 = vrot.lane.b32.xlu0 %v936, 64
        %v1127 = vpop.permute.xlu0 %1126
        %1128 = vrot.lane.b32.xlu0 %v940, 64
        %v1129 = vpop.permute.xlu0 %1128
        %1132 = vrot.lane.b32.xlu0 %v936, 32
        %v1133 = vpop.permute.xlu0 %1132
        %1134 = vrot.lane.b32.xlu0 %v940, 32
        %v1135 = vpop.permute.xlu0 %1134
        %v1138 = vcombine.low %v936, %v1127
        %v1139 = vcombine.high %v936, %v1127
        %v1141 = vunpack.c.l.s4 1983009808
        %v1142 = vunpack.c.0.s8 %v1141
        %v1143 = vlaneseq
        %v1144 = vshrl.u32 %v1143, 7
        %v1145 = vsub.s32 %v1142, %v1144
        %v1146 = vrot.slane %v1138, %v1145
        %v1148 = vunpack.c.l.s4 1983009808
        %v1149 = vunpack.c.0.s8 %v1148
        %v1150 = vlaneseq
        %v1151 = vshrl.u32 %v1150, 7
        %v1152 = vsub.s32 %v1149, %v1151
        %v1153 = vrot.slane %v1139, %v1152
        %v1154 = vcombine.low %v1121, %v1133
        %v1155 = vcombine.high %v1121, %v1133
        %v1157 = vunpack.c.l.s4 1983009808
        %v1158 = vunpack.c.0.s8 %v1157
        %v1159 = vlaneseq
        %v1160 = vshrl.u32 %v1159, 7
        %v1161 = vsub.s32 %v1158, %v1160
        %v1162 = vrot.slane %v1154, %v1161
        %v1164 = vunpack.c.l.s4 1983009808
        %v1165 = vunpack.c.0.s8 %v1164
        %v1166 = vlaneseq
        %v1167 = vshrl.u32 %v1166, 7
        %v1168 = vsub.s32 %v1165, %v1167
        %v1169 = vrot.slane %v1155, %v1168
        %v1170 = vcombine.low %v1146, %v1162
        %v1171 = vcombine.high %v1146, %v1162
        %v1173 = vunpack.c.l.s4 1934713408
        %v1174 = vunpack.c.0.s8 %v1173
        %v1175 = vlaneseq
        %v1176 = vshrl.u32 %v1175, 7
        %v1177 = vsub.s32 %v1174, %v1176
        %v1178 = vrot.slane %v1170, %v1177
        %v1180 = vunpack.c.l.s4 1934713408
        %v1181 = vunpack.c.0.s8 %v1180
        %v1182 = vlaneseq
        %v1183 = vshrl.u32 %v1182, 7
        %v1184 = vsub.s32 %v1181, %v1183
        %v1185 = vrot.slane %v1171, %v1184
        %v1186 = vcombine.low %v1153, %v1169
        %v1187 = vcombine.high %v1153, %v1169
        %v1189 = vunpack.c.l.s4 1934713408
        %v1190 = vunpack.c.0.s8 %v1189
        %v1191 = vlaneseq
        %v1192 = vshrl.u32 %v1191, 7
        %v1193 = vsub.s32 %v1190, %v1192
        %v1194 = vrot.slane %v1186, %v1193
        %v1196 = vunpack.c.l.s4 1934713408
        %v1197 = vunpack.c.0.s8 %v1196
        %v1198 = vlaneseq
        %v1199 = vshrl.u32 %v1198, 7
        %v1200 = vsub.s32 %v1197, %v1199
        %v1201 = vrot.slane %v1187, %v1200
        %v1202 = vcombine.high %v1178, 0.0
        %v1203 = vcombine.high %v1185, 0.0
        %v1204 = vcombine.high %v1194, 0.0
        %v1205 = vcombine.high %v1201, 0.0
        %v1206 = vcombine.low %v940, %v1129
        %v1207 = vcombine.high %v940, %v1129
        %v1209 = vunpack.c.l.s4 1983009808
        %v1210 = vunpack.c.0.s8 %v1209
        %v1211 = vlaneseq
        %v1212 = vshrl.u32 %v1211, 7
        %v1213 = vsub.s32 %v1210, %v1212
        %v1214 = vrot.slane %v1206, %v1213
        %v1216 = vunpack.c.l.s4 1983009808
        %v1217 = vunpack.c.0.s8 %v1216
        %v1218 = vlaneseq
        %v1219 = vshrl.u32 %v1218, 7
        %v1220 = vsub.s32 %v1217, %v1219
        %v1221 = vrot.slane %v1207, %v1220
        %v1222 = vcombine.low %v1123, %v1135
        %v1223 = vcombine.high %v1123, %v1135
        %v1225 = vunpack.c.l.s4 1983009808
        %v1226 = vunpack.c.0.s8 %v1225
        %v1227 = vlaneseq
        %v1228 = vshrl.u32 %v1227, 7
        %v1229 = vsub.s32 %v1226, %v1228
        %v1230 = vrot.slane %v1222, %v1229
        %v1232 = vunpack.c.l.s4 1983009808
        %v1233 = vunpack.c.0.s8 %v1232
        %v1234 = vlaneseq
        %v1235 = vshrl.u32 %v1234, 7
        %v1236 = vsub.s32 %v1233, %v1235
        %v1237 = vrot.slane %v1223, %v1236
        %v1238 = vcombine.low %v1214, %v1230
        %v1239 = vcombine.high %v1214, %v1230
        %v1241 = vunpack.c.l.s4 1934713408
        %v1242 = vunpack.c.0.s8 %v1241
        %v1243 = vlaneseq
        %v1244 = vshrl.u32 %v1243, 7
        %v1245 = vsub.s32 %v1242, %v1244
        %v1246 = vrot.slane %v1238, %v1245
        %v1248 = vunpack.c.l.s4 1934713408
        %v1249 = vunpack.c.0.s8 %v1248
        %v1250 = vlaneseq
        %v1251 = vshrl.u32 %v1250, 7
        %v1252 = vsub.s32 %v1249, %v1251
        %v1253 = vrot.slane %v1239, %v1252
        %v1254 = vcombine.low %v1221, %v1237
        %v1255 = vcombine.high %v1221, %v1237
        %v1257 = vunpack.c.l.s4 1934713408
        %v1258 = vunpack.c.0.s8 %v1257
        %v1259 = vlaneseq
        %v1260 = vshrl.u32 %v1259, 7
        %v1261 = vsub.s32 %v1258, %v1260
        %v1262 = vrot.slane %v1254, %v1261
        %v1264 = vunpack.c.l.s4 1934713408
        %v1265 = vunpack.c.0.s8 %v1264
        %v1266 = vlaneseq
        %v1267 = vshrl.u32 %v1266, 7
        %v1268 = vsub.s32 %v1265, %v1267
        %v1269 = vrot.slane %v1255, %v1268
        %v1270 = vcombine.high %v1246, 0.0
        %v1271 = vcombine.high %v1253, 0.0
        %v1272 = vcombine.high %v1262, 0.0
        %v1273 = vcombine.high %v1269, 0.0
        %v1274 = vpack.c.bf16 %v1178, %v1178
        %v1275 = vpack.c.bf16 %v1202, %v1202
        %v1276 = vpack.c.bf16 %v1185, %v1185
        %v1277 = vpack.c.bf16 %v1203, %v1203
        %v1278 = vpack.c.bf16 %v1194, %v1194
        %v1279 = vpack.c.bf16 %v1204, %v1204
        %v1280 = vpack.c.bf16 %v1201, %v1201
        %v1281 = vpack.c.bf16 %v1205, %v1205
        %v1282 = vpack.c.bf16 %v1246, %v1246
        %v1283 = vpack.c.bf16 %v1270, %v1270
        %v1284 = vpack.c.bf16 %v1253, %v1253
        %v1285 = vpack.c.bf16 %v1271, %v1271
        %v1286 = vpack.c.bf16 %v1262, %v1262
        %v1287 = vpack.c.bf16 %v1272, %v1272
        %v1288 = vpack.c.bf16 %v1269, %v1269
        %v1289 = vpack.c.bf16 %v1273, %v1273
        %1292 = vrot.lane.b32.xlu0 %v938, 96
        %v1293 = vpop.permute.xlu0 %1292
        %1294 = vrot.lane.b32.xlu0 %v942, 96
        %v1295 = vpop.permute.xlu0 %1294
        %1298 = vrot.lane.b32.xlu0 %v938, 64
        %v1299 = vpop.permute.xlu0 %1298
        %1300 = vrot.lane.b32.xlu0 %v942, 64
        %v1301 = vpop.permute.xlu0 %1300
        %1304 = vrot.lane.b32.xlu0 %v938, 32
        %v1305 = vpop.permute.xlu0 %1304
        %1306 = vrot.lane.b32.xlu0 %v942, 32
        %v1307 = vpop.permute.xlu0 %1306
        %v1310 = vcombine.low %v938, %v1299
        %v1311 = vcombine.high %v938, %v1299
        %v1313 = vunpack.c.l.s4 1983009808
        %v1314 = vunpack.c.0.s8 %v1313
        %v1315 = vlaneseq
        %v1316 = vshrl.u32 %v1315, 7
        %v1317 = vsub.s32 %v1314, %v1316
        %v1318 = vrot.slane %v1310, %v1317
        %v1320 = vunpack.c.l.s4 1983009808
        %v1321 = vunpack.c.0.s8 %v1320
        %v1322 = vlaneseq
        %v1323 = vshrl.u32 %v1322, 7
        %v1324 = vsub.s32 %v1321, %v1323
        %v1325 = vrot.slane %v1311, %v1324
        %v1326 = vcombine.low %v1293, %v1305
        %v1327 = vcombine.high %v1293, %v1305
        %v1329 = vunpack.c.l.s4 1983009808
        %v1330 = vunpack.c.0.s8 %v1329
        %v1331 = vlaneseq
        %v1332 = vshrl.u32 %v1331, 7
        %v1333 = vsub.s32 %v1330, %v1332
        %v1334 = vrot.slane %v1326, %v1333
        %v1336 = vunpack.c.l.s4 1983009808
        %v1337 = vunpack.c.0.s8 %v1336
        %v1338 = vlaneseq
        %v1339 = vshrl.u32 %v1338, 7
        %v1340 = vsub.s32 %v1337, %v1339
        %v1341 = vrot.slane %v1327, %v1340
        %v1342 = vcombine.low %v1318, %v1334
        %v1343 = vcombine.high %v1318, %v1334
        %v1345 = vunpack.c.l.s4 1934713408
        %v1346 = vunpack.c.0.s8 %v1345
        %v1347 = vlaneseq
        %v1348 = vshrl.u32 %v1347, 7
        %v1349 = vsub.s32 %v1346, %v1348
        %v1350 = vrot.slane %v1342, %v1349
        %v1352 = vunpack.c.l.s4 1934713408
        %v1353 = vunpack.c.0.s8 %v1352
        %v1354 = vlaneseq
        %v1355 = vshrl.u32 %v1354, 7
        %v1356 = vsub.s32 %v1353, %v1355
        %v1357 = vrot.slane %v1343, %v1356
        %v1358 = vcombine.low %v1325, %v1341
        %v1359 = vcombine.high %v1325, %v1341
        %v1361 = vunpack.c.l.s4 1934713408
        %v1362 = vunpack.c.0.s8 %v1361
        %v1363 = vlaneseq
        %v1364 = vshrl.u32 %v1363, 7
        %v1365 = vsub.s32 %v1362, %v1364
        %v1366 = vrot.slane %v1358, %v1365
        %v1368 = vunpack.c.l.s4 1934713408
        %v1369 = vunpack.c.0.s8 %v1368
        %v1370 = vlaneseq
        %v1371 = vshrl.u32 %v1370, 7
        %v1372 = vsub.s32 %v1369, %v1371
        %v1373 = vrot.slane %v1359, %v1372
        %v1374 = vcombine.high %v1350, 0.0
        %v1375 = vcombine.high %v1357, 0.0
        %v1376 = vcombine.high %v1366, 0.0
        %v1377 = vcombine.high %v1373, 0.0
        %v1378 = vcombine.low %v942, %v1301
        %v1379 = vcombine.high %v942, %v1301
        %v1381 = vunpack.c.l.s4 1983009808
        %v1382 = vunpack.c.0.s8 %v1381
        %v1383 = vlaneseq
        %v1384 = vshrl.u32 %v1383, 7
        %v1385 = vsub.s32 %v1382, %v1384
        %v1386 = vrot.slane %v1378, %v1385
        %v1388 = vunpack.c.l.s4 1983009808
        %v1389 = vunpack.c.0.s8 %v1388
        %v1390 = vlaneseq
        %v1391 = vshrl.u32 %v1390, 7
        %v1392 = vsub.s32 %v1389, %v1391
        %v1393 = vrot.slane %v1379, %v1392
        %v1394 = vcombine.low %v1295, %v1307
        %v1395 = vcombine.high %v1295, %v1307
        %v1397 = vunpack.c.l.s4 1983009808
        %v1398 = vunpack.c.0.s8 %v1397
        %v1399 = vlaneseq
        %v1400 = vshrl.u32 %v1399, 7
        %v1401 = vsub.s32 %v1398, %v1400
        %v1402 = vrot.slane %v1394, %v1401
        %v1404 = vunpack.c.l.s4 1983009808
        %v1405 = vunpack.c.0.s8 %v1404
        %v1406 = vlaneseq
        %v1407 = vshrl.u32 %v1406, 7
        %v1408 = vsub.s32 %v1405, %v1407
        %v1409 = vrot.slane %v1395, %v1408
        %v1410 = vcombine.low %v1386, %v1402
        %v1411 = vcombine.high %v1386, %v1402
        %v1413 = vunpack.c.l.s4 1934713408
        %v1414 = vunpack.c.0.s8 %v1413
        %v1415 = vlaneseq
        %v1416 = vshrl.u32 %v1415, 7
        %v1417 = vsub.s32 %v1414, %v1416
        %v1418 = vrot.slane %v1410, %v1417
        %v1420 = vunpack.c.l.s4 1934713408
        %v1421 = vunpack.c.0.s8 %v1420
        %v1422 = vlaneseq
        %v1423 = vshrl.u32 %v1422, 7
        %v1424 = vsub.s32 %v1421, %v1423
        %v1425 = vrot.slane %v1411, %v1424
        %v1426 = vcombine.low %v1393, %v1409
        %v1427 = vcombine.high %v1393, %v1409
        %v1429 = vunpack.c.l.s4 1934713408
        %v1430 = vunpack.c.0.s8 %v1429
        %v1431 = vlaneseq
        %v1432 = vshrl.u32 %v1431, 7
        %v1433 = vsub.s32 %v1430, %v1432
        %v1434 = vrot.slane %v1426, %v1433
        %v1436 = vunpack.c.l.s4 1934713408
        %v1437 = vunpack.c.0.s8 %v1436
        %v1438 = vlaneseq
        %v1439 = vshrl.u32 %v1438, 7
        %v1440 = vsub.s32 %v1437, %v1439
        %v1441 = vrot.slane %v1427, %v1440
        %v1442 = vcombine.high %v1418, 0.0
        %v1443 = vcombine.high %v1425, 0.0
        %v1444 = vcombine.high %v1434, 0.0
        %v1445 = vcombine.high %v1441, 0.0
        %v1446 = vpack.c.bf16 %v1350, %v1350
        %v1447 = vpack.c.bf16 %v1374, %v1374
        %v1448 = vpack.c.bf16 %v1357, %v1357
        %v1449 = vpack.c.bf16 %v1375, %v1375
        %v1450 = vpack.c.bf16 %v1366, %v1366
        %v1451 = vpack.c.bf16 %v1376, %v1376
        %v1452 = vpack.c.bf16 %v1373, %v1373
        %v1453 = vpack.c.bf16 %v1377, %v1377
        %v1454 = vpack.c.bf16 %v1418, %v1418
        %v1455 = vpack.c.bf16 %v1442, %v1442
        %v1456 = vpack.c.bf16 %v1425, %v1425
        %v1457 = vpack.c.bf16 %v1443, %v1443
        %v1458 = vpack.c.bf16 %v1434, %v1434
        %v1459 = vpack.c.bf16 %v1444, %v1444
        %v1460 = vpack.c.bf16 %v1441, %v1441
        %v1461 = vpack.c.bf16 %v1445, %v1445
        %v1462 = vcombine.low %v1102, %v1106
        %v1464 = vunpack.c.l.s4 1983009808
        %v1465 = vunpack.c.0.s8 %v1464
        %v1466 = vlaneseq
        %v1467 = vshrl.u32 %v1466, 7
        %v1468 = vsub.s32 %v1465, %v1467
        %v1469 = vrot.slane %v1462, %v1468
        %v1470 = vcombine.low %v1104, %v1108
        %v1472 = vunpack.c.l.s4 1983009808
        %v1473 = vunpack.c.0.s8 %v1472
        %v1474 = vlaneseq
        %v1475 = vshrl.u32 %v1474, 7
        %v1476 = vsub.s32 %v1473, %v1475
        %v1477 = vrot.slane %v1470, %v1476
        %v1478 = vcombine.low %v1110, %v1114
        %v1480 = vunpack.c.l.s4 1983009808
        %v1481 = vunpack.c.0.s8 %v1480
        %v1482 = vlaneseq
        %v1483 = vshrl.u32 %v1482, 7
        %v1484 = vsub.s32 %v1481, %v1483
        %v1485 = vrot.slane %v1478, %v1484
        %v1486 = vcombine.low %v1112, %v1116
        %v1488 = vunpack.c.l.s4 1983009808
        %v1489 = vunpack.c.0.s8 %v1488
        %v1490 = vlaneseq
        %v1491 = vshrl.u32 %v1490, 7
        %v1492 = vsub.s32 %v1489, %v1491
        %v1493 = vrot.slane %v1486, %v1492
        %v1494 = vcombine.low %v1469, %v1477
        %v1496 = vunpack.c.l.s4 1934713408
        %v1497 = vunpack.c.0.s8 %v1496
        %v1498 = vlaneseq
        %v1499 = vshrl.u32 %v1498, 7
        %v1500 = vsub.s32 %v1497, %v1499
        %v1501 = vrot.slane %v1494, %v1500
        %v1502 = vcombine.low %v1485, %v1493
        %v1504 = vunpack.c.l.s4 1934713408
        %v1505 = vunpack.c.0.s8 %v1504
        %v1506 = vlaneseq
        %v1507 = vshrl.u32 %v1506, 7
        %v1508 = vsub.s32 %v1505, %v1507
        %v1509 = vrot.slane %v1502, %v1508
        %v1510 = vcombine.low %v1501, %v1509
        %v1511 = vcombine.high %v1501, %v1509
        %v1512 = vcombine.low %v1103, %v1107
        %v1514 = vunpack.c.l.s4 1983009808
        %v1515 = vunpack.c.0.s8 %v1514
        %v1516 = vlaneseq
        %v1517 = vshrl.u32 %v1516, 7
        %v1518 = vsub.s32 %v1515, %v1517
        %v1519 = vrot.slane %v1512, %v1518
        %v1520 = vcombine.low %v1105, %v1109
        %v1522 = vunpack.c.l.s4 1983009808
        %v1523 = vunpack.c.0.s8 %v1522
        %v1524 = vlaneseq
        %v1525 = vshrl.u32 %v1524, 7
        %v1526 = vsub.s32 %v1523, %v1525
        %v1527 = vrot.slane %v1520, %v1526
        %v1528 = vcombine.low %v1111, %v1115
        %v1530 = vunpack.c.l.s4 1983009808
        %v1531 = vunpack.c.0.s8 %v1530
        %v1532 = vlaneseq
        %v1533 = vshrl.u32 %v1532, 7
        %v1534 = vsub.s32 %v1531, %v1533
        %v1535 = vrot.slane %v1528, %v1534
        %v1536 = vcombine.low %v1113, %v1117
        %v1538 = vunpack.c.l.s4 1983009808
        %v1539 = vunpack.c.0.s8 %v1538
        %v1540 = vlaneseq
        %v1541 = vshrl.u32 %v1540, 7
        %v1542 = vsub.s32 %v1539, %v1541
        %v1543 = vrot.slane %v1536, %v1542
        %v1544 = vcombine.low %v1519, %v1527
        %v1546 = vunpack.c.l.s4 1934713408
        %v1547 = vunpack.c.0.s8 %v1546
        %v1548 = vlaneseq
        %v1549 = vshrl.u32 %v1548, 7
        %v1550 = vsub.s32 %v1547, %v1549
        %v1551 = vrot.slane %v1544, %v1550
        %v1552 = vcombine.low %v1535, %v1543
        %v1554 = vunpack.c.l.s4 1934713408
        %v1555 = vunpack.c.0.s8 %v1554
        %v1556 = vlaneseq
        %v1557 = vshrl.u32 %v1556, 7
        %v1558 = vsub.s32 %v1555, %v1557
        %v1559 = vrot.slane %v1552, %v1558
        %v1560 = vcombine.low %v1551, %v1559
        %v1561 = vcombine.high %v1551, %v1559
        %v1564 = vpack.i.b16 %v1560, %v1510
        %v1565 = vshrl.u32 %v1510, 16
        %v1566 = vshrl.u32 %v1560, 16
        %v1567 = vpack.i.b16 %v1566, %v1565
        %v1570 = vpack.i.b16 %v1561, %v1511
        %v1571 = vshrl.u32 %v1511, 16
        %v1572 = vshrl.u32 %v1561, 16
        %v1573 = vpack.i.b16 %v1572, %v1571
        %1574 = vxpose.xlu0.c.b16.start [1/8] %v1274, 128
        %1575 = vxpose.xlu0.c.b16.cont [2/8] 0, 128
        %1576 = vxpose.xlu0.c.b16.cont [3/8] 0, 128
        %1577 = vxpose.xlu0.c.b16.cont [4/8] 0, 128
        %1578 = vxpose.xlu0.c.b16.cont [5/8] 0, 128
        %1579 = vxpose.xlu0.c.b16.cont [6/8] 0, 128
        %1580 = vxpose.xlu0.c.b16.cont [7/8] 0, 128
        %1581 = vxpose.xlu0.c.b16.end [8/8] 0, 128
        %v1582 = vpop.trf.xlu0
        %v1583 = vpop.trf.xlu0
        %v1584 = vpop.trf.xlu0
        %v1585 = vpop.trf.xlu0
        %v1586 = vpop.trf.xlu0
        %v1587 = vpop.trf.xlu0
        %v1588 = vpop.trf.xlu0
        %v1589 = vpop.trf.xlu0
        %1590 = vxpose.xlu0.c.b16.start [1/8] %v1275, 128
        %1591 = vxpose.xlu0.c.b16.cont [2/8] 0, 128
        %1592 = vxpose.xlu0.c.b16.cont [3/8] 0, 128
        %1593 = vxpose.xlu0.c.b16.cont [4/8] 0, 128
        %1594 = vxpose.xlu0.c.b16.cont [5/8] 0, 128
        %1595 = vxpose.xlu0.c.b16.cont [6/8] 0, 128
        %1596 = vxpose.xlu0.c.b16.cont [7/8] 0, 128
        %1597 = vxpose.xlu0.c.b16.end [8/8] 0, 128
        %v1598 = vpop.trf.xlu0
        %v1599 = vpop.trf.xlu0
        %v1600 = vpop.trf.xlu0
        %v1601 = vpop.trf.xlu0
        %v1602 = vpop.trf.xlu0
        %v1603 = vpop.trf.xlu0
        %v1604 = vpop.trf.xlu0
        %v1605 = vpop.trf.xlu0
        %1606 = vxpose.xlu0.c.b16.start [1/8] %v1276, 128
        %1607 = vxpose.xlu0.c.b16.cont [2/8] 0, 128
        %1608 = vxpose.xlu0.c.b16.cont [3/8] 0, 128
        %1609 = vxpose.xlu0.c.b16.cont [4/8] 0, 128
        %1610 = vxpose.xlu0.c.b16.cont [5/8] 0, 128
        %1611 = vxpose.xlu0.c.b16.cont [6/8] 0, 128
        %1612 = vxpose.xlu0.c.b16.cont [7/8] 0, 128
        %1613 = vxpose.xlu0.c.b16.end [8/8] 0, 128
        %v1614 = vpop.trf.xlu0
        %v1615 = vpop.trf.xlu0
        %v1616 = vpop.trf.xlu0
        %v1617 = vpop.trf.xlu0
        %v1618 = vpop.trf.xlu0
        %v1619 = vpop.trf.xlu0
        %v1620 = vpop.trf.xlu0
        %v1621 = vpop.trf.xlu0
        %1622 = vxpose.xlu0.c.b16.start [1/8] %v1277, 128
        %1623 = vxpose.xlu0.c.b16.cont [2/8] 0, 128
        %1624 = vxpose.xlu0.c.b16.cont [3/8] 0, 128
        %1625 = vxpose.xlu0.c.b16.cont [4/8] 0, 128
        %1626 = vxpose.xlu0.c.b16.cont [5/8] 0, 128
        %1627 = vxpose.xlu0.c.b16.cont [6/8] 0, 128
        %1628 = vxpose.xlu0.c.b16.cont [7/8] 0, 128
        %1629 = vxpose.xlu0.c.b16.end [8/8] 0, 128
        %v1630 = vpop.trf.xlu0
        %v1631 = vpop.trf.xlu0
        %v1632 = vpop.trf.xlu0
        %v1633 = vpop.trf.xlu0
        %v1634 = vpop.trf.xlu0
        %v1635 = vpop.trf.xlu0
        %v1636 = vpop.trf.xlu0
        %v1637 = vpop.trf.xlu0
        %1638 = vxpose.xlu0.c.b16.start [1/8] %v1278, 128
        %1639 = vxpose.xlu0.c.b16.cont [2/8] 0, 128
        %1640 = vxpose.xlu0.c.b16.cont [3/8] 0, 128
        %1641 = vxpose.xlu0.c.b16.cont [4/8] 0, 128
        %1642 = vxpose.xlu0.c.b16.cont [5/8] 0, 128
        %1643 = vxpose.xlu0.c.b16.cont [6/8] 0, 128
        %1644 = vxpose.xlu0.c.b16.cont [7/8] 0, 128
        %1645 = vxpose.xlu0.c.b16.end [8/8] 0, 128
        %v1646 = vpop.trf.xlu0
        %v1647 = vpop.trf.xlu0
        %v1648 = vpop.trf.xlu0
        %v1649 = vpop.trf.xlu0
        %v1650 = vpop.trf.xlu0
        %v1651 = vpop.trf.xlu0
        %v1652 = vpop.trf.xlu0
        %v1653 = vpop.trf.xlu0
        %1654 = vxpose.xlu0.c.b16.start [1/8] %v1279, 128
        %1655 = vxpose.xlu0.c.b16.cont [2/8] 0, 128
        %1656 = vxpose.xlu0.c.b16.cont [3/8] 0, 128
        %1657 = vxpose.xlu0.c.b16.cont [4/8] 0, 128
        %1658 = vxpose.xlu0.c.b16.cont [5/8] 0, 128
        %1659 = vxpose.xlu0.c.b16.cont [6/8] 0, 128
        %1660 = vxpose.xlu0.c.b16.cont [7/8] 0, 128
        %1661 = vxpose.xlu0.c.b16.end [8/8] 0, 128
        %v1662 = vpop.trf.xlu0
        %v1663 = vpop.trf.xlu0
        %v1664 = vpop.trf.xlu0
        %v1665 = vpop.trf.xlu0
        %v1666 = vpop.trf.xlu0
        %v1667 = vpop.trf.xlu0
        %v1668 = vpop.trf.xlu0
        %v1669 = vpop.trf.xlu0
        %1670 = vxpose.xlu0.c.b16.start [1/8] %v1280, 128
        %1671 = vxpose.xlu0.c.b16.cont [2/8] 0, 128
        %1672 = vxpose.xlu0.c.b16.cont [3/8] 0, 128
        %1673 = vxpose.xlu0.c.b16.cont [4/8] 0, 128
        %1674 = vxpose.xlu0.c.b16.cont [5/8] 0, 128
        %1675 = vxpose.xlu0.c.b16.cont [6/8] 0, 128
        %1676 = vxpose.xlu0.c.b16.cont [7/8] 0, 128
        %1677 = vxpose.xlu0.c.b16.end [8/8] 0, 128
        %v1678 = vpop.trf.xlu0
        %v1679 = vpop.trf.xlu0
        %v1680 = vpop.trf.xlu0
        %v1681 = vpop.trf.xlu0
        %v1682 = vpop.trf.xlu0
        %v1683 = vpop.trf.xlu0
        %v1684 = vpop.trf.xlu0
        %v1685 = vpop.trf.xlu0
        %1686 = vxpose.xlu0.c.b16.start [1/8] %v1281, 128
        %1687 = vxpose.xlu0.c.b16.cont [2/8] 0, 128
        %1688 = vxpose.xlu0.c.b16.cont [3/8] 0, 128
        %1689 = vxpose.xlu0.c.b16.cont [4/8] 0, 128
        %1690 = vxpose.xlu0.c.b16.cont [5/8] 0, 128
        %1691 = vxpose.xlu0.c.b16.cont [6/8] 0, 128
        %1692 = vxpose.xlu0.c.b16.cont [7/8] 0, 128
        %1693 = vxpose.xlu0.c.b16.end [8/8] 0, 128
        %v1694 = vpop.trf.xlu0
        %v1695 = vpop.trf.xlu0
        %v1696 = vpop.trf.xlu0
        %v1697 = vpop.trf.xlu0
        %v1698 = vpop.trf.xlu0
        %v1699 = vpop.trf.xlu0
        %v1700 = vpop.trf.xlu0
        %v1701 = vpop.trf.xlu0
        %1702 = vxpose.xlu0.c.b16.start [1/8] %v1282, 128
        %1703 = vxpose.xlu0.c.b16.cont [2/8] 0, 128
        %1704 = vxpose.xlu0.c.b16.cont [3/8] 0, 128
        %1705 = vxpose.xlu0.c.b16.cont [4/8] 0, 128
        %1706 = vxpose.xlu0.c.b16.cont [5/8] 0, 128
        %1707 = vxpose.xlu0.c.b16.cont [6/8] 0, 128
        %1708 = vxpose.xlu0.c.b16.cont [7/8] 0, 128
        %1709 = vxpose.xlu0.c.b16.end [8/8] 0, 128
        %v1710 = vpop.trf.xlu0
        %v1711 = vpop.trf.xlu0
        %v1712 = vpop.trf.xlu0
        %v1713 = vpop.trf.xlu0
        %v1714 = vpop.trf.xlu0
        %v1715 = vpop.trf.xlu0
        %v1716 = vpop.trf.xlu0
        %v1717 = vpop.trf.xlu0
        %1718 = vxpose.xlu0.c.b16.start [1/8] %v1283, 128
        %1719 = vxpose.xlu0.c.b16.cont [2/8] 0, 128
        %1720 = vxpose.xlu0.c.b16.cont [3/8] 0, 128
        %1721 = vxpose.xlu0.c.b16.cont [4/8] 0, 128
        %1722 = vxpose.xlu0.c.b16.cont [5/8] 0, 128
        %1723 = vxpose.xlu0.c.b16.cont [6/8] 0, 128
        %1724 = vxpose.xlu0.c.b16.cont [7/8] 0, 128
        %1725 = vxpose.xlu0.c.b16.end [8/8] 0, 128
        %v1726 = vpop.trf.xlu0
        %v1727 = vpop.trf.xlu0
        %v1728 = vpop.trf.xlu0
        %v1729 = vpop.trf.xlu0
        %v1730 = vpop.trf.xlu0
        %v1731 = vpop.trf.xlu0
        %v1732 = vpop.trf.xlu0
        %v1733 = vpop.trf.xlu0
        %1734 = vxpose.xlu0.c.b16.start [1/8] %v1284, 128
        %1735 = vxpose.xlu0.c.b16.cont [2/8] 0, 128
        %1736 = vxpose.xlu0.c.b16.cont [3/8] 0, 128
        %1737 = vxpose.xlu0.c.b16.cont [4/8] 0, 128
        %1738 = vxpose.xlu0.c.b16.cont [5/8] 0, 128
        %1739 = vxpose.xlu0.c.b16.cont [6/8] 0, 128
        %1740 = vxpose.xlu0.c.b16.cont [7/8] 0, 128
        %1741 = vxpose.xlu0.c.b16.end [8/8] 0, 128
        %v1742 = vpop.trf.xlu0
        %v1743 = vpop.trf.xlu0
        %v1744 = vpop.trf.xlu0
        %v1745 = vpop.trf.xlu0
        %v1746 = vpop.trf.xlu0
        %v1747 = vpop.trf.xlu0
        %v1748 = vpop.trf.xlu0
        %v1749 = vpop.trf.xlu0
        %1750 = vxpose.xlu0.c.b16.start [1/8] %v1285, 128
        %1751 = vxpose.xlu0.c.b16.cont [2/8] 0, 128
        %1752 = vxpose.xlu0.c.b16.cont [3/8] 0, 128
        %1753 = vxpose.xlu0.c.b16.cont [4/8] 0, 128
        %1754 = vxpose.xlu0.c.b16.cont [5/8] 0, 128
        %1755 = vxpose.xlu0.c.b16.cont [6/8] 0, 128
        %1756 = vxpose.xlu0.c.b16.cont [7/8] 0, 128
        %1757 = vxpose.xlu0.c.b16.end [8/8] 0, 128
        %v1758 = vpop.trf.xlu0
        %v1759 = vpop.trf.xlu0
        %v1760 = vpop.trf.xlu0
        %v1761 = vpop.trf.xlu0
        %v1762 = vpop.trf.xlu0
        %v1763 = vpop.trf.xlu0
        %v1764 = vpop.trf.xlu0
        %v1765 = vpop.trf.xlu0
        %1766 = vxpose.xlu0.c.b16.start [1/8] %v1286, 128
        %1767 = vxpose.xlu0.c.b16.cont [2/8] 0, 128
        %1768 = vxpose.xlu0.c.b16.cont [3/8] 0, 128
        %1769 = vxpose.xlu0.c.b16.cont [4/8] 0, 128
        %1770 = vxpose.xlu0.c.b16.cont [5/8] 0, 128
        %1771 = vxpose.xlu0.c.b16.cont [6/8] 0, 128
        %1772 = vxpose.xlu0.c.b16.cont [7/8] 0, 128
        %1773 = vxpose.xlu0.c.b16.end [8/8] 0, 128
        %v1774 = vpop.trf.xlu0
        %v1775 = vpop.trf.xlu0
        %v1776 = vpop.trf.xlu0
        %v1777 = vpop.trf.xlu0
        %v1778 = vpop.trf.xlu0
        %v1779 = vpop.trf.xlu0
        %v1780 = vpop.trf.xlu0
        %v1781 = vpop.trf.xlu0
        %1782 = vxpose.xlu0.c.b16.start [1/8] %v1287, 128
        %1783 = vxpose.xlu0.c.b16.cont [2/8] 0, 128
        %1784 = vxpose.xlu0.c.b16.cont [3/8] 0, 128
        %1785 = vxpose.xlu0.c.b16.cont [4/8] 0, 128
        %1786 = vxpose.xlu0.c.b16.cont [5/8] 0, 128
        %1787 = vxpose.xlu0.c.b16.cont [6/8] 0, 128
        %1788 = vxpose.xlu0.c.b16.cont [7/8] 0, 128
        %1789 = vxpose.xlu0.c.b16.end [8/8] 0, 128
        %v1790 = vpop.trf.xlu0
        %v1791 = vpop.trf.xlu0
        %v1792 = vpop.trf.xlu0
        %v1793 = vpop.trf.xlu0
        %v1794 = vpop.trf.xlu0
        %v1795 = vpop.trf.xlu0
        %v1796 = vpop.trf.xlu0
        %v1797 = vpop.trf.xlu0
        %1798 = vxpose.xlu0.c.b16.start [1/8] %v1288, 128
        %1799 = vxpose.xlu0.c.b16.cont [2/8] 0, 128
        %1800 = vxpose.xlu0.c.b16.cont [3/8] 0, 128
        %1801 = vxpose.xlu0.c.b16.cont [4/8] 0, 128
        %1802 = vxpose.xlu0.c.b16.cont [5/8] 0, 128
        %1803 = vxpose.xlu0.c.b16.cont [6/8] 0, 128
        %1804 = vxpose.xlu0.c.b16.cont [7/8] 0, 128
        %1805 = vxpose.xlu0.c.b16.end [8/8] 0, 128
        %v1806 = vpop.trf.xlu0
        %v1807 = vpop.trf.xlu0
        %v1808 = vpop.trf.xlu0
        %v1809 = vpop.trf.xlu0
        %v1810 = vpop.trf.xlu0
        %v1811 = vpop.trf.xlu0
        %v1812 = vpop.trf.xlu0
        %v1813 = vpop.trf.xlu0
        %1814 = vxpose.xlu0.c.b16.start [1/8] %v1289, 128
        %1815 = vxpose.xlu0.c.b16.cont [2/8] 0, 128
        %1816 = vxpose.xlu0.c.b16.cont [3/8] 0, 128
        %1817 = vxpose.xlu0.c.b16.cont [4/8] 0, 128
        %1818 = vxpose.xlu0.c.b16.cont [5/8] 0, 128
        %1819 = vxpose.xlu0.c.b16.cont [6/8] 0, 128
        %1820 = vxpose.xlu0.c.b16.cont [7/8] 0, 128
        %1821 = vxpose.xlu0.c.b16.end [8/8] 0, 128
        %v1822 = vpop.trf.xlu0
        %v1823 = vpop.trf.xlu0
        %v1824 = vpop.trf.xlu0
        %v1825 = vpop.trf.xlu0
        %v1826 = vpop.trf.xlu0
        %v1827 = vpop.trf.xlu0
        %v1828 = vpop.trf.xlu0
        %v1829 = vpop.trf.xlu0
        %v1830 = vcombine.low %v1582, %v1646
        %v1831 = vcombine.high %v1582, %v1646
        %v1833 = vunpack.c.l.s4 1983009808
        %v1834 = vunpack.c.0.s8 %v1833
        %v1835 = vlaneseq
        %v1836 = vshrl.u32 %v1835, 7
        %v1837 = vsub.s32 %v1834, %v1836
        %v1838 = vrot.slane %v1830, %v1837
        %v1840 = vunpack.c.l.s4 1983009808
        %v1841 = vunpack.c.0.s8 %v1840
        %v1842 = vlaneseq
        %v1843 = vshrl.u32 %v1842, 7
        %v1844 = vsub.s32 %v1841, %v1843
        %v1845 = vrot.slane %v1831, %v1844
        %v1846 = vcombine.low %v1614, %v1678
        %v1847 = vcombine.high %v1614, %v1678
        %v1849 = vunpack.c.l.s4 1983009808
        %v1850 = vunpack.c.0.s8 %v1849
        %v1851 = vlaneseq
        %v1852 = vshrl.u32 %v1851, 7
        %v1853 = vsub.s32 %v1850, %v1852
        %v1854 = vrot.slane %v1846, %v1853
        %v1856 = vunpack.c.l.s4 1983009808
        %v1857 = vunpack.c.0.s8 %v1856
        %v1858 = vlaneseq
        %v1859 = vshrl.u32 %v1858, 7
        %v1860 = vsub.s32 %v1857, %v1859
        %v1861 = vrot.slane %v1847, %v1860
        %v1862 = vcombine.low %v1710, %v1774
        %v1863 = vcombine.high %v1710, %v1774
        %v1865 = vunpack.c.l.s4 1983009808
        %v1866 = vunpack.c.0.s8 %v1865
        %v1867 = vlaneseq
        %v1868 = vshrl.u32 %v1867, 7
        %v1869 = vsub.s32 %v1866, %v1868
        %v1870 = vrot.slane %v1862, %v1869
        %v1872 = vunpack.c.l.s4 1983009808
        %v1873 = vunpack.c.0.s8 %v1872
        %v1874 = vlaneseq
        %v1875 = vshrl.u32 %v1874, 7
        %v1876 = vsub.s32 %v1873, %v1875
        %v1877 = vrot.slane %v1863, %v1876
        %v1878 = vcombine.low %v1742, %v1806
        %v1879 = vcombine.high %v1742, %v1806
        %v1881 = vunpack.c.l.s4 1983009808
        %v1882 = vunpack.c.0.s8 %v1881
        %v1883 = vlaneseq
        %v1884 = vshrl.u32 %v1883, 7
        %v1885 = vsub.s32 %v1882, %v1884
        %v1886 = vrot.slane %v1878, %v1885
        %v1888 = vunpack.c.l.s4 1983009808
        %v1889 = vunpack.c.0.s8 %v1888
        %v1890 = vlaneseq
        %v1891 = vshrl.u32 %v1890, 7
        %v1892 = vsub.s32 %v1889, %v1891
        %v1893 = vrot.slane %v1879, %v1892
        %v1894 = vcombine.low %v1838, %v1854
        %v1895 = vcombine.high %v1838, %v1854
        %v1897 = vunpack.c.l.s4 1934713408
        %v1898 = vunpack.c.0.s8 %v1897
        %v1899 = vlaneseq
        %v1900 = vshrl.u32 %v1899, 7
        %v1901 = vsub.s32 %v1898, %v1900
        %v1902 = vrot.slane %v1894, %v1901
        %v1904 = vunpack.c.l.s4 1934713408
        %v1905 = vunpack.c.0.s8 %v1904
        %v1906 = vlaneseq
        %v1907 = vshrl.u32 %v1906, 7
        %v1908 = vsub.s32 %v1905, %v1907
        %v1909 = vrot.slane %v1895, %v1908
        %v1910 = vcombine.low %v1845, %v1861
        %v1911 = vcombine.high %v1845, %v1861
        %v1913 = vunpack.c.l.s4 1934713408
        %v1914 = vunpack.c.0.s8 %v1913
        %v1915 = vlaneseq
        %v1916 = vshrl.u32 %v1915, 7
        %v1917 = vsub.s32 %v1914, %v1916
        %v1918 = vrot.slane %v1910, %v1917
        %v1920 = vunpack.c.l.s4 1934713408
        %v1921 = vunpack.c.0.s8 %v1920
        %v1922 = vlaneseq
        %v1923 = vshrl.u32 %v1922, 7
        %v1924 = vsub.s32 %v1921, %v1923
        %v1925 = vrot.slane %v1911, %v1924
        %v1926 = vcombine.low %v1870, %v1886
        %v1927 = vcombine.high %v1870, %v1886
        %v1929 = vunpack.c.l.s4 1934713408
        %v1930 = vunpack.c.0.s8 %v1929
        %v1931 = vlaneseq
        %v1932 = vshrl.u32 %v1931, 7
        %v1933 = vsub.s32 %v1930, %v1932
        %v1934 = vrot.slane %v1926, %v1933
        %v1936 = vunpack.c.l.s4 1934713408
        %v1937 = vunpack.c.0.s8 %v1936
        %v1938 = vlaneseq
        %v1939 = vshrl.u32 %v1938, 7
        %v1940 = vsub.s32 %v1937, %v1939
        %v1941 = vrot.slane %v1927, %v1940
        %v1942 = vcombine.low %v1877, %v1893
        %v1943 = vcombine.high %v1877, %v1893
        %v1945 = vunpack.c.l.s4 1934713408
        %v1946 = vunpack.c.0.s8 %v1945
        %v1947 = vlaneseq
        %v1948 = vshrl.u32 %v1947, 7
        %v1949 = vsub.s32 %v1946, %v1948
        %v1950 = vrot.slane %v1942, %v1949
        %v1952 = vunpack.c.l.s4 1934713408
        %v1953 = vunpack.c.0.s8 %v1952
        %v1954 = vlaneseq
        %v1955 = vshrl.u32 %v1954, 7
        %v1956 = vsub.s32 %v1953, %v1955
        %v1957 = vrot.slane %v1943, %v1956
        %v1958 = vcombine.low %v1902, %v1934
        %v1959 = vcombine.high %v1902, %v1934
        %v1960 = vcombine.low %v1909, %v1941
        %v1961 = vcombine.high %v1909, %v1941
        %v1962 = vcombine.low %v1918, %v1950
        %v1963 = vcombine.high %v1918, %v1950
        %v1964 = vcombine.low %v1925, %v1957
        %v1965 = vcombine.high %v1925, %v1957
        %v1966 = vcombine.low %v1598, %v1662
        %v1967 = vcombine.high %v1598, %v1662
        %v1969 = vunpack.c.l.s4 1983009808
        %v1970 = vunpack.c.0.s8 %v1969
        %v1971 = vlaneseq
        %v1972 = vshrl.u32 %v1971, 7
        %v1973 = vsub.s32 %v1970, %v1972
        %v1974 = vrot.slane %v1966, %v1973
        %v1976 = vunpack.c.l.s4 1983009808
        %v1977 = vunpack.c.0.s8 %v1976
        %v1978 = vlaneseq
        %v1979 = vshrl.u32 %v1978, 7
        %v1980 = vsub.s32 %v1977, %v1979
        %v1981 = vrot.slane %v1967, %v1980
        %v1982 = vcombine.low %v1630, %v1694
        %v1983 = vcombine.high %v1630, %v1694
        %v1985 = vunpack.c.l.s4 1983009808
        %v1986 = vunpack.c.0.s8 %v1985
        %v1987 = vlaneseq
        %v1988 = vshrl.u32 %v1987, 7
        %v1989 = vsub.s32 %v1986, %v1988
        %v1990 = vrot.slane %v1982, %v1989
        %v1992 = vunpack.c.l.s4 1983009808
        %v1993 = vunpack.c.0.s8 %v1992
        %v1994 = vlaneseq
        %v1995 = vshrl.u32 %v1994, 7
        %v1996 = vsub.s32 %v1993, %v1995
        %v1997 = vrot.slane %v1983, %v1996
        %v1998 = vcombine.low %v1726, %v1790
        %v1999 = vcombine.high %v1726, %v1790
        %v2001 = vunpack.c.l.s4 1983009808
        %v2002 = vunpack.c.0.s8 %v2001
        %v2003 = vlaneseq
        %v2004 = vshrl.u32 %v2003, 7
        %v2005 = vsub.s32 %v2002, %v2004
        %v2006 = vrot.slane %v1998, %v2005
        %v2008 = vunpack.c.l.s4 1983009808
        %v2009 = vunpack.c.0.s8 %v2008
        %v2010 = vlaneseq
        %v2011 = vshrl.u32 %v2010, 7
        %v2012 = vsub.s32 %v2009, %v2011
        %v2013 = vrot.slane %v1999, %v2012
        %v2014 = vcombine.low %v1758, %v1822
        %v2015 = vcombine.high %v1758, %v1822
        %v2017 = vunpack.c.l.s4 1983009808
        %v2018 = vunpack.c.0.s8 %v2017
        %v2019 = vlaneseq
        %v2020 = vshrl.u32 %v2019, 7
        %v2021 = vsub.s32 %v2018, %v2020
        %v2022 = vrot.slane %v2014, %v2021
        %v2024 = vunpack.c.l.s4 1983009808
        %v2025 = vunpack.c.0.s8 %v2024
        %v2026 = vlaneseq
        %v2027 = vshrl.u32 %v2026, 7
        %v2028 = vsub.s32 %v2025, %v2027
        %v2029 = vrot.slane %v2015, %v2028
        %v2030 = vcombine.low %v1974, %v1990
        %v2031 = vcombine.high %v1974, %v1990
        %v2033 = vunpack.c.l.s4 1934713408
        %v2034 = vunpack.c.0.s8 %v2033
        %v2035 = vlaneseq
        %v2036 = vshrl.u32 %v2035, 7
        %v2037 = vsub.s32 %v2034, %v2036
        %v2038 = vrot.slane %v2030, %v2037
        %v2040 = vunpack.c.l.s4 1934713408
        %v2041 = vunpack.c.0.s8 %v2040
        %v2042 = vlaneseq
        %v2043 = vshrl.u32 %v2042, 7
        %v2044 = vsub.s32 %v2041, %v2043
        %v2045 = vrot.slane %v2031, %v2044
        %v2046 = vcombine.low %v1981, %v1997
        %v2047 = vcombine.high %v1981, %v1997
        %v2049 = vunpack.c.l.s4 1934713408
        %v2050 = vunpack.c.0.s8 %v2049
        %v2051 = vlaneseq
        %v2052 = vshrl.u32 %v2051, 7
        %v2053 = vsub.s32 %v2050, %v2052
        %v2054 = vrot.slane %v2046, %v2053
        %v2056 = vunpack.c.l.s4 1934713408
        %v2057 = vunpack.c.0.s8 %v2056
        %v2058 = vlaneseq
        %v2059 = vshrl.u32 %v2058, 7
        %v2060 = vsub.s32 %v2057, %v2059
        %v2061 = vrot.slane %v2047, %v2060
        %v2062 = vcombine.low %v2006, %v2022
        %v2063 = vcombine.high %v2006, %v2022
        %v2065 = vunpack.c.l.s4 1934713408
        %v2066 = vunpack.c.0.s8 %v2065
        %v2067 = vlaneseq
        %v2068 = vshrl.u32 %v2067, 7
        %v2069 = vsub.s32 %v2066, %v2068
        %v2070 = vrot.slane %v2062, %v2069
        %v2072 = vunpack.c.l.s4 1934713408
        %v2073 = vunpack.c.0.s8 %v2072
        %v2074 = vlaneseq
        %v2075 = vshrl.u32 %v2074, 7
        %v2076 = vsub.s32 %v2073, %v2075
        %v2077 = vrot.slane %v2063, %v2076
        %v2078 = vcombine.low %v2013, %v2029
        %v2079 = vcombine.high %v2013, %v2029
        %v2081 = vunpack.c.l.s4 1934713408
        %v2082 = vunpack.c.0.s8 %v2081
        %v2083 = vlaneseq
        %v2084 = vshrl.u32 %v2083, 7
        %v2085 = vsub.s32 %v2082, %v2084
        %v2086 = vrot.slane %v2078, %v2085
        %v2088 = vunpack.c.l.s4 1934713408
        %v2089 = vunpack.c.0.s8 %v2088
        %v2090 = vlaneseq
        %v2091 = vshrl.u32 %v2090, 7
        %v2092 = vsub.s32 %v2089, %v2091
        %v2093 = vrot.slane %v2079, %v2092
        %v2094 = vcombine.low %v2038, %v2070
        %v2095 = vcombine.high %v2038, %v2070
        %v2096 = vcombine.low %v2045, %v2077
        %v2097 = vcombine.high %v2045, %v2077
        %v2098 = vcombine.low %v2054, %v2086
        %v2099 = vcombine.high %v2054, %v2086
        %v2100 = vcombine.low %v2061, %v2093
        %v2101 = vcombine.high %v2061, %v2093
        %v2102 = vcombine.low %v1583, %v1647
        %v2103 = vcombine.high %v1583, %v1647
        %v2105 = vunpack.c.l.s4 1983009808
        %v2106 = vunpack.c.0.s8 %v2105
        %v2107 = vlaneseq
        %v2108 = vshrl.u32 %v2107, 7
        %v2109 = vsub.s32 %v2106, %v2108
        %v2110 = vrot.slane %v2102, %v2109
        %v2112 = vunpack.c.l.s4 1983009808
        %v2113 = vunpack.c.0.s8 %v2112
        %v2114 = vlaneseq
        %v2115 = vshrl.u32 %v2114, 7
        %v2116 = vsub.s32 %v2113, %v2115
        %v2117 = vrot.slane %v2103, %v2116
        %v2118 = vcombine.low %v1615, %v1679
        %v2119 = vcombine.high %v1615, %v1679
        %v2121 = vunpack.c.l.s4 1983009808
        %v2122 = vunpack.c.0.s8 %v2121
        %v2123 = vlaneseq
        %v2124 = vshrl.u32 %v2123, 7
        %v2125 = vsub.s32 %v2122, %v2124
        %v2126 = vrot.slane %v2118, %v2125
        %v2128 = vunpack.c.l.s4 1983009808
        %v2129 = vunpack.c.0.s8 %v2128
        %v2130 = vlaneseq
        %v2131 = vshrl.u32 %v2130, 7
        %v2132 = vsub.s32 %v2129, %v2131
        %v2133 = vrot.slane %v2119, %v2132
        %v2134 = vcombine.low %v1711, %v1775
        %v2135 = vcombine.high %v1711, %v1775
        %v2137 = vunpack.c.l.s4 1983009808
        %v2138 = vunpack.c.0.s8 %v2137
        %v2139 = vlaneseq
        %v2140 = vshrl.u32 %v2139, 7
        %v2141 = vsub.s32 %v2138, %v2140
        %v2142 = vrot.slane %v2134, %v2141
        %v2144 = vunpack.c.l.s4 1983009808
        %v2145 = vunpack.c.0.s8 %v2144
        %v2146 = vlaneseq
        %v2147 = vshrl.u32 %v2146, 7
        %v2148 = vsub.s32 %v2145, %v2147
        %v2149 = vrot.slane %v2135, %v2148
        %v2150 = vcombine.low %v1743, %v1807
        %v2151 = vcombine.high %v1743, %v1807
        %v2153 = vunpack.c.l.s4 1983009808
        %v2154 = vunpack.c.0.s8 %v2153
        %v2155 = vlaneseq
        %v2156 = vshrl.u32 %v2155, 7
        %v2157 = vsub.s32 %v2154, %v2156
        %v2158 = vrot.slane %v2150, %v2157
        %v2160 = vunpack.c.l.s4 1983009808
        %v2161 = vunpack.c.0.s8 %v2160
        %v2162 = vlaneseq
        %v2163 = vshrl.u32 %v2162, 7
        %v2164 = vsub.s32 %v2161, %v2163
        %v2165 = vrot.slane %v2151, %v2164
        %v2166 = vcombine.low %v2110, %v2126
        %v2167 = vcombine.high %v2110, %v2126
        %v2169 = vunpack.c.l.s4 1934713408
        %v2170 = vunpack.c.0.s8 %v2169
        %v2171 = vlaneseq
        %v2172 = vshrl.u32 %v2171, 7
        %v2173 = vsub.s32 %v2170, %v2172
        %v2174 = vrot.slane %v2166, %v2173
        %v2176 = vunpack.c.l.s4 1934713408
        %v2177 = vunpack.c.0.s8 %v2176
        %v2178 = vlaneseq
        %v2179 = vshrl.u32 %v2178, 7
        %v2180 = vsub.s32 %v2177, %v2179
        %v2181 = vrot.slane %v2167, %v2180
        %v2182 = vcombine.low %v2117, %v2133
        %v2183 = vcombine.high %v2117, %v2133
        %v2185 = vunpack.c.l.s4 1934713408
        %v2186 = vunpack.c.0.s8 %v2185
        %v2187 = vlaneseq
        %v2188 = vshrl.u32 %v2187, 7
        %v2189 = vsub.s32 %v2186, %v2188
        %v2190 = vrot.slane %v2182, %v2189
        %v2192 = vunpack.c.l.s4 1934713408
        %v2193 = vunpack.c.0.s8 %v2192
        %v2194 = vlaneseq
        %v2195 = vshrl.u32 %v2194, 7
        %v2196 = vsub.s32 %v2193, %v2195
        %v2197 = vrot.slane %v2183, %v2196
        %v2198 = vcombine.low %v2142, %v2158
        %v2199 = vcombine.high %v2142, %v2158
        %v2201 = vunpack.c.l.s4 1934713408
        %v2202 = vunpack.c.0.s8 %v2201
        %v2203 = vlaneseq
        %v2204 = vshrl.u32 %v2203, 7
        %v2205 = vsub.s32 %v2202, %v2204
        %v2206 = vrot.slane %v2198, %v2205
        %v2208 = vunpack.c.l.s4 1934713408
        %v2209 = vunpack.c.0.s8 %v2208
        %v2210 = vlaneseq
        %v2211 = vshrl.u32 %v2210, 7
        %v2212 = vsub.s32 %v2209, %v2211
        %v2213 = vrot.slane %v2199, %v2212
        %v2214 = vcombine.low %v2149, %v2165
        %v2215 = vcombine.high %v2149, %v2165
        %v2217 = vunpack.c.l.s4 1934713408
        %v2218 = vunpack.c.0.s8 %v2217
        %v2219 = vlaneseq
        %v2220 = vshrl.u32 %v2219, 7
        %v2221 = vsub.s32 %v2218, %v2220
        %v2222 = vrot.slane %v2214, %v2221
        %v2224 = vunpack.c.l.s4 1934713408
        %v2225 = vunpack.c.0.s8 %v2224
        %v2226 = vlaneseq
        %v2227 = vshrl.u32 %v2226, 7
        %v2228 = vsub.s32 %v2225, %v2227
        %v2229 = vrot.slane %v2215, %v2228
        %v2230 = vcombine.low %v2174, %v2206
        %v2231 = vcombine.high %v2174, %v2206
        %v2232 = vcombine.low %v2181, %v2213
        %v2233 = vcombine.high %v2181, %v2213
        %v2234 = vcombine.low %v2190, %v2222
        %v2235 = vcombine.high %v2190, %v2222
        %v2236 = vcombine.low %v2197, %v2229
        %v2237 = vcombine.high %v2197, %v2229
        %v2238 = vcombine.low %v1599, %v1663
        %v2239 = vcombine.high %v1599, %v1663
        %v2241 = vunpack.c.l.s4 1983009808
        %v2242 = vunpack.c.0.s8 %v2241
        %v2243 = vlaneseq
        %v2244 = vshrl.u32 %v2243, 7
        %v2245 = vsub.s32 %v2242, %v2244
        %v2246 = vrot.slane %v2238, %v2245
        %v2248 = vunpack.c.l.s4 1983009808
        %v2249 = vunpack.c.0.s8 %v2248
        %v2250 = vlaneseq
        %v2251 = vshrl.u32 %v2250, 7
        %v2252 = vsub.s32 %v2249, %v2251
        %v2253 = vrot.slane %v2239, %v2252
        %v2254 = vcombine.low %v1631, %v1695
        %v2255 = vcombine.high %v1631, %v1695
        %v2257 = vunpack.c.l.s4 1983009808
        %v2258 = vunpack.c.0.s8 %v2257
        %v2259 = vlaneseq
        %v2260 = vshrl.u32 %v2259, 7
        %v2261 = vsub.s32 %v2258, %v2260
        %v2262 = vrot.slane %v2254, %v2261
        %v2264 = vunpack.c.l.s4 1983009808
        %v2265 = vunpack.c.0.s8 %v2264
        %v2266 = vlaneseq
        %v2267 = vshrl.u32 %v2266, 7
        %v2268 = vsub.s32 %v2265, %v2267
        %v2269 = vrot.slane %v2255, %v2268
        %v2270 = vcombine.low %v1727, %v1791
        %v2271 = vcombine.high %v1727, %v1791
        %v2273 = vunpack.c.l.s4 1983009808
        %v2274 = vunpack.c.0.s8 %v2273
        %v2275 = vlaneseq
        %v2276 = vshrl.u32 %v2275, 7
        %v2277 = vsub.s32 %v2274, %v2276
        %v2278 = vrot.slane %v2270, %v2277
        %v2280 = vunpack.c.l.s4 1983009808
        %v2281 = vunpack.c.0.s8 %v2280
        %v2282 = vlaneseq
        %v2283 = vshrl.u32 %v2282, 7
        %v2284 = vsub.s32 %v2281, %v2283
        %v2285 = vrot.slane %v2271, %v2284
        %v2286 = vcombine.low %v1759, %v1823
        %v2287 = vcombine.high %v1759, %v1823
        %v2289 = vunpack.c.l.s4 1983009808
        %v2290 = vunpack.c.0.s8 %v2289
        %v2291 = vlaneseq
        %v2292 = vshrl.u32 %v2291, 7
        %v2293 = vsub.s32 %v2290, %v2292
        %v2294 = vrot.slane %v2286, %v2293
        %v2296 = vunpack.c.l.s4 1983009808
        %v2297 = vunpack.c.0.s8 %v2296
        %v2298 = vlaneseq
        %v2299 = vshrl.u32 %v2298, 7
        %v2300 = vsub.s32 %v2297, %v2299
        %v2301 = vrot.slane %v2287, %v2300
        %v2302 = vcombine.low %v2246, %v2262
        %v2303 = vcombine.high %v2246, %v2262
        %v2305 = vunpack.c.l.s4 1934713408
        %v2306 = vunpack.c.0.s8 %v2305
        %v2307 = vlaneseq
        %v2308 = vshrl.u32 %v2307, 7
        %v2309 = vsub.s32 %v2306, %v2308
        %v2310 = vrot.slane %v2302, %v2309
        %v2312 = vunpack.c.l.s4 1934713408
        %v2313 = vunpack.c.0.s8 %v2312
        %v2314 = vlaneseq
        %v2315 = vshrl.u32 %v2314, 7
        %v2316 = vsub.s32 %v2313, %v2315
        %v2317 = vrot.slane %v2303, %v2316
        %v2318 = vcombine.low %v2253, %v2269
        %v2319 = vcombine.high %v2253, %v2269
        %v2321 = vunpack.c.l.s4 1934713408
        %v2322 = vunpack.c.0.s8 %v2321
        %v2323 = vlaneseq
        %v2324 = vshrl.u32 %v2323, 7
        %v2325 = vsub.s32 %v2322, %v2324
        %v2326 = vrot.slane %v2318, %v2325
        %v2328 = vunpack.c.l.s4 1934713408
        %v2329 = vunpack.c.0.s8 %v2328
        %v2330 = vlaneseq
        %v2331 = vshrl.u32 %v2330, 7
        %v2332 = vsub.s32 %v2329, %v2331
        %v2333 = vrot.slane %v2319, %v2332
        %v2334 = vcombine.low %v2278, %v2294
        %v2335 = vcombine.high %v2278, %v2294
        %v2337 = vunpack.c.l.s4 1934713408
        %v2338 = vunpack.c.0.s8 %v2337
        %v2339 = vlaneseq
        %v2340 = vshrl.u32 %v2339, 7
        %v2341 = vsub.s32 %v2338, %v2340
        %v2342 = vrot.slane %v2334, %v2341
        %v2344 = vunpack.c.l.s4 1934713408
        %v2345 = vunpack.c.0.s8 %v2344
        %v2346 = vlaneseq
        %v2347 = vshrl.u32 %v2346, 7
        %v2348 = vsub.s32 %v2345, %v2347
        %v2349 = vrot.slane %v2335, %v2348
        %v2350 = vcombine.low %v2285, %v2301
        %v2351 = vcombine.high %v2285, %v2301
        %v2353 = vunpack.c.l.s4 1934713408
        %v2354 = vunpack.c.0.s8 %v2353
        %v2355 = vlaneseq
        %v2356 = vshrl.u32 %v2355, 7
        %v2357 = vsub.s32 %v2354, %v2356
        %v2358 = vrot.slane %v2350, %v2357
        %v2360 = vunpack.c.l.s4 1934713408
        %v2361 = vunpack.c.0.s8 %v2360
        %v2362 = vlaneseq
        %v2363 = vshrl.u32 %v2362, 7
        %v2364 = vsub.s32 %v2361, %v2363
        %v2365 = vrot.slane %v2351, %v2364
        %v2366 = vcombine.low %v2310, %v2342
        %v2367 = vcombine.high %v2310, %v2342
        %v2368 = vcombine.low %v2317, %v2349
        %v2369 = vcombine.high %v2317, %v2349
        %v2370 = vcombine.low %v2326, %v2358
        %v2371 = vcombine.high %v2326, %v2358
        %v2372 = vcombine.low %v2333, %v2365
        %v2373 = vcombine.high %v2333, %v2365
        %v2376 = vpack.i.b16 %v2094, %v1958
        %v2378 = vshrl.u32 %v1958, 16
        %v2379 = vshrl.u32 %v2094, 16
        %v2380 = vpack.i.b16 %v2379, %v2378
        %v2384 = vpack.i.b16 %v2095, %v1959
        %v2386 = vshrl.u32 %v1959, 16
        %v2387 = vshrl.u32 %v2095, 16
        %v2388 = vpack.i.b16 %v2387, %v2386
        %v2392 = vpack.i.b16 %v2096, %v1960
        %v2394 = vshrl.u32 %v1960, 16
        %v2395 = vshrl.u32 %v2096, 16
        %v2396 = vpack.i.b16 %v2395, %v2394
        %v2400 = vpack.i.b16 %v2097, %v1961
        %v2402 = vshrl.u32 %v1961, 16
        %v2403 = vshrl.u32 %v2097, 16
        %v2404 = vpack.i.b16 %v2403, %v2402
        %v2408 = vpack.i.b16 %v2098, %v1962
        %v2410 = vshrl.u32 %v1962, 16
        %v2411 = vshrl.u32 %v2098, 16
        %v2412 = vpack.i.b16 %v2411, %v2410
        %v2416 = vpack.i.b16 %v2099, %v1963
        %v2418 = vshrl.u32 %v1963, 16
        %v2419 = vshrl.u32 %v2099, 16
        %v2420 = vpack.i.b16 %v2419, %v2418
        %v2424 = vpack.i.b16 %v2100, %v1964
        %v2426 = vshrl.u32 %v1964, 16
        %v2427 = vshrl.u32 %v2100, 16
        %v2428 = vpack.i.b16 %v2427, %v2426
        %v2432 = vpack.i.b16 %v2101, %v1965
        %v2434 = vshrl.u32 %v1965, 16
        %v2435 = vshrl.u32 %v2101, 16
        %v2436 = vpack.i.b16 %v2435, %v2434
        %v2440 = vpack.i.b16 %v2366, %v2230
        %v2442 = vshrl.u32 %v2230, 16
        %v2443 = vshrl.u32 %v2366, 16
        %v2444 = vpack.i.b16 %v2443, %v2442
        %v2448 = vpack.i.b16 %v2367, %v2231
        %v2450 = vshrl.u32 %v2231, 16
        %v2451 = vshrl.u32 %v2367, 16
        %v2452 = vpack.i.b16 %v2451, %v2450
        %v2456 = vpack.i.b16 %v2368, %v2232
        %v2458 = vshrl.u32 %v2232, 16
        %v2459 = vshrl.u32 %v2368, 16
        %v2460 = vpack.i.b16 %v2459, %v2458
        %v2464 = vpack.i.b16 %v2369, %v2233
        %v2466 = vshrl.u32 %v2233, 16
        %v2467 = vshrl.u32 %v2369, 16
        %v2468 = vpack.i.b16 %v2467, %v2466
        %v2472 = vpack.i.b16 %v2370, %v2234
        %v2474 = vshrl.u32 %v2234, 16
        %v2475 = vshrl.u32 %v2370, 16
        %v2476 = vpack.i.b16 %v2475, %v2474
        %v2480 = vpack.i.b16 %v2371, %v2235
        %v2482 = vshrl.u32 %v2235, 16
        %v2483 = vshrl.u32 %v2371, 16
        %v2484 = vpack.i.b16 %v2483, %v2482
        %v2488 = vpack.i.b16 %v2372, %v2236
        %v2490 = vshrl.u32 %v2236, 16
        %v2491 = vshrl.u32 %v2372, 16
        %v2492 = vpack.i.b16 %v2491, %v2490
        %v2496 = vpack.i.b16 %v2373, %v2237
        %v2498 = vshrl.u32 %v2237, 16
        %v2499 = vshrl.u32 %v2373, 16
        %v2500 = vpack.i.b16 %v2499, %v2498
        %2502 = vxpose.xlu0.c.b16.start [1/8] %v2376, 128
        %2503 = vxpose.xlu0.c.b16.cont [2/8] 0, 128
        %2504 = vxpose.xlu0.c.b16.cont [3/8] 0, 128
        %2505 = vxpose.xlu0.c.b16.cont [4/8] 0, 128
        %2506 = vxpose.xlu0.c.b16.cont [5/8] 0, 128
        %2507 = vxpose.xlu0.c.b16.cont [6/8] 0, 128
        %2508 = vxpose.xlu0.c.b16.cont [7/8] 0, 128
        %2509 = vxpose.xlu0.c.b16.end [8/8] 0, 128
        %v2510 = vpop.trf.xlu0
        %v2511 = vpop.trf.xlu0
        %v2512 = vpop.trf.xlu0
        %v2513 = vpop.trf.xlu0
        %v2514 = vpop.trf.xlu0
        %v2515 = vpop.trf.xlu0
        %v2516 = vpop.trf.xlu0
        %v2517 = vpop.trf.xlu0
        %2518 = vxpose.xlu0.c.b16.start [1/8] %v2380, 128
        %2519 = vxpose.xlu0.c.b16.cont [2/8] 0, 128
        %2520 = vxpose.xlu0.c.b16.cont [3/8] 0, 128
        %2521 = vxpose.xlu0.c.b16.cont [4/8] 0, 128
        %2522 = vxpose.xlu0.c.b16.cont [5/8] 0, 128
        %2523 = vxpose.xlu0.c.b16.cont [6/8] 0, 128
        %2524 = vxpose.xlu0.c.b16.cont [7/8] 0, 128
        %2525 = vxpose.xlu0.c.b16.end [8/8] 0, 128
        %v2526 = vpop.trf.xlu0
        %v2527 = vpop.trf.xlu0
        %v2528 = vpop.trf.xlu0
        %v2529 = vpop.trf.xlu0
        %v2530 = vpop.trf.xlu0
        %v2531 = vpop.trf.xlu0
        %v2532 = vpop.trf.xlu0
        %v2533 = vpop.trf.xlu0
        %2534 = vxpose.xlu0.c.b16.start [1/8] %v2384, 128
        %2535 = vxpose.xlu0.c.b16.cont [2/8] 0, 128
        %2536 = vxpose.xlu0.c.b16.cont [3/8] 0, 128
        %2537 = vxpose.xlu0.c.b16.cont [4/8] 0, 128
        %2538 = vxpose.xlu0.c.b16.cont [5/8] 0, 128
        %2539 = vxpose.xlu0.c.b16.cont [6/8] 0, 128
        %2540 = vxpose.xlu0.c.b16.cont [7/8] 0, 128
        %2541 = vxpose.xlu0.c.b16.end [8/8] 0, 128
        %v2542 = vpop.trf.xlu0
        %v2543 = vpop.trf.xlu0
        %v2544 = vpop.trf.xlu0
        %v2545 = vpop.trf.xlu0
        %v2546 = vpop.trf.xlu0
        %v2547 = vpop.trf.xlu0
        %v2548 = vpop.trf.xlu0
        %v2549 = vpop.trf.xlu0
        %2550 = vxpose.xlu0.c.b16.start [1/8] %v2388, 128
        %2551 = vxpose.xlu0.c.b16.cont [2/8] 0, 128
        %2552 = vxpose.xlu0.c.b16.cont [3/8] 0, 128
        %2553 = vxpose.xlu0.c.b16.cont [4/8] 0, 128
        %2554 = vxpose.xlu0.c.b16.cont [5/8] 0, 128
        %2555 = vxpose.xlu0.c.b16.cont [6/8] 0, 128
        %2556 = vxpose.xlu0.c.b16.cont [7/8] 0, 128
        %2557 = vxpose.xlu0.c.b16.end [8/8] 0, 128
        %v2558 = vpop.trf.xlu0
        %v2559 = vpop.trf.xlu0
        %v2560 = vpop.trf.xlu0
        %v2561 = vpop.trf.xlu0
        %v2562 = vpop.trf.xlu0
        %v2563 = vpop.trf.xlu0
        %v2564 = vpop.trf.xlu0
        %v2565 = vpop.trf.xlu0
        %2566 = vxpose.xlu0.c.b16.start [1/8] %v2392, 128
        %2567 = vxpose.xlu0.c.b16.cont [2/8] 0, 128
        %2568 = vxpose.xlu0.c.b16.cont [3/8] 0, 128
        %2569 = vxpose.xlu0.c.b16.cont [4/8] 0, 128
        %2570 = vxpose.xlu0.c.b16.cont [5/8] 0, 128
        %2571 = vxpose.xlu0.c.b16.cont [6/8] 0, 128
        %2572 = vxpose.xlu0.c.b16.cont [7/8] 0, 128
        %2573 = vxpose.xlu0.c.b16.end [8/8] 0, 128
        %v2574 = vpop.trf.xlu0
        %v2575 = vpop.trf.xlu0
        %v2576 = vpop.trf.xlu0
        %v2577 = vpop.trf.xlu0
        %v2578 = vpop.trf.xlu0
        %v2579 = vpop.trf.xlu0
        %v2580 = vpop.trf.xlu0
        %v2581 = vpop.trf.xlu0
        %2582 = vxpose.xlu0.c.b16.start [1/8] %v2396, 128
        %2583 = vxpose.xlu0.c.b16.cont [2/8] 0, 128
        %2584 = vxpose.xlu0.c.b16.cont [3/8] 0, 128
        %2585 = vxpose.xlu0.c.b16.cont [4/8] 0, 128
        %2586 = vxpose.xlu0.c.b16.cont [5/8] 0, 128
        %2587 = vxpose.xlu0.c.b16.cont [6/8] 0, 128
        %2588 = vxpose.xlu0.c.b16.cont [7/8] 0, 128
        %2589 = vxpose.xlu0.c.b16.end [8/8] 0, 128
        %v2590 = vpop.trf.xlu0
        %v2591 = vpop.trf.xlu0
        %v2592 = vpop.trf.xlu0
        %v2593 = vpop.trf.xlu0
        %v2594 = vpop.trf.xlu0
        %v2595 = vpop.trf.xlu0
        %v2596 = vpop.trf.xlu0
        %v2597 = vpop.trf.xlu0
        %2598 = vxpose.xlu0.c.b16.start [1/8] %v2400, 128
        %2599 = vxpose.xlu0.c.b16.cont [2/8] 0, 128
        %2600 = vxpose.xlu0.c.b16.cont [3/8] 0, 128
        %2601 = vxpose.xlu0.c.b16.cont [4/8] 0, 128
        %2602 = vxpose.xlu0.c.b16.cont [5/8] 0, 128
        %2603 = vxpose.xlu0.c.b16.cont [6/8] 0, 128
        %2604 = vxpose.xlu0.c.b16.cont [7/8] 0, 128
        %2605 = vxpose.xlu0.c.b16.end [8/8] 0, 128
        %v2606 = vpop.trf.xlu0
        %v2607 = vpop.trf.xlu0
        %v2608 = vpop.trf.xlu0
        %v2609 = vpop.trf.xlu0
        %v2610 = vpop.trf.xlu0
        %v2611 = vpop.trf.xlu0
        %v2612 = vpop.trf.xlu0
        %v2613 = vpop.trf.xlu0
        %2614 = vxpose.xlu0.c.b16.start [1/8] %v2404, 128
        %2615 = vxpose.xlu0.c.b16.cont [2/8] 0, 128
        %2616 = vxpose.xlu0.c.b16.cont [3/8] 0, 128
        %2617 = vxpose.xlu0.c.b16.cont [4/8] 0, 128
        %2618 = vxpose.xlu0.c.b16.cont [5/8] 0, 128
        %2619 = vxpose.xlu0.c.b16.cont [6/8] 0, 128
        %2620 = vxpose.xlu0.c.b16.cont [7/8] 0, 128
        %2621 = vxpose.xlu0.c.b16.end [8/8] 0, 128
        %v2622 = vpop.trf.xlu0
        %v2623 = vpop.trf.xlu0
        %v2624 = vpop.trf.xlu0
        %v2625 = vpop.trf.xlu0
        %v2626 = vpop.trf.xlu0
        %v2627 = vpop.trf.xlu0
        %v2628 = vpop.trf.xlu0
        %v2629 = vpop.trf.xlu0
        %2630 = vxpose.xlu0.c.b16.start [1/8] %v2408, 128
        %2631 = vxpose.xlu0.c.b16.cont [2/8] 0, 128
        %2632 = vxpose.xlu0.c.b16.cont [3/8] 0, 128
        %2633 = vxpose.xlu0.c.b16.cont [4/8] 0, 128
        %2634 = vxpose.xlu0.c.b16.cont [5/8] 0, 128
        %2635 = vxpose.xlu0.c.b16.cont [6/8] 0, 128
        %2636 = vxpose.xlu0.c.b16.cont [7/8] 0, 128
        %2637 = vxpose.xlu0.c.b16.end [8/8] 0, 128
        %v2638 = vpop.trf.xlu0
        %v2639 = vpop.trf.xlu0
        %v2640 = vpop.trf.xlu0
        %v2641 = vpop.trf.xlu0
        %v2642 = vpop.trf.xlu0
        %v2643 = vpop.trf.xlu0
        %v2644 = vpop.trf.xlu0
        %v2645 = vpop.trf.xlu0
        %2646 = vxpose.xlu0.c.b16.start [1/8] %v2412, 128
        %2647 = vxpose.xlu0.c.b16.cont [2/8] 0, 128
        %2648 = vxpose.xlu0.c.b16.cont [3/8] 0, 128
        %2649 = vxpose.xlu0.c.b16.cont [4/8] 0, 128
        %2650 = vxpose.xlu0.c.b16.cont [5/8] 0, 128
        %2651 = vxpose.xlu0.c.b16.cont [6/8] 0, 128
        %2652 = vxpose.xlu0.c.b16.cont [7/8] 0, 128
        %2653 = vxpose.xlu0.c.b16.end [8/8] 0, 128
        %v2654 = vpop.trf.xlu0
        %v2655 = vpop.trf.xlu0
        %v2656 = vpop.trf.xlu0
        %v2657 = vpop.trf.xlu0
        %v2658 = vpop.trf.xlu0
        %v2659 = vpop.trf.xlu0
        %v2660 = vpop.trf.xlu0
        %v2661 = vpop.trf.xlu0
        %2662 = vxpose.xlu0.c.b16.start [1/8] %v2416, 128
        %2663 = vxpose.xlu0.c.b16.cont [2/8] 0, 128
        %2664 = vxpose.xlu0.c.b16.cont [3/8] 0, 128
        %2665 = vxpose.xlu0.c.b16.cont [4/8] 0, 128
        %2666 = vxpose.xlu0.c.b16.cont [5/8] 0, 128
        %2667 = vxpose.xlu0.c.b16.cont [6/8] 0, 128
        %2668 = vxpose.xlu0.c.b16.cont [7/8] 0, 128
        %2669 = vxpose.xlu0.c.b16.end [8/8] 0, 128
        %v2670 = vpop.trf.xlu0
        %v2671 = vpop.trf.xlu0
        %v2672 = vpop.trf.xlu0
        %v2673 = vpop.trf.xlu0
        %v2674 = vpop.trf.xlu0
        %v2675 = vpop.trf.xlu0
        %v2676 = vpop.trf.xlu0
        %v2677 = vpop.trf.xlu0
        %2678 = vxpose.xlu0.c.b16.start [1/8] %v2420, 128
        %2679 = vxpose.xlu0.c.b16.cont [2/8] 0, 128
        %2680 = vxpose.xlu0.c.b16.cont [3/8] 0, 128
        %2681 = vxpose.xlu0.c.b16.cont [4/8] 0, 128
        %2682 = vxpose.xlu0.c.b16.cont [5/8] 0, 128
        %2683 = vxpose.xlu0.c.b16.cont [6/8] 0, 128
        %2684 = vxpose.xlu0.c.b16.cont [7/8] 0, 128
        %2685 = vxpose.xlu0.c.b16.end [8/8] 0, 128
        %v2686 = vpop.trf.xlu0
        %v2687 = vpop.trf.xlu0
        %v2688 = vpop.trf.xlu0
        %v2689 = vpop.trf.xlu0
        %v2690 = vpop.trf.xlu0
        %v2691 = vpop.trf.xlu0
        %v2692 = vpop.trf.xlu0
        %v2693 = vpop.trf.xlu0
        %2694 = vxpose.xlu0.c.b16.start [1/8] %v2424, 128
        %2695 = vxpose.xlu0.c.b16.cont [2/8] 0, 128
        %2696 = vxpose.xlu0.c.b16.cont [3/8] 0, 128
        %2697 = vxpose.xlu0.c.b16.cont [4/8] 0, 128
        %2698 = vxpose.xlu0.c.b16.cont [5/8] 0, 128
        %2699 = vxpose.xlu0.c.b16.cont [6/8] 0, 128
        %2700 = vxpose.xlu0.c.b16.cont [7/8] 0, 128
        %2701 = vxpose.xlu0.c.b16.end [8/8] 0, 128
        %v2702 = vpop.trf.xlu0
        %v2703 = vpop.trf.xlu0
        %v2704 = vpop.trf.xlu0
        %v2705 = vpop.trf.xlu0
        %v2706 = vpop.trf.xlu0
        %v2707 = vpop.trf.xlu0
        %v2708 = vpop.trf.xlu0
        %v2709 = vpop.trf.xlu0
        %2710 = vxpose.xlu0.c.b16.start [1/8] %v2428, 128
        %2711 = vxpose.xlu0.c.b16.cont [2/8] 0, 128
        %2712 = vxpose.xlu0.c.b16.cont [3/8] 0, 128
        %2713 = vxpose.xlu0.c.b16.cont [4/8] 0, 128
        %2714 = vxpose.xlu0.c.b16.cont [5/8] 0, 128
        %2715 = vxpose.xlu0.c.b16.cont [6/8] 0, 128
        %2716 = vxpose.xlu0.c.b16.cont [7/8] 0, 128
        %2717 = vxpose.xlu0.c.b16.end [8/8] 0, 128
        %v2718 = vpop.trf.xlu0
        %v2719 = vpop.trf.xlu0
        %v2720 = vpop.trf.xlu0
        %v2721 = vpop.trf.xlu0
        %v2722 = vpop.trf.xlu0
        %v2723 = vpop.trf.xlu0
        %v2724 = vpop.trf.xlu0
        %v2725 = vpop.trf.xlu0
        %2726 = vxpose.xlu0.c.b16.start [1/8] %v2432, 128
        %2727 = vxpose.xlu0.c.b16.cont [2/8] 0, 128
        %2728 = vxpose.xlu0.c.b16.cont [3/8] 0, 128
        %2729 = vxpose.xlu0.c.b16.cont [4/8] 0, 128
        %2730 = vxpose.xlu0.c.b16.cont [5/8] 0, 128
        %2731 = vxpose.xlu0.c.b16.cont [6/8] 0, 128
        %2732 = vxpose.xlu0.c.b16.cont [7/8] 0, 128
        %2733 = vxpose.xlu0.c.b16.end [8/8] 0, 128
        %v2734 = vpop.trf.xlu0
        %v2735 = vpop.trf.xlu0
        %v2736 = vpop.trf.xlu0
        %v2737 = vpop.trf.xlu0
        %v2738 = vpop.trf.xlu0
        %v2739 = vpop.trf.xlu0
        %v2740 = vpop.trf.xlu0
        %v2741 = vpop.trf.xlu0
        %2742 = vxpose.xlu0.c.b16.start [1/8] %v2436, 128
        %2743 = vxpose.xlu0.c.b16.cont [2/8] 0, 128
        %2744 = vxpose.xlu0.c.b16.cont [3/8] 0, 128
        %2745 = vxpose.xlu0.c.b16.cont [4/8] 0, 128
        %2746 = vxpose.xlu0.c.b16.cont [5/8] 0, 128
        %2747 = vxpose.xlu0.c.b16.cont [6/8] 0, 128
        %2748 = vxpose.xlu0.c.b16.cont [7/8] 0, 128
        %2749 = vxpose.xlu0.c.b16.end [8/8] 0, 128
        %v2750 = vpop.trf.xlu0
        %v2751 = vpop.trf.xlu0
        %v2752 = vpop.trf.xlu0
        %v2753 = vpop.trf.xlu0
        %v2754 = vpop.trf.xlu0
        %v2755 = vpop.trf.xlu0
        %v2756 = vpop.trf.xlu0
        %v2757 = vpop.trf.xlu0
        %2758 = vxpose.xlu0.c.b16.start [1/8] %v2440, 128
        %2759 = vxpose.xlu0.c.b16.cont [2/8] 0, 128
        %2760 = vxpose.xlu0.c.b16.cont [3/8] 0, 128
        %2761 = vxpose.xlu0.c.b16.cont [4/8] 0, 128
        %2762 = vxpose.xlu0.c.b16.cont [5/8] 0, 128
        %2763 = vxpose.xlu0.c.b16.cont [6/8] 0, 128
        %2764 = vxpose.xlu0.c.b16.cont [7/8] 0, 128
        %2765 = vxpose.xlu0.c.b16.end [8/8] 0, 128
        %v2766 = vpop.trf.xlu0
        %v2767 = vpop.trf.xlu0
        %v2768 = vpop.trf.xlu0
        %v2769 = vpop.trf.xlu0
        %v2770 = vpop.trf.xlu0
        %v2771 = vpop.trf.xlu0
        %v2772 = vpop.trf.xlu0
        %v2773 = vpop.trf.xlu0
        %2774 = vxpose.xlu0.c.b16.start [1/8] %v2444, 128
        %2775 = vxpose.xlu0.c.b16.cont [2/8] 0, 128
        %2776 = vxpose.xlu0.c.b16.cont [3/8] 0, 128
        %2777 = vxpose.xlu0.c.b16.cont [4/8] 0, 128
        %2778 = vxpose.xlu0.c.b16.cont [5/8] 0, 128
        %2779 = vxpose.xlu0.c.b16.cont [6/8] 0, 128
        %2780 = vxpose.xlu0.c.b16.cont [7/8] 0, 128
        %2781 = vxpose.xlu0.c.b16.end [8/8] 0, 128
        %v2782 = vpop.trf.xlu0
        %v2783 = vpop.trf.xlu0
        %v2784 = vpop.trf.xlu0
        %v2785 = vpop.trf.xlu0
        %v2786 = vpop.trf.xlu0
        %v2787 = vpop.trf.xlu0
        %v2788 = vpop.trf.xlu0
        %v2789 = vpop.trf.xlu0
        %2790 = vxpose.xlu0.c.b16.start [1/8] %v2448, 128
        %2791 = vxpose.xlu0.c.b16.cont [2/8] 0, 128
        %2792 = vxpose.xlu0.c.b16.cont [3/8] 0, 128
        %2793 = vxpose.xlu0.c.b16.cont [4/8] 0, 128
        %2794 = vxpose.xlu0.c.b16.cont [5/8] 0, 128
        %2795 = vxpose.xlu0.c.b16.cont [6/8] 0, 128
        %2796 = vxpose.xlu0.c.b16.cont [7/8] 0, 128
        %2797 = vxpose.xlu0.c.b16.end [8/8] 0, 128
        %v2798 = vpop.trf.xlu0
        %v2799 = vpop.trf.xlu0
        %v2800 = vpop.trf.xlu0
        %v2801 = vpop.trf.xlu0
        %v2802 = vpop.trf.xlu0
        %v2803 = vpop.trf.xlu0
        %v2804 = vpop.trf.xlu0
        %v2805 = vpop.trf.xlu0
        %2806 = vxpose.xlu0.c.b16.start [1/8] %v2452, 128
        %2807 = vxpose.xlu0.c.b16.cont [2/8] 0, 128
        %2808 = vxpose.xlu0.c.b16.cont [3/8] 0, 128
        %2809 = vxpose.xlu0.c.b16.cont [4/8] 0, 128
        %2810 = vxpose.xlu0.c.b16.cont [5/8] 0, 128
        %2811 = vxpose.xlu0.c.b16.cont [6/8] 0, 128
        %2812 = vxpose.xlu0.c.b16.cont [7/8] 0, 128
        %2813 = vxpose.xlu0.c.b16.end [8/8] 0, 128
        %v2814 = vpop.trf.xlu0
        %v2815 = vpop.trf.xlu0
        %v2816 = vpop.trf.xlu0
        %v2817 = vpop.trf.xlu0
        %v2818 = vpop.trf.xlu0
        %v2819 = vpop.trf.xlu0
        %v2820 = vpop.trf.xlu0
        %v2821 = vpop.trf.xlu0
        %2822 = vxpose.xlu0.c.b16.start [1/8] %v2456, 128
        %2823 = vxpose.xlu0.c.b16.cont [2/8] 0, 128
        %2824 = vxpose.xlu0.c.b16.cont [3/8] 0, 128
        %2825 = vxpose.xlu0.c.b16.cont [4/8] 0, 128
        %2826 = vxpose.xlu0.c.b16.cont [5/8] 0, 128
        %2827 = vxpose.xlu0.c.b16.cont [6/8] 0, 128
        %2828 = vxpose.xlu0.c.b16.cont [7/8] 0, 128
        %2829 = vxpose.xlu0.c.b16.end [8/8] 0, 128
        %v2830 = vpop.trf.xlu0
        %v2831 = vpop.trf.xlu0
        %v2832 = vpop.trf.xlu0
        %v2833 = vpop.trf.xlu0
        %v2834 = vpop.trf.xlu0
        %v2835 = vpop.trf.xlu0
        %v2836 = vpop.trf.xlu0
        %v2837 = vpop.trf.xlu0
        %2838 = vxpose.xlu0.c.b16.start [1/8] %v2460, 128
        %2839 = vxpose.xlu0.c.b16.cont [2/8] 0, 128
        %2840 = vxpose.xlu0.c.b16.cont [3/8] 0, 128
        %2841 = vxpose.xlu0.c.b16.cont [4/8] 0, 128
        %2842 = vxpose.xlu0.c.b16.cont [5/8] 0, 128
        %2843 = vxpose.xlu0.c.b16.cont [6/8] 0, 128
        %2844 = vxpose.xlu0.c.b16.cont [7/8] 0, 128
        %2845 = vxpose.xlu0.c.b16.end [8/8] 0, 128
        %v2846 = vpop.trf.xlu0
        %v2847 = vpop.trf.xlu0
        %v2848 = vpop.trf.xlu0
        %v2849 = vpop.trf.xlu0
        %v2850 = vpop.trf.xlu0
        %v2851 = vpop.trf.xlu0
        %v2852 = vpop.trf.xlu0
        %v2853 = vpop.trf.xlu0
        %2854 = vxpose.xlu0.c.b16.start [1/8] %v2464, 128
        %2855 = vxpose.xlu0.c.b16.cont [2/8] 0, 128
        %2856 = vxpose.xlu0.c.b16.cont [3/8] 0, 128
        %2857 = vxpose.xlu0.c.b16.cont [4/8] 0, 128
        %2858 = vxpose.xlu0.c.b16.cont [5/8] 0, 128
        %2859 = vxpose.xlu0.c.b16.cont [6/8] 0, 128
        %2860 = vxpose.xlu0.c.b16.cont [7/8] 0, 128
        %2861 = vxpose.xlu0.c.b16.end [8/8] 0, 128
        %v2862 = vpop.trf.xlu0
        %v2863 = vpop.trf.xlu0
        %v2864 = vpop.trf.xlu0
        %v2865 = vpop.trf.xlu0
        %v2866 = vpop.trf.xlu0
        %v2867 = vpop.trf.xlu0
        %v2868 = vpop.trf.xlu0
        %v2869 = vpop.trf.xlu0
        %2870 = vxpose.xlu0.c.b16.start [1/8] %v2468, 128
        %2871 = vxpose.xlu0.c.b16.cont [2/8] 0, 128
        %2872 = vxpose.xlu0.c.b16.cont [3/8] 0, 128
        %2873 = vxpose.xlu0.c.b16.cont [4/8] 0, 128
        %2874 = vxpose.xlu0.c.b16.cont [5/8] 0, 128
        %2875 = vxpose.xlu0.c.b16.cont [6/8] 0, 128
        %2876 = vxpose.xlu0.c.b16.cont [7/8] 0, 128
        %2877 = vxpose.xlu0.c.b16.end [8/8] 0, 128
        %v2878 = vpop.trf.xlu0
        %v2879 = vpop.trf.xlu0
        %v2880 = vpop.trf.xlu0
        %v2881 = vpop.trf.xlu0
        %v2882 = vpop.trf.xlu0
        %v2883 = vpop.trf.xlu0
        %v2884 = vpop.trf.xlu0
        %v2885 = vpop.trf.xlu0
        %2886 = vxpose.xlu0.c.b16.start [1/8] %v2472, 128
        %2887 = vxpose.xlu0.c.b16.cont [2/8] 0, 128
        %2888 = vxpose.xlu0.c.b16.cont [3/8] 0, 128
        %2889 = vxpose.xlu0.c.b16.cont [4/8] 0, 128
        %2890 = vxpose.xlu0.c.b16.cont [5/8] 0, 128
        %2891 = vxpose.xlu0.c.b16.cont [6/8] 0, 128
        %2892 = vxpose.xlu0.c.b16.cont [7/8] 0, 128
        %2893 = vxpose.xlu0.c.b16.end [8/8] 0, 128
        %v2894 = vpop.trf.xlu0
        %v2895 = vpop.trf.xlu0
        %v2896 = vpop.trf.xlu0
        %v2897 = vpop.trf.xlu0
        %v2898 = vpop.trf.xlu0
        %v2899 = vpop.trf.xlu0
        %v2900 = vpop.trf.xlu0
        %v2901 = vpop.trf.xlu0
        %2902 = vxpose.xlu0.c.b16.start [1/8] %v2476, 128
        %2903 = vxpose.xlu0.c.b16.cont [2/8] 0, 128
        %2904 = vxpose.xlu0.c.b16.cont [3/8] 0, 128
        %2905 = vxpose.xlu0.c.b16.cont [4/8] 0, 128
        %2906 = vxpose.xlu0.c.b16.cont [5/8] 0, 128
        %2907 = vxpose.xlu0.c.b16.cont [6/8] 0, 128
        %2908 = vxpose.xlu0.c.b16.cont [7/8] 0, 128
        %2909 = vxpose.xlu0.c.b16.end [8/8] 0, 128
        %v2910 = vpop.trf.xlu0
        %v2911 = vpop.trf.xlu0
        %v2912 = vpop.trf.xlu0
        %v2913 = vpop.trf.xlu0
        %v2914 = vpop.trf.xlu0
        %v2915 = vpop.trf.xlu0
        %v2916 = vpop.trf.xlu0
        %v2917 = vpop.trf.xlu0
        %2918 = vxpose.xlu0.c.b16.start [1/8] %v2480, 128
        %2919 = vxpose.xlu0.c.b16.cont [2/8] 0, 128
        %2920 = vxpose.xlu0.c.b16.cont [3/8] 0, 128
        %2921 = vxpose.xlu0.c.b16.cont [4/8] 0, 128
        %2922 = vxpose.xlu0.c.b16.cont [5/8] 0, 128
        %2923 = vxpose.xlu0.c.b16.cont [6/8] 0, 128
        %2924 = vxpose.xlu0.c.b16.cont [7/8] 0, 128
        %2925 = vxpose.xlu0.c.b16.end [8/8] 0, 128
        %v2926 = vpop.trf.xlu0
        %v2927 = vpop.trf.xlu0
        %v2928 = vpop.trf.xlu0
        %v2929 = vpop.trf.xlu0
        %v2930 = vpop.trf.xlu0
        %v2931 = vpop.trf.xlu0
        %v2932 = vpop.trf.xlu0
        %v2933 = vpop.trf.xlu0
        %2934 = vxpose.xlu0.c.b16.start [1/8] %v2484, 128
        %2935 = vxpose.xlu0.c.b16.cont [2/8] 0, 128
        %2936 = vxpose.xlu0.c.b16.cont [3/8] 0, 128
        %2937 = vxpose.xlu0.c.b16.cont [4/8] 0, 128
        %2938 = vxpose.xlu0.c.b16.cont [5/8] 0, 128
        %2939 = vxpose.xlu0.c.b16.cont [6/8] 0, 128
        %2940 = vxpose.xlu0.c.b16.cont [7/8] 0, 128
        %2941 = vxpose.xlu0.c.b16.end [8/8] 0, 128
        %v2942 = vpop.trf.xlu0
        %v2943 = vpop.trf.xlu0
        %v2944 = vpop.trf.xlu0
        %v2945 = vpop.trf.xlu0
        %v2946 = vpop.trf.xlu0
        %v2947 = vpop.trf.xlu0
        %v2948 = vpop.trf.xlu0
        %v2949 = vpop.trf.xlu0
        %2950 = vxpose.xlu0.c.b16.start [1/8] %v2488, 128
        %2951 = vxpose.xlu0.c.b16.cont [2/8] 0, 128
        %2952 = vxpose.xlu0.c.b16.cont [3/8] 0, 128
        %2953 = vxpose.xlu0.c.b16.cont [4/8] 0, 128
        %2954 = vxpose.xlu0.c.b16.cont [5/8] 0, 128
        %2955 = vxpose.xlu0.c.b16.cont [6/8] 0, 128
        %2956 = vxpose.xlu0.c.b16.cont [7/8] 0, 128
        %2957 = vxpose.xlu0.c.b16.end [8/8] 0, 128
        %v2958 = vpop.trf.xlu0
        %v2959 = vpop.trf.xlu0
        %v2960 = vpop.trf.xlu0
        %v2961 = vpop.trf.xlu0
        %v2962 = vpop.trf.xlu0
        %v2963 = vpop.trf.xlu0
        %v2964 = vpop.trf.xlu0
        %v2965 = vpop.trf.xlu0
        %2966 = vxpose.xlu0.c.b16.start [1/8] %v2492, 128
        %2967 = vxpose.xlu0.c.b16.cont [2/8] 0, 128
        %2968 = vxpose.xlu0.c.b16.cont [3/8] 0, 128
        %2969 = vxpose.xlu0.c.b16.cont [4/8] 0, 128
        %2970 = vxpose.xlu0.c.b16.cont [5/8] 0, 128
        %2971 = vxpose.xlu0.c.b16.cont [6/8] 0, 128
        %2972 = vxpose.xlu0.c.b16.cont [7/8] 0, 128
        %2973 = vxpose.xlu0.c.b16.end [8/8] 0, 128
        %v2974 = vpop.trf.xlu0
        %v2975 = vpop.trf.xlu0
        %v2976 = vpop.trf.xlu0
        %v2977 = vpop.trf.xlu0
        %v2978 = vpop.trf.xlu0
        %v2979 = vpop.trf.xlu0
        %v2980 = vpop.trf.xlu0
        %v2981 = vpop.trf.xlu0
        %2982 = vxpose.xlu0.c.b16.start [1/8] %v2496, 128
        %2983 = vxpose.xlu0.c.b16.cont [2/8] 0, 128
        %2984 = vxpose.xlu0.c.b16.cont [3/8] 0, 128
        %2985 = vxpose.xlu0.c.b16.cont [4/8] 0, 128
        %2986 = vxpose.xlu0.c.b16.cont [5/8] 0, 128
        %2987 = vxpose.xlu0.c.b16.cont [6/8] 0, 128
        %2988 = vxpose.xlu0.c.b16.cont [7/8] 0, 128
        %2989 = vxpose.xlu0.c.b16.end [8/8] 0, 128
        %v2990 = vpop.trf.xlu0
        %v2991 = vpop.trf.xlu0
        %v2992 = vpop.trf.xlu0
        %v2993 = vpop.trf.xlu0
        %v2994 = vpop.trf.xlu0
        %v2995 = vpop.trf.xlu0
        %v2996 = vpop.trf.xlu0
        %v2997 = vpop.trf.xlu0
        %2998 = vxpose.xlu0.c.b16.start [1/8] %v2500, 128
        %2999 = vxpose.xlu0.c.b16.cont [2/8] 0, 128
        %3000 = vxpose.xlu0.c.b16.cont [3/8] 0, 128
        %3001 = vxpose.xlu0.c.b16.cont [4/8] 0, 128
        %3002 = vxpose.xlu0.c.b16.cont [5/8] 0, 128
        %3003 = vxpose.xlu0.c.b16.cont [6/8] 0, 128
        %3004 = vxpose.xlu0.c.b16.cont [7/8] 0, 128
        %3005 = vxpose.xlu0.c.b16.end [8/8] 0, 128
        %v3006 = vpop.trf.xlu0
        %v3007 = vpop.trf.xlu0
        %v3008 = vpop.trf.xlu0
        %v3009 = vpop.trf.xlu0
        %v3010 = vpop.trf.xlu0
        %v3011 = vpop.trf.xlu0
        %v3012 = vpop.trf.xlu0
        %v3013 = vpop.trf.xlu0
        %v3014 = vcombine.low %v2510, %v2574
        %v3016 = vunpack.c.l.s4 1983009808
        %v3017 = vunpack.c.0.s8 %v3016
        %v3018 = vlaneseq
        %v3019 = vshrl.u32 %v3018, 7
        %v3020 = vsub.s32 %v3017, %v3019
        %v3021 = vrot.slane %v3014, %v3020
        %v3022 = vcombine.low %v2542, %v2606
        %v3024 = vunpack.c.l.s4 1983009808
        %v3025 = vunpack.c.0.s8 %v3024
        %v3026 = vlaneseq
        %v3027 = vshrl.u32 %v3026, 7
        %v3028 = vsub.s32 %v3025, %v3027
        %v3029 = vrot.slane %v3022, %v3028
        %v3030 = vcombine.low %v2638, %v2702
        %v3032 = vunpack.c.l.s4 1983009808
        %v3033 = vunpack.c.0.s8 %v3032
        %v3034 = vlaneseq
        %v3035 = vshrl.u32 %v3034, 7
        %v3036 = vsub.s32 %v3033, %v3035
        %v3037 = vrot.slane %v3030, %v3036
        %v3038 = vcombine.low %v2670, %v2734
        %v3040 = vunpack.c.l.s4 1983009808
        %v3041 = vunpack.c.0.s8 %v3040
        %v3042 = vlaneseq
        %v3043 = vshrl.u32 %v3042, 7
        %v3044 = vsub.s32 %v3041, %v3043
        %v3045 = vrot.slane %v3038, %v3044
        %v3046 = vcombine.low %v3021, %v3029
        %v3048 = vunpack.c.l.s4 1934713408
        %v3049 = vunpack.c.0.s8 %v3048
        %v3050 = vlaneseq
        %v3051 = vshrl.u32 %v3050, 7
        %v3052 = vsub.s32 %v3049, %v3051
        %v3053 = vrot.slane %v3046, %v3052
        %v3054 = vcombine.low %v3037, %v3045
        %v3056 = vunpack.c.l.s4 1934713408
        %v3057 = vunpack.c.0.s8 %v3056
        %v3058 = vlaneseq
        %v3059 = vshrl.u32 %v3058, 7
        %v3060 = vsub.s32 %v3057, %v3059
        %v3061 = vrot.slane %v3054, %v3060
        %v3062 = vcombine.low %v3053, %v3061
        %v3063 = vcombine.high %v3053, %v3061
        %v3064 = vcombine.low %v2526, %v2590
        %v3066 = vunpack.c.l.s4 1983009808
        %v3067 = vunpack.c.0.s8 %v3066
        %v3068 = vlaneseq
        %v3069 = vshrl.u32 %v3068, 7
        %v3070 = vsub.s32 %v3067, %v3069
        %v3071 = vrot.slane %v3064, %v3070
        %v3072 = vcombine.low %v2558, %v2622
        %v3074 = vunpack.c.l.s4 1983009808
        %v3075 = vunpack.c.0.s8 %v3074
        %v3076 = vlaneseq
        %v3077 = vshrl.u32 %v3076, 7
        %v3078 = vsub.s32 %v3075, %v3077
        %v3079 = vrot.slane %v3072, %v3078
        %v3080 = vcombine.low %v2654, %v2718
        %v3082 = vunpack.c.l.s4 1983009808
        %v3083 = vunpack.c.0.s8 %v3082
        %v3084 = vlaneseq
        %v3085 = vshrl.u32 %v3084, 7
        %v3086 = vsub.s32 %v3083, %v3085
        %v3087 = vrot.slane %v3080, %v3086
        %v3088 = vcombine.low %v2686, %v2750
        %v3090 = vunpack.c.l.s4 1983009808
        %v3091 = vunpack.c.0.s8 %v3090
        %v3092 = vlaneseq
        %v3093 = vshrl.u32 %v3092, 7
        %v3094 = vsub.s32 %v3091, %v3093
        %v3095 = vrot.slane %v3088, %v3094
        %v3096 = vcombine.low %v3071, %v3079
        %v3098 = vunpack.c.l.s4 1934713408
        %v3099 = vunpack.c.0.s8 %v3098
        %v3100 = vlaneseq
        %v3101 = vshrl.u32 %v3100, 7
        %v3102 = vsub.s32 %v3099, %v3101
        %v3103 = vrot.slane %v3096, %v3102
        %v3104 = vcombine.low %v3087, %v3095
        %v3106 = vunpack.c.l.s4 1934713408
        %v3107 = vunpack.c.0.s8 %v3106
        %v3108 = vlaneseq
        %v3109 = vshrl.u32 %v3108, 7
        %v3110 = vsub.s32 %v3107, %v3109
        %v3111 = vrot.slane %v3104, %v3110
        %v3112 = vcombine.low %v3103, %v3111
        %v3113 = vcombine.high %v3103, %v3111
        %v3114 = vcombine.low %v2766, %v2830
        %v3116 = vunpack.c.l.s4 1983009808
        %v3117 = vunpack.c.0.s8 %v3116
        %v3118 = vlaneseq
        %v3119 = vshrl.u32 %v3118, 7
        %v3120 = vsub.s32 %v3117, %v3119
        %v3121 = vrot.slane %v3114, %v3120
        %v3122 = vcombine.low %v2798, %v2862
        %v3124 = vunpack.c.l.s4 1983009808
        %v3125 = vunpack.c.0.s8 %v3124
        %v3126 = vlaneseq
        %v3127 = vshrl.u32 %v3126, 7
        %v3128 = vsub.s32 %v3125, %v3127
        %v3129 = vrot.slane %v3122, %v3128
        %v3130 = vcombine.low %v2894, %v2958
        %v3132 = vunpack.c.l.s4 1983009808
        %v3133 = vunpack.c.0.s8 %v3132
        %v3134 = vlaneseq
        %v3135 = vshrl.u32 %v3134, 7
        %v3136 = vsub.s32 %v3133, %v3135
        %v3137 = vrot.slane %v3130, %v3136
        %v3138 = vcombine.low %v2926, %v2990
        %v3140 = vunpack.c.l.s4 1983009808
        %v3141 = vunpack.c.0.s8 %v3140
        %v3142 = vlaneseq
        %v3143 = vshrl.u32 %v3142, 7
        %v3144 = vsub.s32 %v3141, %v3143
        %v3145 = vrot.slane %v3138, %v3144
        %v3146 = vcombine.low %v3121, %v3129
        %v3148 = vunpack.c.l.s4 1934713408
        %v3149 = vunpack.c.0.s8 %v3148
        %v3150 = vlaneseq
        %v3151 = vshrl.u32 %v3150, 7
        %v3152 = vsub.s32 %v3149, %v3151
        %v3153 = vrot.slane %v3146, %v3152
        %v3154 = vcombine.low %v3137, %v3145
        %v3156 = vunpack.c.l.s4 1934713408
        %v3157 = vunpack.c.0.s8 %v3156
        %v3158 = vlaneseq
        %v3159 = vshrl.u32 %v3158, 7
        %v3160 = vsub.s32 %v3157, %v3159
        %v3161 = vrot.slane %v3154, %v3160
        %v3162 = vcombine.low %v3153, %v3161
        %v3163 = vcombine.high %v3153, %v3161
        %v3164 = vcombine.low %v2782, %v2846
        %v3166 = vunpack.c.l.s4 1983009808
        %v3167 = vunpack.c.0.s8 %v3166
        %v3168 = vlaneseq
        %v3169 = vshrl.u32 %v3168, 7
        %v3170 = vsub.s32 %v3167, %v3169
        %v3171 = vrot.slane %v3164, %v3170
        %v3172 = vcombine.low %v2814, %v2878
        %v3174 = vunpack.c.l.s4 1983009808
        %v3175 = vunpack.c.0.s8 %v3174
        %v3176 = vlaneseq
        %v3177 = vshrl.u32 %v3176, 7
        %v3178 = vsub.s32 %v3175, %v3177
        %v3179 = vrot.slane %v3172, %v3178
        %v3180 = vcombine.low %v2910, %v2974
        %v3182 = vunpack.c.l.s4 1983009808
        %v3183 = vunpack.c.0.s8 %v3182
        %v3184 = vlaneseq
        %v3185 = vshrl.u32 %v3184, 7
        %v3186 = vsub.s32 %v3183, %v3185
        %v3187 = vrot.slane %v3180, %v3186
        %v3188 = vcombine.low %v2942, %v3006
        %v3190 = vunpack.c.l.s4 1983009808
        %v3191 = vunpack.c.0.s8 %v3190
        %v3192 = vlaneseq
        %v3193 = vshrl.u32 %v3192, 7
        %v3194 = vsub.s32 %v3191, %v3193
        %v3195 = vrot.slane %v3188, %v3194
        %v3196 = vcombine.low %v3171, %v3179
        %v3198 = vunpack.c.l.s4 1934713408
        %v3199 = vunpack.c.0.s8 %v3198
        %v3200 = vlaneseq
        %v3201 = vshrl.u32 %v3200, 7
        %v3202 = vsub.s32 %v3199, %v3201
        %v3203 = vrot.slane %v3196, %v3202
        %v3204 = vcombine.low %v3187, %v3195
        %v3206 = vunpack.c.l.s4 1934713408
        %v3207 = vunpack.c.0.s8 %v3206
        %v3208 = vlaneseq
        %v3209 = vshrl.u32 %v3208, 7
        %v3210 = vsub.s32 %v3207, %v3209
        %v3211 = vrot.slane %v3204, %v3210
        %v3212 = vcombine.low %v3203, %v3211
        %v3213 = vcombine.high %v3203, %v3211
        %v3216 = vpack.i.b16 %v3112, %v3062
        %v3218 = vshrl.u32 %v3062, 16
        %v3219 = vshrl.u32 %v3112, 16
        %v3220 = vpack.i.b16 %v3219, %v3218
        %v3224 = vpack.i.b16 %v3113, %v3063
        %v3226 = vshrl.u32 %v3063, 16
        %v3227 = vshrl.u32 %v3113, 16
        %v3228 = vpack.i.b16 %v3227, %v3226
        %v3232 = vpack.i.b16 %v3212, %v3162
        %v3234 = vshrl.u32 %v3162, 16
        %v3235 = vshrl.u32 %v3212, 16
        %v3236 = vpack.i.b16 %v3235, %v3234
        %v3240 = vpack.i.b16 %v3213, %v3163
        %v3242 = vshrl.u32 %v3163, 16
        %v3243 = vshrl.u32 %v3213, 16
        %v3244 = vpack.i.b16 %v3243, %v3242
        %vm3246 = vcmask 261120
        %v3248 = vsel %vm3246, %v1564, 0
        %3250 = vmatprep.subr.bf16.mxu0 0
        %3251 = vmatpush1.bf16.msra.mxu0 0
        %3252 = vmatprep.subr.bf16.mxu0 0
        %3253 = vmatpush1.bf16.msra.mxu0 0
        %3254 = vmatprep.subr.bf16.mxu0 0
        %3255 = vmatpush1.bf16.msra.mxu0 0
        %3256 = vmatprep.subr.bf16.mxu0 0
        %3257 = vmatpush1.bf16.msra.mxu0 0
        %3258 = vmatprep.subr.bf16.mxu0 0
        %3259 = vmatpush1.bf16.msra.mxu0 0
        %3260 = vmatprep.subr.bf16.mxu0 0
        %3261 = vmatpush1.bf16.msra.mxu0 0
        %3262 = vmatprep.subr.bf16.mxu0 0
        %3263 = vmatpush1.bf16.msra.mxu0 %v3232
        %3264 = vmatprep.subr.bf16.mxu0 0
        %3265 = vmatpush1.bf16.msra.mxu0 %v3216
        %3266 = vmatprep.subr.bf16.mxu0 0
        %3267 = vmatpush2.bf16.msra.mxu0 0
        %3268 = vmatprep.subr.bf16.mxu0 0
        %3269 = vmatpush2.bf16.msra.mxu0 0
        %3270 = vmatprep.subr.bf16.mxu0 0
        %3271 = vmatpush2.bf16.msra.mxu0 0
        %3272 = vmatprep.subr.bf16.mxu0 0
        %3273 = vmatpush2.bf16.msra.mxu0 0
        %3274 = vmatprep.subr.bf16.mxu0 0
        %3275 = vmatpush2.bf16.msra.mxu0 0
        %3276 = vmatprep.subr.bf16.mxu0 0
        %3277 = vmatpush2.bf16.msra.mxu0 0
        %3278 = vmatprep.subr.bf16.mxu0 0
        %3279 = vmatpush2.bf16.msra.mxu0 0
        %3280 = vmatprep.subr.bf16.mxu0 0
        %3281 = vmatpush2.bf16.msra.mxu0 0
        %3282 = vmatprep.mubr.bf16.mxu0 0
        %3283 = vmatmul.mubr.bf16.gmra.mxu0 %v3248
        %v3284 = vpop.f32.mrf.mxu0
        %v3285 = vadd.f32 0.0, %v3284
        %v3286 = vpop.f32.mrf.mxu0
        %v3287 = vpop.f32.mrf.mxu0
        %v3288 = vadd.f32 0.0, %v3287
        %v3289 = vpop.f32.mrf.mxu0
        %3290 = vdwg.mxu0
        %v3292 = vsel %vm3246, %v1567, 0
        %3294 = vmatprep.subr.bf16.mxu0 0
        %3295 = vmatpush1.bf16.msra.mxu0 0
        %3296 = vmatprep.subr.bf16.mxu0 0
        %3297 = vmatpush1.bf16.msra.mxu0 0
        %3298 = vmatprep.subr.bf16.mxu0 0
        %3299 = vmatpush1.bf16.msra.mxu0 0
        %3300 = vmatprep.subr.bf16.mxu0 0
        %3301 = vmatpush1.bf16.msra.mxu0 0
        %3302 = vmatprep.subr.bf16.mxu0 0
        %3303 = vmatpush1.bf16.msra.mxu0 0
        %3304 = vmatprep.subr.bf16.mxu0 0
        %3305 = vmatpush1.bf16.msra.mxu0 0
        %3306 = vmatprep.subr.bf16.mxu0 0
        %3307 = vmatpush1.bf16.msra.mxu0 %v3236
        %3308 = vmatprep.subr.bf16.mxu0 0
        %3309 = vmatpush1.bf16.msra.mxu0 %v3220
        %3310 = vmatprep.subr.bf16.mxu0 0
        %3311 = vmatpush2.bf16.msra.mxu0 0
        %3312 = vmatprep.subr.bf16.mxu0 0
        %3313 = vmatpush2.bf16.msra.mxu0 0
        %3314 = vmatprep.subr.bf16.mxu0 0
        %3315 = vmatpush2.bf16.msra.mxu0 0
        %3316 = vmatprep.subr.bf16.mxu0 0
        %3317 = vmatpush2.bf16.msra.mxu0 0
        %3318 = vmatprep.subr.bf16.mxu0 0
        %3319 = vmatpush2.bf16.msra.mxu0 0
        %3320 = vmatprep.subr.bf16.mxu0 0
        %3321 = vmatpush2.bf16.msra.mxu0 0
        %3322 = vmatprep.subr.bf16.mxu0 0
        %3323 = vmatpush2.bf16.msra.mxu0 0
        %3324 = vmatprep.subr.bf16.mxu0 0
        %3325 = vmatpush2.bf16.msra.mxu0 0
        %3326 = vmatprep.mubr.bf16.mxu0 0
        %3327 = vmatmul.mubr.bf16.gmra.mxu0 %v3292
        %v3328 = vpop.f32.mrf.mxu0
        %v3329 = vadd.f32 0.0, %v3328
        %v3330 = vpop.f32.mrf.mxu0
        %v3331 = vpop.f32.mrf.mxu0
        %v3332 = vadd.f32 0.0, %v3331
        %v3333 = vpop.f32.mrf.mxu0
        %3334 = vdwg.mxu0
        %v3336 = vsel %vm3246, %v1570, 0
        %3338 = vmatprep.subr.bf16.mxu0 0
        %3339 = vmatpush1.bf16.msra.mxu0 0
        %3340 = vmatprep.subr.bf16.mxu0 0
        %3341 = vmatpush1.bf16.msra.mxu0 0
        %3342 = vmatprep.subr.bf16.mxu0 0
        %3343 = vmatpush1.bf16.msra.mxu0 0
        %3344 = vmatprep.subr.bf16.mxu0 0
        %3345 = vmatpush1.bf16.msra.mxu0 0
        %3346 = vmatprep.subr.bf16.mxu0 0
        %3347 = vmatpush1.bf16.msra.mxu0 0
        %3348 = vmatprep.subr.bf16.mxu0 0
        %3349 = vmatpush1.bf16.msra.mxu0 0
        %3350 = vmatprep.subr.bf16.mxu0 0
        %3351 = vmatpush1.bf16.msra.mxu0 %v3240
        %3352 = vmatprep.subr.bf16.mxu0 0
        %3353 = vmatpush1.bf16.msra.mxu0 %v3224
        %3354 = vmatprep.subr.bf16.mxu0 0
        %3355 = vmatpush2.bf16.msra.mxu0 0
        %3356 = vmatprep.subr.bf16.mxu0 0
        %3357 = vmatpush2.bf16.msra.mxu0 0
        %3358 = vmatprep.subr.bf16.mxu0 0
        %3359 = vmatpush2.bf16.msra.mxu0 0
        %3360 = vmatprep.subr.bf16.mxu0 0
        %3361 = vmatpush2.bf16.msra.mxu0 0
        %3362 = vmatprep.subr.bf16.mxu0 0
        %3363 = vmatpush2.bf16.msra.mxu0 0
        %3364 = vmatprep.subr.bf16.mxu0 0
        %3365 = vmatpush2.bf16.msra.mxu0 0
        %3366 = vmatprep.subr.bf16.mxu0 0
        %3367 = vmatpush2.bf16.msra.mxu0 0
        %3368 = vmatprep.subr.bf16.mxu0 0
        %3369 = vmatpush2.bf16.msra.mxu0 0
        %3370 = vmatprep.mubr.bf16.mxu0 0
        %3371 = vmatmul.mubr.bf16.gmra.mxu0 %v3336
        %v3372 = vpop.f32.mrf.mxu0
        %v3373 = vadd.f32 0.0, %v3372
        %v3374 = vpop.f32.mrf.mxu0
        %v3375 = vpop.f32.mrf.mxu0
        %v3376 = vadd.f32 0.0, %v3375
        %v3377 = vpop.f32.mrf.mxu0
        %3378 = vdwg.mxu0
        %v3380 = vsel %vm3246, %v1573, 0
        %3382 = vmatprep.subr.bf16.mxu0 0
        %3383 = vmatpush1.bf16.msra.mxu0 0
        %3384 = vmatprep.subr.bf16.mxu0 0
        %3385 = vmatpush1.bf16.msra.mxu0 0
        %3386 = vmatprep.subr.bf16.mxu0 0
        %3387 = vmatpush1.bf16.msra.mxu0 0
        %3388 = vmatprep.subr.bf16.mxu0 0
        %3389 = vmatpush1.bf16.msra.mxu0 0
        %3390 = vmatprep.subr.bf16.mxu0 0
        %3391 = vmatpush1.bf16.msra.mxu0 0
        %3392 = vmatprep.subr.bf16.mxu0 0
        %3393 = vmatpush1.bf16.msra.mxu0 0
        %3394 = vmatprep.subr.bf16.mxu0 0
        %3395 = vmatpush1.bf16.msra.mxu0 %v3244
        %3396 = vmatprep.subr.bf16.mxu0 0
        %3397 = vmatpush1.bf16.msra.mxu0 %v3228
        %3398 = vmatprep.subr.bf16.mxu0 0
        %3399 = vmatpush2.bf16.msra.mxu0 0
        %3400 = vmatprep.subr.bf16.mxu0 0
        %3401 = vmatpush2.bf16.msra.mxu0 0
        %3402 = vmatprep.subr.bf16.mxu0 0
        %3403 = vmatpush2.bf16.msra.mxu0 0
        %3404 = vmatprep.subr.bf16.mxu0 0
        %3405 = vmatpush2.bf16.msra.mxu0 0
        %3406 = vmatprep.subr.bf16.mxu0 0
        %3407 = vmatpush2.bf16.msra.mxu0 0
        %3408 = vmatprep.subr.bf16.mxu0 0
        %3409 = vmatpush2.bf16.msra.mxu0 0
        %3410 = vmatprep.subr.bf16.mxu0 0
        %3411 = vmatpush2.bf16.msra.mxu0 0
        %3412 = vmatprep.subr.bf16.mxu0 0
        %3413 = vmatpush2.bf16.msra.mxu0 0
        %3414 = vmatprep.mubr.bf16.mxu0 0
        %3415 = vmatmul.mubr.bf16.gmra.mxu0 %v3380
        %v3416 = vpop.f32.mrf.mxu0
        %v3417 = vadd.f32 0.0, %v3416
        %v3418 = vpop.f32.mrf.mxu0
        %v3419 = vpop.f32.mrf.mxu0
        %v3420 = vadd.f32 0.0, %v3419
        %v3421 = vpop.f32.mrf.mxu0
        %3422 = vdwg.mxu0
        %vm3423 = vcmask 130048
        %v3424 = vsel %vm3423, %v3285, -inf
        %3425 = vmax.xlane.f32.xlu0 %v3424
        %v3426 = vpop.xlane.xlu0 %3425
        %v3427 = vsel %vm3423, %v3288, -inf
        %3428 = vmax.xlane.f32.xlu0 %v3427
        %v3429 = vpop.xlane.xlu0 %3428
        %v3430 = vsel %vm3423, %v3329, -inf
        %3431 = vmax.xlane.f32.xlu0 %v3430
        %v3432 = vpop.xlane.xlu0 %3431
        %v3433 = vsel %vm3423, %v3332, -inf
        %3434 = vmax.xlane.f32.xlu0 %v3433
        %v3435 = vpop.xlane.xlu0 %3434
        %v3436 = vsel %vm3423, %v3373, -inf
        %3437 = vmax.xlane.f32.xlu0 %v3436
        %v3438 = vpop.xlane.xlu0 %3437
        %v3439 = vsel %vm3423, %v3376, -inf
        %3440 = vmax.xlane.f32.xlu0 %v3439
        %v3441 = vpop.xlane.xlu0 %3440
        %v3442 = vsel %vm3423, %v3417, -inf
        %3443 = vmax.xlane.f32.xlu0 %v3442
        %v3444 = vpop.xlane.xlu0 %3443
        %v3445 = vsel %vm3423, %v3420, -inf
        %3446 = vmax.xlane.f32.xlu0 %v3445
        %v3447 = vpop.xlane.xlu0 %3446
        %v3448 = vsub.f32 %v3285, %v3426
        %v3449 = vsub.f32 %v3288, %v3429
        %v3450 = vsub.f32 %v3329, %v3432
        %v3451 = vsub.f32 %v3332, %v3435
        %v3452 = vsub.f32 %v3373, %v3438
        %v3453 = vsub.f32 %v3376, %v3441
        %v3454 = vsub.f32 %v3417, %v3444
        %v3455 = vsub.f32 %v3420, %v3447
        %v3456 = vmul.f32 %v3448, 1.442695
        %v3457 = vpow.pop %v3456
        %v3458 = vmul.f32 %v3449, 1.442695
        %v3459 = vpow.pop %v3458
        %v3460 = vmul.f32 %v3450, 1.442695
        %v3461 = vpow.pop %v3460
        %v3462 = vmul.f32 %v3451, 1.442695
        %v3463 = vpow.pop %v3462
        %v3464 = vmul.f32 %v3452, 1.442695
        %v3465 = vpow.pop %v3464
        %v3466 = vmul.f32 %v3453, 1.442695
        %v3467 = vpow.pop %v3466
        %v3468 = vmul.f32 %v3454, 1.442695
        %v3469 = vpow.pop %v3468
        %v3470 = vmul.f32 %v3455, 1.442695
        %v3471 = vpow.pop %v3470
        %v3472 = vsel %vm3423, %v3457, 0.0
        %3473 = vadd.xlane.f32.xlu0 %v3472
        %v3474 = vpop.xlane.xlu0 %3473
        %v3475 = vsel %vm3423, %v3459, 0.0
        %3476 = vadd.xlane.f32.xlu0 %v3475
        %v3477 = vpop.xlane.xlu0 %3476
        %v3478 = vsel %vm3423, %v3461, 0.0
        %3479 = vadd.xlane.f32.xlu0 %v3478
        %v3480 = vpop.xlane.xlu0 %3479
        %v3481 = vsel %vm3423, %v3463, 0.0
        %3482 = vadd.xlane.f32.xlu0 %v3481
        %v3483 = vpop.xlane.xlu0 %3482
        %v3484 = vsel %vm3423, %v3465, 0.0
        %3485 = vadd.xlane.f32.xlu0 %v3484
        %v3486 = vpop.xlane.xlu0 %3485
        %v3487 = vsel %vm3423, %v3467, 0.0
        %3488 = vadd.xlane.f32.xlu0 %v3487
        %v3489 = vpop.xlane.xlu0 %3488
        %v3490 = vsel %vm3423, %v3469, 0.0
        %3491 = vadd.xlane.f32.xlu0 %v3490
        %v3492 = vpop.xlane.xlu0 %3491
        %v3493 = vsel %vm3423, %v3471, 0.0
        %3494 = vadd.xlane.f32.xlu0 %v3493
        %v3495 = vpop.xlane.xlu0 %3494
        %v3496 = vpack.c.bf16 %v3459, %v3457
        %v3497 = vpack.c.bf16 %v3463, %v3461
        %v3498 = vpack.c.bf16 %v3467, %v3465
        %v3499 = vpack.c.bf16 %v3471, %v3469
        %v3500 = vcombine.low %v1446, %v1450
        %v3502 = vunpack.c.l.s4 1983009808
        %v3503 = vunpack.c.0.s8 %v3502
        %v3504 = vlaneseq
        %v3505 = vshrl.u32 %v3504, 7
        %v3506 = vsub.s32 %v3503, %v3505
        %v3507 = vrot.slane %v3500, %v3506
        %v3508 = vcombine.low %v1448, %v1452
        %v3510 = vunpack.c.l.s4 1983009808
        %v3511 = vunpack.c.0.s8 %v3510
        %v3512 = vlaneseq
        %v3513 = vshrl.u32 %v3512, 7
        %v3514 = vsub.s32 %v3511, %v3513
        %v3515 = vrot.slane %v3508, %v3514
        %v3516 = vcombine.low %v1454, %v1458
        %v3518 = vunpack.c.l.s4 1983009808
        %v3519 = vunpack.c.0.s8 %v3518
        %v3520 = vlaneseq
        %v3521 = vshrl.u32 %v3520, 7
        %v3522 = vsub.s32 %v3519, %v3521
        %v3523 = vrot.slane %v3516, %v3522
        %v3524 = vcombine.low %v1456, %v1460
        %v3526 = vunpack.c.l.s4 1983009808
        %v3527 = vunpack.c.0.s8 %v3526
        %v3528 = vlaneseq
        %v3529 = vshrl.u32 %v3528, 7
        %v3530 = vsub.s32 %v3527, %v3529
        %v3531 = vrot.slane %v3524, %v3530
        %v3532 = vcombine.low %v3507, %v3515
        %v3534 = vunpack.c.l.s4 1934713408
        %v3535 = vunpack.c.0.s8 %v3534
        %v3536 = vlaneseq
        %v3537 = vshrl.u32 %v3536, 7
        %v3538 = vsub.s32 %v3535, %v3537
        %v3539 = vrot.slane %v3532, %v3538
        %v3540 = vcombine.low %v3523, %v3531
        %v3542 = vunpack.c.l.s4 1934713408
        %v3543 = vunpack.c.0.s8 %v3542
        %v3544 = vlaneseq
        %v3545 = vshrl.u32 %v3544, 7
        %v3546 = vsub.s32 %v3543, %v3545
        %v3547 = vrot.slane %v3540, %v3546
        %v3548 = vcombine.low %v3539, %v3547
        %v3549 = vcombine.high %v3539, %v3547
        %v3550 = vcombine.low %v1447, %v1451
        %v3552 = vunpack.c.l.s4 1983009808
        %v3553 = vunpack.c.0.s8 %v3552
        %v3554 = vlaneseq
        %v3555 = vshrl.u32 %v3554, 7
        %v3556 = vsub.s32 %v3553, %v3555
        %v3557 = vrot.slane %v3550, %v3556
        %v3558 = vcombine.low %v1449, %v1453
        %v3560 = vunpack.c.l.s4 1983009808
        %v3561 = vunpack.c.0.s8 %v3560
        %v3562 = vlaneseq
        %v3563 = vshrl.u32 %v3562, 7
        %v3564 = vsub.s32 %v3561, %v3563
        %v3565 = vrot.slane %v3558, %v3564
        %v3566 = vcombine.low %v1455, %v1459
        %v3568 = vunpack.c.l.s4 1983009808
        %v3569 = vunpack.c.0.s8 %v3568
        %v3570 = vlaneseq
        %v3571 = vshrl.u32 %v3570, 7
        %v3572 = vsub.s32 %v3569, %v3571
        %v3573 = vrot.slane %v3566, %v3572
        %v3574 = vcombine.low %v1457, %v1461
        %v3576 = vunpack.c.l.s4 1983009808
        %v3577 = vunpack.c.0.s8 %v3576
        %v3578 = vlaneseq
        %v3579 = vshrl.u32 %v3578, 7
        %v3580 = vsub.s32 %v3577, %v3579
        %v3581 = vrot.slane %v3574, %v3580
        %v3582 = vcombine.low %v3557, %v3565
        %v3584 = vunpack.c.l.s4 1934713408
        %v3585 = vunpack.c.0.s8 %v3584
        %v3586 = vlaneseq
        %v3587 = vshrl.u32 %v3586, 7
        %v3588 = vsub.s32 %v3585, %v3587
        %v3589 = vrot.slane %v3582, %v3588
        %v3590 = vcombine.low %v3573, %v3581
        %v3592 = vunpack.c.l.s4 1934713408
        %v3593 = vunpack.c.0.s8 %v3592
        %v3594 = vlaneseq
        %v3595 = vshrl.u32 %v3594, 7
        %v3596 = vsub.s32 %v3593, %v3595
        %v3597 = vrot.slane %v3590, %v3596
        %v3598 = vcombine.low %v3589, %v3597
        %v3599 = vcombine.high %v3589, %v3597
        %v3602 = vpack.i.b16 %v3598, %v3548
        %v3604 = vshrl.u32 %v3548, 16
        %v3605 = vshrl.u32 %v3598, 16
        %v3606 = vpack.i.b16 %v3605, %v3604
        %v3610 = vpack.i.b16 %v3599, %v3549
        %v3612 = vshrl.u32 %v3549, 16
        %v3613 = vshrl.u32 %v3599, 16
        %v3614 = vpack.i.b16 %v3613, %v3612
        %v3617 = vsel %vm3423, %v3496, 0
        %3619 = vmatprep.subr.bf16.mxu0 0
        %3620 = vmatpush1.bf16.msra.mxu0 0
        %3621 = vmatprep.subr.bf16.mxu0 0
        %3622 = vmatpush1.bf16.msra.mxu0 0
        %3623 = vmatprep.subr.bf16.mxu0 0
        %3624 = vmatpush1.bf16.msra.mxu0 0
        %3625 = vmatprep.subr.bf16.mxu0 0
        %3626 = vmatpush1.bf16.msra.mxu0 0
        %3627 = vmatprep.subr.bf16.mxu0 0
        %3628 = vmatpush1.bf16.msra.mxu0 0
        %3629 = vmatprep.subr.bf16.mxu0 0
        %3630 = vmatpush1.bf16.msra.mxu0 0
        %3631 = vmatprep.subr.bf16.mxu0 0
        %3632 = vmatpush1.bf16.msra.mxu0 0
        %3633 = vmatprep.subr.bf16.mxu0 0
        %3634 = vmatpush1.bf16.msra.mxu0 %v3602
        %3635 = vmatprep.subr.bf16.mxu0 0
        %3636 = vmatpush2.bf16.msra.mxu0 0
        %3637 = vmatprep.subr.bf16.mxu0 0
        %3638 = vmatpush2.bf16.msra.mxu0 0
        %3639 = vmatprep.subr.bf16.mxu0 0
        %3640 = vmatpush2.bf16.msra.mxu0 0
        %3641 = vmatprep.subr.bf16.mxu0 0
        %3642 = vmatpush2.bf16.msra.mxu0 0
        %3643 = vmatprep.subr.bf16.mxu0 0
        %3644 = vmatpush2.bf16.msra.mxu0 0
        %3645 = vmatprep.subr.bf16.mxu0 0
        %3646 = vmatpush2.bf16.msra.mxu0 0
        %3647 = vmatprep.subr.bf16.mxu0 0
        %3648 = vmatpush2.bf16.msra.mxu0 0
        %3649 = vmatprep.subr.bf16.mxu0 0
        %3650 = vmatpush2.bf16.msra.mxu0 0
        %3651 = vmatprep.mubr.bf16.mxu0 0
        %3652 = vmatmul.mubr.bf16.gmra.mxu0 %v3617
        %v3653 = vpop.f32.mrf.mxu0
        %v3654 = vadd.f32 0.0, %v3653
        %v3655 = vpop.f32.mrf.mxu0
        %v3656 = vpop.f32.mrf.mxu0
        %v3657 = vadd.f32 0.0, %v3656
        %v3658 = vpop.f32.mrf.mxu0
        %3659 = vdwg.mxu0
        %v3661 = vsel %vm3423, %v3497, 0
        %3663 = vmatprep.subr.bf16.mxu0 0
        %3664 = vmatpush1.bf16.msra.mxu0 0
        %3665 = vmatprep.subr.bf16.mxu0 0
        %3666 = vmatpush1.bf16.msra.mxu0 0
        %3667 = vmatprep.subr.bf16.mxu0 0
        %3668 = vmatpush1.bf16.msra.mxu0 0
        %3669 = vmatprep.subr.bf16.mxu0 0
        %3670 = vmatpush1.bf16.msra.mxu0 0
        %3671 = vmatprep.subr.bf16.mxu0 0
        %3672 = vmatpush1.bf16.msra.mxu0 0
        %3673 = vmatprep.subr.bf16.mxu0 0
        %3674 = vmatpush1.bf16.msra.mxu0 0
        %3675 = vmatprep.subr.bf16.mxu0 0
        %3676 = vmatpush1.bf16.msra.mxu0 0
        %3677 = vmatprep.subr.bf16.mxu0 0
        %3678 = vmatpush1.bf16.msra.mxu0 %v3606
        %3679 = vmatprep.subr.bf16.mxu0 0
        %3680 = vmatpush2.bf16.msra.mxu0 0
        %3681 = vmatprep.subr.bf16.mxu0 0
        %3682 = vmatpush2.bf16.msra.mxu0 0
        %3683 = vmatprep.subr.bf16.mxu0 0
        %3684 = vmatpush2.bf16.msra.mxu0 0
        %3685 = vmatprep.subr.bf16.mxu0 0
        %3686 = vmatpush2.bf16.msra.mxu0 0
        %3687 = vmatprep.subr.bf16.mxu0 0
        %3688 = vmatpush2.bf16.msra.mxu0 0
        %3689 = vmatprep.subr.bf16.mxu0 0
        %3690 = vmatpush2.bf16.msra.mxu0 0
        %3691 = vmatprep.subr.bf16.mxu0 0
        %3692 = vmatpush2.bf16.msra.mxu0 0
        %3693 = vmatprep.subr.bf16.mxu0 0
        %3694 = vmatpush2.bf16.msra.mxu0 0
        %3695 = vmatprep.mubr.bf16.mxu0 0
        %3696 = vmatmul.mubr.bf16.gmra.mxu0 %v3661
        %v3697 = vpop.f32.mrf.mxu0
        %v3698 = vadd.f32 0.0, %v3697
        %v3699 = vpop.f32.mrf.mxu0
        %v3700 = vpop.f32.mrf.mxu0
        %v3701 = vadd.f32 0.0, %v3700
        %v3702 = vpop.f32.mrf.mxu0
        %3703 = vdwg.mxu0
        %v3705 = vsel %vm3423, %v3498, 0
        %3707 = vmatprep.subr.bf16.mxu0 0
        %3708 = vmatpush1.bf16.msra.mxu0 0
        %3709 = vmatprep.subr.bf16.mxu0 0
        %3710 = vmatpush1.bf16.msra.mxu0 0
        %3711 = vmatprep.subr.bf16.mxu0 0
        %3712 = vmatpush1.bf16.msra.mxu0 0
        %3713 = vmatprep.subr.bf16.mxu0 0
        %3714 = vmatpush1.bf16.msra.mxu0 0
        %3715 = vmatprep.subr.bf16.mxu0 0
        %3716 = vmatpush1.bf16.msra.mxu0 0
        %3717 = vmatprep.subr.bf16.mxu0 0
        %3718 = vmatpush1.bf16.msra.mxu0 0
        %3719 = vmatprep.subr.bf16.mxu0 0
        %3720 = vmatpush1.bf16.msra.mxu0 0
        %3721 = vmatprep.subr.bf16.mxu0 0
        %3722 = vmatpush1.bf16.msra.mxu0 %v3610
        %3723 = vmatprep.subr.bf16.mxu0 0
        %3724 = vmatpush2.bf16.msra.mxu0 0
        %3725 = vmatprep.subr.bf16.mxu0 0
        %3726 = vmatpush2.bf16.msra.mxu0 0
        %3727 = vmatprep.subr.bf16.mxu0 0
        %3728 = vmatpush2.bf16.msra.mxu0 0
        %3729 = vmatprep.subr.bf16.mxu0 0
        %3730 = vmatpush2.bf16.msra.mxu0 0
        %3731 = vmatprep.subr.bf16.mxu0 0
        %3732 = vmatpush2.bf16.msra.mxu0 0
        %3733 = vmatprep.subr.bf16.mxu0 0
        %3734 = vmatpush2.bf16.msra.mxu0 0
        %3735 = vmatprep.subr.bf16.mxu0 0
        %3736 = vmatpush2.bf16.msra.mxu0 0
        %3737 = vmatprep.subr.bf16.mxu0 0
        %3738 = vmatpush2.bf16.msra.mxu0 0
        %3739 = vmatprep.mubr.bf16.mxu0 0
        %3740 = vmatmul.mubr.bf16.gmra.mxu0 %v3705
        %v3741 = vpop.f32.mrf.mxu0
        %v3742 = vadd.f32 0.0, %v3741
        %v3743 = vpop.f32.mrf.mxu0
        %v3744 = vpop.f32.mrf.mxu0
        %v3745 = vadd.f32 0.0, %v3744
        %v3746 = vpop.f32.mrf.mxu0
        %3747 = vdwg.mxu0
        %v3749 = vsel %vm3423, %v3499, 0
        %3751 = vmatprep.subr.bf16.mxu0 0
        %3752 = vmatpush1.bf16.msra.mxu0 0
        %3753 = vmatprep.subr.bf16.mxu0 0
        %3754 = vmatpush1.bf16.msra.mxu0 0
        %3755 = vmatprep.subr.bf16.mxu0 0
        %3756 = vmatpush1.bf16.msra.mxu0 0
        %3757 = vmatprep.subr.bf16.mxu0 0
        %3758 = vmatpush1.bf16.msra.mxu0 0
        %3759 = vmatprep.subr.bf16.mxu0 0
        %3760 = vmatpush1.bf16.msra.mxu0 0
        %3761 = vmatprep.subr.bf16.mxu0 0
        %3762 = vmatpush1.bf16.msra.mxu0 0
        %3763 = vmatprep.subr.bf16.mxu0 0
        %3764 = vmatpush1.bf16.msra.mxu0 0
        %3765 = vmatprep.subr.bf16.mxu0 0
        %3766 = vmatpush1.bf16.msra.mxu0 %v3614
        %3767 = vmatprep.subr.bf16.mxu0 0
        %3768 = vmatpush2.bf16.msra.mxu0 0
        %3769 = vmatprep.subr.bf16.mxu0 0
        %3770 = vmatpush2.bf16.msra.mxu0 0
        %3771 = vmatprep.subr.bf16.mxu0 0
        %3772 = vmatpush2.bf16.msra.mxu0 0
        %3773 = vmatprep.subr.bf16.mxu0 0
        %3774 = vmatpush2.bf16.msra.mxu0 0
        %3775 = vmatprep.subr.bf16.mxu0 0
        %3776 = vmatpush2.bf16.msra.mxu0 0
        %3777 = vmatprep.subr.bf16.mxu0 0
        %3778 = vmatpush2.bf16.msra.mxu0 0
        %3779 = vmatprep.subr.bf16.mxu0 0
        %3780 = vmatpush2.bf16.msra.mxu0 0
        %3781 = vmatprep.subr.bf16.mxu0 0
        %3782 = vmatpush2.bf16.msra.mxu0 0
        %3783 = vmatprep.mubr.bf16.mxu0 0
        %3784 = vmatmul.mubr.bf16.gmra.mxu0 %v3749
        %v3785 = vpop.f32.mrf.mxu0
        %v3786 = vadd.f32 0.0, %v3785
        %v3787 = vpop.f32.mrf.mxu0
        %v3788 = vpop.f32.mrf.mxu0
        %v3789 = vadd.f32 0.0, %v3788
        %v3790 = vpop.f32.mrf.mxu0
        %3791 = vdwg.mxu0
        %v3792 = vrcp.pop %v3474
        %v3793 = vrcp.pop %v3477
        %v3794 = vrcp.pop %v3480
        %v3795 = vrcp.pop %v3483
        %v3796 = vrcp.pop %v3486
        %v3797 = vrcp.pop %v3489
        %v3798 = vrcp.pop %v3492
        %v3799 = vrcp.pop %v3495
        %v3800 = vmul.f32 %v3654, %v3792
        %v3801 = vmul.f32 %v3657, %v3793
        %v3802 = vmul.f32 %v3698, %v3794
        %v3803 = vmul.f32 %v3701, %v3795
        %v3804 = vmul.f32 %v3742, %v3796
        %v3805 = vmul.f32 %v3745, %v3797
        %v3806 = vmul.f32 %v3786, %v3798
        %v3807 = vmul.f32 %v3789, %v3799
        %v3808 = vcombine.low %v3800, %v3804
        %v3809 = vcombine.high %v3800, %v3804
        %v3811 = vunpack.c.l.s4 1983009808
        %v3812 = vunpack.c.0.s8 %v3811
        %v3813 = vlaneseq
        %v3814 = vshrl.u32 %v3813, 7
        %v3815 = vsub.s32 %v3812, %v3814
        %v3816 = vrot.slane %v3808, %v3815
        %v3818 = vunpack.c.l.s4 1983009808
        %v3819 = vunpack.c.0.s8 %v3818
        %v3820 = vlaneseq
        %v3821 = vshrl.u32 %v3820, 7
        %v3822 = vsub.s32 %v3819, %v3821
        %v3823 = vrot.slane %v3809, %v3822
        %v3824 = vcombine.low %v3802, %v3806
        %v3825 = vcombine.high %v3802, %v3806
        %v3827 = vunpack.c.l.s4 1983009808
        %v3828 = vunpack.c.0.s8 %v3827
        %v3829 = vlaneseq
        %v3830 = vshrl.u32 %v3829, 7
        %v3831 = vsub.s32 %v3828, %v3830
        %v3832 = vrot.slane %v3824, %v3831
        %v3834 = vunpack.c.l.s4 1983009808
        %v3835 = vunpack.c.0.s8 %v3834
        %v3836 = vlaneseq
        %v3837 = vshrl.u32 %v3836, 7
        %v3838 = vsub.s32 %v3835, %v3837
        %v3839 = vrot.slane %v3825, %v3838
        %v3840 = vcombine.low %v3816, %v3832
        %v3841 = vcombine.high %v3816, %v3832
        %v3843 = vunpack.c.l.s4 1934713408
        %v3844 = vunpack.c.0.s8 %v3843
        %v3845 = vlaneseq
        %v3846 = vshrl.u32 %v3845, 7
        %v3847 = vsub.s32 %v3844, %v3846
        %v3848 = vrot.slane %v3840, %v3847
        %v3850 = vunpack.c.l.s4 1934713408
        %v3851 = vunpack.c.0.s8 %v3850
        %v3852 = vlaneseq
        %v3853 = vshrl.u32 %v3852, 7
        %v3854 = vsub.s32 %v3851, %v3853
        %v3855 = vrot.slane %v3841, %v3854
        %v3856 = vcombine.low %v3823, %v3839
        %v3857 = vcombine.high %v3823, %v3839
        %v3859 = vunpack.c.l.s4 1934713408
        %v3860 = vunpack.c.0.s8 %v3859
        %v3861 = vlaneseq
        %v3862 = vshrl.u32 %v3861, 7
        %v3863 = vsub.s32 %v3860, %v3862
        %v3864 = vrot.slane %v3856, %v3863
        %v3866 = vunpack.c.l.s4 1934713408
        %v3867 = vunpack.c.0.s8 %v3866
        %v3868 = vlaneseq
        %v3869 = vshrl.u32 %v3868, 7
        %v3870 = vsub.s32 %v3867, %v3869
        %v3871 = vrot.slane %v3857, %v3870
        %v3872 = vcombine.high %v3848, 0.0
        %v3873 = vcombine.high %v3855, 0.0
        %v3874 = vcombine.high %v3864, 0.0
        %v3875 = vcombine.high %v3871, 0.0
        %v3876 = vcombine.low %v3801, %v3805
        %v3877 = vcombine.high %v3801, %v3805
        %v3879 = vunpack.c.l.s4 1983009808
        %v3880 = vunpack.c.0.s8 %v3879
        %v3881 = vlaneseq
        %v3882 = vshrl.u32 %v3881, 7
        %v3883 = vsub.s32 %v3880, %v3882
        %v3884 = vrot.slane %v3876, %v3883
        %v3886 = vunpack.c.l.s4 1983009808
        %v3887 = vunpack.c.0.s8 %v3886
        %v3888 = vlaneseq
        %v3889 = vshrl.u32 %v3888, 7
        %v3890 = vsub.s32 %v3887, %v3889
        %v3891 = vrot.slane %v3877, %v3890
        %v3892 = vcombine.low %v3803, %v3807
        %v3893 = vcombine.high %v3803, %v3807
        %v3895 = vunpack.c.l.s4 1983009808
        %v3896 = vunpack.c.0.s8 %v3895
        %v3897 = vlaneseq
        %v3898 = vshrl.u32 %v3897, 7
        %v3899 = vsub.s32 %v3896, %v3898
        %v3900 = vrot.slane %v3892, %v3899
        %v3902 = vunpack.c.l.s4 1983009808
        %v3903 = vunpack.c.0.s8 %v3902
        %v3904 = vlaneseq
        %v3905 = vshrl.u32 %v3904, 7
        %v3906 = vsub.s32 %v3903, %v3905
        %v3907 = vrot.slane %v3893, %v3906
        %v3908 = vcombine.low %v3884, %v3900
        %v3909 = vcombine.high %v3884, %v3900
        %v3911 = vunpack.c.l.s4 1934713408
        %v3912 = vunpack.c.0.s8 %v3911
        %v3913 = vlaneseq
        %v3914 = vshrl.u32 %v3913, 7
        %v3915 = vsub.s32 %v3912, %v3914
        %v3916 = vrot.slane %v3908, %v3915
        %v3918 = vunpack.c.l.s4 1934713408
        %v3919 = vunpack.c.0.s8 %v3918
        %v3920 = vlaneseq
        %v3921 = vshrl.u32 %v3920, 7
        %v3922 = vsub.s32 %v3919, %v3921
        %v3923 = vrot.slane %v3909, %v3922
        %v3924 = vcombine.low %v3891, %v3907
        %v3925 = vcombine.high %v3891, %v3907
        %v3927 = vunpack.c.l.s4 1934713408
        %v3928 = vunpack.c.0.s8 %v3927
        %v3929 = vlaneseq
        %v3930 = vshrl.u32 %v3929, 7
        %v3931 = vsub.s32 %v3928, %v3930
        %v3932 = vrot.slane %v3924, %v3931
        %v3934 = vunpack.c.l.s4 1934713408
        %v3935 = vunpack.c.0.s8 %v3934
        %v3936 = vlaneseq
        %v3937 = vshrl.u32 %v3936, 7
        %v3938 = vsub.s32 %v3935, %v3937
        %v3939 = vrot.slane %v3925, %v3938
        %v3940 = vcombine.high %v3916, 0.0
        %v3941 = vcombine.high %v3923, 0.0
        %v3942 = vcombine.high %v3932, 0.0
        %v3943 = vcombine.high %v3939, 0.0
        %v3944 = vcombine.low %v3848, %v3855
        %v3946 = vunpack.c.l.s4 1983009808
        %v3947 = vunpack.c.0.s8 %v3946
        %v3948 = vlaneseq
        %v3949 = vshrl.u32 %v3948, 7
        %v3950 = vsub.s32 %v3947, %v3949
        %v3951 = vrot.slane %v3944, %v3950
        %v3952 = vcombine.low %v3872, %v3873
        %v3954 = vunpack.c.l.s4 1983009808
        %v3955 = vunpack.c.0.s8 %v3954
        %v3956 = vlaneseq
        %v3957 = vshrl.u32 %v3956, 7
        %v3958 = vsub.s32 %v3955, %v3957
        %v3959 = vrot.slane %v3952, %v3958
        %v3960 = vcombine.low %v3864, %v3871
        %v3962 = vunpack.c.l.s4 1983009808
        %v3963 = vunpack.c.0.s8 %v3962
        %v3964 = vlaneseq
        %v3965 = vshrl.u32 %v3964, 7
        %v3966 = vsub.s32 %v3963, %v3965
        %v3967 = vrot.slane %v3960, %v3966
        %v3968 = vcombine.low %v3874, %v3875
        %v3970 = vunpack.c.l.s4 1983009808
        %v3971 = vunpack.c.0.s8 %v3970
        %v3972 = vlaneseq
        %v3973 = vshrl.u32 %v3972, 7
        %v3974 = vsub.s32 %v3971, %v3973
        %v3975 = vrot.slane %v3968, %v3974
        %v3976 = vcombine.low %v3951, %v3959
        %v3977 = vcombine.high %v3951, %v3959
        %v3979 = vunpack.c.l.s4 1934713408
        %v3980 = vunpack.c.0.s8 %v3979
        %v3981 = vlaneseq
        %v3982 = vshrl.u32 %v3981, 7
        %v3983 = vsub.s32 %v3980, %v3982
        %v3984 = vrot.slane %v3976, %v3983
        %v3986 = vunpack.c.l.s4 1934713408
        %v3987 = vunpack.c.0.s8 %v3986
        %v3988 = vlaneseq
        %v3989 = vshrl.u32 %v3988, 7
        %v3990 = vsub.s32 %v3987, %v3989
        %v3991 = vrot.slane %v3977, %v3990
        %v3992 = vcombine.low %v3967, %v3975
        %v3993 = vcombine.high %v3967, %v3975
        %v3995 = vunpack.c.l.s4 1934713408
        %v3996 = vunpack.c.0.s8 %v3995
        %v3997 = vlaneseq
        %v3998 = vshrl.u32 %v3997, 7
        %v3999 = vsub.s32 %v3996, %v3998
        %v4000 = vrot.slane %v3992, %v3999
        %v4002 = vunpack.c.l.s4 1934713408
        %v4003 = vunpack.c.0.s8 %v4002
        %v4004 = vlaneseq
        %v4005 = vshrl.u32 %v4004, 7
        %v4006 = vsub.s32 %v4003, %v4005
        %v4007 = vrot.slane %v3993, %v4006
        %v4008 = vcombine.low %v3984, %v4000
        %v4009 = vcombine.high %v3984, %v4000
        %v4010 = vcombine.low %v3991, %v4007
        %v4011 = vcombine.high %v3991, %v4007
        %v4012 = vcombine.low %v3916, %v3923
        %v4014 = vunpack.c.l.s4 1983009808
        %v4015 = vunpack.c.0.s8 %v4014
        %v4016 = vlaneseq
        %v4017 = vshrl.u32 %v4016, 7
        %v4018 = vsub.s32 %v4015, %v4017
        %v4019 = vrot.slane %v4012, %v4018
        %v4020 = vcombine.low %v3940, %v3941
        %v4022 = vunpack.c.l.s4 1983009808
        %v4023 = vunpack.c.0.s8 %v4022
        %v4024 = vlaneseq
        %v4025 = vshrl.u32 %v4024, 7
        %v4026 = vsub.s32 %v4023, %v4025
        %v4027 = vrot.slane %v4020, %v4026
        %v4028 = vcombine.low %v3932, %v3939
        %v4030 = vunpack.c.l.s4 1983009808
        %v4031 = vunpack.c.0.s8 %v4030
        %v4032 = vlaneseq
        %v4033 = vshrl.u32 %v4032, 7
        %v4034 = vsub.s32 %v4031, %v4033
        %v4035 = vrot.slane %v4028, %v4034
        %v4036 = vcombine.low %v3942, %v3943
        %v4038 = vunpack.c.l.s4 1983009808
        %v4039 = vunpack.c.0.s8 %v4038
        %v4040 = vlaneseq
        %v4041 = vshrl.u32 %v4040, 7
        %v4042 = vsub.s32 %v4039, %v4041
        %v4043 = vrot.slane %v4036, %v4042
        %v4044 = vcombine.low %v4019, %v4027
        %v4045 = vcombine.high %v4019, %v4027
        %v4047 = vunpack.c.l.s4 1934713408
        %v4048 = vunpack.c.0.s8 %v4047
        %v4049 = vlaneseq
        %v4050 = vshrl.u32 %v4049, 7
        %v4051 = vsub.s32 %v4048, %v4050
        %v4052 = vrot.slane %v4044, %v4051
        %v4054 = vunpack.c.l.s4 1934713408
        %v4055 = vunpack.c.0.s8 %v4054
        %v4056 = vlaneseq
        %v4057 = vshrl.u32 %v4056, 7
        %v4058 = vsub.s32 %v4055, %v4057
        %v4059 = vrot.slane %v4045, %v4058
        %v4060 = vcombine.low %v4035, %v4043
        %v4061 = vcombine.high %v4035, %v4043
        %v4063 = vunpack.c.l.s4 1934713408
        %v4064 = vunpack.c.0.s8 %v4063
        %v4065 = vlaneseq
        %v4066 = vshrl.u32 %v4065, 7
        %v4067 = vsub.s32 %v4064, %v4066
        %v4068 = vrot.slane %v4060, %v4067
        %v4070 = vunpack.c.l.s4 1934713408
        %v4071 = vunpack.c.0.s8 %v4070
        %v4072 = vlaneseq
        %v4073 = vshrl.u32 %v4072, 7
        %v4074 = vsub.s32 %v4071, %v4073
        %v4075 = vrot.slane %v4061, %v4074
        %v4076 = vcombine.low %v4052, %v4068
        %v4077 = vcombine.high %v4052, %v4068
        %v4078 = vcombine.low %v4059, %v4075
        %v4079 = vcombine.high %v4059, %v4075
        %4082 = vrot.lane.b32.xlu0 %v4009, 32
        %v4083 = vpop.permute.xlu0 %4082
        %4084 = vrot.lane.b32.xlu0 %v4077, 32
        %v4085 = vpop.permute.xlu0 %4084
        %4090 = vrot.lane.b32.xlu0 %v4010, 64
        %v4091 = vpop.permute.xlu0 %4090
        %4092 = vrot.lane.b32.xlu0 %v4078, 64
        %v4093 = vpop.permute.xlu0 %4092
        %4098 = vrot.lane.b32.xlu0 %v4011, 96
        %v4099 = vpop.permute.xlu0 %4098
        %4100 = vrot.lane.b32.xlu0 %v4079, 96
        %v4101 = vpop.permute.xlu0 %4100
        %v4104 = vsel %vm3246, %v4008, %v4083
        %v4105 = vsel %vm3246, %v4076, %v4085
        %v4106 = vsel %vm897, %v4104, %v4091
        %v4107 = vsel %vm897, %v4105, %v4093
        %vm4108 = vcmask 785408
        %v4109 = vsel %vm4108, %v4106, %v4099
        %v4110 = vsel %vm4108, %v4107, %v4101
        %v4111 = vpack.c.bf16 %v4110, %v4109
        %v4112 = vld [vmem:[#allocation11] sm:$0xf]
        %v4113 = vld [vmem:[#allocation11 + $0x4] sm:$0xf]
        %v4114 = vld [vmem:[#allocation11 + $0x8] sm:$0xf]
        %v4115 = vld [vmem:[#allocation11 + $0xc] sm:$0xf]
        %v4116 = vld [vmem:[#allocation11 + $0x10] sm:$0xf]
        %v4117 = vld [vmem:[#allocation11 + $0x14] sm:$0xf]
        %v4118 = vld [vmem:[#allocation11 + $0x18] sm:$0xf]
        %v4119 = vld [vmem:[#allocation11 + $0x1c] sm:$0xf]
        %v4120 = vld [vmem:[#allocation11 + $0x20] sm:$0xf]
        %v4121 = vld [vmem:[#allocation11 + $0x24] sm:$0xf]
        %v4122 = vld [vmem:[#allocation11 + $0x28] sm:$0xf]
        %v4123 = vld [vmem:[#allocation11 + $0x2c] sm:$0xf]
        %v4124 = vld [vmem:[#allocation11 + $0x30] sm:$0xf]
        %v4125 = vld [vmem:[#allocation11 + $0x34] sm:$0xf]
        %v4126 = vld [vmem:[#allocation11 + $0x38] sm:$0xf]
        %v4127 = vld [vmem:[#allocation11 + $0x3c] sm:$0xf]
        %v4128 = vld [vmem:[%s9] sm:$0x1]
        %v4130 = vlaneseq
        %v4131 = vshrl.u32 %v4130, 7
        %v4132 = vsub.s32 0, %v4131
        %v4133 = vrot.slane %v4128, %v4132
        %v4151 = vunpack.c.l.b16 %v4112
        %v4152 = vunpack.c.l.b16 %v4113
        %v4153 = vunpack.c.l.b16 %v4114
        %v4154 = vunpack.c.l.b16 %v4115
        %v4155 = vunpack.c.l.b16 %v4116
        %v4156 = vunpack.c.l.b16 %v4117
        %v4157 = vunpack.c.l.b16 %v4118
        %v4158 = vunpack.c.l.b16 %v4119
        %v4159 = vunpack.c.l.b16 %v4120
        %v4160 = vunpack.c.l.b16 %v4121
        %v4161 = vunpack.c.l.b16 %v4122
        %v4162 = vunpack.c.l.b16 %v4123
        %v4163 = vunpack.c.l.b16 %v4124
        %v4164 = vunpack.c.l.b16 %v4125
        %v4165 = vunpack.c.l.b16 %v4126
        %v4166 = vunpack.c.l.b16 %v4127
        %v4167 = vpack.c.b16 %v4152, %v4151
        %v4168 = vpack.c.b16 %v4154, %v4153
        %v4169 = vpack.c.b16 %v4156, %v4155
        %v4170 = vpack.c.b16 %v4158, %v4157
        %v4171 = vpack.c.b16 %v4160, %v4159
        %v4172 = vpack.c.b16 %v4162, %v4161
        %v4173 = vpack.c.b16 %v4164, %v4163
        %v4174 = vpack.c.b16 %v4166, %v4165
        %4183 = vmatprep.subr.bf16.mxu0 0
        %4184 = vmatpush1.bf16.msra.mxu0 %v4174
        %4185 = vmatprep.subr.bf16.mxu0 0
        %4186 = vmatpush1.bf16.msra.mxu0 %v4173
        %4187 = vmatprep.subr.bf16.mxu0 0
        %4188 = vmatpush1.bf16.msra.mxu0 %v4172
        %4189 = vmatprep.subr.bf16.mxu0 0
        %4190 = vmatpush1.bf16.msra.mxu0 %v4171
        %4191 = vmatprep.subr.bf16.mxu0 0
        %4192 = vmatpush1.bf16.msra.mxu0 %v4170
        %4193 = vmatprep.subr.bf16.mxu0 0
        %4194 = vmatpush1.bf16.msra.mxu0 %v4169
        %4195 = vmatprep.subr.bf16.mxu0 0
        %4196 = vmatpush1.bf16.msra.mxu0 %v4168
        %4197 = vmatprep.subr.bf16.mxu0 0
        %4198 = vmatpush1.bf16.msra.mxu0 %v4167
        %4199 = vmatprep.subr.bf16.mxu0 0
        %4200 = vmatpush2.bf16.msra.mxu0 0
        %4201 = vmatprep.subr.bf16.mxu0 0
        %4202 = vmatpush2.bf16.msra.mxu0 0
        %4203 = vmatprep.subr.bf16.mxu0 0
        %4204 = vmatpush2.bf16.msra.mxu0 0
        %4205 = vmatprep.subr.bf16.mxu0 0
        %4206 = vmatpush2.bf16.msra.mxu0 0
        %4207 = vmatprep.subr.bf16.mxu0 0
        %4208 = vmatpush2.bf16.msra.mxu0 0
        %4209 = vmatprep.subr.bf16.mxu0 0
        %4210 = vmatpush2.bf16.msra.mxu0 0
        %4211 = vmatprep.subr.bf16.mxu0 0
        %4212 = vmatpush2.bf16.msra.mxu0 0
        %4213 = vmatprep.subr.bf16.mxu0 0
        %4214 = vmatpush2.bf16.msra.mxu0 0
        %4215 = vmatprep.mubr.bf16.mxu0 0
        %4216 = vmatmul.mubr.bf16.gmra.mxu0 %v4111
        %v4217 = vpop.f32.mrf.mxu0
        %v4218 = vadd.f32 %v4133, %v4217
        %v4219 = vpop.f32.mrf.mxu0
        %v4220 = vpop.f32.mrf.mxu0
        %v4221 = vadd.f32 %v4133, %v4220
        %v4222 = vpop.f32.mrf.mxu0
        %4223 = vdwg.mxu0
        %v4224 = vadd.f32 %v697, %v4218
        %v4225 = vadd.f32 %v701, %v4221
        %v4226 = vpack.c.bf16 %v4225, %v4224
        %v4227 = vld [vmem:[#allocation13] sm:$0xf]
        %v4228 = vld [vmem:[#allocation13 + $0x4] sm:$0xf]
        %v4229 = vld [vmem:[#allocation13 + $0x8] sm:$0xf]
        %v4230 = vld [vmem:[#allocation13 + $0xc] sm:$0xf]
        %v4231 = vld [vmem:[#allocation13 + $0x10] sm:$0xf]
        %v4232 = vld [vmem:[#allocation13 + $0x14] sm:$0xf]
        %v4233 = vld [vmem:[#allocation13 + $0x18] sm:$0xf]
        %v4234 = vld [vmem:[#allocation13 + $0x1c] sm:$0xf]
        %v4235 = vld [vmem:[#allocation13 + $0x20] sm:$0xf]
        %v4236 = vld [vmem:[#allocation13 + $0x24] sm:$0xf]
        %v4237 = vld [vmem:[#allocation13 + $0x28] sm:$0xf]
        %v4238 = vld [vmem:[#allocation13 + $0x2c] sm:$0xf]
        %v4239 = vld [vmem:[#allocation13 + $0x30] sm:$0xf]
        %v4240 = vld [vmem:[#allocation13 + $0x34] sm:$0xf]
        %v4241 = vld [vmem:[#allocation13 + $0x38] sm:$0xf]
        %v4242 = vld [vmem:[#allocation13 + $0x3c] sm:$0xf]
        %v4243 = vld [vmem:[%s11] sm:$0x1]
        %v4245 = vlaneseq
        %v4246 = vshrl.u32 %v4245, 7
        %v4247 = vsub.s32 0, %v4246
        %v4248 = vrot.slane %v4243, %v4247
        %v4266 = vunpack.c.l.b16 %v4227
        %v4267 = vunpack.c.l.b16 %v4228
        %v4268 = vunpack.c.l.b16 %v4229
        %v4269 = vunpack.c.l.b16 %v4230
        %v4270 = vunpack.c.l.b16 %v4231
        %v4271 = vunpack.c.l.b16 %v4232
        %v4272 = vunpack.c.l.b16 %v4233
        %v4273 = vunpack.c.l.b16 %v4234
        %v4274 = vunpack.c.l.b16 %v4235
        %v4275 = vunpack.c.l.b16 %v4236
        %v4276 = vunpack.c.l.b16 %v4237
        %v4277 = vunpack.c.l.b16 %v4238
        %v4278 = vunpack.c.l.b16 %v4239
        %v4279 = vunpack.c.l.b16 %v4240
        %v4280 = vunpack.c.l.b16 %v4241
        %v4281 = vunpack.c.l.b16 %v4242
        %v4282 = vpack.c.b16 %v4267, %v4266
        %v4283 = vpack.c.b16 %v4269, %v4268
        %v4284 = vpack.c.b16 %v4271, %v4270
        %v4285 = vpack.c.b16 %v4273, %v4272
        %v4286 = vpack.c.b16 %v4275, %v4274
        %v4287 = vpack.c.b16 %v4277, %v4276
        %v4288 = vpack.c.b16 %v4279, %v4278
        %v4289 = vpack.c.b16 %v4281, %v4280
        %4298 = vmatprep.subr.bf16.mxu0 0
        %4299 = vmatpush1.bf16.msra.mxu0 %v4289
        %4300 = vmatprep.subr.bf16.mxu0 0
        %4301 = vmatpush1.bf16.msra.mxu0 %v4288
        %4302 = vmatprep.subr.bf16.mxu0 0
        %4303 = vmatpush1.bf16.msra.mxu0 %v4287
        %4304 = vmatprep.subr.bf16.mxu0 0
        %4305 = vmatpush1.bf16.msra.mxu0 %v4286
        %4306 = vmatprep.subr.bf16.mxu0 0
        %4307 = vmatpush1.bf16.msra.mxu0 %v4285
        %4308 = vmatprep.subr.bf16.mxu0 0
        %4309 = vmatpush1.bf16.msra.mxu0 %v4284
        %4310 = vmatprep.subr.bf16.mxu0 0
        %4311 = vmatpush1.bf16.msra.mxu0 %v4283
        %4312 = vmatprep.subr.bf16.mxu0 0
        %4313 = vmatpush1.bf16.msra.mxu0 %v4282
        %4314 = vmatprep.subr.bf16.mxu0 0
        %4315 = vmatpush2.bf16.msra.mxu0 0
        %4316 = vmatprep.subr.bf16.mxu0 0
        %4317 = vmatpush2.bf16.msra.mxu0 0
        %4318 = vmatprep.subr.bf16.mxu0 0
        %4319 = vmatpush2.bf16.msra.mxu0 0
        %4320 = vmatprep.subr.bf16.mxu0 0
        %4321 = vmatpush2.bf16.msra.mxu0 0
        %4322 = vmatprep.subr.bf16.mxu0 0
        %4323 = vmatpush2.bf16.msra.mxu0 0
        %4324 = vmatprep.subr.bf16.mxu0 0
        %4325 = vmatpush2.bf16.msra.mxu0 0
        %4326 = vmatprep.subr.bf16.mxu0 0
        %4327 = vmatpush2.bf16.msra.mxu0 0
        %4328 = vmatprep.subr.bf16.mxu0 0
        %4329 = vmatpush2.bf16.msra.mxu0 0
        %4330 = vmatprep.mubr.bf16.mxu0 0
        %4331 = vmatmul.mubr.bf16.gmra.mxu0 %v4226
        %v4332 = vpop.f32.mrf.mxu0
        %v4333 = vadd.f32 %v4248, %v4332
        %v4334 = vpop.f32.mrf.mxu0
        %v4335 = vpop.f32.mrf.mxu0
        %v4336 = vadd.f32 %v4248, %v4335
        %v4337 = vpop.f32.mrf.mxu0
        %4338 = vdwg.mxu0
        %v4339 = vmax.f32 %v4333, 0.0
        %v4340 = vmax.f32 %v4336, 0.0
        %v4341 = vadd.f32 %v4224, %v4339
        %v4342 = vadd.f32 %v4225, %v4340
        %v4343 = vmul.f32 %v4341, %v717
        %v4344 = vmul.f32 %v4342, %v718
        %v4345 = vpack.c.bf16 %v4344, %v4343
        %v4347 = vunpack.c.l.b16 %v4345
        %v4348 = vunpack.c.h.b16 %v4345
        %v4349 = vpack.c.b16 %v4347, %v4347
        %v4350 = vpack.c.b16 %v4348, %v4348
        %4353 = vst [vmem:[%s540] sm:$0xf] %v4349
        %4354 = vst [vmem:[%s540 + $0x4] sm:$0xf] %v4350
        %s4355 = sand.u32 %s316, 1
        %s4356 = scalar_lea.sflag [#allocation4], %s4355
        %s4357 = sand.u32 %s316, 1
        %s4358 = smul.addr %s4357, 8
        %s4359 = scalar_lea.vmem [#allocation14], %s4358
        // Predicated region
        $region97: #{tpu_custom_call.1} parent=67 // pred_check
          %p4360 = pneg %p326
        $region98: #{tpu_custom_call.1} parent=67 // pred_check_branch
          %4362 = sbr.rel (%p4360) target = $region100
        $region99: #{tpu_custom_call.1} parent=67 // pred_region
          %s4363 = smul.u32 2, %s37
          %s4365 = ssub.s32 128, 128
          %4366 = vsyncadd %s4356, %s4365
          %s4367 = smul.addr %s36, 2
          %s4368 = sadd.s32 %s4363, %s4367
          %s4369 = smul.addr %s4368, 64
          %s4370 = scalar_lea.hbm %s12, %s4369
          %s4371 = sshll.u32 %s4359, 4
          %s4372 = int_to_ptr.vmem [resolvable:$true] %s4371
          %4377 = dma.vmem_to_hbm [thread:$0]  %s4372, 128, %s4370, %s4356, 64, 64, 4
        $region100: #{tpu_custom_call.1} parent=67 // pred_fallthru
          _
      $region68: #{tpu_custom_call.1} parent=5 // pred_fallthru
        _
      %p4378 = scmp.le.s32.totalorder 2, %s27
      // Predicated region
      $region101: #{tpu_custom_call.1} parent=5 // pred_check
        %p4379 = pneg %p4378
      $region102: #{tpu_custom_call.1} parent=5 // pred_check_branch
        %4381 = sbr.rel (%p4379) target = $region104
      $region103: #{tpu_custom_call.1} parent=5 // pred_region
        %s4382 = ssub.s32 %s27, 2
        // Predicated region
        $region105: #{tpu_custom_call.1} parent=103 // pred_check
          %p4383 = pneg %p332
        $region106: #{tpu_custom_call.1} parent=103 // pred_check_branch
          %4385 = sbr.rel (%p4383) target = $region108
        $region107: #{tpu_custom_call.1} parent=103 // pred_region
          %s4386 = sand.u32 %s317, 1
          %s4387 = scalar_lea.sflag [#allocation4], %s4386
          %s4388 = sand.u32 %s317, 1
          %s4389 = smul.addr %s4388, 8
          %s4390 = scalar_lea.vmem [#allocation14], %s4389
          %4391 = dma.done %s4387, 128
        $region108: #{tpu_custom_call.1} parent=103 // pred_fallthru
          _
      $region104: #{tpu_custom_call.1} parent=5 // pred_fallthru
        _
    $region6: #{tpu_custom_call.1} parent=1 // loop_footer
      %s31 = sadd.s32 1, %s27
    $region7: #{tpu_custom_call.1} parent=1 // loop_footer_branch
      %26 = sbr.rel target = $region3
    $region8: #{tpu_custom_call.1} parent=1 // loop_exit
      _
    %4392 = vsyncpa [#allocation3], 1
    %s4393 = scalar_lea.sflag [#allocation3], 1
    %4394 = vsyncpa %s4393, 1
    %4395 = vsyncpa [#allocation6], 1
    %s4396 = scalar_lea.sflag [#allocation6], 1
    %4397 = vsyncpa %s4396, 1
    %4398 = vsyncpa [#allocation9], 1
    %4399 = vsyncpa [#allocation12], 1
    %4400 = vsyncpa [#allocation4], 1
    %s4401 = scalar_lea.sflag [#allocation4], 1
    %4402 = vsyncpa %s4401, 1

</llo_original>
